<compile_context>
chip_gen: v7x
topology: tpu7x:2x2x1
jax: 0.10.0
libtpu: 0.0.40
codegen_flags: <defaults>
</compile_context>

<pallas_src>
import functools

import jax
import jax.numpy as jnp
from jax.experimental import pallas as pl
from jax.experimental.pallas import tpu as pltpu


def _round_up(n, m):
    return ((n + m - 1) // m) * m


# VMEM budgeting: keep the per-step working set comfortably under the 32 MiB
# scoped limit (safe on v5e/v6e/v7x; v7x physical VMEM is only 64 MiB).
_VMEM_LIMIT_BYTES = 32 * 1024 * 1024
_VMEM_TARGET_BYTES = 24 * 1024 * 1024


def _autoencoder_kernel(x_ref,
                        w1_ref, b1_ref,
                        w2_ref, b2_ref,
                        w3_ref, b3_ref,
                        wd_ref, bd_ref,
                        latent_ref, recon_ref,
                        *, compute_dtype):
    """Fused MLP autoencoder forward for one batch tile.

    All matmuls accumulate in f32 (preferred_element_type); operands are fed
    to the MXU in `compute_dtype` (bf16 default).  Bias add / ReLU stay f32.
    """
    x = x_ref[...]
    if x.dtype != compute_dtype:
        x = x.astype(compute_dtype)

    # Encoder layer 1 + ReLU
    h1 = jnp.dot(x, w1_ref[...], preferred_element_type=jnp.float32) + b1_ref[...]
    h1 = jnp.maximum(h1, 0.0)
    if h1.dtype != compute_dtype:
        h1 = h1.astype(compute_dtype)

    # Encoder layer 2 + ReLU
    h2 = jnp.dot(h1, w2_ref[...], preferred_element_type=jnp.float32) + b2_ref[...]
    h2 = jnp.maximum(h2, 0.0)
    if h2.dtype != compute_dtype:
        h2 = h2.astype(compute_dtype)

    # Encoder output projection (latent, lane-dense padded width)
    z = jnp.dot(h2, w3_ref[...], preferred_element_type=jnp.float32) + b3_ref[...]
    latent_ref[...] = z.astype(latent_ref.dtype)

    # Decoder
    zc = z if z.dtype == compute_dtype else z.astype(compute_dtype)
    recon = jnp.dot(zc, wd_ref[...], preferred_element_type=jnp.float32) + bd_ref[...]
    recon_ref[...] = recon.astype(recon_ref.dtype)


def _pick_batch_tile(B, batch_tile, per_row_io_bytes, resident_weight_bytes):
    """Pick a batch tile: big enough to amortize per-step overhead / fill the
    MXU M dimension, small enough to fit VMEM, and yielding a grid >= 2."""
    if batch_tile is None:
        batch_tile = 1024 if B >= 4096 else 512
    batch_tile = max(8, _round_up(batch_tile, 8))
    # Guarantee grid >= 2 for small batches (v7x megacore + DMA pipelining).
    if B <= batch_tile:
        batch_tile = max(8, _round_up(-(-B // 2), 8))
    # VMEM budget check (double-buffered activations + resident weights).
    while (batch_tile > 8 and
           batch_tile * per_row_io_bytes + resident_weight_bytes > _VMEM_TARGET_BYTES):
        batch_tile = max(8, _round_up(batch_tile // 2, 8))
    return batch_tile


def _weight_spec(shape, single_buffer):
    if single_buffer:
        # Grid-invariant block: single-buffer to halve its VMEM residency.
        return pl.BlockSpec(shape, lambda i: (0, 0), pipeline_mode=pl.Buffered(1))
    return pl.BlockSpec(shape, lambda i: (0, 0))


def contrastive_autoencoder_forward(x, params, *, batch_tile=None,
                                    compute_dtype=jnp.bfloat16,
                                    out_dtype=None):
    """Runs the autoencoder forward pass as a single fused Pallas kernel.

    Args:
      x: [B, input_dim] input embeddings (f32 or bf16).
      params: dict with keys w1,b1,w2,b2,w3,b3,wd,bd (weights already [in,out],
              biases [1,out]); logical (unpadded) shapes.
      batch_tile: rows per grid step (multiple of 8); None -> auto (512/1024),
                  shrunk for small B so the grid stays >= 2 and VMEM fits.
      compute_dtype: dtype fed to the MXU (bf16 default; f32 for tight
                     numerics).  Accumulation is always f32.
      out_dtype: dtype of latent/recon outputs (default: x.dtype).  Use bf16
                 to halve writeback traffic if the downstream loss tolerates it.

    Returns:
      (latent [B, latent_dim], reconstructed [B, input_dim])
    """
    B, input_dim = x.shape
    h1_dim = params["w1"].shape[1]
    h2_dim = params["w2"].shape[1]
    latent_dim = params["w3"].shape[1]
    assert params["wd"].shape == (latent_dim, input_dim)
    if out_dtype is None:
        out_dtype = x.dtype

    # ---- pad latent dim to a lane-dense multiple of 128 ------------------
    latent_pad = _round_up(latent_dim, 128)
    w3, b3, wd = params["w3"], params["b3"], params["wd"]
    if latent_pad != latent_dim:
        w3 = jnp.pad(w3, ((0, 0), (0, latent_pad - latent_dim)))
        b3 = jnp.pad(b3, ((0, 0), (0, latent_pad - latent_dim)))
        wd = jnp.pad(wd, ((0, latent_pad - latent_dim), (0, 0)))  # zero rows

    # Weights in compute dtype (bf16 halves DMA and runs the MXU natively on
    # v5e/v6e/v7x); biases stay f32 so the VPU bias-add / ReLU stay f32.
    w1 = params["w1"].astype(compute_dtype)
    w2 = params["w2"].astype(compute_dtype)
    w3 = w3.astype(compute_dtype)
    wd = wd.astype(compute_dtype)
    b1, b2, bd = params["b1"], params["b2"], params["bd"]

    # ---- batch tiling / padding ------------------------------------------
    x_bytes = jnp.dtype(x.dtype).itemsize
    o_bytes = jnp.dtype(out_dtype).itemsize
    per_row_io_bytes = 2 * (input_dim * x_bytes            # x tile (x2 buf)
                            + input_dim * o_bytes          # recon tile
                            + latent_pad * o_bytes)        # latent tile
    w_elems = (input_dim * h1_dim + h1_dim * h2_dim
               + h2_dim * latent_pad + latent_pad * input_dim)
    b_elems = h1_dim + h2_dim + latent_pad + input_dim
    # Conservative: assume weights end up double-buffered if Buffered(1) is
    # unavailable in this Pallas version.
    resident_weight_bytes = 2 * (w_elems * jnp.dtype(compute_dtype).itemsize
                                 + b_elems * 4)

    batch_tile = _pick_batch_tile(B, batch_tile, per_row_io_bytes,
                                  resident_weight_bytes)
    B_pad = _round_up(B, batch_tile)
    x_in = x if B_pad == B else jnp.pad(x, ((0, B_pad - B), (0, 0)))
    grid = (B_pad // batch_tile,)

    out_shape = (
        jax.ShapeDtypeStruct((B_pad, latent_pad), out_dtype),
        jax.ShapeDtypeStruct((B_pad, input_dim), out_dtype),
    )
    kernel = functools.partial(_autoencoder_kernel, compute_dtype=compute_dtype)

    def _call(single_buffer_weights):
        whole = lambda shape: _weight_spec(shape, single_buffer_weights)
        in_specs = [
            pl.BlockSpec((batch_tile, input_dim), lambda i: (i, 0)),   # x tile
            whole((input_dim, h1_dim)),     whole((1, h1_dim)),        # layer 1
            whole((h1_dim, h2_dim)),        whole((1, h2_dim)),        # layer 2
            whole((h2_dim, latent_pad)),    whole((1, latent_pad)),    # latent proj
            whole((latent_pad, input_dim)), whole((1, input_dim)),     # decoder
        ]
        out_specs = [
            pl.BlockSpec((batch_tile, latent_pad), lambda i: (i, 0)),
            pl.BlockSpec((batch_tile, input_dim), lambda i: (i, 0)),
        ]
        return pl.pallas_call(
            kernel,
            out_shape=out_shape,
            grid_spec=pltpu.PrefetchScalarGridSpec(
                num_scalar_prefetch=0,
                grid=grid,
                in_specs=in_specs,
                out_specs=out_specs,
            ),
            compiler_params=pltpu.CompilerParams(
                dimension_semantics=("parallel",),        # megacore-shard batch (v7x)
                vmem_limit_bytes=_VMEM_LIMIT_BYTES,       # safe on v5e/v6e/v7x
            ),
        )(x_in, w1, b1, w2, b2, w3, b3, wd, bd)

    try:
        latent_pad_out, recon_pad_out = _call(True)
    except Exception:
        # Pallas version without pipeline_mode/Buffered(1): fall back to the
        # default double-buffered weight specs (costs ~1.3-2.6 MB extra VMEM).
        latent_pad_out, recon_pad_out = _call(False)

    # Strip batch / latent padding (pure XLA slices, negligible).
    latent = latent_pad_out[:B, :latent_dim]
    recon = recon_pad_out[:B, :]
    return latent, recon


def init_params(key, input_dim=768, latent_dim=75, hidden_dims=(512, 256)):
    """Deterministic init mimicking PyTorch nn.Linear default
    (uniform in [-1/sqrt(fan_in), 1/sqrt(fan_in)]).
    Weights returned pre-transposed to [in, out]; biases as [1, out]."""
    dims = [input_dim, *hidden_dims, latent_dim]
    params = {}
    names = ["1", "2", "3"]
    for name, (fan_in, fan_out) in zip(names, zip(dims[:-1], dims[1:])):
        key, kw, kb = jax.random.split(key, 3)
        bound = 1.0 / jnp.sqrt(fan_in)
        params[f"w{name}"] = jax.random.uniform(
            kw, (fan_in, fan_out), jnp.float32, -bound, bound)
        params[f"b{name}"] = jax.random.uniform(
            kb, (1, fan_out), jnp.float32, -bound, bound)
    # decoder: Linear(latent_dim -> input_dim)
    key, kw, kb = jax.random.split(key, 3)
    bound = 1.0 / jnp.sqrt(latent_dim)
    params["wd"] = jax.random.uniform(
        kw, (latent_dim, input_dim), jnp.float32, -bound, bound)
    params["bd"] = jax.random.uniform(
        kb, (1, input_dim), jnp.float32, -bound, bound)
    return params


def reference_forward(x, params):
    """Pure-JAX reference of the same forward pass (eval-mode dropout)."""
    with jax.default_matmul_precision("highest"):
        h1 = jnp.maximum(x @ params["w1"] + params["b1"], 0.0)
        h2 = jnp.maximum(h1 @ params["w2"] + params["b2"], 0.0)
        z = h2 @ params["w3"] + params["b3"]
        recon = z @ params["wd"] + params["bd"]
    return z, recon


if __name__ == "__main__":
    key = jax.random.PRNGKey(0)
    input_dim, latent_dim, hidden_dims = 768, 75, (512, 256)
    batch = 256   # small demo batch; auto tile -> 128 rows, grid=(2,)

    key, kx, kp = jax.random.split(key, 3)
    x = jax.random.normal(kx, (batch, input_dim), jnp.float32)
    params = init_params(kp, input_dim, latent_dim, hidden_dims)

    ref_latent, ref_recon = reference_forward(x, params)

    # Default path: bf16 MXU compute, f32 accumulation, f32 outputs.
    latent, recon = contrastive_autoencoder_forward(x, params)
    latent = jax.block_until_ready(latent)
    recon = jax.block_until_ready(recon)
    assert latent.shape == (batch, latent_dim)
    assert recon.shape == (batch, input_dim)
    assert jnp.allclose(latent, ref_latent, atol=5e-2, rtol=5e-2)
    assert jnp.allclose(recon, ref_recon, atol=5e-2, rtol=5e-2)

    # f32 compute path: tighter match to the reference (only this path is
    # expected to track the PyTorch f32 forward closely).
    latent32, recon32 = contrastive_autoencoder_forward(
        x, params, compute_dtype=jnp.float32)
    latent32 = jax.block_until_ready(latent32)
    recon32 = jax.block_until_ready(recon32)
    assert jnp.allclose(latent32, ref_latent, atol=1e-2, rtol=1e-2)
    assert jnp.allclose(recon32, ref_recon, atol=1e-2, rtol=1e-2)

    print("KERNEL_OK")
</pallas_src>

<mosaic_0001>
module attributes {stable_mosaic.version = 11 : i64} {
  func.func @_autoencoder_kernel(%arg0: i32, %arg1: memref<128x768xf32, #tpu.memory_space<vmem>>, %arg2: memref<768x512xbf16, #tpu.memory_space<vmem>>, %arg3: memref<1x512xf32, #tpu.memory_space<vmem>>, %arg4: memref<512x256xbf16, #tpu.memory_space<vmem>>, %arg5: memref<1x256xf32, #tpu.memory_space<vmem>>, %arg6: memref<256x128xbf16, #tpu.memory_space<vmem>>, %arg7: memref<1x128xf32, #tpu.memory_space<vmem>>, %arg8: memref<128x768xbf16, #tpu.memory_space<vmem>>, %arg9: memref<1x768xf32, #tpu.memory_space<vmem>>, %arg10: memref<128x128xf32, #tpu.memory_space<vmem>>, %arg11: memref<128x768xf32, #tpu.memory_space<vmem>>) attributes {dimension_semantics = [#tpu.dimension_semantics<parallel>], iteration_bounds = array<i64: 2>, scalar_prefetch = 0 : i64, scratch_operands = 0 : i64, tpu.core_type = #tpu.core_type<tc>, window_params = [{transform_indices = @transform_0, window_bounds = array<i64: 128, 768>}, {pipeline_mode = #tpu.pipeline_mode<synchronous>, transform_indices = @transform_1, window_bounds = array<i64: 768, 512>}, {pipeline_mode = #tpu.pipeline_mode<synchronous>, transform_indices = @transform_2, window_bounds = array<i64: 1, 512>}, {pipeline_mode = #tpu.pipeline_mode<synchronous>, transform_indices = @transform_3, window_bounds = array<i64: 512, 256>}, {pipeline_mode = #tpu.pipeline_mode<synchronous>, transform_indices = @transform_4, window_bounds = array<i64: 1, 256>}, {pipeline_mode = #tpu.pipeline_mode<synchronous>, transform_indices = @transform_5, window_bounds = array<i64: 256, 128>}, {pipeline_mode = #tpu.pipeline_mode<synchronous>, transform_indices = @transform_6, window_bounds = array<i64: 1, 128>}, {pipeline_mode = #tpu.pipeline_mode<synchronous>, transform_indices = @transform_7, window_bounds = array<i64: 128, 768>}, {pipeline_mode = #tpu.pipeline_mode<synchronous>, transform_indices = @transform_8, window_bounds = array<i64: 1, 768>}, {transform_indices = @transform_9, window_bounds = array<i64: 128, 128>}, {transform_indices = @transform_10, window_bounds = array<i64: 128, 768>}]} {
    %c0 = arith.constant 0 : index
    %c0_0 = arith.constant 0 : index
    %0 = vector.load %arg1[%c0, %c0_0] : memref<128x768xf32, #tpu.memory_space<vmem>>, vector<128x768xf32>
    %1 = arith.truncf %0 : vector<128x768xf32> to vector<128x768xbf16>
    %c0_1 = arith.constant 0 : index
    %c0_2 = arith.constant 0 : index
    %2 = vector.load %arg2[%c0_1, %c0_2] : memref<768x512xbf16, #tpu.memory_space<vmem>>, vector<768x512xbf16>
    %cst = arith.constant dense<0.000000e+00> : vector<128x512xf32>
    %3 = tpu.matmul %1, %2, %cst {dimension_numbers = #tpu.dot_dimension_numbers<[1], [0], [0], [1], [0, 0, 1, 1], [], []>} : vector<128x768xbf16>, vector<768x512xbf16>, vector<128x512xf32> -> vector<128x512xf32>
    %c0_3 = arith.constant 0 : index
    %c0_4 = arith.constant 0 : index
    %4 = vector.load %arg3[%c0_3, %c0_4] : memref<1x512xf32, #tpu.memory_space<vmem>>, vector<1x512xf32>
    %5 = vector.broadcast %4 : vector<1x512xf32> to vector<128x512xf32>
    %6 = arith.addf %3, %5 : vector<128x512xf32>
    %cst_5 = arith.constant 0.000000e+00 : f32
    %7 = vector.broadcast %cst_5 : f32 to vector<128x512xf32>
    %8 = arith.maximumf %6, %7 : vector<128x512xf32>
    %9 = arith.truncf %8 : vector<128x512xf32> to vector<128x512xbf16>
    %c0_6 = arith.constant 0 : index
    %c0_7 = arith.constant 0 : index
    %10 = vector.load %arg4[%c0_6, %c0_7] : memref<512x256xbf16, #tpu.memory_space<vmem>>, vector<512x256xbf16>
    %cst_8 = arith.constant dense<0.000000e+00> : vector<128x256xf32>
    %11 = tpu.matmul %9, %10, %cst_8 {dimension_numbers = #tpu.dot_dimension_numbers<[1], [0], [0], [1], [0, 0, 1, 1], [], []>} : vector<128x512xbf16>, vector<512x256xbf16>, vector<128x256xf32> -> vector<128x256xf32>
    %c0_9 = arith.constant 0 : index
    %c0_10 = arith.constant 0 : index
    %12 = vector.load %arg5[%c0_9, %c0_10] : memref<1x256xf32, #tpu.memory_space<vmem>>, vector<1x256xf32>
    %13 = vector.broadcast %12 : vector<1x256xf32> to vector<128x256xf32>
    %14 = arith.addf %11, %13 : vector<128x256xf32>
    %cst_11 = arith.constant 0.000000e+00 : f32
    %15 = vector.broadcast %cst_11 : f32 to vector<128x256xf32>
    %16 = arith.maximumf %14, %15 : vector<128x256xf32>
    %17 = arith.truncf %16 : vector<128x256xf32> to vector<128x256xbf16>
    %c0_12 = arith.constant 0 : index
    %c0_13 = arith.constant 0 : index
    %18 = vector.load %arg6[%c0_12, %c0_13] : memref<256x128xbf16, #tpu.memory_space<vmem>>, vector<256x128xbf16>
    %cst_14 = arith.constant dense<0.000000e+00> : vector<128x128xf32>
    %19 = tpu.matmul %17, %18, %cst_14 {dimension_numbers = #tpu.dot_dimension_numbers<[1], [0], [0], [1], [0, 0, 1, 1], [], []>} : vector<128x256xbf16>, vector<256x128xbf16>, vector<128x128xf32> -> vector<128x128xf32>
    %c0_15 = arith.constant 0 : index
    %c0_16 = arith.constant 0 : index
    %20 = vector.load %arg7[%c0_15, %c0_16] : memref<1x128xf32, #tpu.memory_space<vmem>>, vector<1x128xf32>
    %21 = vector.broadcast %20 : vector<1x128xf32> to vector<128x128xf32>
    %22 = arith.addf %19, %21 : vector<128x128xf32>
    %c0_17 = arith.constant 0 : index
    %c0_18 = arith.constant 0 : index
    %23 = vector.load %arg10[%c0_17, %c0_18] : memref<128x128xf32, #tpu.memory_space<vmem>>, vector<128x128xf32>
    tpu.vector_store %arg10[%c0_17, %c0_18], %22 {strides = array<i32>} : memref<128x128xf32, #tpu.memory_space<vmem>>, vector<128x128xf32>,
    %24 = arith.truncf %22 : vector<128x128xf32> to vector<128x128xbf16>
    %c0_19 = arith.constant 0 : index
    %c0_20 = arith.constant 0 : index
    %25 = vector.load %arg8[%c0_19, %c0_20] : memref<128x768xbf16, #tpu.memory_space<vmem>>, vector<128x768xbf16>
    %cst_21 = arith.constant dense<0.000000e+00> : vector<128x768xf32>
    %26 = tpu.matmul %24, %25, %cst_21 {dimension_numbers = #tpu.dot_dimension_numbers<[1], [0], [0], [1], [0, 0, 1, 1], [], []>} : vector<128x128xbf16>, vector<128x768xbf16>, vector<128x768xf32> -> vector<128x768xf32>
    %c0_22 = arith.constant 0 : index
    %c0_23 = arith.constant 0 : index
    %27 = vector.load %arg9[%c0_22, %c0_23] : memref<1x768xf32, #tpu.memory_space<vmem>>, vector<1x768xf32>
    %28 = vector.broadcast %27 : vector<1x768xf32> to vector<128x768xf32>
    %29 = arith.addf %26, %28 : vector<128x768xf32>
    %c0_24 = arith.constant 0 : index
    %c0_25 = arith.constant 0 : index
    %30 = vector.load %arg11[%c0_24, %c0_25] : memref<128x768xf32, #tpu.memory_space<vmem>>, vector<128x768xf32>
    tpu.vector_store %arg11[%c0_24, %c0_25], %29 {strides = array<i32>} : memref<128x768xf32, #tpu.memory_space<vmem>>, vector<128x768xf32>,
    return
  }
  func.func @transform_0(%arg0: i32) -> (i32, i32) {
    %c0_i32 = arith.constant 0 : i32
    %c0_i32_0 = arith.constant 0 : i32
    return %arg0, %c0_i32 : i32, i32
  }
  func.func @transform_1(%arg0: i32) -> (i32, i32) {
    %c0_i32 = arith.constant 0 : i32
    %c0_i32_0 = arith.constant 0 : i32
    %c0_i32_1 = arith.constant 0 : i32
    return %c0_i32, %c0_i32_0 : i32, i32
  }
  func.func @transform_2(%arg0: i32) -> (i32, i32) {
    %c0_i32 = arith.constant 0 : i32
    %c0_i32_0 = arith.constant 0 : i32
    %c0_i32_1 = arith.constant 0 : i32
    return %c0_i32, %c0_i32_0 : i32, i32
  }
  func.func @transform_3(%arg0: i32) -> (i32, i32) {
    %c0_i32 = arith.constant 0 : i32
    %c0_i32_0 = arith.constant 0 : i32
    %c0_i32_1 = arith.constant 0 : i32
    return %c0_i32, %c0_i32_0 : i32, i32
  }
  func.func @transform_4(%arg0: i32) -> (i32, i32) {
    %c0_i32 = arith.constant 0 : i32
    %c0_i32_0 = arith.constant 0 : i32
    %c0_i32_1 = arith.constant 0 : i32
    return %c0_i32, %c0_i32_0 : i32, i32
  }
  func.func @transform_5(%arg0: i32) -> (i32, i32) {
    %c0_i32 = arith.constant 0 : i32
    %c0_i32_0 = arith.constant 0 : i32
    %c0_i32_1 = arith.constant 0 : i32
    return %c0_i32, %c0_i32_0 : i32, i32
  }
  func.func @transform_6(%arg0: i32) -> (i32, i32) {
    %c0_i32 = arith.constant 0 : i32
    %c0_i32_0 = arith.constant 0 : i32
    %c0_i32_1 = arith.constant 0 : i32
    return %c0_i32, %c0_i32_0 : i32, i32
  }
  func.func @transform_7(%arg0: i32) -> (i32, i32) {
    %c0_i32 = arith.constant 0 : i32
    %c0_i32_0 = arith.constant 0 : i32
    %c0_i32_1 = arith.constant 0 : i32
    return %c0_i32, %c0_i32_0 : i32, i32
  }
  func.func @transform_8(%arg0: i32) -> (i32, i32) {
    %c0_i32 = arith.constant 0 : i32
    %c0_i32_0 = arith.constant 0 : i32
    %c0_i32_1 = arith.constant 0 : i32
    return %c0_i32, %c0_i32_0 : i32, i32
  }
  func.func @transform_9(%arg0: i32) -> (i32, i32) {
    %c0_i32 = arith.constant 0 : i32
    %c0_i32_0 = arith.constant 0 : i32
    return %arg0, %c0_i32 : i32, i32
  }
  func.func @transform_10(%arg0: i32) -> (i32, i32) {
    %c0_i32 = arith.constant 0 : i32
    %c0_i32_0 = arith.constant 0 : i32
    return %arg0, %c0_i32 : i32, i32
  }
}

module attributes {stable_mosaic.version = 11 : i64} {
  func.func @_autoencoder_kernel(%arg0: i32, %arg1: memref<128x768xf32, #tpu.memory_space<vmem>>, %arg2: memref<768x512xbf16, #tpu.memory_space<vmem>>, %arg3: memref<1x512xf32, #tpu.memory_space<vmem>>, %arg4: memref<512x256xbf16, #tpu.memory_space<vmem>>, %arg5: memref<1x256xf32, #tpu.memory_space<vmem>>, %arg6: memref<256x128xbf16, #tpu.memory_space<vmem>>, %arg7: memref<1x128xf32, #tpu.memory_space<vmem>>, %arg8: memref<128x768xbf16, #tpu.memory_space<vmem>>, %arg9: memref<1x768xf32, #tpu.memory_space<vmem>>, %arg10: memref<128x128xf32, #tpu.memory_space<vmem>>, %arg11: memref<128x768xf32, #tpu.memory_space<vmem>>) attributes {dimension_semantics = [#tpu.dimension_semantics<parallel>], iteration_bounds = array<i64: 2>, scalar_prefetch = 0 : i64, scratch_operands = 0 : i64, tpu.core_type = #tpu.core_type<tc>, window_params = [{transform_indices = @transform_0, window_bounds = array<i64: 128, 768>}, {pipeline_mode = #tpu.pipeline_mode<synchronous>, transform_indices = @transform_1, window_bounds = array<i64: 768, 512>}, {pipeline_mode = #tpu.pipeline_mode<synchronous>, transform_indices = @transform_2, window_bounds = array<i64: 1, 512>}, {pipeline_mode = #tpu.pipeline_mode<synchronous>, transform_indices = @transform_3, window_bounds = array<i64: 512, 256>}, {pipeline_mode = #tpu.pipeline_mode<synchronous>, transform_indices = @transform_4, window_bounds = array<i64: 1, 256>}, {pipeline_mode = #tpu.pipeline_mode<synchronous>, transform_indices = @transform_5, window_bounds = array<i64: 256, 128>}, {pipeline_mode = #tpu.pipeline_mode<synchronous>, transform_indices = @transform_6, window_bounds = array<i64: 1, 128>}, {pipeline_mode = #tpu.pipeline_mode<synchronous>, transform_indices = @transform_7, window_bounds = array<i64: 128, 768>}, {pipeline_mode = #tpu.pipeline_mode<synchronous>, transform_indices = @transform_8, window_bounds = array<i64: 1, 768>}, {transform_indices = @transform_9, window_bounds = array<i64: 128, 128>}, {transform_indices = @transform_10, window_bounds = array<i64: 128, 768>}]} {
    %c0 = arith.constant 0 : index
    %c0_0 = arith.constant 0 : index
    %0 = vector.load %arg1[%c0, %c0_0] : memref<128x768xf32, #tpu.memory_space<vmem>>, vector<128x768xf32>
    %1 = arith.truncf %0 : vector<128x768xf32> to vector<128x768xbf16>
    %c0_1 = arith.constant 0 : index
    %c0_2 = arith.constant 0 : index
    %2 = vector.load %arg2[%c0_1, %c0_2] : memref<768x512xbf16, #tpu.memory_space<vmem>>, vector<768x512xbf16>
    %cst = arith.constant dense<0.000000e+00> : vector<128x512xf32>
    %3 = tpu.matmul %1, %2, %cst {dimension_numbers = #tpu.dot_dimension_numbers<[1], [0], [0], [1], [0, 0, 1, 1], [], []>} : vector<128x768xbf16>, vector<768x512xbf16>, vector<128x512xf32> -> vector<128x512xf32>
    %c0_3 = arith.constant 0 : index
    %c0_4 = arith.constant 0 : index
    %4 = vector.load %arg3[%c0_3, %c0_4] : memref<1x512xf32, #tpu.memory_space<vmem>>, vector<1x512xf32>
    %5 = vector.broadcast %4 : vector<1x512xf32> to vector<128x512xf32>
    %6 = arith.addf %3, %5 : vector<128x512xf32>
    %cst_5 = arith.constant 0.000000e+00 : f32
    %7 = vector.broadcast %cst_5 : f32 to vector<128x512xf32>
    %8 = arith.maximumf %6, %7 : vector<128x512xf32>
    %9 = arith.truncf %8 : vector<128x512xf32> to vector<128x512xbf16>
    %c0_6 = arith.constant 0 : index
    %c0_7 = arith.constant 0 : index
    %10 = vector.load %arg4[%c0_6, %c0_7] : memref<512x256xbf16, #tpu.memory_space<vmem>>, vector<512x256xbf16>
    %cst_8 = arith.constant dense<0.000000e+00> : vector<128x256xf32>
    %11 = tpu.matmul %9, %10, %cst_8 {dimension_numbers = #tpu.dot_dimension_numbers<[1], [0], [0], [1], [0, 0, 1, 1], [], []>} : vector<128x512xbf16>, vector<512x256xbf16>, vector<128x256xf32> -> vector<128x256xf32>
    %c0_9 = arith.constant 0 : index
    %c0_10 = arith.constant 0 : index
    %12 = vector.load %arg5[%c0_9, %c0_10] : memref<1x256xf32, #tpu.memory_space<vmem>>, vector<1x256xf32>
    %13 = vector.broadcast %12 : vector<1x256xf32> to vector<128x256xf32>
    %14 = arith.addf %11, %13 : vector<128x256xf32>
    %cst_11 = arith.constant 0.000000e+00 : f32
    %15 = vector.broadcast %cst_11 : f32 to vector<128x256xf32>
    %16 = arith.maximumf %14, %15 : vector<128x256xf32>
    %17 = arith.truncf %16 : vector<128x256xf32> to vector<128x256xbf16>
    %c0_12 = arith.constant 0 : index
    %c0_13 = arith.constant 0 : index
    %18 = vector.load %arg6[%c0_12, %c0_13] : memref<256x128xbf16, #tpu.memory_space<vmem>>, vector<256x128xbf16>
    %cst_14 = arith.constant dense<0.000000e+00> : vector<128x128xf32>
    %19 = tpu.matmul %17, %18, %cst_14 {dimension_numbers = #tpu.dot_dimension_numbers<[1], [0], [0], [1], [0, 0, 1, 1], [], []>} : vector<128x256xbf16>, vector<256x128xbf16>, vector<128x128xf32> -> vector<128x128xf32>
    %c0_15 = arith.constant 0 : index
    %c0_16 = arith.constant 0 : index
    %20 = vector.load %arg7[%c0_15, %c0_16] : memref<1x128xf32, #tpu.memory_space<vmem>>, vector<1x128xf32>
    %21 = vector.broadcast %20 : vector<1x128xf32> to vector<128x128xf32>
    %22 = arith.addf %19, %21 : vector<128x128xf32>
    %c0_17 = arith.constant 0 : index
    %c0_18 = arith.constant 0 : index
    %23 = vector.load %arg10[%c0_17, %c0_18] : memref<128x128xf32, #tpu.memory_space<vmem>>, vector<128x128xf32>
    tpu.vector_store %arg10[%c0_17, %c0_18], %22 {strides = array<i32>} : memref<128x128xf32, #tpu.memory_space<vmem>>, vector<128x128xf32>,
    %24 = arith.truncf %22 : vector<128x128xf32> to vector<128x128xbf16>
    %c0_19 = arith.constant 0 : index
    %c0_20 = arith.constant 0 : index
    %25 = vector.load %arg8[%c0_19, %c0_20] : memref<128x768xbf16, #tpu.memory_space<vmem>>, vector<128x768xbf16>
    %cst_21 = arith.constant dense<0.000000e+00> : vector<128x768xf32>
    %26 = tpu.matmul %24, %25, %cst_21 {dimension_numbers = #tpu.dot_dimension_numbers<[1], [0], [0], [1], [0, 0, 1, 1], [], []>} : vector<128x128xbf16>, vector<128x768xbf16>, vector<128x768xf32> -> vector<128x768xf32>
    %c0_22 = arith.constant 0 : index
    %c0_23 = arith.constant 0 : index
    %27 = vector.load %arg9[%c0_22, %c0_23] : memref<1x768xf32, #tpu.memory_space<vmem>>, vector<1x768xf32>
    %28 = vector.broadcast %27 : vector<1x768xf32> to vector<128x768xf32>
    %29 = arith.addf %26, %28 : vector<128x768xf32>
    %c0_24 = arith.constant 0 : index
    %c0_25 = arith.constant 0 : index
    %30 = vector.load %arg11[%c0_24, %c0_25] : memref<128x768xf32, #tpu.memory_space<vmem>>, vector<128x768xf32>
    tpu.vector_store %arg11[%c0_24, %c0_25], %29 {strides = array<i32>} : memref<128x768xf32, #tpu.memory_space<vmem>>, vector<128x768xf32>,
    return
  }
  func.func @transform_0(%arg0: i32) -> (i32, i32) {
    %c0_i32 = arith.constant 0 : i32
    %c0_i32_0 = arith.constant 0 : i32
    return %arg0, %c0_i32 : i32, i32
  }
  func.func @transform_1(%arg0: i32) -> (i32, i32) {
    %c0_i32 = arith.constant 0 : i32
    %c0_i32_0 = arith.constant 0 : i32
    %c0_i32_1 = arith.constant 0 : i32
    return %c0_i32, %c0_i32_0 : i32, i32
  }
  func.func @transform_2(%arg0: i32) -> (i32, i32) {
    %c0_i32 = arith.constant 0 : i32
    %c0_i32_0 = arith.constant 0 : i32
    %c0_i32_1 = arith.constant 0 : i32
    return %c0_i32, %c0_i32_0 : i32, i32
  }
  func.func @transform_3(%arg0: i32) -> (i32, i32) {
    %c0_i32 = arith.constant 0 : i32
    %c0_i32_0 = arith.constant 0 : i32
    %c0_i32_1 = arith.constant 0 : i32
    return %c0_i32, %c0_i32_0 : i32, i32
  }
  func.func @transform_4(%arg0: i32) -> (i32, i32) {
    %c0_i32 = arith.constant 0 : i32
    %c0_i32_0 = arith.constant 0 : i32
    %c0_i32_1 = arith.constant 0 : i32
    return %c0_i32, %c0_i32_0 : i32, i32
  }
  func.func @transform_5(%arg0: i32) -> (i32, i32) {
    %c0_i32 = arith.constant 0 : i32
    %c0_i32_0 = arith.constant 0 : i32
    %c0_i32_1 = arith.constant 0 : i32
    return %c0_i32, %c0_i32_0 : i32, i32
  }
  func.func @transform_6(%arg0: i32) -> (i32, i32) {
    %c0_i32 = arith.constant 0 : i32
    %c0_i32_0 = arith.constant 0 : i32
    %c0_i32_1 = arith.constant 0 : i32
    return %c0_i32, %c0_i32_0 : i32, i32
  }
  func.func @transform_7(%arg0: i32) -> (i32, i32) {
    %c0_i32 = arith.constant 0 : i32
    %c0_i32_0 = arith.constant 0 : i32
    %c0_i32_1 = arith.constant 0 : i32
    return %c0_i32, %c0_i32_0 : i32, i32
  }
  func.func @transform_8(%arg0: i32) -> (i32, i32) {
    %c0_i32 = arith.constant 0 : i32
    %c0_i32_0 = arith.constant 0 : i32
    %c0_i32_1 = arith.constant 0 : i32
    return %c0_i32, %c0_i32_0 : i32, i32
  }
  func.func @transform_9(%arg0: i32) -> (i32, i32) {
    %c0_i32 = arith.constant 0 : i32
    %c0_i32_0 = arith.constant 0 : i32
    return %arg0, %c0_i32 : i32, i32
  }
  func.func @transform_10(%arg0: i32) -> (i32, i32) {
    %c0_i32 = arith.constant 0 : i32
    %c0_i32_0 = arith.constant 0 : i32
    return %arg0, %c0_i32 : i32, i32
  }
}

</mosaic_0001>

<llo_original>
// kernel: tpu_custom_call.1
$region0: #{tpu_custom_call.1}
  #allocation0 [shape = 'u32[]', space=smem, size = 0x4, offset = 0x4, fixed_abs, tag = 'smem constant byte address 0x4 - core index']
  #allocation1 [shape = 'u32[144,128]{1,0:T(1,128)}', space=vmem, size = 0x12000, scoped, tag = 'internal scratch']
  %s0 = inlined_call_operand.hbm [shape: f32[256,768], index: 0, kind: input, shape index: {}]
  %s1 = inlined_call_operand.hbm [shape: bf16[768,512], index: 1, kind: input, shape index: {}]
  %s2 = inlined_call_operand.vmem [shape: f32[1,512], index: 2, kind: input, shape index: {}]
  %s3 = inlined_call_operand.hbm [shape: bf16[512,256], index: 3, kind: input, shape index: {}]
  %s4 = inlined_call_operand.vmem [shape: f32[1,256], index: 4, kind: input, shape index: {}]
  %s5 = inlined_call_operand.hbm [shape: bf16[256,128], index: 5, kind: input, shape index: {}]
  %s6 = inlined_call_operand.vmem [shape: f32[1,128], index: 6, kind: input, shape index: {}]
  %s7 = inlined_call_operand.hbm [shape: bf16[128,768], index: 7, kind: input, shape index: {}]
  %s8 = inlined_call_operand.vmem [shape: f32[1,768], index: 8, kind: input, shape index: {}]
  %s9 = inlined_call_operand.hbm [shape: f32[256,128], index: 9, kind: output, shape index: {0}]
  %s10 = inlined_call_operand.hbm [shape: f32[256,768], index: 10, kind: output, shape index: {1}]
  %11 = xla_tuple %s9, %s10
  %s12 = sld [smem:[#allocation0]]
  $region97: #{tpu_custom_call.1} parent=0
    _
  %s14 = ssub.s32 1, %s12
  %s15 = scalar_select 0, %s14, %s12
  $region1: #{tpu_custom_call.1} parent=0
    #allocation2 [shape = 'u8[786432]{0}', space=vmem, size = 0xc0000, scoped, tag = 'input window, operand 0']
    #allocation3 [shape = 's32[2]{0}', space=sflag, size = 0x8, scoped, tag = 'scoped memory for tpu_custom_call.1']
    #allocation4 [shape = 's32[2]{0}', space=sflag, size = 0x8, scoped, tag = 'scoped memory for tpu_custom_call.1']
    #allocation5 [shape = 'u8[786432]{0}', space=vmem, size = 0xc0000, scoped, tag = 'input window, operand 1, single buffered']
    #allocation6 [shape = 's32[1]{0}', space=sflag, size = 0x4, scoped, tag = 'scoped memory for tpu_custom_call.1']
    #allocation7 [shape = 'u8[262144]{0}', space=vmem, size = 0x40000, scoped, tag = 'input window, operand 3, single buffered']
    #allocation8 [shape = 'u8[65536]{0}', space=vmem, size = 0x10000, scoped, tag = 'input window, operand 5, single buffered']
    #allocation9 [shape = 's32[1]{0}', space=sflag, size = 0x4, scoped, tag = 'scoped memory for tpu_custom_call.1']
    #allocation10 [shape = 'u8[196608]{0}', space=vmem, size = 0x30000, scoped, tag = 'input window, operand 7, single buffered']
    #allocation11 [shape = 'u8[131072]{0}', space=vmem, size = 0x20000, scoped, tag = 'output window, operand 0']
    #allocation12 [shape = 'u8[786432]{0}', space=vmem, size = 0xc0000, scoped, tag = 'output window, operand 1']
    #allocation13 [shape = 's32[2]{0}', space=sflag, size = 0x8, scoped, tag = 'scoped memory for tpu_custom_call.1']
    %16 = vsyncpa [#allocation3], 0
    %s17 = scalar_lea.sflag [#allocation3], 1
    %18 = vsyncpa %s17, 0
    %19 = vsyncpa [#allocation6], 0
    %20 = vsyncpa [#allocation9], 0
    %21 = vsyncpa [#allocation4], 0
    %s22 = scalar_lea.sflag [#allocation4], 1
    %23 = vsyncpa %s22, 0
    %24 = vsyncpa [#allocation13], 0
    %s25 = scalar_lea.sflag [#allocation13], 1
    %26 = vsyncpa %s25, 0
    loop: start=0, step=1, limit=4
    $region2: #{tpu_custom_call.1} parent=1 // loop_pre_header
      _
    $region3: #{tpu_custom_call.1} parent=1 // loop_header
      %s28 = sphi 0, %s32
      %p29 = scmp.ge.s32.totalorder %s28, 4
      %s38 = sphi 0, %s40
      %s41 = sphi 0, %s38
      %s42 = sphi 0, %s41
      %s58 = sphi 0, %s42
      %s62 = sphi 0, %s62
      %s64 = sphi 0, %s62
      %s65 = sphi 0, %s64
      %s79 = sphi 0, %s65
      %s83 = sphi 0, %s83
      %s85 = sphi 0, %s83
      %s86 = sphi 0, %s85
      %s100 = sphi 0, %s86
      %s104 = sphi 0, %s104
      %s106 = sphi 0, %s104
      %s107 = sphi 0, %s106
      %s121 = sphi 0, %s107
      %s125 = sphi 0, %s125
      %s127 = sphi 0, %s125
      %s128 = sphi 0, %s127
      %s142 = sphi 0, %s128
      %s146 = sphi 0, %s146
      %s148 = sphi 0, %s146
      %s149 = sphi 0, %s148
      %s163 = sphi 0, %s149
      %s167 = sphi 0, %s167
      %s169 = sphi 0, %s167
      %s170 = sphi 0, %s169
      %s184 = sphi 0, %s170
      %s188 = sphi 0, %s188
      %s190 = sphi 0, %s188
      %s191 = sphi 0, %s190
      %s205 = sphi 0, %s191
      %s209 = sphi 0, %s209
      %s211 = sphi 0, %s209
      %s212 = sphi 0, %s211
      %s226 = sphi 0, %s212
      %s232 = sphi 0, %s234
      %s235 = sphi 0, %s232
      %s236 = sphi 0, %s235
      %s252 = sphi 0, %s236
      %s258 = sphi 0, %s260
      %s261 = sphi 0, %s258
      %s262 = sphi 0, %s261
      %s278 = sphi 0, %s262
    $region4: #{tpu_custom_call.1} parent=1 // loop_header_branch
      %31 = sbr.rel (%p29) target = $region8
    $region5: #{tpu_custom_call.1} parent=1 // loop_body
      %s33 = ssub.s32 %s28, 1
      %s34 = ssub.s32 %s28, 2
      %s35 = sadd.s32 %s28, 1
      %s36 = ssub.s32 %s28, %s35
      %p37 = scmp.eq.s32.totalorder %s36, 0
      %s39 = sadd.s32 %s38, 1
      %s40 = scalar_select %p37, %s38, %s39
      %p43 = pneg %p37
      %p44 = scmp.eq.s32.totalorder %s28, 1
      %p45 = por %p43, %p44
      %p46 = scmp.ne.s32.totalorder %s38, %s41
      %p47 = scmp.eq.s32.totalorder %s28, 0
      %p48 = por %p46, %p47
      %p49 = scmp.ne.s32.totalorder %s38, %s41
      %p50 = scmp.eq.s32.totalorder %s33, 1
      %p51 = por %p49, %p50
      %p52 = scmp.ne.s32.totalorder %s41, %s42
      %p53 = scmp.eq.s32.totalorder %s33, 0
      %p54 = por %p52, %p53
      %p55 = scmp.ne.s32.totalorder %s41, %s42
      %p56 = scmp.eq.s32.totalorder %s34, 1
      %p57 = por %p55, %p56
      %p59 = scmp.ne.s32.totalorder %s42, %s58
      %p60 = scmp.eq.s32.totalorder %s34, 0
      %p61 = por %p59, %p60
      %s63 = sadd.s32 %s62, 1
      %p66 = scmp.eq.s32.totalorder %s28, 1
      %p67 = scmp.ne.s32.totalorder %s62, %s64
      %p68 = scmp.eq.s32.totalorder %s28, 0
      %p69 = por %p67, %p68
      %p70 = scmp.ne.s32.totalorder %s62, %s64
      %p71 = scmp.eq.s32.totalorder %s33, 1
      %p72 = por %p70, %p71
      %p73 = scmp.ne.s32.totalorder %s64, %s65
      %p74 = scmp.eq.s32.totalorder %s33, 0
      %p75 = por %p73, %p74
      %p76 = scmp.ne.s32.totalorder %s64, %s65
      %p77 = scmp.eq.s32.totalorder %s34, 1
      %p78 = por %p76, %p77
      %p80 = scmp.ne.s32.totalorder %s65, %s79
      %p81 = scmp.eq.s32.totalorder %s34, 0
      %p82 = por %p80, %p81
      %s84 = sadd.s32 %s83, 1
      %p87 = scmp.eq.s32.totalorder %s28, 1
      %p88 = scmp.ne.s32.totalorder %s83, %s85
      %p89 = scmp.eq.s32.totalorder %s28, 0
      %p90 = por %p88, %p89
      %p91 = scmp.ne.s32.totalorder %s83, %s85
      %p92 = scmp.eq.s32.totalorder %s33, 1
      %p93 = por %p91, %p92
      %p94 = scmp.ne.s32.totalorder %s85, %s86
      %p95 = scmp.eq.s32.totalorder %s33, 0
      %p96 = por %p94, %p95
      %p97 = scmp.ne.s32.totalorder %s85, %s86
      %p98 = scmp.eq.s32.totalorder %s34, 1
      %p99 = por %p97, %p98
      %p101 = scmp.ne.s32.totalorder %s86, %s100
      %p102 = scmp.eq.s32.totalorder %s34, 0
      %p103 = por %p101, %p102
      %s105 = sadd.s32 %s104, 1
      %p108 = scmp.eq.s32.totalorder %s28, 1
      %p109 = scmp.ne.s32.totalorder %s104, %s106
      %p110 = scmp.eq.s32.totalorder %s28, 0
      %p111 = por %p109, %p110
      %p112 = scmp.ne.s32.totalorder %s104, %s106
      %p113 = scmp.eq.s32.totalorder %s33, 1
      %p114 = por %p112, %p113
      %p115 = scmp.ne.s32.totalorder %s106, %s107
      %p116 = scmp.eq.s32.totalorder %s33, 0
      %p117 = por %p115, %p116
      %p118 = scmp.ne.s32.totalorder %s106, %s107
      %p119 = scmp.eq.s32.totalorder %s34, 1
      %p120 = por %p118, %p119
      %p122 = scmp.ne.s32.totalorder %s107, %s121
      %p123 = scmp.eq.s32.totalorder %s34, 0
      %p124 = por %p122, %p123
      %s126 = sadd.s32 %s125, 1
      %p129 = scmp.eq.s32.totalorder %s28, 1
      %p130 = scmp.ne.s32.totalorder %s125, %s127
      %p131 = scmp.eq.s32.totalorder %s28, 0
      %p132 = por %p130, %p131
      %p133 = scmp.ne.s32.totalorder %s125, %s127
      %p134 = scmp.eq.s32.totalorder %s33, 1
      %p135 = por %p133, %p134
      %p136 = scmp.ne.s32.totalorder %s127, %s128
      %p137 = scmp.eq.s32.totalorder %s33, 0
      %p138 = por %p136, %p137
      %p139 = scmp.ne.s32.totalorder %s127, %s128
      %p140 = scmp.eq.s32.totalorder %s34, 1
      %p141 = por %p139, %p140
      %p143 = scmp.ne.s32.totalorder %s128, %s142
      %p144 = scmp.eq.s32.totalorder %s34, 0
      %p145 = por %p143, %p144
      %s147 = sadd.s32 %s146, 1
      %p150 = scmp.eq.s32.totalorder %s28, 1
      %p151 = scmp.ne.s32.totalorder %s146, %s148
      %p152 = scmp.eq.s32.totalorder %s28, 0
      %p153 = por %p151, %p152
      %p154 = scmp.ne.s32.totalorder %s146, %s148
      %p155 = scmp.eq.s32.totalorder %s33, 1
      %p156 = por %p154, %p155
      %p157 = scmp.ne.s32.totalorder %s148, %s149
      %p158 = scmp.eq.s32.totalorder %s33, 0
      %p159 = por %p157, %p158
      %p160 = scmp.ne.s32.totalorder %s148, %s149
      %p161 = scmp.eq.s32.totalorder %s34, 1
      %p162 = por %p160, %p161
      %p164 = scmp.ne.s32.totalorder %s149, %s163
      %p165 = scmp.eq.s32.totalorder %s34, 0
      %p166 = por %p164, %p165
      %s168 = sadd.s32 %s167, 1
      %p171 = scmp.eq.s32.totalorder %s28, 1
      %p172 = scmp.ne.s32.totalorder %s167, %s169
      %p173 = scmp.eq.s32.totalorder %s28, 0
      %p174 = por %p172, %p173
      %p175 = scmp.ne.s32.totalorder %s167, %s169
      %p176 = scmp.eq.s32.totalorder %s33, 1
      %p177 = por %p175, %p176
      %p178 = scmp.ne.s32.totalorder %s169, %s170
      %p179 = scmp.eq.s32.totalorder %s33, 0
      %p180 = por %p178, %p179
      %p181 = scmp.ne.s32.totalorder %s169, %s170
      %p182 = scmp.eq.s32.totalorder %s34, 1
      %p183 = por %p181, %p182
      %p185 = scmp.ne.s32.totalorder %s170, %s184
      %p186 = scmp.eq.s32.totalorder %s34, 0
      %p187 = por %p185, %p186
      %s189 = sadd.s32 %s188, 1
      %p192 = scmp.eq.s32.totalorder %s28, 1
      %p193 = scmp.ne.s32.totalorder %s188, %s190
      %p194 = scmp.eq.s32.totalorder %s28, 0
      %p195 = por %p193, %p194
      %p196 = scmp.ne.s32.totalorder %s188, %s190
      %p197 = scmp.eq.s32.totalorder %s33, 1
      %p198 = por %p196, %p197
      %p199 = scmp.ne.s32.totalorder %s190, %s191
      %p200 = scmp.eq.s32.totalorder %s33, 0
      %p201 = por %p199, %p200
      %p202 = scmp.ne.s32.totalorder %s190, %s191
      %p203 = scmp.eq.s32.totalorder %s34, 1
      %p204 = por %p202, %p203
      %p206 = scmp.ne.s32.totalorder %s191, %s205
      %p207 = scmp.eq.s32.totalorder %s34, 0
      %p208 = por %p206, %p207
      %s210 = sadd.s32 %s209, 1
      %p213 = scmp.eq.s32.totalorder %s28, 1
      %p214 = scmp.ne.s32.totalorder %s209, %s211
      %p215 = scmp.eq.s32.totalorder %s28, 0
      %p216 = por %p214, %p215
      %p217 = scmp.ne.s32.totalorder %s209, %s211
      %p218 = scmp.eq.s32.totalorder %s33, 1
      %p219 = por %p217, %p218
      %p220 = scmp.ne.s32.totalorder %s211, %s212
      %p221 = scmp.eq.s32.totalorder %s33, 0
      %p222 = por %p220, %p221
      %p223 = scmp.ne.s32.totalorder %s211, %s212
      %p224 = scmp.eq.s32.totalorder %s34, 1
      %p225 = por %p223, %p224
      %p227 = scmp.ne.s32.totalorder %s212, %s226
      %p228 = scmp.eq.s32.totalorder %s34, 0
      %p229 = por %p227, %p228
      %s230 = ssub.s32 %s28, %s35
      %p231 = scmp.eq.s32.totalorder %s230, 0
      %s233 = sadd.s32 %s232, 1
      %s234 = scalar_select %p231, %s232, %s233
      %p237 = pneg %p231
      %p238 = scmp.eq.s32.totalorder %s28, 1
      %p239 = por %p237, %p238
      %p240 = scmp.ne.s32.totalorder %s232, %s235
      %p241 = scmp.eq.s32.totalorder %s28, 0
      %p242 = por %p240, %p241
      %p243 = scmp.ne.s32.totalorder %s232, %s235
      %p244 = scmp.eq.s32.totalorder %s33, 1
      %p245 = por %p243, %p244
      %p246 = scmp.ne.s32.totalorder %s235, %s236
      %p247 = scmp.eq.s32.totalorder %s33, 0
      %p248 = por %p246, %p247
      %p249 = scmp.ne.s32.totalorder %s235, %s236
      %p250 = scmp.eq.s32.totalorder %s34, 1
      %p251 = por %p249, %p250
      %p253 = scmp.ne.s32.totalorder %s236, %s252
      %p254 = scmp.eq.s32.totalorder %s34, 0
      %p255 = por %p253, %p254
      %s256 = ssub.s32 %s28, %s35
      %p257 = scmp.eq.s32.totalorder %s256, 0
      %s259 = sadd.s32 %s258, 1
      %s260 = scalar_select %p257, %s258, %s259
      %p263 = pneg %p257
      %p264 = scmp.eq.s32.totalorder %s28, 1
      %p265 = por %p263, %p264
      %p266 = scmp.ne.s32.totalorder %s258, %s261
      %p267 = scmp.eq.s32.totalorder %s28, 0
      %p268 = por %p266, %p267
      %p269 = scmp.ne.s32.totalorder %s258, %s261
      %p270 = scmp.eq.s32.totalorder %s33, 1
      %p271 = por %p269, %p270
      %p272 = scmp.ne.s32.totalorder %s261, %s262
      %p273 = scmp.eq.s32.totalorder %s33, 0
      %p274 = por %p272, %p273
      %p275 = scmp.ne.s32.totalorder %s261, %s262
      %p276 = scmp.eq.s32.totalorder %s34, 1
      %p277 = por %p275, %p276
      %p279 = scmp.ne.s32.totalorder %s262, %s278
      %p280 = scmp.eq.s32.totalorder %s34, 0
      %p281 = por %p279, %p280
      %p282 = scmp.le.s32.totalorder 1, %s28
      %p283 = scmp.lt.s32.totalorder %s28, 3
      %p284 = pnand %p282, %p283
      %p285 = pneg %p284
      // Predicated region
      $region9: #{tpu_custom_call.1} parent=5 // pred_check
        _
      $region10: #{tpu_custom_call.1} parent=5 // pred_check_branch
        %287 = sbr.rel (%p284) target = $region12
      $region11: #{tpu_custom_call.1} parent=5 // pred_region
        %s288 = ssub.s32 %s28, 1
        // Predicated region
        $region13: #{tpu_custom_call.1} parent=11 // pred_check
          %p289 = pneg %p75
        $region14: #{tpu_custom_call.1} parent=11 // pred_check_branch
          %291 = sbr.rel (%p289) target = $region16
        $region15: #{tpu_custom_call.1} parent=11 // pred_region
          %s293 = ssub.s32 24576, 24576
          %294 = vsyncadd [#allocation6], %s293
          %s295 = sshll.u32 [#allocation5], 4
          %s296 = int_to_ptr.vmem [resolvable:$true] %s295
          %301 = dma.hbm_to_vmem [thread:$0]  %s1, 24576, %s296, [#allocation6], 256, 256, 16
        $region16: #{tpu_custom_call.1} parent=11 // pred_fallthru
          _
        // Predicated region
        $region17: #{tpu_custom_call.1} parent=11 // pred_check
          %p302 = pneg %p96
        $region18: #{tpu_custom_call.1} parent=11 // pred_check_branch
          %304 = sbr.rel (%p302) target = $region20
        $region19: #{tpu_custom_call.1} parent=11 // pred_region
          _
        $region20: #{tpu_custom_call.1} parent=11 // pred_fallthru
          _
        // Predicated region
        $region21: #{tpu_custom_call.1} parent=11 // pred_check
          %p305 = pneg %p117
        $region22: #{tpu_custom_call.1} parent=11 // pred_check_branch
          %307 = sbr.rel (%p305) target = $region24
        $region23: #{tpu_custom_call.1} parent=11 // pred_region
          %s309 = ssub.s32 8192, 8192
          %310 = vsyncadd [#allocation6], %s309
          %s311 = sshll.u32 [#allocation7], 4
          %s312 = int_to_ptr.vmem [resolvable:$true] %s311
          %317 = dma.hbm_to_vmem [thread:$0]  %s3, 8192, %s312, [#allocation6], 128, 128, 8
        $region24: #{tpu_custom_call.1} parent=11 // pred_fallthru
          _
        // Predicated region
        $region25: #{tpu_custom_call.1} parent=11 // pred_check
          %p318 = pneg %p138
        $region26: #{tpu_custom_call.1} parent=11 // pred_check_branch
          %320 = sbr.rel (%p318) target = $region28
        $region27: #{tpu_custom_call.1} parent=11 // pred_region
          _
        $region28: #{tpu_custom_call.1} parent=11 // pred_fallthru
          _
        // Predicated region
        $region29: #{tpu_custom_call.1} parent=11 // pred_check
          %p321 = pneg %p159
        $region30: #{tpu_custom_call.1} parent=11 // pred_check_branch
          %323 = sbr.rel (%p321) target = $region32
        $region31: #{tpu_custom_call.1} parent=11 // pred_region
          %s325 = ssub.s32 2048, 2048
          %326 = vsyncadd [#allocation9], %s325
          %s327 = sshll.u32 [#allocation8], 4
          %s328 = int_to_ptr.vmem [resolvable:$true] %s327
          %333 = dma.hbm_to_vmem [thread:$0]  %s5, 2048, %s328, [#allocation9], 64, 64, 4
        $region32: #{tpu_custom_call.1} parent=11 // pred_fallthru
          _
        // Predicated region
        $region33: #{tpu_custom_call.1} parent=11 // pred_check
          %p334 = pneg %p180
        $region34: #{tpu_custom_call.1} parent=11 // pred_check_branch
          %336 = sbr.rel (%p334) target = $region36
        $region35: #{tpu_custom_call.1} parent=11 // pred_region
          _
        $region36: #{tpu_custom_call.1} parent=11 // pred_fallthru
          _
        // Predicated region
        $region37: #{tpu_custom_call.1} parent=11 // pred_check
          %p337 = pneg %p201
        $region38: #{tpu_custom_call.1} parent=11 // pred_check_branch
          %339 = sbr.rel (%p337) target = $region40
        $region39: #{tpu_custom_call.1} parent=11 // pred_region
          %s341 = ssub.s32 6144, 6144
          %342 = vsyncadd [#allocation9], %s341
          %s343 = sshll.u32 [#allocation10], 4
          %s344 = int_to_ptr.vmem [resolvable:$true] %s343
          %349 = dma.hbm_to_vmem [thread:$0]  %s7, 6144, %s344, [#allocation9], 384, 384, 24
        $region40: #{tpu_custom_call.1} parent=11 // pred_fallthru
          _
        // Predicated region
        $region41: #{tpu_custom_call.1} parent=11 // pred_check
          %p350 = pneg %p222
        $region42: #{tpu_custom_call.1} parent=11 // pred_check_branch
          %352 = sbr.rel (%p350) target = $region44
        $region43: #{tpu_custom_call.1} parent=11 // pred_region
          _
        $region44: #{tpu_custom_call.1} parent=11 // pred_fallthru
          _
      $region12: #{tpu_custom_call.1} parent=5 // pred_fallthru
        _
      %p353 = scmp.lt.s32.totalorder %s28, 2
      // Predicated region
      $region45: #{tpu_custom_call.1} parent=5 // pred_check
        %p354 = pneg %p353
      $region46: #{tpu_custom_call.1} parent=5 // pred_check_branch
        %356 = sbr.rel (%p354) target = $region48
      $region47: #{tpu_custom_call.1} parent=5 // pred_region
        // Predicated region
        $region49: #{tpu_custom_call.1} parent=47 // pred_check
          %p357 = pneg %p48
        $region50: #{tpu_custom_call.1} parent=47 // pred_check_branch
          %359 = sbr.rel (%p357) target = $region52
        $region51: #{tpu_custom_call.1} parent=47 // pred_region
          %s360 = sand.u32 %s38, 1
          %s361 = scalar_lea.sflag [#allocation3], %s360
          %s362 = sand.u32 %s38, 1
          %s363 = smul.addr %s362, 768
          %s364 = scalar_lea.vmem [#allocation2], %s363
          %s365 = smul.u32 16, %s28
          %s367 = ssub.s32 12288, 12288
          %368 = vsyncadd %s361, %s367
          %s369 = smul.addr %s365, 6
          %s370 = smul.addr %s369, 128
          %s371 = scalar_lea.hbm %s0, %s370
          %s372 = sshll.u32 %s364, 4
          %s373 = int_to_ptr.vmem [resolvable:$true] %s372
          %378 = dma.hbm_to_vmem [thread:$0]  %s371, 12288, %s373, %s361, 768, 768, 48
        $region52: #{tpu_custom_call.1} parent=47 // pred_fallthru
          _
      $region48: #{tpu_custom_call.1} parent=5 // pred_fallthru
        _
      %p379 = scmp.le.s32.totalorder 1, %s28
      %p380 = scmp.lt.s32.totalorder %s28, 3
      %p381 = pnand %p379, %p380
      %p382 = pneg %p381
      // Predicated region
      $region53: #{tpu_custom_call.1} parent=5 // pred_check
        _
      $region54: #{tpu_custom_call.1} parent=5 // pred_check_branch
        %384 = sbr.rel (%p381) target = $region56
      $region55: #{tpu_custom_call.1} parent=5 // pred_region
        %s385 = ssub.s32 %s28, 1
        %s386 = sand.u32 %s41, 1
        %s387 = scalar_lea.sflag [#allocation3], %s386
        %s388 = sand.u32 %s41, 1
        %s389 = smul.addr %s388, 768
        %s390 = scalar_lea.vmem [#allocation2], %s389
        // Predicated region
        $region57: #{tpu_custom_call.1} parent=55 // pred_check
          %p391 = pneg %p54
        $region58: #{tpu_custom_call.1} parent=55 // pred_check_branch
          %393 = sbr.rel (%p391) target = $region60
        $region59: #{tpu_custom_call.1} parent=55 // pred_region
          %394 = dma.done %s387, 12288
        $region60: #{tpu_custom_call.1} parent=55 // pred_fallthru
          _
        // Predicated region
        $region61: #{tpu_custom_call.1} parent=55 // pred_check
          %p395 = pneg %p75
        $region62: #{tpu_custom_call.1} parent=55 // pred_check_branch
          %397 = sbr.rel (%p395) target = $region64
        $region63: #{tpu_custom_call.1} parent=55 // pred_region
          %398 = dma.done [#allocation6], 24576
        $region64: #{tpu_custom_call.1} parent=55 // pred_fallthru
          _
        // Predicated region
        $region65: #{tpu_custom_call.1} parent=55 // pred_check
          %p399 = pneg %p117
        $region66: #{tpu_custom_call.1} parent=55 // pred_check_branch
          %401 = sbr.rel (%p399) target = $region68
        $region67: #{tpu_custom_call.1} parent=55 // pred_region
          %402 = dma.done [#allocation6], 8192
        $region68: #{tpu_custom_call.1} parent=55 // pred_fallthru
          _
        // Predicated region
        $region69: #{tpu_custom_call.1} parent=55 // pred_check
          %p403 = pneg %p159
        $region70: #{tpu_custom_call.1} parent=55 // pred_check_branch
          %405 = sbr.rel (%p403) target = $region72
        $region71: #{tpu_custom_call.1} parent=55 // pred_region
          %406 = dma.done [#allocation9], 2048
        $region72: #{tpu_custom_call.1} parent=55 // pred_fallthru
          _
        // Predicated region
        $region73: #{tpu_custom_call.1} parent=55 // pred_check
          %p407 = pneg %p201
        $region74: #{tpu_custom_call.1} parent=55 // pred_check_branch
          %409 = sbr.rel (%p407) target = $region76
        $region75: #{tpu_custom_call.1} parent=55 // pred_region
          %410 = dma.done [#allocation9], 6144
        $region76: #{tpu_custom_call.1} parent=55 // pred_fallthru
          _
        %s411 = sand.u32 %s41, 1
        %s412 = scalar_lea.sflag [#allocation3], %s411
        %s413 = sand.u32 %s41, 1
        %s414 = smul.addr %s413, 768
        %s415 = scalar_lea.vmem [#allocation2], %s414
        %p416 = pneg %p54
        %p417 = pneg %p51
        %p418 = pneg %p75
        %p419 = pneg %p72
        %p420 = pneg %p96
        %p421 = pneg %p93
        %p422 = pneg %p117
        %p423 = pneg %p114
        %p424 = pneg %p138
        %p425 = pneg %p135
        %p426 = pneg %p159
        %p427 = pneg %p156
        %p428 = pneg %p180
        %p429 = pneg %p177
        %p430 = pneg %p201
        %p431 = pneg %p198
        %p432 = pneg %p222
        %p433 = pneg %p219
        %p434 = pneg %p248
        %p435 = pneg %p245
        %s436 = sand.u32 %s235, 1
        %s437 = scalar_lea.sflag [#allocation4], %s436
        %s438 = sand.u32 %s235, 1
        %s439 = smul.addr %s438, 128
        %s440 = scalar_lea.vmem [#allocation11], %s439
        %p441 = pneg %p274
        %p442 = pneg %p271
        %s443 = sand.u32 %s261, 1
        %s444 = scalar_lea.sflag [#allocation13], %s443
        %s445 = sand.u32 %s261, 1
        %s446 = smul.addr %s445, 768
        %s447 = scalar_lea.vmem [#allocation12], %s446
        %s448 = smul.u32 16, %s33
        %s449 = smul.u32 16, %s33
        %s450 = smul.u32 16, %s33
        %v452 = vld [vmem:[%s390] sm:$0xff]
        %v453 = vld [vmem:[%s390 + $0x8] sm:$0xff]
        %v454 = vld [vmem:[%s390 + $0x10] sm:$0xff]
        %v455 = vld [vmem:[%s390 + $0x18] sm:$0xff]
        %v456 = vld [vmem:[%s390 + $0x20] sm:$0xff]
        %v457 = vld [vmem:[%s390 + $0x28] sm:$0xff]
        %v458 = vld [vmem:[%s390 + $0x30] sm:$0xff]
        %v459 = vld [vmem:[%s390 + $0x38] sm:$0xff]
        %v460 = vld [vmem:[%s390 + $0x40] sm:$0xff]
        %v461 = vld [vmem:[%s390 + $0x48] sm:$0xff]
        %v462 = vld [vmem:[%s390 + $0x50] sm:$0xff]
        %v463 = vld [vmem:[%s390 + $0x58] sm:$0xff]
        %v464 = vld [vmem:[%s390 + $0x60] sm:$0xff]
        %v465 = vld [vmem:[%s390 + $0x68] sm:$0xff]
        %v466 = vld [vmem:[%s390 + $0x70] sm:$0xff]
        %v467 = vld [vmem:[%s390 + $0x78] sm:$0xff]
        %v468 = vld [vmem:[%s390 + $0x80] sm:$0xff]
        %v469 = vld [vmem:[%s390 + $0x88] sm:$0xff]
        %v470 = vld [vmem:[%s390 + $0x90] sm:$0xff]
        %v471 = vld [vmem:[%s390 + $0x98] sm:$0xff]
        %v472 = vld [vmem:[%s390 + $0xa0] sm:$0xff]
        %v473 = vld [vmem:[%s390 + $0xa8] sm:$0xff]
        %v474 = vld [vmem:[%s390 + $0xb0] sm:$0xff]
        %v475 = vld [vmem:[%s390 + $0xb8] sm:$0xff]
        %v476 = vld [vmem:[%s390 + $0xc0] sm:$0xff]
        %v477 = vld [vmem:[%s390 + $0xc8] sm:$0xff]
        %v478 = vld [vmem:[%s390 + $0xd0] sm:$0xff]
        %v479 = vld [vmem:[%s390 + $0xd8] sm:$0xff]
        %v480 = vld [vmem:[%s390 + $0xe0] sm:$0xff]
        %v481 = vld [vmem:[%s390 + $0xe8] sm:$0xff]
        %v482 = vld [vmem:[%s390 + $0xf0] sm:$0xff]
        %v483 = vld [vmem:[%s390 + $0xf8] sm:$0xff]
        %v484 = vld [vmem:[%s390 + $0x100] sm:$0xff]
        %v485 = vld [vmem:[%s390 + $0x108] sm:$0xff]
        %v486 = vld [vmem:[%s390 + $0x110] sm:$0xff]
        %v487 = vld [vmem:[%s390 + $0x118] sm:$0xff]
        %v488 = vld [vmem:[%s390 + $0x120] sm:$0xff]
        %v489 = vld [vmem:[%s390 + $0x128] sm:$0xff]
        %v490 = vld [vmem:[%s390 + $0x130] sm:$0xff]
        %v491 = vld [vmem:[%s390 + $0x138] sm:$0xff]
        %v492 = vld [vmem:[%s390 + $0x140] sm:$0xff]
        %v493 = vld [vmem:[%s390 + $0x148] sm:$0xff]
        %v494 = vld [vmem:[%s390 + $0x150] sm:$0xff]
        %v495 = vld [vmem:[%s390 + $0x158] sm:$0xff]
        %v496 = vld [vmem:[%s390 + $0x160] sm:$0xff]
        %v497 = vld [vmem:[%s390 + $0x168] sm:$0xff]
        %v498 = vld [vmem:[%s390 + $0x170] sm:$0xff]
        %v499 = vld [vmem:[%s390 + $0x178] sm:$0xff]
        %v500 = vld [vmem:[%s390 + $0x180] sm:$0xff]
        %v501 = vld [vmem:[%s390 + $0x188] sm:$0xff]
        %v502 = vld [vmem:[%s390 + $0x190] sm:$0xff]
        %v503 = vld [vmem:[%s390 + $0x198] sm:$0xff]
        %v504 = vld [vmem:[%s390 + $0x1a0] sm:$0xff]
        %v505 = vld [vmem:[%s390 + $0x1a8] sm:$0xff]
        %v506 = vld [vmem:[%s390 + $0x1b0] sm:$0xff]
        %v507 = vld [vmem:[%s390 + $0x1b8] sm:$0xff]
        %v508 = vld [vmem:[%s390 + $0x1c0] sm:$0xff]
        %v509 = vld [vmem:[%s390 + $0x1c8] sm:$0xff]
        %v510 = vld [vmem:[%s390 + $0x1d0] sm:$0xff]
        %v511 = vld [vmem:[%s390 + $0x1d8] sm:$0xff]
        %v512 = vld [vmem:[%s390 + $0x1e0] sm:$0xff]
        %v513 = vld [vmem:[%s390 + $0x1e8] sm:$0xff]
        %v514 = vld [vmem:[%s390 + $0x1f0] sm:$0xff]
        %v515 = vld [vmem:[%s390 + $0x1f8] sm:$0xff]
        %v516 = vld [vmem:[%s390 + $0x200] sm:$0xff]
        %v517 = vld [vmem:[%s390 + $0x208] sm:$0xff]
        %v518 = vld [vmem:[%s390 + $0x210] sm:$0xff]
        %v519 = vld [vmem:[%s390 + $0x218] sm:$0xff]
        %v520 = vld [vmem:[%s390 + $0x220] sm:$0xff]
        %v521 = vld [vmem:[%s390 + $0x228] sm:$0xff]
        %v522 = vld [vmem:[%s390 + $0x230] sm:$0xff]
        %v523 = vld [vmem:[%s390 + $0x238] sm:$0xff]
        %v524 = vld [vmem:[%s390 + $0x240] sm:$0xff]
        %v525 = vld [vmem:[%s390 + $0x248] sm:$0xff]
        %v526 = vld [vmem:[%s390 + $0x250] sm:$0xff]
        %v527 = vld [vmem:[%s390 + $0x258] sm:$0xff]
        %v528 = vld [vmem:[%s390 + $0x260] sm:$0xff]
        %v529 = vld [vmem:[%s390 + $0x268] sm:$0xff]
        %v530 = vld [vmem:[%s390 + $0x270] sm:$0xff]
        %v531 = vld [vmem:[%s390 + $0x278] sm:$0xff]
        %v532 = vld [vmem:[%s390 + $0x280] sm:$0xff]
        %v533 = vld [vmem:[%s390 + $0x288] sm:$0xff]
        %v534 = vld [vmem:[%s390 + $0x290] sm:$0xff]
        %v535 = vld [vmem:[%s390 + $0x298] sm:$0xff]
        %v536 = vld [vmem:[%s390 + $0x2a0] sm:$0xff]
        %v537 = vld [vmem:[%s390 + $0x2a8] sm:$0xff]
        %v538 = vld [vmem:[%s390 + $0x2b0] sm:$0xff]
        %v539 = vld [vmem:[%s390 + $0x2b8] sm:$0xff]
        %v540 = vld [vmem:[%s390 + $0x2c0] sm:$0xff]
        %v541 = vld [vmem:[%s390 + $0x2c8] sm:$0xff]
        %v542 = vld [vmem:[%s390 + $0x2d0] sm:$0xff]
        %v543 = vld [vmem:[%s390 + $0x2d8] sm:$0xff]
        %v544 = vld [vmem:[%s390 + $0x2e0] sm:$0xff]
        %v545 = vld [vmem:[%s390 + $0x2e8] sm:$0xff]
        %v546 = vld [vmem:[%s390 + $0x2f0] sm:$0xff]
        %v547 = vld [vmem:[%s390 + $0x2f8] sm:$0xff]
        %v548 = vpack.c.bf16 %v458, %v452
        %v549 = vpack.c.bf16 %v459, %v453
        %v550 = vpack.c.bf16 %v460, %v454
        %v551 = vpack.c.bf16 %v461, %v455
        %v552 = vpack.c.bf16 %v462, %v456
        %v553 = vpack.c.bf16 %v463, %v457
        %v554 = vpack.c.bf16 %v470, %v464
        %v555 = vpack.c.bf16 %v471, %v465
        %v556 = vpack.c.bf16 %v472, %v466
        %v557 = vpack.c.bf16 %v473, %v467
        %v558 = vpack.c.bf16 %v474, %v468
        %v559 = vpack.c.bf16 %v475, %v469
        %v560 = vpack.c.bf16 %v482, %v476
        %v561 = vpack.c.bf16 %v483, %v477
        %v562 = vpack.c.bf16 %v484, %v478
        %v563 = vpack.c.bf16 %v485, %v479
        %v564 = vpack.c.bf16 %v486, %v480
        %v565 = vpack.c.bf16 %v487, %v481
        %v566 = vpack.c.bf16 %v494, %v488
        %v567 = vpack.c.bf16 %v495, %v489
        %v568 = vpack.c.bf16 %v496, %v490
        %v569 = vpack.c.bf16 %v497, %v491
        %v570 = vpack.c.bf16 %v498, %v492
        %v571 = vpack.c.bf16 %v499, %v493
        %v572 = vpack.c.bf16 %v506, %v500
        %v573 = vpack.c.bf16 %v507, %v501
        %v574 = vpack.c.bf16 %v508, %v502
        %v575 = vpack.c.bf16 %v509, %v503
        %v576 = vpack.c.bf16 %v510, %v504
        %v577 = vpack.c.bf16 %v511, %v505
        %v578 = vpack.c.bf16 %v518, %v512
        %v579 = vpack.c.bf16 %v519, %v513
        %v580 = vpack.c.bf16 %v520, %v514
        %v581 = vpack.c.bf16 %v521, %v515
        %v582 = vpack.c.bf16 %v522, %v516
        %v583 = vpack.c.bf16 %v523, %v517
        %v584 = vpack.c.bf16 %v530, %v524
        %v585 = vpack.c.bf16 %v531, %v525
        %v586 = vpack.c.bf16 %v532, %v526
        %v587 = vpack.c.bf16 %v533, %v527
        %v588 = vpack.c.bf16 %v534, %v528
        %v589 = vpack.c.bf16 %v535, %v529
        %v590 = vpack.c.bf16 %v542, %v536
        %v591 = vpack.c.bf16 %v543, %v537
        %v592 = vpack.c.bf16 %v544, %v538
        %v593 = vpack.c.bf16 %v545, %v539
        %v594 = vpack.c.bf16 %v546, %v540
        %v595 = vpack.c.bf16 %v547, %v541
        %v596 = vld [vmem:[#allocation5] sm:$0xff]
        %v597 = vld [vmem:[#allocation5 + $0x8] sm:$0xff]
        %v598 = vld [vmem:[#allocation5 + $0x10] sm:$0xff]
        %v599 = vld [vmem:[#allocation5 + $0x18] sm:$0xff]
        %v600 = vld [vmem:[#allocation5 + $0x20] sm:$0xff]
        %v601 = vld [vmem:[#allocation5 + $0x28] sm:$0xff]
        %v602 = vld [vmem:[#allocation5 + $0x30] sm:$0xff]
        %v603 = vld [vmem:[#allocation5 + $0x38] sm:$0xff]
        %v604 = vld [vmem:[#allocation5 + $0x40] sm:$0xff]
        %v605 = vld [vmem:[#allocation5 + $0x48] sm:$0xff]
        %v606 = vld [vmem:[#allocation5 + $0x50] sm:$0xff]
        %v607 = vld [vmem:[#allocation5 + $0x58] sm:$0xff]
        %v608 = vld [vmem:[#allocation5 + $0x60] sm:$0xff]
        %v609 = vld [vmem:[#allocation5 + $0x68] sm:$0xff]
        %v610 = vld [vmem:[#allocation5 + $0x70] sm:$0xff]
        %v611 = vld [vmem:[#allocation5 + $0x78] sm:$0xff]
        %v612 = vld [vmem:[#allocation5 + $0x80] sm:$0xff]
        %v613 = vld [vmem:[#allocation5 + $0x88] sm:$0xff]
        %v614 = vld [vmem:[#allocation5 + $0x90] sm:$0xff]
        %v615 = vld [vmem:[#allocation5 + $0x98] sm:$0xff]
        %v616 = vld [vmem:[#allocation5 + $0xa0] sm:$0xff]
        %v617 = vld [vmem:[#allocation5 + $0xa8] sm:$0xff]
        %v618 = vld [vmem:[#allocation5 + $0xb0] sm:$0xff]
        %v619 = vld [vmem:[#allocation5 + $0xb8] sm:$0xff]
        %v620 = vld [vmem:[#allocation5 + $0xc0] sm:$0xff]
        %v621 = vld [vmem:[#allocation5 + $0xc8] sm:$0xff]
        %v622 = vld [vmem:[#allocation5 + $0xd0] sm:$0xff]
        %v623 = vld [vmem:[#allocation5 + $0xd8] sm:$0xff]
        %v624 = vld [vmem:[#allocation5 + $0xe0] sm:$0xff]
        %v625 = vld [vmem:[#allocation5 + $0xe8] sm:$0xff]
        %v626 = vld [vmem:[#allocation5 + $0xf0] sm:$0xff]
        %v627 = vld [vmem:[#allocation5 + $0xf8] sm:$0xff]
        %v628 = vld [vmem:[#allocation5 + $0x100] sm:$0xff]
        %v629 = vld [vmem:[#allocation5 + $0x108] sm:$0xff]
        %v630 = vld [vmem:[#allocation5 + $0x110] sm:$0xff]
        %v631 = vld [vmem:[#allocation5 + $0x118] sm:$0xff]
        %v632 = vld [vmem:[#allocation5 + $0x120] sm:$0xff]
        %v633 = vld [vmem:[#allocation5 + $0x128] sm:$0xff]
        %v634 = vld [vmem:[#allocation5 + $0x130] sm:$0xff]
        %v635 = vld [vmem:[#allocation5 + $0x138] sm:$0xff]
        %v636 = vld [vmem:[#allocation5 + $0x140] sm:$0xff]
        %v637 = vld [vmem:[#allocation5 + $0x148] sm:$0xff]
        %v638 = vld [vmem:[#allocation5 + $0x150] sm:$0xff]
        %v639 = vld [vmem:[#allocation5 + $0x158] sm:$0xff]
        %v640 = vld [vmem:[#allocation5 + $0x160] sm:$0xff]
        %v641 = vld [vmem:[#allocation5 + $0x168] sm:$0xff]
        %v642 = vld [vmem:[#allocation5 + $0x170] sm:$0xff]
        %v643 = vld [vmem:[#allocation5 + $0x178] sm:$0xff]
        %v644 = vld [vmem:[#allocation5 + $0x180] sm:$0xff]
        %v645 = vld [vmem:[#allocation5 + $0x188] sm:$0xff]
        %v646 = vld [vmem:[#allocation5 + $0x190] sm:$0xff]
        %v647 = vld [vmem:[#allocation5 + $0x198] sm:$0xff]
        %v648 = vld [vmem:[#allocation5 + $0x1a0] sm:$0xff]
        %v649 = vld [vmem:[#allocation5 + $0x1a8] sm:$0xff]
        %v650 = vld [vmem:[#allocation5 + $0x1b0] sm:$0xff]
        %v651 = vld [vmem:[#allocation5 + $0x1b8] sm:$0xff]
        %v652 = vld [vmem:[#allocation5 + $0x1c0] sm:$0xff]
        %v653 = vld [vmem:[#allocation5 + $0x1c8] sm:$0xff]
        %v654 = vld [vmem:[#allocation5 + $0x1d0] sm:$0xff]
        %v655 = vld [vmem:[#allocation5 + $0x1d8] sm:$0xff]
        %v656 = vld [vmem:[#allocation5 + $0x1e0] sm:$0xff]
        %v657 = vld [vmem:[#allocation5 + $0x1e8] sm:$0xff]
        %v658 = vld [vmem:[#allocation5 + $0x1f0] sm:$0xff]
        %v659 = vld [vmem:[#allocation5 + $0x1f8] sm:$0xff]
        %v660 = vld [vmem:[#allocation5 + $0x200] sm:$0xff]
        %v661 = vld [vmem:[#allocation5 + $0x208] sm:$0xff]
        %v662 = vld [vmem:[#allocation5 + $0x210] sm:$0xff]
        %v663 = vld [vmem:[#allocation5 + $0x218] sm:$0xff]
        %v664 = vld [vmem:[#allocation5 + $0x220] sm:$0xff]
        %v665 = vld [vmem:[#allocation5 + $0x228] sm:$0xff]
        %v666 = vld [vmem:[#allocation5 + $0x230] sm:$0xff]
        %v667 = vld [vmem:[#allocation5 + $0x238] sm:$0xff]
        %v668 = vld [vmem:[#allocation5 + $0x240] sm:$0xff]
        %v669 = vld [vmem:[#allocation5 + $0x248] sm:$0xff]
        %v670 = vld [vmem:[#allocation5 + $0x250] sm:$0xff]
        %v671 = vld [vmem:[#allocation5 + $0x258] sm:$0xff]
        %v672 = vld [vmem:[#allocation5 + $0x260] sm:$0xff]
        %v673 = vld [vmem:[#allocation5 + $0x268] sm:$0xff]
        %v674 = vld [vmem:[#allocation5 + $0x270] sm:$0xff]
        %v675 = vld [vmem:[#allocation5 + $0x278] sm:$0xff]
        %v676 = vld [vmem:[#allocation5 + $0x280] sm:$0xff]
        %v677 = vld [vmem:[#allocation5 + $0x288] sm:$0xff]
        %v678 = vld [vmem:[#allocation5 + $0x290] sm:$0xff]
        %v679 = vld [vmem:[#allocation5 + $0x298] sm:$0xff]
        %v680 = vld [vmem:[#allocation5 + $0x2a0] sm:$0xff]
        %v681 = vld [vmem:[#allocation5 + $0x2a8] sm:$0xff]
        %v682 = vld [vmem:[#allocation5 + $0x2b0] sm:$0xff]
        %v683 = vld [vmem:[#allocation5 + $0x2b8] sm:$0xff]
        %v684 = vld [vmem:[#allocation5 + $0x2c0] sm:$0xff]
        %v685 = vld [vmem:[#allocation5 + $0x2c8] sm:$0xff]
        %v686 = vld [vmem:[#allocation5 + $0x2d0] sm:$0xff]
        %v687 = vld [vmem:[#allocation5 + $0x2d8] sm:$0xff]
        %v688 = vld [vmem:[#allocation5 + $0x2e0] sm:$0xff]
        %v689 = vld [vmem:[#allocation5 + $0x2e8] sm:$0xff]
        %v690 = vld [vmem:[#allocation5 + $0x2f0] sm:$0xff]
        %v691 = vld [vmem:[#allocation5 + $0x2f8] sm:$0xff]
        %v692 = vld [vmem:[#allocation5 + $0x300] sm:$0xff]
        %v693 = vld [vmem:[#allocation5 + $0x308] sm:$0xff]
        %v694 = vld [vmem:[#allocation5 + $0x310] sm:$0xff]
        %v695 = vld [vmem:[#allocation5 + $0x318] sm:$0xff]
        %v696 = vld [vmem:[#allocation5 + $0x320] sm:$0xff]
        %v697 = vld [vmem:[#allocation5 + $0x328] sm:$0xff]
        %v698 = vld [vmem:[#allocation5 + $0x330] sm:$0xff]
        %v699 = vld [vmem:[#allocation5 + $0x338] sm:$0xff]
        %v700 = vld [vmem:[#allocation5 + $0x340] sm:$0xff]
        %v701 = vld [vmem:[#allocation5 + $0x348] sm:$0xff]
        %v702 = vld [vmem:[#allocation5 + $0x350] sm:$0xff]
        %v703 = vld [vmem:[#allocation5 + $0x358] sm:$0xff]
        %v704 = vld [vmem:[#allocation5 + $0x360] sm:$0xff]
        %v705 = vld [vmem:[#allocation5 + $0x368] sm:$0xff]
        %v706 = vld [vmem:[#allocation5 + $0x370] sm:$0xff]
        %v707 = vld [vmem:[#allocation5 + $0x378] sm:$0xff]
        %v708 = vld [vmem:[#allocation5 + $0x380] sm:$0xff]
        %v709 = vld [vmem:[#allocation5 + $0x388] sm:$0xff]
        %v710 = vld [vmem:[#allocation5 + $0x390] sm:$0xff]
        %v711 = vld [vmem:[#allocation5 + $0x398] sm:$0xff]
        %v712 = vld [vmem:[#allocation5 + $0x3a0] sm:$0xff]
        %v713 = vld [vmem:[#allocation5 + $0x3a8] sm:$0xff]
        %v714 = vld [vmem:[#allocation5 + $0x3b0] sm:$0xff]
        %v715 = vld [vmem:[#allocation5 + $0x3b8] sm:$0xff]
        %v716 = vld [vmem:[#allocation5 + $0x3c0] sm:$0xff]
        %v717 = vld [vmem:[#allocation5 + $0x3c8] sm:$0xff]
        %v718 = vld [vmem:[#allocation5 + $0x3d0] sm:$0xff]
        %v719 = vld [vmem:[#allocation5 + $0x3d8] sm:$0xff]
        %v720 = vld [vmem:[#allocation5 + $0x3e0] sm:$0xff]
        %v721 = vld [vmem:[#allocation5 + $0x3e8] sm:$0xff]
        %v722 = vld [vmem:[#allocation5 + $0x3f0] sm:$0xff]
        %v723 = vld [vmem:[#allocation5 + $0x3f8] sm:$0xff]
        %v724 = vld [vmem:[#allocation5 + $0x400] sm:$0xff]
        %v725 = vld [vmem:[#allocation5 + $0x408] sm:$0xff]
        %v726 = vld [vmem:[#allocation5 + $0x410] sm:$0xff]
        %v727 = vld [vmem:[#allocation5 + $0x418] sm:$0xff]
        %v728 = vld [vmem:[#allocation5 + $0x420] sm:$0xff]
        %v729 = vld [vmem:[#allocation5 + $0x428] sm:$0xff]
        %v730 = vld [vmem:[#allocation5 + $0x430] sm:$0xff]
        %v731 = vld [vmem:[#allocation5 + $0x438] sm:$0xff]
        %v732 = vld [vmem:[#allocation5 + $0x440] sm:$0xff]
        %v733 = vld [vmem:[#allocation5 + $0x448] sm:$0xff]
        %v734 = vld [vmem:[#allocation5 + $0x450] sm:$0xff]
        %v735 = vld [vmem:[#allocation5 + $0x458] sm:$0xff]
        %v736 = vld [vmem:[#allocation5 + $0x460] sm:$0xff]
        %v737 = vld [vmem:[#allocation5 + $0x468] sm:$0xff]
        %v738 = vld [vmem:[#allocation5 + $0x470] sm:$0xff]
        %v739 = vld [vmem:[#allocation5 + $0x478] sm:$0xff]
        %v740 = vld [vmem:[#allocation5 + $0x480] sm:$0xff]
        %v741 = vld [vmem:[#allocation5 + $0x488] sm:$0xff]
        %v742 = vld [vmem:[#allocation5 + $0x490] sm:$0xff]
        %v743 = vld [vmem:[#allocation5 + $0x498] sm:$0xff]
        %v744 = vld [vmem:[#allocation5 + $0x4a0] sm:$0xff]
        %v745 = vld [vmem:[#allocation5 + $0x4a8] sm:$0xff]
        %v746 = vld [vmem:[#allocation5 + $0x4b0] sm:$0xff]
        %v747 = vld [vmem:[#allocation5 + $0x4b8] sm:$0xff]
        %v748 = vld [vmem:[#allocation5 + $0x4c0] sm:$0xff]
        %v749 = vld [vmem:[#allocation5 + $0x4c8] sm:$0xff]
        %v750 = vld [vmem:[#allocation5 + $0x4d0] sm:$0xff]
        %v751 = vld [vmem:[#allocation5 + $0x4d8] sm:$0xff]
        %v752 = vld [vmem:[#allocation5 + $0x4e0] sm:$0xff]
        %v753 = vld [vmem:[#allocation5 + $0x4e8] sm:$0xff]
        %v754 = vld [vmem:[#allocation5 + $0x4f0] sm:$0xff]
        %v755 = vld [vmem:[#allocation5 + $0x4f8] sm:$0xff]
        %v756 = vld [vmem:[#allocation5 + $0x500] sm:$0xff]
        %v757 = vld [vmem:[#allocation5 + $0x508] sm:$0xff]
        %v758 = vld [vmem:[#allocation5 + $0x510] sm:$0xff]
        %v759 = vld [vmem:[#allocation5 + $0x518] sm:$0xff]
        %v760 = vld [vmem:[#allocation5 + $0x520] sm:$0xff]
        %v761 = vld [vmem:[#allocation5 + $0x528] sm:$0xff]
        %v762 = vld [vmem:[#allocation5 + $0x530] sm:$0xff]
        %v763 = vld [vmem:[#allocation5 + $0x538] sm:$0xff]
        %v764 = vld [vmem:[#allocation5 + $0x540] sm:$0xff]
        %v765 = vld [vmem:[#allocation5 + $0x548] sm:$0xff]
        %v766 = vld [vmem:[#allocation5 + $0x550] sm:$0xff]
        %v767 = vld [vmem:[#allocation5 + $0x558] sm:$0xff]
        %v768 = vld [vmem:[#allocation5 + $0x560] sm:$0xff]
        %v769 = vld [vmem:[#allocation5 + $0x568] sm:$0xff]
        %v770 = vld [vmem:[#allocation5 + $0x570] sm:$0xff]
        %v771 = vld [vmem:[#allocation5 + $0x578] sm:$0xff]
        %v772 = vld [vmem:[#allocation5 + $0x580] sm:$0xff]
        %v773 = vld [vmem:[#allocation5 + $0x588] sm:$0xff]
        %v774 = vld [vmem:[#allocation5 + $0x590] sm:$0xff]
        %v775 = vld [vmem:[#allocation5 + $0x598] sm:$0xff]
        %v776 = vld [vmem:[#allocation5 + $0x5a0] sm:$0xff]
        %v777 = vld [vmem:[#allocation5 + $0x5a8] sm:$0xff]
        %v778 = vld [vmem:[#allocation5 + $0x5b0] sm:$0xff]
        %v779 = vld [vmem:[#allocation5 + $0x5b8] sm:$0xff]
        %v780 = vld [vmem:[#allocation5 + $0x5c0] sm:$0xff]
        %v781 = vld [vmem:[#allocation5 + $0x5c8] sm:$0xff]
        %v782 = vld [vmem:[#allocation5 + $0x5d0] sm:$0xff]
        %v783 = vld [vmem:[#allocation5 + $0x5d8] sm:$0xff]
        %v784 = vld [vmem:[#allocation5 + $0x5e0] sm:$0xff]
        %v785 = vld [vmem:[#allocation5 + $0x5e8] sm:$0xff]
        %v786 = vld [vmem:[#allocation5 + $0x5f0] sm:$0xff]
        %v787 = vld [vmem:[#allocation5 + $0x5f8] sm:$0xff]
        %v788 = vld [vmem:[%s2] sm:$0xf]
        %v790 = vlaneseq
        %v791 = vshrl.u32 %v790, 7
        %v792 = vsub.s32 0, %v791
        %v793 = vrot.slane %v788, %v792
        %v794 = vlaneseq
        %v795 = vshrl.u32 %v794, 7
        %v796 = vsub.s32 1, %v795
        %v797 = vrot.slane %v788, %v796
        %v798 = vlaneseq
        %v799 = vshrl.u32 %v798, 7
        %v800 = vsub.s32 2, %v799
        %v801 = vrot.slane %v788, %v800
        %v802 = vlaneseq
        %v803 = vshrl.u32 %v802, 7
        %v804 = vsub.s32 3, %v803
        %v805 = vrot.slane %v788, %v804
        %v1002 = vunpack.c.l.b16 %v596
        %v1003 = vunpack.c.h.b16 %v596
        %v1004 = vunpack.c.l.b16 %v597
        %v1005 = vunpack.c.h.b16 %v597
        %v1006 = vunpack.c.l.b16 %v598
        %v1007 = vunpack.c.h.b16 %v598
        %v1008 = vunpack.c.l.b16 %v599
        %v1009 = vunpack.c.h.b16 %v599
        %v1010 = vunpack.c.l.b16 %v600
        %v1011 = vunpack.c.h.b16 %v600
        %v1012 = vunpack.c.l.b16 %v601
        %v1013 = vunpack.c.h.b16 %v601
        %v1014 = vunpack.c.l.b16 %v602
        %v1015 = vunpack.c.h.b16 %v602
        %v1016 = vunpack.c.l.b16 %v603
        %v1017 = vunpack.c.h.b16 %v603
        %v1018 = vunpack.c.l.b16 %v604
        %v1019 = vunpack.c.h.b16 %v604
        %v1020 = vunpack.c.l.b16 %v605
        %v1021 = vunpack.c.h.b16 %v605
        %v1022 = vunpack.c.l.b16 %v606
        %v1023 = vunpack.c.h.b16 %v606
        %v1024 = vunpack.c.l.b16 %v607
        %v1025 = vunpack.c.h.b16 %v607
        %v1026 = vunpack.c.l.b16 %v608
        %v1027 = vunpack.c.h.b16 %v608
        %v1028 = vunpack.c.l.b16 %v609
        %v1029 = vunpack.c.h.b16 %v609
        %v1030 = vunpack.c.l.b16 %v610
        %v1031 = vunpack.c.h.b16 %v610
        %v1032 = vunpack.c.l.b16 %v611
        %v1033 = vunpack.c.h.b16 %v611
        %v1034 = vunpack.c.l.b16 %v612
        %v1035 = vunpack.c.h.b16 %v612
        %v1036 = vunpack.c.l.b16 %v613
        %v1037 = vunpack.c.h.b16 %v613
        %v1038 = vunpack.c.l.b16 %v614
        %v1039 = vunpack.c.h.b16 %v614
        %v1040 = vunpack.c.l.b16 %v615
        %v1041 = vunpack.c.h.b16 %v615
        %v1042 = vunpack.c.l.b16 %v616
        %v1043 = vunpack.c.h.b16 %v616
        %v1044 = vunpack.c.l.b16 %v617
        %v1045 = vunpack.c.h.b16 %v617
        %v1046 = vunpack.c.l.b16 %v618
        %v1047 = vunpack.c.h.b16 %v618
        %v1048 = vunpack.c.l.b16 %v619
        %v1049 = vunpack.c.h.b16 %v619
        %v1050 = vunpack.c.l.b16 %v620
        %v1051 = vunpack.c.h.b16 %v620
        %v1052 = vunpack.c.l.b16 %v621
        %v1053 = vunpack.c.h.b16 %v621
        %v1054 = vunpack.c.l.b16 %v622
        %v1055 = vunpack.c.h.b16 %v622
        %v1056 = vunpack.c.l.b16 %v623
        %v1057 = vunpack.c.h.b16 %v623
        %v1058 = vunpack.c.l.b16 %v624
        %v1059 = vunpack.c.h.b16 %v624
        %v1060 = vunpack.c.l.b16 %v625
        %v1061 = vunpack.c.h.b16 %v625
        %v1062 = vunpack.c.l.b16 %v626
        %v1063 = vunpack.c.h.b16 %v626
        %v1064 = vunpack.c.l.b16 %v627
        %v1065 = vunpack.c.h.b16 %v627
        %v1066 = vunpack.c.l.b16 %v628
        %v1067 = vunpack.c.h.b16 %v628
        %v1068 = vunpack.c.l.b16 %v629
        %v1069 = vunpack.c.h.b16 %v629
        %v1070 = vunpack.c.l.b16 %v630
        %v1071 = vunpack.c.h.b16 %v630
        %v1072 = vunpack.c.l.b16 %v631
        %v1073 = vunpack.c.h.b16 %v631
        %v1074 = vunpack.c.l.b16 %v632
        %v1075 = vunpack.c.h.b16 %v632
        %v1076 = vunpack.c.l.b16 %v633
        %v1077 = vunpack.c.h.b16 %v633
        %v1078 = vunpack.c.l.b16 %v634
        %v1079 = vunpack.c.h.b16 %v634
        %v1080 = vunpack.c.l.b16 %v635
        %v1081 = vunpack.c.h.b16 %v635
        %v1082 = vunpack.c.l.b16 %v636
        %v1083 = vunpack.c.h.b16 %v636
        %v1084 = vunpack.c.l.b16 %v637
        %v1085 = vunpack.c.h.b16 %v637
        %v1086 = vunpack.c.l.b16 %v638
        %v1087 = vunpack.c.h.b16 %v638
        %v1088 = vunpack.c.l.b16 %v639
        %v1089 = vunpack.c.h.b16 %v639
        %v1090 = vunpack.c.l.b16 %v640
        %v1091 = vunpack.c.h.b16 %v640
        %v1092 = vunpack.c.l.b16 %v641
        %v1093 = vunpack.c.h.b16 %v641
        %v1094 = vunpack.c.l.b16 %v642
        %v1095 = vunpack.c.h.b16 %v642
        %v1096 = vunpack.c.l.b16 %v643
        %v1097 = vunpack.c.h.b16 %v643
        %v1098 = vunpack.c.l.b16 %v644
        %v1099 = vunpack.c.h.b16 %v644
        %v1100 = vunpack.c.l.b16 %v645
        %v1101 = vunpack.c.h.b16 %v645
        %v1102 = vunpack.c.l.b16 %v646
        %v1103 = vunpack.c.h.b16 %v646
        %v1104 = vunpack.c.l.b16 %v647
        %v1105 = vunpack.c.h.b16 %v647
        %v1106 = vunpack.c.l.b16 %v648
        %v1107 = vunpack.c.h.b16 %v648
        %v1108 = vunpack.c.l.b16 %v649
        %v1109 = vunpack.c.h.b16 %v649
        %v1110 = vunpack.c.l.b16 %v650
        %v1111 = vunpack.c.h.b16 %v650
        %v1112 = vunpack.c.l.b16 %v651
        %v1113 = vunpack.c.h.b16 %v651
        %v1114 = vunpack.c.l.b16 %v652
        %v1115 = vunpack.c.h.b16 %v652
        %v1116 = vunpack.c.l.b16 %v653
        %v1117 = vunpack.c.h.b16 %v653
        %v1118 = vunpack.c.l.b16 %v654
        %v1119 = vunpack.c.h.b16 %v654
        %v1120 = vunpack.c.l.b16 %v655
        %v1121 = vunpack.c.h.b16 %v655
        %v1122 = vunpack.c.l.b16 %v656
        %v1123 = vunpack.c.h.b16 %v656
        %v1124 = vunpack.c.l.b16 %v657
        %v1125 = vunpack.c.h.b16 %v657
        %v1126 = vunpack.c.l.b16 %v658
        %v1127 = vunpack.c.h.b16 %v658
        %v1128 = vunpack.c.l.b16 %v659
        %v1129 = vunpack.c.h.b16 %v659
        %v1130 = vunpack.c.l.b16 %v660
        %v1131 = vunpack.c.h.b16 %v660
        %v1132 = vunpack.c.l.b16 %v661
        %v1133 = vunpack.c.h.b16 %v661
        %v1134 = vunpack.c.l.b16 %v662
        %v1135 = vunpack.c.h.b16 %v662
        %v1136 = vunpack.c.l.b16 %v663
        %v1137 = vunpack.c.h.b16 %v663
        %v1138 = vunpack.c.l.b16 %v664
        %v1139 = vunpack.c.h.b16 %v664
        %v1140 = vunpack.c.l.b16 %v665
        %v1141 = vunpack.c.h.b16 %v665
        %v1142 = vunpack.c.l.b16 %v666
        %v1143 = vunpack.c.h.b16 %v666
        %v1144 = vunpack.c.l.b16 %v667
        %v1145 = vunpack.c.h.b16 %v667
        %v1146 = vunpack.c.l.b16 %v668
        %v1147 = vunpack.c.h.b16 %v668
        %v1148 = vunpack.c.l.b16 %v669
        %v1149 = vunpack.c.h.b16 %v669
        %v1150 = vunpack.c.l.b16 %v670
        %v1151 = vunpack.c.h.b16 %v670
        %v1152 = vunpack.c.l.b16 %v671
        %v1153 = vunpack.c.h.b16 %v671
        %v1154 = vunpack.c.l.b16 %v672
        %v1155 = vunpack.c.h.b16 %v672
        %v1156 = vunpack.c.l.b16 %v673
        %v1157 = vunpack.c.h.b16 %v673
        %v1158 = vunpack.c.l.b16 %v674
        %v1159 = vunpack.c.h.b16 %v674
        %v1160 = vunpack.c.l.b16 %v675
        %v1161 = vunpack.c.h.b16 %v675
        %v1162 = vunpack.c.l.b16 %v676
        %v1163 = vunpack.c.h.b16 %v676
        %v1164 = vunpack.c.l.b16 %v677
        %v1165 = vunpack.c.h.b16 %v677
        %v1166 = vunpack.c.l.b16 %v678
        %v1167 = vunpack.c.h.b16 %v678
        %v1168 = vunpack.c.l.b16 %v679
        %v1169 = vunpack.c.h.b16 %v679
        %v1170 = vunpack.c.l.b16 %v680
        %v1171 = vunpack.c.h.b16 %v680
        %v1172 = vunpack.c.l.b16 %v681
        %v1173 = vunpack.c.h.b16 %v681
        %v1174 = vunpack.c.l.b16 %v682
        %v1175 = vunpack.c.h.b16 %v682
        %v1176 = vunpack.c.l.b16 %v683
        %v1177 = vunpack.c.h.b16 %v683
        %v1178 = vunpack.c.l.b16 %v684
        %v1179 = vunpack.c.h.b16 %v684
        %v1180 = vunpack.c.l.b16 %v685
        %v1181 = vunpack.c.h.b16 %v685
        %v1182 = vunpack.c.l.b16 %v686
        %v1183 = vunpack.c.h.b16 %v686
        %v1184 = vunpack.c.l.b16 %v687
        %v1185 = vunpack.c.h.b16 %v687
        %v1186 = vunpack.c.l.b16 %v688
        %v1187 = vunpack.c.h.b16 %v688
        %v1188 = vunpack.c.l.b16 %v689
        %v1189 = vunpack.c.h.b16 %v689
        %v1190 = vunpack.c.l.b16 %v690
        %v1191 = vunpack.c.h.b16 %v690
        %v1192 = vunpack.c.l.b16 %v691
        %v1193 = vunpack.c.h.b16 %v691
        %v1194 = vunpack.c.l.b16 %v692
        %v1195 = vunpack.c.h.b16 %v692
        %v1196 = vunpack.c.l.b16 %v693
        %v1197 = vunpack.c.h.b16 %v693
        %v1198 = vunpack.c.l.b16 %v694
        %v1199 = vunpack.c.h.b16 %v694
        %v1200 = vunpack.c.l.b16 %v695
        %v1201 = vunpack.c.h.b16 %v695
        %v1202 = vunpack.c.l.b16 %v696
        %v1203 = vunpack.c.h.b16 %v696
        %v1204 = vunpack.c.l.b16 %v697
        %v1205 = vunpack.c.h.b16 %v697
        %v1206 = vunpack.c.l.b16 %v698
        %v1207 = vunpack.c.h.b16 %v698
        %v1208 = vunpack.c.l.b16 %v699
        %v1209 = vunpack.c.h.b16 %v699
        %v1210 = vunpack.c.l.b16 %v700
        %v1211 = vunpack.c.h.b16 %v700
        %v1212 = vunpack.c.l.b16 %v701
        %v1213 = vunpack.c.h.b16 %v701
        %v1214 = vunpack.c.l.b16 %v702
        %v1215 = vunpack.c.h.b16 %v702
        %v1216 = vunpack.c.l.b16 %v703
        %v1217 = vunpack.c.h.b16 %v703
        %v1218 = vunpack.c.l.b16 %v704
        %v1219 = vunpack.c.h.b16 %v704
        %v1220 = vunpack.c.l.b16 %v705
        %v1221 = vunpack.c.h.b16 %v705
        %v1222 = vunpack.c.l.b16 %v706
        %v1223 = vunpack.c.h.b16 %v706
        %v1224 = vunpack.c.l.b16 %v707
        %v1225 = vunpack.c.h.b16 %v707
        %v1226 = vunpack.c.l.b16 %v708
        %v1227 = vunpack.c.h.b16 %v708
        %v1228 = vunpack.c.l.b16 %v709
        %v1229 = vunpack.c.h.b16 %v709
        %v1230 = vunpack.c.l.b16 %v710
        %v1231 = vunpack.c.h.b16 %v710
        %v1232 = vunpack.c.l.b16 %v711
        %v1233 = vunpack.c.h.b16 %v711
        %v1234 = vunpack.c.l.b16 %v712
        %v1235 = vunpack.c.h.b16 %v712
        %v1236 = vunpack.c.l.b16 %v713
        %v1237 = vunpack.c.h.b16 %v713
        %v1238 = vunpack.c.l.b16 %v714
        %v1239 = vunpack.c.h.b16 %v714
        %v1240 = vunpack.c.l.b16 %v715
        %v1241 = vunpack.c.h.b16 %v715
        %v1242 = vunpack.c.l.b16 %v716
        %v1243 = vunpack.c.h.b16 %v716
        %v1244 = vunpack.c.l.b16 %v717
        %v1245 = vunpack.c.h.b16 %v717
        %v1246 = vunpack.c.l.b16 %v718
        %v1247 = vunpack.c.h.b16 %v718
        %v1248 = vunpack.c.l.b16 %v719
        %v1249 = vunpack.c.h.b16 %v719
        %v1250 = vunpack.c.l.b16 %v720
        %v1251 = vunpack.c.h.b16 %v720
        %v1252 = vunpack.c.l.b16 %v721
        %v1253 = vunpack.c.h.b16 %v721
        %v1254 = vunpack.c.l.b16 %v722
        %v1255 = vunpack.c.h.b16 %v722
        %v1256 = vunpack.c.l.b16 %v723
        %v1257 = vunpack.c.h.b16 %v723
        %v1258 = vunpack.c.l.b16 %v724
        %v1259 = vunpack.c.h.b16 %v724
        %v1260 = vunpack.c.l.b16 %v725
        %v1261 = vunpack.c.h.b16 %v725
        %v1262 = vunpack.c.l.b16 %v726
        %v1263 = vunpack.c.h.b16 %v726
        %v1264 = vunpack.c.l.b16 %v727
        %v1265 = vunpack.c.h.b16 %v727
        %v1266 = vunpack.c.l.b16 %v728
        %v1267 = vunpack.c.h.b16 %v728
        %v1268 = vunpack.c.l.b16 %v729
        %v1269 = vunpack.c.h.b16 %v729
        %v1270 = vunpack.c.l.b16 %v730
        %v1271 = vunpack.c.h.b16 %v730
        %v1272 = vunpack.c.l.b16 %v731
        %v1273 = vunpack.c.h.b16 %v731
        %v1274 = vunpack.c.l.b16 %v732
        %v1275 = vunpack.c.h.b16 %v732
        %v1276 = vunpack.c.l.b16 %v733
        %v1277 = vunpack.c.h.b16 %v733
        %v1278 = vunpack.c.l.b16 %v734
        %v1279 = vunpack.c.h.b16 %v734
        %v1280 = vunpack.c.l.b16 %v735
        %v1281 = vunpack.c.h.b16 %v735
        %v1282 = vunpack.c.l.b16 %v736
        %v1283 = vunpack.c.h.b16 %v736
        %v1284 = vunpack.c.l.b16 %v737
        %v1285 = vunpack.c.h.b16 %v737
        %v1286 = vunpack.c.l.b16 %v738
        %v1287 = vunpack.c.h.b16 %v738
        %v1288 = vunpack.c.l.b16 %v739
        %v1289 = vunpack.c.h.b16 %v739
        %v1290 = vunpack.c.l.b16 %v740
        %v1291 = vunpack.c.h.b16 %v740
        %v1292 = vunpack.c.l.b16 %v741
        %v1293 = vunpack.c.h.b16 %v741
        %v1294 = vunpack.c.l.b16 %v742
        %v1295 = vunpack.c.h.b16 %v742
        %v1296 = vunpack.c.l.b16 %v743
        %v1297 = vunpack.c.h.b16 %v743
        %v1298 = vunpack.c.l.b16 %v744
        %v1299 = vunpack.c.h.b16 %v744
        %v1300 = vunpack.c.l.b16 %v745
        %v1301 = vunpack.c.h.b16 %v745
        %v1302 = vunpack.c.l.b16 %v746
        %v1303 = vunpack.c.h.b16 %v746
        %v1304 = vunpack.c.l.b16 %v747
        %v1305 = vunpack.c.h.b16 %v747
        %v1306 = vunpack.c.l.b16 %v748
        %v1307 = vunpack.c.h.b16 %v748
        %v1308 = vunpack.c.l.b16 %v749
        %v1309 = vunpack.c.h.b16 %v749
        %v1310 = vunpack.c.l.b16 %v750
        %v1311 = vunpack.c.h.b16 %v750
        %v1312 = vunpack.c.l.b16 %v751
        %v1313 = vunpack.c.h.b16 %v751
        %v1314 = vunpack.c.l.b16 %v752
        %v1315 = vunpack.c.h.b16 %v752
        %v1316 = vunpack.c.l.b16 %v753
        %v1317 = vunpack.c.h.b16 %v753
        %v1318 = vunpack.c.l.b16 %v754
        %v1319 = vunpack.c.h.b16 %v754
        %v1320 = vunpack.c.l.b16 %v755
        %v1321 = vunpack.c.h.b16 %v755
        %v1322 = vunpack.c.l.b16 %v756
        %v1323 = vunpack.c.h.b16 %v756
        %v1324 = vunpack.c.l.b16 %v757
        %v1325 = vunpack.c.h.b16 %v757
        %v1326 = vunpack.c.l.b16 %v758
        %v1327 = vunpack.c.h.b16 %v758
        %v1328 = vunpack.c.l.b16 %v759
        %v1329 = vunpack.c.h.b16 %v759
        %v1330 = vunpack.c.l.b16 %v760
        %v1331 = vunpack.c.h.b16 %v760
        %v1332 = vunpack.c.l.b16 %v761
        %v1333 = vunpack.c.h.b16 %v761
        %v1334 = vunpack.c.l.b16 %v762
        %v1335 = vunpack.c.h.b16 %v762
        %v1336 = vunpack.c.l.b16 %v763
        %v1337 = vunpack.c.h.b16 %v763
        %v1338 = vunpack.c.l.b16 %v764
        %v1339 = vunpack.c.h.b16 %v764
        %v1340 = vunpack.c.l.b16 %v765
        %v1341 = vunpack.c.h.b16 %v765
        %v1342 = vunpack.c.l.b16 %v766
        %v1343 = vunpack.c.h.b16 %v766
        %v1344 = vunpack.c.l.b16 %v767
        %v1345 = vunpack.c.h.b16 %v767
        %v1346 = vunpack.c.l.b16 %v768
        %v1347 = vunpack.c.h.b16 %v768
        %v1348 = vunpack.c.l.b16 %v769
        %v1349 = vunpack.c.h.b16 %v769
        %v1350 = vunpack.c.l.b16 %v770
        %v1351 = vunpack.c.h.b16 %v770
        %v1352 = vunpack.c.l.b16 %v771
        %v1353 = vunpack.c.h.b16 %v771
        %v1354 = vunpack.c.l.b16 %v772
        %v1355 = vunpack.c.h.b16 %v772
        %v1356 = vunpack.c.l.b16 %v773
        %v1357 = vunpack.c.h.b16 %v773
        %v1358 = vunpack.c.l.b16 %v774
        %v1359 = vunpack.c.h.b16 %v774
        %v1360 = vunpack.c.l.b16 %v775
        %v1361 = vunpack.c.h.b16 %v775
        %v1362 = vunpack.c.l.b16 %v776
        %v1363 = vunpack.c.h.b16 %v776
        %v1364 = vunpack.c.l.b16 %v777
        %v1365 = vunpack.c.h.b16 %v777
        %v1366 = vunpack.c.l.b16 %v778
        %v1367 = vunpack.c.h.b16 %v778
        %v1368 = vunpack.c.l.b16 %v779
        %v1369 = vunpack.c.h.b16 %v779
        %v1370 = vunpack.c.l.b16 %v780
        %v1371 = vunpack.c.h.b16 %v780
        %v1372 = vunpack.c.l.b16 %v781
        %v1373 = vunpack.c.h.b16 %v781
        %v1374 = vunpack.c.l.b16 %v782
        %v1375 = vunpack.c.h.b16 %v782
        %v1376 = vunpack.c.l.b16 %v783
        %v1377 = vunpack.c.h.b16 %v783
        %v1378 = vunpack.c.l.b16 %v784
        %v1379 = vunpack.c.h.b16 %v784
        %v1380 = vunpack.c.l.b16 %v785
        %v1381 = vunpack.c.h.b16 %v785
        %v1382 = vunpack.c.l.b16 %v786
        %v1383 = vunpack.c.h.b16 %v786
        %v1384 = vunpack.c.l.b16 %v787
        %v1385 = vunpack.c.h.b16 %v787
        %v1386 = vpack.c.b16 %v1006, %v1002
        %v1387 = vpack.c.b16 %v1007, %v1003
        %v1388 = vpack.c.b16 %v1008, %v1004
        %v1389 = vpack.c.b16 %v1009, %v1005
        %v1390 = vpack.c.b16 %v1014, %v1010
        %v1391 = vpack.c.b16 %v1015, %v1011
        %v1392 = vpack.c.b16 %v1016, %v1012
        %v1393 = vpack.c.b16 %v1017, %v1013
        %v1394 = vpack.c.b16 %v1022, %v1018
        %v1395 = vpack.c.b16 %v1023, %v1019
        %v1396 = vpack.c.b16 %v1024, %v1020
        %v1397 = vpack.c.b16 %v1025, %v1021
        %v1398 = vpack.c.b16 %v1030, %v1026
        %v1399 = vpack.c.b16 %v1031, %v1027
        %v1400 = vpack.c.b16 %v1032, %v1028
        %v1401 = vpack.c.b16 %v1033, %v1029
        %v1402 = vpack.c.b16 %v1038, %v1034
        %v1403 = vpack.c.b16 %v1039, %v1035
        %v1404 = vpack.c.b16 %v1040, %v1036
        %v1405 = vpack.c.b16 %v1041, %v1037
        %v1406 = vpack.c.b16 %v1046, %v1042
        %v1407 = vpack.c.b16 %v1047, %v1043
        %v1408 = vpack.c.b16 %v1048, %v1044
        %v1409 = vpack.c.b16 %v1049, %v1045
        %v1410 = vpack.c.b16 %v1054, %v1050
        %v1411 = vpack.c.b16 %v1055, %v1051
        %v1412 = vpack.c.b16 %v1056, %v1052
        %v1413 = vpack.c.b16 %v1057, %v1053
        %v1414 = vpack.c.b16 %v1062, %v1058
        %v1415 = vpack.c.b16 %v1063, %v1059
        %v1416 = vpack.c.b16 %v1064, %v1060
        %v1417 = vpack.c.b16 %v1065, %v1061
        %v1418 = vpack.c.b16 %v1070, %v1066
        %v1419 = vpack.c.b16 %v1071, %v1067
        %v1420 = vpack.c.b16 %v1072, %v1068
        %v1421 = vpack.c.b16 %v1073, %v1069
        %v1422 = vpack.c.b16 %v1078, %v1074
        %v1423 = vpack.c.b16 %v1079, %v1075
        %v1424 = vpack.c.b16 %v1080, %v1076
        %v1425 = vpack.c.b16 %v1081, %v1077
        %v1426 = vpack.c.b16 %v1086, %v1082
        %v1427 = vpack.c.b16 %v1087, %v1083
        %v1428 = vpack.c.b16 %v1088, %v1084
        %v1429 = vpack.c.b16 %v1089, %v1085
        %v1430 = vpack.c.b16 %v1094, %v1090
        %v1431 = vpack.c.b16 %v1095, %v1091
        %v1432 = vpack.c.b16 %v1096, %v1092
        %v1433 = vpack.c.b16 %v1097, %v1093
        %v1434 = vpack.c.b16 %v1102, %v1098
        %v1435 = vpack.c.b16 %v1103, %v1099
        %v1436 = vpack.c.b16 %v1104, %v1100
        %v1437 = vpack.c.b16 %v1105, %v1101
        %v1438 = vpack.c.b16 %v1110, %v1106
        %v1439 = vpack.c.b16 %v1111, %v1107
        %v1440 = vpack.c.b16 %v1112, %v1108
        %v1441 = vpack.c.b16 %v1113, %v1109
        %v1442 = vpack.c.b16 %v1118, %v1114
        %v1443 = vpack.c.b16 %v1119, %v1115
        %v1444 = vpack.c.b16 %v1120, %v1116
        %v1445 = vpack.c.b16 %v1121, %v1117
        %v1446 = vpack.c.b16 %v1126, %v1122
        %v1447 = vpack.c.b16 %v1127, %v1123
        %v1448 = vpack.c.b16 %v1128, %v1124
        %v1449 = vpack.c.b16 %v1129, %v1125
        %v1450 = vpack.c.b16 %v1134, %v1130
        %v1451 = vpack.c.b16 %v1135, %v1131
        %v1452 = vpack.c.b16 %v1136, %v1132
        %v1453 = vpack.c.b16 %v1137, %v1133
        %v1454 = vpack.c.b16 %v1142, %v1138
        %v1455 = vpack.c.b16 %v1143, %v1139
        %v1456 = vpack.c.b16 %v1144, %v1140
        %v1457 = vpack.c.b16 %v1145, %v1141
        %v1458 = vpack.c.b16 %v1150, %v1146
        %v1459 = vpack.c.b16 %v1151, %v1147
        %v1460 = vpack.c.b16 %v1152, %v1148
        %v1461 = vpack.c.b16 %v1153, %v1149
        %v1462 = vpack.c.b16 %v1158, %v1154
        %v1463 = vpack.c.b16 %v1159, %v1155
        %v1464 = vpack.c.b16 %v1160, %v1156
        %v1465 = vpack.c.b16 %v1161, %v1157
        %v1466 = vpack.c.b16 %v1166, %v1162
        %v1467 = vpack.c.b16 %v1167, %v1163
        %v1468 = vpack.c.b16 %v1168, %v1164
        %v1469 = vpack.c.b16 %v1169, %v1165
        %v1470 = vpack.c.b16 %v1174, %v1170
        %v1471 = vpack.c.b16 %v1175, %v1171
        %v1472 = vpack.c.b16 %v1176, %v1172
        %v1473 = vpack.c.b16 %v1177, %v1173
        %v1474 = vpack.c.b16 %v1182, %v1178
        %v1475 = vpack.c.b16 %v1183, %v1179
        %v1476 = vpack.c.b16 %v1184, %v1180
        %v1477 = vpack.c.b16 %v1185, %v1181
        %v1478 = vpack.c.b16 %v1190, %v1186
        %v1479 = vpack.c.b16 %v1191, %v1187
        %v1480 = vpack.c.b16 %v1192, %v1188
        %v1481 = vpack.c.b16 %v1193, %v1189
        %v1482 = vpack.c.b16 %v1198, %v1194
        %v1483 = vpack.c.b16 %v1199, %v1195
        %v1484 = vpack.c.b16 %v1200, %v1196
        %v1485 = vpack.c.b16 %v1201, %v1197
        %v1486 = vpack.c.b16 %v1206, %v1202
        %v1487 = vpack.c.b16 %v1207, %v1203
        %v1488 = vpack.c.b16 %v1208, %v1204
        %v1489 = vpack.c.b16 %v1209, %v1205
        %v1490 = vpack.c.b16 %v1214, %v1210
        %v1491 = vpack.c.b16 %v1215, %v1211
        %v1492 = vpack.c.b16 %v1216, %v1212
        %v1493 = vpack.c.b16 %v1217, %v1213
        %v1494 = vpack.c.b16 %v1222, %v1218
        %v1495 = vpack.c.b16 %v1223, %v1219
        %v1496 = vpack.c.b16 %v1224, %v1220
        %v1497 = vpack.c.b16 %v1225, %v1221
        %v1498 = vpack.c.b16 %v1230, %v1226
        %v1499 = vpack.c.b16 %v1231, %v1227
        %v1500 = vpack.c.b16 %v1232, %v1228
        %v1501 = vpack.c.b16 %v1233, %v1229
        %v1502 = vpack.c.b16 %v1238, %v1234
        %v1503 = vpack.c.b16 %v1239, %v1235
        %v1504 = vpack.c.b16 %v1240, %v1236
        %v1505 = vpack.c.b16 %v1241, %v1237
        %v1506 = vpack.c.b16 %v1246, %v1242
        %v1507 = vpack.c.b16 %v1247, %v1243
        %v1508 = vpack.c.b16 %v1248, %v1244
        %v1509 = vpack.c.b16 %v1249, %v1245
        %v1510 = vpack.c.b16 %v1254, %v1250
        %v1511 = vpack.c.b16 %v1255, %v1251
        %v1512 = vpack.c.b16 %v1256, %v1252
        %v1513 = vpack.c.b16 %v1257, %v1253
        %v1514 = vpack.c.b16 %v1262, %v1258
        %v1515 = vpack.c.b16 %v1263, %v1259
        %v1516 = vpack.c.b16 %v1264, %v1260
        %v1517 = vpack.c.b16 %v1265, %v1261
        %v1518 = vpack.c.b16 %v1270, %v1266
        %v1519 = vpack.c.b16 %v1271, %v1267
        %v1520 = vpack.c.b16 %v1272, %v1268
        %v1521 = vpack.c.b16 %v1273, %v1269
        %v1522 = vpack.c.b16 %v1278, %v1274
        %v1523 = vpack.c.b16 %v1279, %v1275
        %v1524 = vpack.c.b16 %v1280, %v1276
        %v1525 = vpack.c.b16 %v1281, %v1277
        %v1526 = vpack.c.b16 %v1286, %v1282
        %v1527 = vpack.c.b16 %v1287, %v1283
        %v1528 = vpack.c.b16 %v1288, %v1284
        %v1529 = vpack.c.b16 %v1289, %v1285
        %v1530 = vpack.c.b16 %v1294, %v1290
        %v1531 = vpack.c.b16 %v1295, %v1291
        %v1532 = vpack.c.b16 %v1296, %v1292
        %v1533 = vpack.c.b16 %v1297, %v1293
        %v1534 = vpack.c.b16 %v1302, %v1298
        %v1535 = vpack.c.b16 %v1303, %v1299
        %v1536 = vpack.c.b16 %v1304, %v1300
        %v1537 = vpack.c.b16 %v1305, %v1301
        %v1538 = vpack.c.b16 %v1310, %v1306
        %v1539 = vpack.c.b16 %v1311, %v1307
        %v1540 = vpack.c.b16 %v1312, %v1308
        %v1541 = vpack.c.b16 %v1313, %v1309
        %v1542 = vpack.c.b16 %v1318, %v1314
        %v1543 = vpack.c.b16 %v1319, %v1315
        %v1544 = vpack.c.b16 %v1320, %v1316
        %v1545 = vpack.c.b16 %v1321, %v1317
        %v1546 = vpack.c.b16 %v1326, %v1322
        %v1547 = vpack.c.b16 %v1327, %v1323
        %v1548 = vpack.c.b16 %v1328, %v1324
        %v1549 = vpack.c.b16 %v1329, %v1325
        %v1550 = vpack.c.b16 %v1334, %v1330
        %v1551 = vpack.c.b16 %v1335, %v1331
        %v1552 = vpack.c.b16 %v1336, %v1332
        %v1553 = vpack.c.b16 %v1337, %v1333
        %v1554 = vpack.c.b16 %v1342, %v1338
        %v1555 = vpack.c.b16 %v1343, %v1339
        %v1556 = vpack.c.b16 %v1344, %v1340
        %v1557 = vpack.c.b16 %v1345, %v1341
        %v1558 = vpack.c.b16 %v1350, %v1346
        %v1559 = vpack.c.b16 %v1351, %v1347
        %v1560 = vpack.c.b16 %v1352, %v1348
        %v1561 = vpack.c.b16 %v1353, %v1349
        %v1562 = vpack.c.b16 %v1358, %v1354
        %v1563 = vpack.c.b16 %v1359, %v1355
        %v1564 = vpack.c.b16 %v1360, %v1356
        %v1565 = vpack.c.b16 %v1361, %v1357
        %v1566 = vpack.c.b16 %v1366, %v1362
        %v1567 = vpack.c.b16 %v1367, %v1363
        %v1568 = vpack.c.b16 %v1368, %v1364
        %v1569 = vpack.c.b16 %v1369, %v1365
        %v1570 = vpack.c.b16 %v1374, %v1370
        %v1571 = vpack.c.b16 %v1375, %v1371
        %v1572 = vpack.c.b16 %v1376, %v1372
        %v1573 = vpack.c.b16 %v1377, %v1373
        %v1574 = vpack.c.b16 %v1382, %v1378
        %v1575 = vpack.c.b16 %v1383, %v1379
        %v1576 = vpack.c.b16 %v1384, %v1380
        %v1577 = vpack.c.b16 %v1385, %v1381
        %1770 = vmatprep.subr.bf16.mxu0 %v1387
        %1771 = vmatpush1.bf16.msra.mxu0 %v1386
        %1772 = vmatprep.subr.bf16.mxu0 %v1391
        %1773 = vmatpush1.bf16.msra.mxu0 %v1390
        %1774 = vmatprep.subr.bf16.mxu0 %v1395
        %1775 = vmatpush1.bf16.msra.mxu0 %v1394
        %1776 = vmatprep.subr.bf16.mxu0 %v1399
        %1777 = vmatpush1.bf16.msra.mxu0 %v1398
        %1778 = vmatprep.subr.bf16.mxu0 %v1403
        %1779 = vmatpush1.bf16.msra.mxu0 %v1402
        %1780 = vmatprep.subr.bf16.mxu0 %v1407
        %1781 = vmatpush1.bf16.msra.mxu0 %v1406
        %1782 = vmatprep.subr.bf16.mxu0 %v1411
        %1783 = vmatpush1.bf16.msra.mxu0 %v1410
        %1784 = vmatprep.subr.bf16.mxu0 %v1415
        %1785 = vmatpush1.bf16.msra.mxu0 %v1414
        %1786 = vmatprep.subr.bf16.mxu0 %v1419
        %1787 = vmatpush1.bf16.msra.mxu0 %v1418
        %1788 = vmatprep.subr.bf16.mxu0 %v1423
        %1789 = vmatpush1.bf16.msra.mxu0 %v1422
        %1790 = vmatprep.subr.bf16.mxu0 %v1427
        %1791 = vmatpush1.bf16.msra.mxu0 %v1426
        %1792 = vmatprep.subr.bf16.mxu0 %v1431
        %1793 = vmatpush1.bf16.msra.mxu0 %v1430
        %1794 = vmatprep.subr.bf16.mxu0 %v1435
        %1795 = vmatpush1.bf16.msra.mxu0 %v1434
        %1796 = vmatprep.subr.bf16.mxu0 %v1439
        %1797 = vmatpush1.bf16.msra.mxu0 %v1438
        %1798 = vmatprep.subr.bf16.mxu0 %v1443
        %1799 = vmatpush1.bf16.msra.mxu0 %v1442
        %1800 = vmatprep.subr.bf16.mxu0 %v1447
        %1801 = vmatpush1.bf16.msra.mxu0 %v1446
        %1802 = vmatprep.mubr.bf16.mxu0 %v549
        %1803 = vmatmul.mubr.bf16.gmra.mrb[0].mxu0 %v548
        %v1804 = vpop.f32.mrb[0].mxu0
        %v1805 = vadd.f32 %v793, %v1804
        %v1806 = vpop.f32.mrb[0].mxu0
        %v1807 = vadd.f32 %v797, %v1806
        %v1808 = vpop.f32.mrb[0].mxu0
        %v1809 = vadd.f32 %v793, %v1808
        %v1810 = vpop.f32.mrb[0].mxu0
        %v1811 = vadd.f32 %v797, %v1810
        %1812 = vmatprep.mubr.bf16.mxu0 %v555
        %1813 = vmatmul.mubr.bf16.gmra.mrb[0].mxu0 %v554
        %v1814 = vpop.f32.mrb[0].mxu0
        %v1815 = vadd.f32 %v793, %v1814
        %v1816 = vpop.f32.mrb[0].mxu0
        %v1817 = vadd.f32 %v797, %v1816
        %v1818 = vpop.f32.mrb[0].mxu0
        %v1819 = vadd.f32 %v793, %v1818
        %v1820 = vpop.f32.mrb[0].mxu0
        %v1821 = vadd.f32 %v797, %v1820
        %1822 = vmatprep.mubr.bf16.mxu0 %v561
        %1823 = vmatmul.mubr.bf16.gmra.mrb[0].mxu0 %v560
        %v1824 = vpop.f32.mrb[0].mxu0
        %v1825 = vadd.f32 %v793, %v1824
        %v1826 = vpop.f32.mrb[0].mxu0
        %v1827 = vadd.f32 %v797, %v1826
        %v1828 = vpop.f32.mrb[0].mxu0
        %v1829 = vadd.f32 %v793, %v1828
        %v1830 = vpop.f32.mrb[0].mxu0
        %v1831 = vadd.f32 %v797, %v1830
        %1832 = vmatprep.mubr.bf16.mxu0 %v567
        %1833 = vmatmul.mubr.bf16.gmra.mrb[0].mxu0 %v566
        %v1834 = vpop.f32.mrb[0].mxu0
        %v1835 = vadd.f32 %v793, %v1834
        %v1836 = vpop.f32.mrb[0].mxu0
        %v1837 = vadd.f32 %v797, %v1836
        %v1838 = vpop.f32.mrb[0].mxu0
        %v1839 = vadd.f32 %v793, %v1838
        %v1840 = vpop.f32.mrb[0].mxu0
        %v1841 = vadd.f32 %v797, %v1840
        %1842 = vmatprep.mubr.bf16.mxu0 %v573
        %1843 = vmatmul.mubr.bf16.gmra.mrb[0].mxu0 %v572
        %v1844 = vpop.f32.mrb[0].mxu0
        %v1845 = vadd.f32 %v793, %v1844
        %v1846 = vpop.f32.mrb[0].mxu0
        %v1847 = vadd.f32 %v797, %v1846
        %v1848 = vpop.f32.mrb[0].mxu0
        %v1849 = vadd.f32 %v793, %v1848
        %v1850 = vpop.f32.mrb[0].mxu0
        %v1851 = vadd.f32 %v797, %v1850
        %1852 = vmatprep.mubr.bf16.mxu0 %v579
        %1853 = vmatmul.mubr.bf16.gmra.mrb[0].mxu0 %v578
        %v1854 = vpop.f32.mrb[0].mxu0
        %v1855 = vadd.f32 %v793, %v1854
        %v1856 = vpop.f32.mrb[0].mxu0
        %v1857 = vadd.f32 %v797, %v1856
        %v1858 = vpop.f32.mrb[0].mxu0
        %v1859 = vadd.f32 %v793, %v1858
        %v1860 = vpop.f32.mrb[0].mxu0
        %v1861 = vadd.f32 %v797, %v1860
        %1862 = vmatprep.mubr.bf16.mxu0 %v585
        %1863 = vmatmul.mubr.bf16.gmra.mrb[0].mxu0 %v584
        %v1864 = vpop.f32.mrb[0].mxu0
        %v1865 = vadd.f32 %v793, %v1864
        %v1866 = vpop.f32.mrb[0].mxu0
        %v1867 = vadd.f32 %v797, %v1866
        %v1868 = vpop.f32.mrb[0].mxu0
        %v1869 = vadd.f32 %v793, %v1868
        %v1870 = vpop.f32.mrb[0].mxu0
        %v1871 = vadd.f32 %v797, %v1870
        %1872 = vmatprep.mubr.bf16.mxu0 %v591
        %1873 = vmatmul.mubr.bf16.gmra.mrb[0].mxu0 %v590
        %v1874 = vpop.f32.mrb[0].mxu0
        %v1875 = vadd.f32 %v793, %v1874
        %v1876 = vpop.f32.mrb[0].mxu0
        %v1877 = vadd.f32 %v797, %v1876
        %v1878 = vpop.f32.mrb[0].mxu0
        %v1879 = vadd.f32 %v793, %v1878
        %v1880 = vpop.f32.mrb[0].mxu0
        %v1881 = vadd.f32 %v797, %v1880
        %1882 = vdwg.mxu0
        %1883 = vmatprep.subr.bf16.mxu0 %v1451
        %1884 = vmatpush1.bf16.msra.mxu0 %v1450
        %1885 = vmatprep.subr.bf16.mxu0 %v1455
        %1886 = vmatpush1.bf16.msra.mxu0 %v1454
        %1887 = vmatprep.subr.bf16.mxu0 %v1459
        %1888 = vmatpush1.bf16.msra.mxu0 %v1458
        %1889 = vmatprep.subr.bf16.mxu0 %v1463
        %1890 = vmatpush1.bf16.msra.mxu0 %v1462
        %1891 = vmatprep.subr.bf16.mxu0 %v1467
        %1892 = vmatpush1.bf16.msra.mxu0 %v1466
        %1893 = vmatprep.subr.bf16.mxu0 %v1471
        %1894 = vmatpush1.bf16.msra.mxu0 %v1470
        %1895 = vmatprep.subr.bf16.mxu0 %v1475
        %1896 = vmatpush1.bf16.msra.mxu0 %v1474
        %1897 = vmatprep.subr.bf16.mxu0 %v1479
        %1898 = vmatpush1.bf16.msra.mxu0 %v1478
        %1899 = vmatprep.subr.bf16.mxu0 %v1483
        %1900 = vmatpush1.bf16.msra.mxu0 %v1482
        %1901 = vmatprep.subr.bf16.mxu0 %v1487
        %1902 = vmatpush1.bf16.msra.mxu0 %v1486
        %1903 = vmatprep.subr.bf16.mxu0 %v1491
        %1904 = vmatpush1.bf16.msra.mxu0 %v1490
        %1905 = vmatprep.subr.bf16.mxu0 %v1495
        %1906 = vmatpush1.bf16.msra.mxu0 %v1494
        %1907 = vmatprep.subr.bf16.mxu0 %v1499
        %1908 = vmatpush1.bf16.msra.mxu0 %v1498
        %1909 = vmatprep.subr.bf16.mxu0 %v1503
        %1910 = vmatpush1.bf16.msra.mxu0 %v1502
        %1911 = vmatprep.subr.bf16.mxu0 %v1507
        %1912 = vmatpush1.bf16.msra.mxu0 %v1506
        %1913 = vmatprep.subr.bf16.mxu0 %v1511
        %1914 = vmatpush1.bf16.msra.mxu0 %v1510
        %1915 = vmatprep.mubr.bf16.mxu0 %v551
        %1916 = vmatmul.mubr.bf16.gmra.mrb[0].mxu0 %v550
        %v1917 = vpop.f32.mrb[0].mxu0
        %v1918 = vadd.f32 %v1805, %v1917
        %v1919 = vpop.f32.mrb[0].mxu0
        %v1920 = vadd.f32 %v1807, %v1919
        %v1921 = vpop.f32.mrb[0].mxu0
        %v1922 = vadd.f32 %v1809, %v1921
        %v1923 = vpop.f32.mrb[0].mxu0
        %v1924 = vadd.f32 %v1811, %v1923
        %1925 = vmatprep.mubr.bf16.mxu0 %v557
        %1926 = vmatmul.mubr.bf16.gmra.mrb[0].mxu0 %v556
        %v1927 = vpop.f32.mrb[0].mxu0
        %v1928 = vadd.f32 %v1815, %v1927
        %v1929 = vpop.f32.mrb[0].mxu0
        %v1930 = vadd.f32 %v1817, %v1929
        %v1931 = vpop.f32.mrb[0].mxu0
        %v1932 = vadd.f32 %v1819, %v1931
        %v1933 = vpop.f32.mrb[0].mxu0
        %v1934 = vadd.f32 %v1821, %v1933
        %1935 = vmatprep.mubr.bf16.mxu0 %v563
        %1936 = vmatmul.mubr.bf16.gmra.mrb[0].mxu0 %v562
        %v1937 = vpop.f32.mrb[0].mxu0
        %v1938 = vadd.f32 %v1825, %v1937
        %v1939 = vpop.f32.mrb[0].mxu0
        %v1940 = vadd.f32 %v1827, %v1939
        %v1941 = vpop.f32.mrb[0].mxu0
        %v1942 = vadd.f32 %v1829, %v1941
        %v1943 = vpop.f32.mrb[0].mxu0
        %v1944 = vadd.f32 %v1831, %v1943
        %1945 = vmatprep.mubr.bf16.mxu0 %v569
        %1946 = vmatmul.mubr.bf16.gmra.mrb[0].mxu0 %v568
        %v1947 = vpop.f32.mrb[0].mxu0
        %v1948 = vadd.f32 %v1835, %v1947
        %v1949 = vpop.f32.mrb[0].mxu0
        %v1950 = vadd.f32 %v1837, %v1949
        %v1951 = vpop.f32.mrb[0].mxu0
        %v1952 = vadd.f32 %v1839, %v1951
        %v1953 = vpop.f32.mrb[0].mxu0
        %v1954 = vadd.f32 %v1841, %v1953
        %1955 = vmatprep.mubr.bf16.mxu0 %v575
        %1956 = vmatmul.mubr.bf16.gmra.mrb[0].mxu0 %v574
        %v1957 = vpop.f32.mrb[0].mxu0
        %v1958 = vadd.f32 %v1845, %v1957
        %v1959 = vpop.f32.mrb[0].mxu0
        %v1960 = vadd.f32 %v1847, %v1959
        %v1961 = vpop.f32.mrb[0].mxu0
        %v1962 = vadd.f32 %v1849, %v1961
        %v1963 = vpop.f32.mrb[0].mxu0
        %v1964 = vadd.f32 %v1851, %v1963
        %1965 = vmatprep.mubr.bf16.mxu0 %v581
        %1966 = vmatmul.mubr.bf16.gmra.mrb[0].mxu0 %v580
        %v1967 = vpop.f32.mrb[0].mxu0
        %v1968 = vadd.f32 %v1855, %v1967
        %v1969 = vpop.f32.mrb[0].mxu0
        %v1970 = vadd.f32 %v1857, %v1969
        %v1971 = vpop.f32.mrb[0].mxu0
        %v1972 = vadd.f32 %v1859, %v1971
        %v1973 = vpop.f32.mrb[0].mxu0
        %v1974 = vadd.f32 %v1861, %v1973
        %1975 = vmatprep.mubr.bf16.mxu0 %v587
        %1976 = vmatmul.mubr.bf16.gmra.mrb[0].mxu0 %v586
        %v1977 = vpop.f32.mrb[0].mxu0
        %v1978 = vadd.f32 %v1865, %v1977
        %v1979 = vpop.f32.mrb[0].mxu0
        %v1980 = vadd.f32 %v1867, %v1979
        %v1981 = vpop.f32.mrb[0].mxu0
        %v1982 = vadd.f32 %v1869, %v1981
        %v1983 = vpop.f32.mrb[0].mxu0
        %v1984 = vadd.f32 %v1871, %v1983
        %1985 = vmatprep.mubr.bf16.mxu0 %v593
        %1986 = vmatmul.mubr.bf16.gmra.mrb[0].mxu0 %v592
        %v1987 = vpop.f32.mrb[0].mxu0
        %v1988 = vadd.f32 %v1875, %v1987
        %v1989 = vpop.f32.mrb[0].mxu0
        %v1990 = vadd.f32 %v1877, %v1989
        %v1991 = vpop.f32.mrb[0].mxu0
        %v1992 = vadd.f32 %v1879, %v1991
        %v1993 = vpop.f32.mrb[0].mxu0
        %v1994 = vadd.f32 %v1881, %v1993
        %1995 = vdwg.mxu0
        %1996 = vmatprep.subr.bf16.mxu0 %v1515
        %1997 = vmatpush1.bf16.msra.mxu0 %v1514
        %1998 = vmatprep.subr.bf16.mxu0 %v1519
        %1999 = vmatpush1.bf16.msra.mxu0 %v1518
        %2000 = vmatprep.subr.bf16.mxu0 %v1523
        %2001 = vmatpush1.bf16.msra.mxu0 %v1522
        %2002 = vmatprep.subr.bf16.mxu0 %v1527
        %2003 = vmatpush1.bf16.msra.mxu0 %v1526
        %2004 = vmatprep.subr.bf16.mxu0 %v1531
        %2005 = vmatpush1.bf16.msra.mxu0 %v1530
        %2006 = vmatprep.subr.bf16.mxu0 %v1535
        %2007 = vmatpush1.bf16.msra.mxu0 %v1534
        %2008 = vmatprep.subr.bf16.mxu0 %v1539
        %2009 = vmatpush1.bf16.msra.mxu0 %v1538
        %2010 = vmatprep.subr.bf16.mxu0 %v1543
        %2011 = vmatpush1.bf16.msra.mxu0 %v1542
        %2012 = vmatprep.subr.bf16.mxu0 %v1547
        %2013 = vmatpush1.bf16.msra.mxu0 %v1546
        %2014 = vmatprep.subr.bf16.mxu0 %v1551
        %2015 = vmatpush1.bf16.msra.mxu0 %v1550
        %2016 = vmatprep.subr.bf16.mxu0 %v1555
        %2017 = vmatpush1.bf16.msra.mxu0 %v1554
        %2018 = vmatprep.subr.bf16.mxu0 %v1559
        %2019 = vmatpush1.bf16.msra.mxu0 %v1558
        %2020 = vmatprep.subr.bf16.mxu0 %v1563
        %2021 = vmatpush1.bf16.msra.mxu0 %v1562
        %2022 = vmatprep.subr.bf16.mxu0 %v1567
        %2023 = vmatpush1.bf16.msra.mxu0 %v1566
        %2024 = vmatprep.subr.bf16.mxu0 %v1571
        %2025 = vmatpush1.bf16.msra.mxu0 %v1570
        %2026 = vmatprep.subr.bf16.mxu0 %v1575
        %2027 = vmatpush1.bf16.msra.mxu0 %v1574
        %2028 = vmatprep.mubr.bf16.mxu0 %v553
        %2029 = vmatmul.mubr.bf16.gmra.mrb[0].mxu0 %v552
        %v2030 = vpop.f32.mrb[0].mxu0
        %v2031 = vadd.f32 %v1918, %v2030
        %v2032 = vpop.f32.mrb[0].mxu0
        %v2033 = vadd.f32 %v1920, %v2032
        %v2034 = vpop.f32.mrb[0].mxu0
        %v2035 = vadd.f32 %v1922, %v2034
        %v2036 = vpop.f32.mrb[0].mxu0
        %v2037 = vadd.f32 %v1924, %v2036
        %2038 = vmatprep.mubr.bf16.mxu0 %v559
        %2039 = vmatmul.mubr.bf16.gmra.mrb[0].mxu0 %v558
        %v2040 = vpop.f32.mrb[0].mxu0
        %v2041 = vadd.f32 %v1928, %v2040
        %v2042 = vpop.f32.mrb[0].mxu0
        %v2043 = vadd.f32 %v1930, %v2042
        %v2044 = vpop.f32.mrb[0].mxu0
        %v2045 = vadd.f32 %v1932, %v2044
        %v2046 = vpop.f32.mrb[0].mxu0
        %v2047 = vadd.f32 %v1934, %v2046
        %2048 = vmatprep.mubr.bf16.mxu0 %v565
        %2049 = vmatmul.mubr.bf16.gmra.mrb[0].mxu0 %v564
        %v2050 = vpop.f32.mrb[0].mxu0
        %v2051 = vadd.f32 %v1938, %v2050
        %v2052 = vpop.f32.mrb[0].mxu0
        %v2053 = vadd.f32 %v1940, %v2052
        %v2054 = vpop.f32.mrb[0].mxu0
        %v2055 = vadd.f32 %v1942, %v2054
        %v2056 = vpop.f32.mrb[0].mxu0
        %v2057 = vadd.f32 %v1944, %v2056
        %2058 = vmatprep.mubr.bf16.mxu0 %v571
        %2059 = vmatmul.mubr.bf16.gmra.mrb[0].mxu0 %v570
        %v2060 = vpop.f32.mrb[0].mxu0
        %v2061 = vadd.f32 %v1948, %v2060
        %v2062 = vpop.f32.mrb[0].mxu0
        %v2063 = vadd.f32 %v1950, %v2062
        %v2064 = vpop.f32.mrb[0].mxu0
        %v2065 = vadd.f32 %v1952, %v2064
        %v2066 = vpop.f32.mrb[0].mxu0
        %v2067 = vadd.f32 %v1954, %v2066
        %2068 = vmatprep.mubr.bf16.mxu0 %v577
        %2069 = vmatmul.mubr.bf16.gmra.mrb[0].mxu0 %v576
        %v2070 = vpop.f32.mrb[0].mxu0
        %v2071 = vadd.f32 %v1958, %v2070
        %v2072 = vpop.f32.mrb[0].mxu0
        %v2073 = vadd.f32 %v1960, %v2072
        %v2074 = vpop.f32.mrb[0].mxu0
        %v2075 = vadd.f32 %v1962, %v2074
        %v2076 = vpop.f32.mrb[0].mxu0
        %v2077 = vadd.f32 %v1964, %v2076
        %2078 = vmatprep.mubr.bf16.mxu0 %v583
        %2079 = vmatmul.mubr.bf16.gmra.mrb[0].mxu0 %v582
        %v2080 = vpop.f32.mrb[0].mxu0
        %v2081 = vadd.f32 %v1968, %v2080
        %v2082 = vpop.f32.mrb[0].mxu0
        %v2083 = vadd.f32 %v1970, %v2082
        %v2084 = vpop.f32.mrb[0].mxu0
        %v2085 = vadd.f32 %v1972, %v2084
        %v2086 = vpop.f32.mrb[0].mxu0
        %v2087 = vadd.f32 %v1974, %v2086
        %2088 = vmatprep.mubr.bf16.mxu0 %v589
        %2089 = vmatmul.mubr.bf16.gmra.mrb[0].mxu0 %v588
        %v2090 = vpop.f32.mrb[0].mxu0
        %v2091 = vadd.f32 %v1978, %v2090
        %v2092 = vpop.f32.mrb[0].mxu0
        %v2093 = vadd.f32 %v1980, %v2092
        %v2094 = vpop.f32.mrb[0].mxu0
        %v2095 = vadd.f32 %v1982, %v2094
        %v2096 = vpop.f32.mrb[0].mxu0
        %v2097 = vadd.f32 %v1984, %v2096
        %2098 = vmatprep.mubr.bf16.mxu0 %v595
        %2099 = vmatmul.mubr.bf16.gmra.mrb[0].mxu0 %v594
        %v2100 = vpop.f32.mrb[0].mxu0
        %v2101 = vadd.f32 %v1988, %v2100
        %v2102 = vpop.f32.mrb[0].mxu0
        %v2103 = vadd.f32 %v1990, %v2102
        %v2104 = vpop.f32.mrb[0].mxu0
        %v2105 = vadd.f32 %v1992, %v2104
        %v2106 = vpop.f32.mrb[0].mxu0
        %v2107 = vadd.f32 %v1994, %v2106
        %2108 = vdwg.mxu0
        %2109 = vmatprep.subr.bf16.mxu0 %v1389
        %2110 = vmatpush1.bf16.msra.mxu0 %v1388
        %2111 = vmatprep.subr.bf16.mxu0 %v1393
        %2112 = vmatpush1.bf16.msra.mxu0 %v1392
        %2113 = vmatprep.subr.bf16.mxu0 %v1397
        %2114 = vmatpush1.bf16.msra.mxu0 %v1396
        %2115 = vmatprep.subr.bf16.mxu0 %v1401
        %2116 = vmatpush1.bf16.msra.mxu0 %v1400
        %2117 = vmatprep.subr.bf16.mxu0 %v1405
        %2118 = vmatpush1.bf16.msra.mxu0 %v1404
        %2119 = vmatprep.subr.bf16.mxu0 %v1409
        %2120 = vmatpush1.bf16.msra.mxu0 %v1408
        %2121 = vmatprep.subr.bf16.mxu0 %v1413
        %2122 = vmatpush1.bf16.msra.mxu0 %v1412
        %2123 = vmatprep.subr.bf16.mxu0 %v1417
        %2124 = vmatpush1.bf16.msra.mxu0 %v1416
        %2125 = vmatprep.subr.bf16.mxu0 %v1421
        %2126 = vmatpush1.bf16.msra.mxu0 %v1420
        %2127 = vmatprep.subr.bf16.mxu0 %v1425
        %2128 = vmatpush1.bf16.msra.mxu0 %v1424
        %2129 = vmatprep.subr.bf16.mxu0 %v1429
        %2130 = vmatpush1.bf16.msra.mxu0 %v1428
        %2131 = vmatprep.subr.bf16.mxu0 %v1433
        %2132 = vmatpush1.bf16.msra.mxu0 %v1432
        %2133 = vmatprep.subr.bf16.mxu0 %v1437
        %2134 = vmatpush1.bf16.msra.mxu0 %v1436
        %2135 = vmatprep.subr.bf16.mxu0 %v1441
        %2136 = vmatpush1.bf16.msra.mxu0 %v1440
        %2137 = vmatprep.subr.bf16.mxu0 %v1445
        %2138 = vmatpush1.bf16.msra.mxu0 %v1444
        %2139 = vmatprep.subr.bf16.mxu0 %v1449
        %2140 = vmatpush1.bf16.msra.mxu0 %v1448
        %2141 = vmatprep.mubr.bf16.mxu0 %v549
        %2142 = vmatmul.mubr.bf16.gmra.mrb[0].mxu0 %v548
        %v2143 = vpop.f32.mrb[0].mxu0
        %v2144 = vadd.f32 %v801, %v2143
        %v2145 = vpop.f32.mrb[0].mxu0
        %v2146 = vadd.f32 %v805, %v2145
        %v2147 = vpop.f32.mrb[0].mxu0
        %v2148 = vadd.f32 %v801, %v2147
        %v2149 = vpop.f32.mrb[0].mxu0
        %v2150 = vadd.f32 %v805, %v2149
        %2151 = vmatprep.mubr.bf16.mxu0 %v555
        %2152 = vmatmul.mubr.bf16.gmra.mrb[0].mxu0 %v554
        %v2153 = vpop.f32.mrb[0].mxu0
        %v2154 = vadd.f32 %v801, %v2153
        %v2155 = vpop.f32.mrb[0].mxu0
        %v2156 = vadd.f32 %v805, %v2155
        %v2157 = vpop.f32.mrb[0].mxu0
        %v2158 = vadd.f32 %v801, %v2157
        %v2159 = vpop.f32.mrb[0].mxu0
        %v2160 = vadd.f32 %v805, %v2159
        %2161 = vmatprep.mubr.bf16.mxu0 %v561
        %2162 = vmatmul.mubr.bf16.gmra.mrb[0].mxu0 %v560
        %v2163 = vpop.f32.mrb[0].mxu0
        %v2164 = vadd.f32 %v801, %v2163
        %v2165 = vpop.f32.mrb[0].mxu0
        %v2166 = vadd.f32 %v805, %v2165
        %v2167 = vpop.f32.mrb[0].mxu0
        %v2168 = vadd.f32 %v801, %v2167
        %v2169 = vpop.f32.mrb[0].mxu0
        %v2170 = vadd.f32 %v805, %v2169
        %2171 = vmatprep.mubr.bf16.mxu0 %v567
        %2172 = vmatmul.mubr.bf16.gmra.mrb[0].mxu0 %v566
        %v2173 = vpop.f32.mrb[0].mxu0
        %v2174 = vadd.f32 %v801, %v2173
        %v2175 = vpop.f32.mrb[0].mxu0
        %v2176 = vadd.f32 %v805, %v2175
        %v2177 = vpop.f32.mrb[0].mxu0
        %v2178 = vadd.f32 %v801, %v2177
        %v2179 = vpop.f32.mrb[0].mxu0
        %v2180 = vadd.f32 %v805, %v2179
        %2181 = vmatprep.mubr.bf16.mxu0 %v573
        %2182 = vmatmul.mubr.bf16.gmra.mrb[0].mxu0 %v572
        %v2183 = vpop.f32.mrb[0].mxu0
        %v2184 = vadd.f32 %v801, %v2183
        %v2185 = vpop.f32.mrb[0].mxu0
        %v2186 = vadd.f32 %v805, %v2185
        %v2187 = vpop.f32.mrb[0].mxu0
        %v2188 = vadd.f32 %v801, %v2187
        %v2189 = vpop.f32.mrb[0].mxu0
        %v2190 = vadd.f32 %v805, %v2189
        %2191 = vmatprep.mubr.bf16.mxu0 %v579
        %2192 = vmatmul.mubr.bf16.gmra.mrb[0].mxu0 %v578
        %v2193 = vpop.f32.mrb[0].mxu0
        %v2194 = vadd.f32 %v801, %v2193
        %v2195 = vpop.f32.mrb[0].mxu0
        %v2196 = vadd.f32 %v805, %v2195
        %v2197 = vpop.f32.mrb[0].mxu0
        %v2198 = vadd.f32 %v801, %v2197
        %v2199 = vpop.f32.mrb[0].mxu0
        %v2200 = vadd.f32 %v805, %v2199
        %2201 = vmatprep.mubr.bf16.mxu0 %v585
        %2202 = vmatmul.mubr.bf16.gmra.mrb[0].mxu0 %v584
        %v2203 = vpop.f32.mrb[0].mxu0
        %v2204 = vadd.f32 %v801, %v2203
        %v2205 = vpop.f32.mrb[0].mxu0
        %v2206 = vadd.f32 %v805, %v2205
        %v2207 = vpop.f32.mrb[0].mxu0
        %v2208 = vadd.f32 %v801, %v2207
        %v2209 = vpop.f32.mrb[0].mxu0
        %v2210 = vadd.f32 %v805, %v2209
        %2211 = vmatprep.mubr.bf16.mxu0 %v591
        %2212 = vmatmul.mubr.bf16.gmra.mrb[0].mxu0 %v590
        %v2213 = vpop.f32.mrb[0].mxu0
        %v2214 = vadd.f32 %v801, %v2213
        %v2215 = vpop.f32.mrb[0].mxu0
        %v2216 = vadd.f32 %v805, %v2215
        %v2217 = vpop.f32.mrb[0].mxu0
        %v2218 = vadd.f32 %v801, %v2217
        %v2219 = vpop.f32.mrb[0].mxu0
        %v2220 = vadd.f32 %v805, %v2219
        %2221 = vdwg.mxu0
        %2222 = vmatprep.subr.bf16.mxu0 %v1453
        %2223 = vmatpush1.bf16.msra.mxu0 %v1452
        %2224 = vmatprep.subr.bf16.mxu0 %v1457
        %2225 = vmatpush1.bf16.msra.mxu0 %v1456
        %2226 = vmatprep.subr.bf16.mxu0 %v1461
        %2227 = vmatpush1.bf16.msra.mxu0 %v1460
        %2228 = vmatprep.subr.bf16.mxu0 %v1465
        %2229 = vmatpush1.bf16.msra.mxu0 %v1464
        %2230 = vmatprep.subr.bf16.mxu0 %v1469
        %2231 = vmatpush1.bf16.msra.mxu0 %v1468
        %2232 = vmatprep.subr.bf16.mxu0 %v1473
        %2233 = vmatpush1.bf16.msra.mxu0 %v1472
        %2234 = vmatprep.subr.bf16.mxu0 %v1477
        %2235 = vmatpush1.bf16.msra.mxu0 %v1476
        %2236 = vmatprep.subr.bf16.mxu0 %v1481
        %2237 = vmatpush1.bf16.msra.mxu0 %v1480
        %2238 = vmatprep.subr.bf16.mxu0 %v1485
        %2239 = vmatpush1.bf16.msra.mxu0 %v1484
        %2240 = vmatprep.subr.bf16.mxu0 %v1489
        %2241 = vmatpush1.bf16.msra.mxu0 %v1488
        %2242 = vmatprep.subr.bf16.mxu0 %v1493
        %2243 = vmatpush1.bf16.msra.mxu0 %v1492
        %2244 = vmatprep.subr.bf16.mxu0 %v1497
        %2245 = vmatpush1.bf16.msra.mxu0 %v1496
        %2246 = vmatprep.subr.bf16.mxu0 %v1501
        %2247 = vmatpush1.bf16.msra.mxu0 %v1500
        %2248 = vmatprep.subr.bf16.mxu0 %v1505
        %2249 = vmatpush1.bf16.msra.mxu0 %v1504
        %2250 = vmatprep.subr.bf16.mxu0 %v1509
        %2251 = vmatpush1.bf16.msra.mxu0 %v1508
        %2252 = vmatprep.subr.bf16.mxu0 %v1513
        %2253 = vmatpush1.bf16.msra.mxu0 %v1512
        %2254 = vmatprep.mubr.bf16.mxu0 %v551
        %2255 = vmatmul.mubr.bf16.gmra.mrb[0].mxu0 %v550
        %v2256 = vpop.f32.mrb[0].mxu0
        %v2257 = vadd.f32 %v2144, %v2256
        %v2258 = vpop.f32.mrb[0].mxu0
        %v2259 = vadd.f32 %v2146, %v2258
        %v2260 = vpop.f32.mrb[0].mxu0
        %v2261 = vadd.f32 %v2148, %v2260
        %v2262 = vpop.f32.mrb[0].mxu0
        %v2263 = vadd.f32 %v2150, %v2262
        %2264 = vmatprep.mubr.bf16.mxu0 %v557
        %2265 = vmatmul.mubr.bf16.gmra.mrb[0].mxu0 %v556
        %v2266 = vpop.f32.mrb[0].mxu0
        %v2267 = vadd.f32 %v2154, %v2266
        %v2268 = vpop.f32.mrb[0].mxu0
        %v2269 = vadd.f32 %v2156, %v2268
        %v2270 = vpop.f32.mrb[0].mxu0
        %v2271 = vadd.f32 %v2158, %v2270
        %v2272 = vpop.f32.mrb[0].mxu0
        %v2273 = vadd.f32 %v2160, %v2272
        %2274 = vmatprep.mubr.bf16.mxu0 %v563
        %2275 = vmatmul.mubr.bf16.gmra.mrb[0].mxu0 %v562
        %v2276 = vpop.f32.mrb[0].mxu0
        %v2277 = vadd.f32 %v2164, %v2276
        %v2278 = vpop.f32.mrb[0].mxu0
        %v2279 = vadd.f32 %v2166, %v2278
        %v2280 = vpop.f32.mrb[0].mxu0
        %v2281 = vadd.f32 %v2168, %v2280
        %v2282 = vpop.f32.mrb[0].mxu0
        %v2283 = vadd.f32 %v2170, %v2282
        %2284 = vmatprep.mubr.bf16.mxu0 %v569
        %2285 = vmatmul.mubr.bf16.gmra.mrb[0].mxu0 %v568
        %v2286 = vpop.f32.mrb[0].mxu0
        %v2287 = vadd.f32 %v2174, %v2286
        %v2288 = vpop.f32.mrb[0].mxu0
        %v2289 = vadd.f32 %v2176, %v2288
        %v2290 = vpop.f32.mrb[0].mxu0
        %v2291 = vadd.f32 %v2178, %v2290
        %v2292 = vpop.f32.mrb[0].mxu0
        %v2293 = vadd.f32 %v2180, %v2292
        %2294 = vmatprep.mubr.bf16.mxu0 %v575
        %2295 = vmatmul.mubr.bf16.gmra.mrb[0].mxu0 %v574
        %v2296 = vpop.f32.mrb[0].mxu0
        %v2297 = vadd.f32 %v2184, %v2296
        %v2298 = vpop.f32.mrb[0].mxu0
        %v2299 = vadd.f32 %v2186, %v2298
        %v2300 = vpop.f32.mrb[0].mxu0
        %v2301 = vadd.f32 %v2188, %v2300
        %v2302 = vpop.f32.mrb[0].mxu0
        %v2303 = vadd.f32 %v2190, %v2302
        %2304 = vmatprep.mubr.bf16.mxu0 %v581
        %2305 = vmatmul.mubr.bf16.gmra.mrb[0].mxu0 %v580
        %v2306 = vpop.f32.mrb[0].mxu0
        %v2307 = vadd.f32 %v2194, %v2306
        %v2308 = vpop.f32.mrb[0].mxu0
        %v2309 = vadd.f32 %v2196, %v2308
        %v2310 = vpop.f32.mrb[0].mxu0
        %v2311 = vadd.f32 %v2198, %v2310
        %v2312 = vpop.f32.mrb[0].mxu0
        %v2313 = vadd.f32 %v2200, %v2312
        %2314 = vmatprep.mubr.bf16.mxu0 %v587
        %2315 = vmatmul.mubr.bf16.gmra.mrb[0].mxu0 %v586
        %v2316 = vpop.f32.mrb[0].mxu0
        %v2317 = vadd.f32 %v2204, %v2316
        %v2318 = vpop.f32.mrb[0].mxu0
        %v2319 = vadd.f32 %v2206, %v2318
        %v2320 = vpop.f32.mrb[0].mxu0
        %v2321 = vadd.f32 %v2208, %v2320
        %v2322 = vpop.f32.mrb[0].mxu0
        %v2323 = vadd.f32 %v2210, %v2322
        %2324 = vmatprep.mubr.bf16.mxu0 %v593
        %2325 = vmatmul.mubr.bf16.gmra.mrb[0].mxu0 %v592
        %v2326 = vpop.f32.mrb[0].mxu0
        %v2327 = vadd.f32 %v2214, %v2326
        %v2328 = vpop.f32.mrb[0].mxu0
        %v2329 = vadd.f32 %v2216, %v2328
        %v2330 = vpop.f32.mrb[0].mxu0
        %v2331 = vadd.f32 %v2218, %v2330
        %v2332 = vpop.f32.mrb[0].mxu0
        %v2333 = vadd.f32 %v2220, %v2332
        %2334 = vdwg.mxu0
        %2335 = vmatprep.subr.bf16.mxu0 %v1517
        %2336 = vmatpush1.bf16.msra.mxu0 %v1516
        %2337 = vmatprep.subr.bf16.mxu0 %v1521
        %2338 = vmatpush1.bf16.msra.mxu0 %v1520
        %2339 = vmatprep.subr.bf16.mxu0 %v1525
        %2340 = vmatpush1.bf16.msra.mxu0 %v1524
        %2341 = vmatprep.subr.bf16.mxu0 %v1529
        %2342 = vmatpush1.bf16.msra.mxu0 %v1528
        %2343 = vmatprep.subr.bf16.mxu0 %v1533
        %2344 = vmatpush1.bf16.msra.mxu0 %v1532
        %2345 = vmatprep.subr.bf16.mxu0 %v1537
        %2346 = vmatpush1.bf16.msra.mxu0 %v1536
        %2347 = vmatprep.subr.bf16.mxu0 %v1541
        %2348 = vmatpush1.bf16.msra.mxu0 %v1540
        %2349 = vmatprep.subr.bf16.mxu0 %v1545
        %2350 = vmatpush1.bf16.msra.mxu0 %v1544
        %2351 = vmatprep.subr.bf16.mxu0 %v1549
        %2352 = vmatpush1.bf16.msra.mxu0 %v1548
        %2353 = vmatprep.subr.bf16.mxu0 %v1553
        %2354 = vmatpush1.bf16.msra.mxu0 %v1552
        %2355 = vmatprep.subr.bf16.mxu0 %v1557
        %2356 = vmatpush1.bf16.msra.mxu0 %v1556
        %2357 = vmatprep.subr.bf16.mxu0 %v1561
        %2358 = vmatpush1.bf16.msra.mxu0 %v1560
        %2359 = vmatprep.subr.bf16.mxu0 %v1565
        %2360 = vmatpush1.bf16.msra.mxu0 %v1564
        %2361 = vmatprep.subr.bf16.mxu0 %v1569
        %2362 = vmatpush1.bf16.msra.mxu0 %v1568
        %2363 = vmatprep.subr.bf16.mxu0 %v1573
        %2364 = vmatpush1.bf16.msra.mxu0 %v1572
        %2365 = vmatprep.subr.bf16.mxu0 %v1577
        %2366 = vmatpush1.bf16.msra.mxu0 %v1576
        %2367 = vmatprep.mubr.bf16.mxu0 %v553
        %2368 = vmatmul.mubr.bf16.gmra.mrb[0].mxu0 %v552
        %v2369 = vpop.f32.mrb[0].mxu0
        %v2370 = vadd.f32 %v2257, %v2369
        %v2371 = vpop.f32.mrb[0].mxu0
        %v2372 = vadd.f32 %v2259, %v2371
        %v2373 = vpop.f32.mrb[0].mxu0
        %v2374 = vadd.f32 %v2261, %v2373
        %v2375 = vpop.f32.mrb[0].mxu0
        %v2376 = vadd.f32 %v2263, %v2375
        %2377 = vmatprep.mubr.bf16.mxu0 %v559
        %2378 = vmatmul.mubr.bf16.gmra.mrb[0].mxu0 %v558
        %v2379 = vpop.f32.mrb[0].mxu0
        %v2380 = vadd.f32 %v2267, %v2379
        %v2381 = vpop.f32.mrb[0].mxu0
        %v2382 = vadd.f32 %v2269, %v2381
        %v2383 = vpop.f32.mrb[0].mxu0
        %v2384 = vadd.f32 %v2271, %v2383
        %v2385 = vpop.f32.mrb[0].mxu0
        %v2386 = vadd.f32 %v2273, %v2385
        %2387 = vmatprep.mubr.bf16.mxu0 %v565
        %2388 = vmatmul.mubr.bf16.gmra.mrb[0].mxu0 %v564
        %v2389 = vpop.f32.mrb[0].mxu0
        %v2390 = vadd.f32 %v2277, %v2389
        %v2391 = vpop.f32.mrb[0].mxu0
        %v2392 = vadd.f32 %v2279, %v2391
        %v2393 = vpop.f32.mrb[0].mxu0
        %v2394 = vadd.f32 %v2281, %v2393
        %v2395 = vpop.f32.mrb[0].mxu0
        %v2396 = vadd.f32 %v2283, %v2395
        %2397 = vmatprep.mubr.bf16.mxu0 %v571
        %2398 = vmatmul.mubr.bf16.gmra.mrb[0].mxu0 %v570
        %v2399 = vpop.f32.mrb[0].mxu0
        %v2400 = vadd.f32 %v2287, %v2399
        %v2401 = vpop.f32.mrb[0].mxu0
        %v2402 = vadd.f32 %v2289, %v2401
        %v2403 = vpop.f32.mrb[0].mxu0
        %v2404 = vadd.f32 %v2291, %v2403
        %v2405 = vpop.f32.mrb[0].mxu0
        %v2406 = vadd.f32 %v2293, %v2405
        %2407 = vmatprep.mubr.bf16.mxu0 %v577
        %2408 = vmatmul.mubr.bf16.gmra.mrb[0].mxu0 %v576
        %v2409 = vpop.f32.mrb[0].mxu0
        %v2410 = vadd.f32 %v2297, %v2409
        %v2411 = vpop.f32.mrb[0].mxu0
        %v2412 = vadd.f32 %v2299, %v2411
        %v2413 = vpop.f32.mrb[0].mxu0
        %v2414 = vadd.f32 %v2301, %v2413
        %v2415 = vpop.f32.mrb[0].mxu0
        %v2416 = vadd.f32 %v2303, %v2415
        %2417 = vmatprep.mubr.bf16.mxu0 %v583
        %2418 = vmatmul.mubr.bf16.gmra.mrb[0].mxu0 %v582
        %v2419 = vpop.f32.mrb[0].mxu0
        %v2420 = vadd.f32 %v2307, %v2419
        %v2421 = vpop.f32.mrb[0].mxu0
        %v2422 = vadd.f32 %v2309, %v2421
        %v2423 = vpop.f32.mrb[0].mxu0
        %v2424 = vadd.f32 %v2311, %v2423
        %v2425 = vpop.f32.mrb[0].mxu0
        %v2426 = vadd.f32 %v2313, %v2425
        %2427 = vmatprep.mubr.bf16.mxu0 %v589
        %2428 = vmatmul.mubr.bf16.gmra.mrb[0].mxu0 %v588
        %v2429 = vpop.f32.mrb[0].mxu0
        %v2430 = vadd.f32 %v2317, %v2429
        %v2431 = vpop.f32.mrb[0].mxu0
        %v2432 = vadd.f32 %v2319, %v2431
        %v2433 = vpop.f32.mrb[0].mxu0
        %v2434 = vadd.f32 %v2321, %v2433
        %v2435 = vpop.f32.mrb[0].mxu0
        %v2436 = vadd.f32 %v2323, %v2435
        %2437 = vmatprep.mubr.bf16.mxu0 %v595
        %2438 = vmatmul.mubr.bf16.gmra.mrb[0].mxu0 %v594
        %v2439 = vpop.f32.mrb[0].mxu0
        %v2440 = vadd.f32 %v2327, %v2439
        %v2441 = vpop.f32.mrb[0].mxu0
        %v2442 = vadd.f32 %v2329, %v2441
        %v2443 = vpop.f32.mrb[0].mxu0
        %v2444 = vadd.f32 %v2331, %v2443
        %v2445 = vpop.f32.mrb[0].mxu0
        %v2446 = vadd.f32 %v2333, %v2445
        %2447 = vdwg.mxu0
        %v2448 = vmax.f32 %v2031, 0.0
        %v2449 = vmax.f32 %v2033, 0.0
        %v2450 = vmax.f32 %v2370, 0.0
        %v2451 = vmax.f32 %v2372, 0.0
        %v2452 = vmax.f32 %v2035, 0.0
        %v2453 = vmax.f32 %v2037, 0.0
        %v2454 = vmax.f32 %v2374, 0.0
        %v2455 = vmax.f32 %v2376, 0.0
        %v2456 = vmax.f32 %v2041, 0.0
        %v2457 = vmax.f32 %v2043, 0.0
        %v2458 = vmax.f32 %v2380, 0.0
        %v2459 = vmax.f32 %v2382, 0.0
        %v2460 = vmax.f32 %v2045, 0.0
        %v2461 = vmax.f32 %v2047, 0.0
        %v2462 = vmax.f32 %v2384, 0.0
        %v2463 = vmax.f32 %v2386, 0.0
        %v2464 = vmax.f32 %v2051, 0.0
        %v2465 = vmax.f32 %v2053, 0.0
        %v2466 = vmax.f32 %v2390, 0.0
        %v2467 = vmax.f32 %v2392, 0.0
        %v2468 = vmax.f32 %v2055, 0.0
        %v2469 = vmax.f32 %v2057, 0.0
        %v2470 = vmax.f32 %v2394, 0.0
        %v2471 = vmax.f32 %v2396, 0.0
        %v2472 = vmax.f32 %v2061, 0.0
        %v2473 = vmax.f32 %v2063, 0.0
        %v2474 = vmax.f32 %v2400, 0.0
        %v2475 = vmax.f32 %v2402, 0.0
        %v2476 = vmax.f32 %v2065, 0.0
        %v2477 = vmax.f32 %v2067, 0.0
        %v2478 = vmax.f32 %v2404, 0.0
        %v2479 = vmax.f32 %v2406, 0.0
        %v2480 = vmax.f32 %v2071, 0.0
        %v2481 = vmax.f32 %v2073, 0.0
        %v2482 = vmax.f32 %v2410, 0.0
        %v2483 = vmax.f32 %v2412, 0.0
        %v2484 = vmax.f32 %v2075, 0.0
        %v2485 = vmax.f32 %v2077, 0.0
        %v2486 = vmax.f32 %v2414, 0.0
        %v2487 = vmax.f32 %v2416, 0.0
        %v2488 = vmax.f32 %v2081, 0.0
        %v2489 = vmax.f32 %v2083, 0.0
        %v2490 = vmax.f32 %v2420, 0.0
        %v2491 = vmax.f32 %v2422, 0.0
        %v2492 = vmax.f32 %v2085, 0.0
        %v2493 = vmax.f32 %v2087, 0.0
        %v2494 = vmax.f32 %v2424, 0.0
        %v2495 = vmax.f32 %v2426, 0.0
        %v2496 = vmax.f32 %v2091, 0.0
        %v2497 = vmax.f32 %v2093, 0.0
        %v2498 = vmax.f32 %v2430, 0.0
        %v2499 = vmax.f32 %v2432, 0.0
        %v2500 = vmax.f32 %v2095, 0.0
        %v2501 = vmax.f32 %v2097, 0.0
        %v2502 = vmax.f32 %v2434, 0.0
        %v2503 = vmax.f32 %v2436, 0.0
        %v2504 = vmax.f32 %v2101, 0.0
        %v2505 = vmax.f32 %v2103, 0.0
        %v2506 = vmax.f32 %v2440, 0.0
        %v2507 = vmax.f32 %v2442, 0.0
        %v2508 = vmax.f32 %v2105, 0.0
        %v2509 = vmax.f32 %v2107, 0.0
        %v2510 = vmax.f32 %v2444, 0.0
        %v2511 = vmax.f32 %v2446, 0.0
        %v2512 = vpack.c.bf16 %v2452, %v2448
        %v2513 = vpack.c.bf16 %v2453, %v2449
        %v2514 = vpack.c.bf16 %v2454, %v2450
        %v2515 = vpack.c.bf16 %v2455, %v2451
        %v2516 = vpack.c.bf16 %v2460, %v2456
        %v2517 = vpack.c.bf16 %v2461, %v2457
        %v2518 = vpack.c.bf16 %v2462, %v2458
        %v2519 = vpack.c.bf16 %v2463, %v2459
        %v2520 = vpack.c.bf16 %v2468, %v2464
        %v2521 = vpack.c.bf16 %v2469, %v2465
        %v2522 = vpack.c.bf16 %v2470, %v2466
        %v2523 = vpack.c.bf16 %v2471, %v2467
        %v2524 = vpack.c.bf16 %v2476, %v2472
        %v2525 = vpack.c.bf16 %v2477, %v2473
        %v2526 = vpack.c.bf16 %v2478, %v2474
        %v2527 = vpack.c.bf16 %v2479, %v2475
        %v2528 = vpack.c.bf16 %v2484, %v2480
        %v2529 = vpack.c.bf16 %v2485, %v2481
        %v2530 = vpack.c.bf16 %v2486, %v2482
        %v2531 = vpack.c.bf16 %v2487, %v2483
        %v2532 = vpack.c.bf16 %v2492, %v2488
        %v2533 = vpack.c.bf16 %v2493, %v2489
        %v2534 = vpack.c.bf16 %v2494, %v2490
        %v2535 = vpack.c.bf16 %v2495, %v2491
        %v2536 = vpack.c.bf16 %v2500, %v2496
        %v2537 = vpack.c.bf16 %v2501, %v2497
        %v2538 = vpack.c.bf16 %v2502, %v2498
        %v2539 = vpack.c.bf16 %v2503, %v2499
        %v2540 = vpack.c.bf16 %v2508, %v2504
        %v2541 = vpack.c.bf16 %v2509, %v2505
        %v2542 = vpack.c.bf16 %v2510, %v2506
        %v2543 = vpack.c.bf16 %v2511, %v2507
        %v2544 = vld [vmem:[#allocation7] sm:$0xff]
        %v2545 = vld [vmem:[#allocation7 + $0x8] sm:$0xff]
        %v2546 = vld [vmem:[#allocation7 + $0x10] sm:$0xff]
        %v2547 = vld [vmem:[#allocation7 + $0x18] sm:$0xff]
        %v2548 = vld [vmem:[#allocation7 + $0x20] sm:$0xff]
        %v2549 = vld [vmem:[#allocation7 + $0x28] sm:$0xff]
        %v2550 = vld [vmem:[#allocation7 + $0x30] sm:$0xff]
        %v2551 = vld [vmem:[#allocation7 + $0x38] sm:$0xff]
        %v2552 = vld [vmem:[#allocation7 + $0x40] sm:$0xff]
        %v2553 = vld [vmem:[#allocation7 + $0x48] sm:$0xff]
        %v2554 = vld [vmem:[#allocation7 + $0x50] sm:$0xff]
        %v2555 = vld [vmem:[#allocation7 + $0x58] sm:$0xff]
        %v2556 = vld [vmem:[#allocation7 + $0x60] sm:$0xff]
        %v2557 = vld [vmem:[#allocation7 + $0x68] sm:$0xff]
        %v2558 = vld [vmem:[#allocation7 + $0x70] sm:$0xff]
        %v2559 = vld [vmem:[#allocation7 + $0x78] sm:$0xff]
        %v2560 = vld [vmem:[#allocation7 + $0x80] sm:$0xff]
        %v2561 = vld [vmem:[#allocation7 + $0x88] sm:$0xff]
        %v2562 = vld [vmem:[#allocation7 + $0x90] sm:$0xff]
        %v2563 = vld [vmem:[#allocation7 + $0x98] sm:$0xff]
        %v2564 = vld [vmem:[#allocation7 + $0xa0] sm:$0xff]
        %v2565 = vld [vmem:[#allocation7 + $0xa8] sm:$0xff]
        %v2566 = vld [vmem:[#allocation7 + $0xb0] sm:$0xff]
        %v2567 = vld [vmem:[#allocation7 + $0xb8] sm:$0xff]
        %v2568 = vld [vmem:[#allocation7 + $0xc0] sm:$0xff]
        %v2569 = vld [vmem:[#allocation7 + $0xc8] sm:$0xff]
        %v2570 = vld [vmem:[#allocation7 + $0xd0] sm:$0xff]
        %v2571 = vld [vmem:[#allocation7 + $0xd8] sm:$0xff]
        %v2572 = vld [vmem:[#allocation7 + $0xe0] sm:$0xff]
        %v2573 = vld [vmem:[#allocation7 + $0xe8] sm:$0xff]
        %v2574 = vld [vmem:[#allocation7 + $0xf0] sm:$0xff]
        %v2575 = vld [vmem:[#allocation7 + $0xf8] sm:$0xff]
        %v2576 = vld [vmem:[#allocation7 + $0x100] sm:$0xff]
        %v2577 = vld [vmem:[#allocation7 + $0x108] sm:$0xff]
        %v2578 = vld [vmem:[#allocation7 + $0x110] sm:$0xff]
        %v2579 = vld [vmem:[#allocation7 + $0x118] sm:$0xff]
        %v2580 = vld [vmem:[#allocation7 + $0x120] sm:$0xff]
        %v2581 = vld [vmem:[#allocation7 + $0x128] sm:$0xff]
        %v2582 = vld [vmem:[#allocation7 + $0x130] sm:$0xff]
        %v2583 = vld [vmem:[#allocation7 + $0x138] sm:$0xff]
        %v2584 = vld [vmem:[#allocation7 + $0x140] sm:$0xff]
        %v2585 = vld [vmem:[#allocation7 + $0x148] sm:$0xff]
        %v2586 = vld [vmem:[#allocation7 + $0x150] sm:$0xff]
        %v2587 = vld [vmem:[#allocation7 + $0x158] sm:$0xff]
        %v2588 = vld [vmem:[#allocation7 + $0x160] sm:$0xff]
        %v2589 = vld [vmem:[#allocation7 + $0x168] sm:$0xff]
        %v2590 = vld [vmem:[#allocation7 + $0x170] sm:$0xff]
        %v2591 = vld [vmem:[#allocation7 + $0x178] sm:$0xff]
        %v2592 = vld [vmem:[#allocation7 + $0x180] sm:$0xff]
        %v2593 = vld [vmem:[#allocation7 + $0x188] sm:$0xff]
        %v2594 = vld [vmem:[#allocation7 + $0x190] sm:$0xff]
        %v2595 = vld [vmem:[#allocation7 + $0x198] sm:$0xff]
        %v2596 = vld [vmem:[#allocation7 + $0x1a0] sm:$0xff]
        %v2597 = vld [vmem:[#allocation7 + $0x1a8] sm:$0xff]
        %v2598 = vld [vmem:[#allocation7 + $0x1b0] sm:$0xff]
        %v2599 = vld [vmem:[#allocation7 + $0x1b8] sm:$0xff]
        %v2600 = vld [vmem:[#allocation7 + $0x1c0] sm:$0xff]
        %v2601 = vld [vmem:[#allocation7 + $0x1c8] sm:$0xff]
        %v2602 = vld [vmem:[#allocation7 + $0x1d0] sm:$0xff]
        %v2603 = vld [vmem:[#allocation7 + $0x1d8] sm:$0xff]
        %v2604 = vld [vmem:[#allocation7 + $0x1e0] sm:$0xff]
        %v2605 = vld [vmem:[#allocation7 + $0x1e8] sm:$0xff]
        %v2606 = vld [vmem:[#allocation7 + $0x1f0] sm:$0xff]
        %v2607 = vld [vmem:[#allocation7 + $0x1f8] sm:$0xff]
        %v2608 = vld [vmem:[%s4] sm:$0x3]
        %v2610 = vlaneseq
        %v2611 = vshrl.u32 %v2610, 7
        %v2612 = vsub.s32 0, %v2611
        %v2613 = vrot.slane %v2608, %v2612
        %v2614 = vlaneseq
        %v2615 = vshrl.u32 %v2614, 7
        %v2616 = vsub.s32 1, %v2615
        %v2617 = vrot.slane %v2608, %v2616
        %v2684 = vunpack.c.l.b16 %v2544
        %v2685 = vunpack.c.h.b16 %v2544
        %v2686 = vunpack.c.l.b16 %v2545
        %v2687 = vunpack.c.h.b16 %v2545
        %v2688 = vunpack.c.l.b16 %v2546
        %v2689 = vunpack.c.h.b16 %v2546
        %v2690 = vunpack.c.l.b16 %v2547
        %v2691 = vunpack.c.h.b16 %v2547
        %v2692 = vunpack.c.l.b16 %v2548
        %v2693 = vunpack.c.h.b16 %v2548
        %v2694 = vunpack.c.l.b16 %v2549
        %v2695 = vunpack.c.h.b16 %v2549
        %v2696 = vunpack.c.l.b16 %v2550
        %v2697 = vunpack.c.h.b16 %v2550
        %v2698 = vunpack.c.l.b16 %v2551
        %v2699 = vunpack.c.h.b16 %v2551
        %v2700 = vunpack.c.l.b16 %v2552
        %v2701 = vunpack.c.h.b16 %v2552
        %v2702 = vunpack.c.l.b16 %v2553
        %v2703 = vunpack.c.h.b16 %v2553
        %v2704 = vunpack.c.l.b16 %v2554
        %v2705 = vunpack.c.h.b16 %v2554
        %v2706 = vunpack.c.l.b16 %v2555
        %v2707 = vunpack.c.h.b16 %v2555
        %v2708 = vunpack.c.l.b16 %v2556
        %v2709 = vunpack.c.h.b16 %v2556
        %v2710 = vunpack.c.l.b16 %v2557
        %v2711 = vunpack.c.h.b16 %v2557
        %v2712 = vunpack.c.l.b16 %v2558
        %v2713 = vunpack.c.h.b16 %v2558
        %v2714 = vunpack.c.l.b16 %v2559
        %v2715 = vunpack.c.h.b16 %v2559
        %v2716 = vunpack.c.l.b16 %v2560
        %v2717 = vunpack.c.h.b16 %v2560
        %v2718 = vunpack.c.l.b16 %v2561
        %v2719 = vunpack.c.h.b16 %v2561
        %v2720 = vunpack.c.l.b16 %v2562
        %v2721 = vunpack.c.h.b16 %v2562
        %v2722 = vunpack.c.l.b16 %v2563
        %v2723 = vunpack.c.h.b16 %v2563
        %v2724 = vunpack.c.l.b16 %v2564
        %v2725 = vunpack.c.h.b16 %v2564
        %v2726 = vunpack.c.l.b16 %v2565
        %v2727 = vunpack.c.h.b16 %v2565
        %v2728 = vunpack.c.l.b16 %v2566
        %v2729 = vunpack.c.h.b16 %v2566
        %v2730 = vunpack.c.l.b16 %v2567
        %v2731 = vunpack.c.h.b16 %v2567
        %v2732 = vunpack.c.l.b16 %v2568
        %v2733 = vunpack.c.h.b16 %v2568
        %v2734 = vunpack.c.l.b16 %v2569
        %v2735 = vunpack.c.h.b16 %v2569
        %v2736 = vunpack.c.l.b16 %v2570
        %v2737 = vunpack.c.h.b16 %v2570
        %v2738 = vunpack.c.l.b16 %v2571
        %v2739 = vunpack.c.h.b16 %v2571
        %v2740 = vunpack.c.l.b16 %v2572
        %v2741 = vunpack.c.h.b16 %v2572
        %v2742 = vunpack.c.l.b16 %v2573
        %v2743 = vunpack.c.h.b16 %v2573
        %v2744 = vunpack.c.l.b16 %v2574
        %v2745 = vunpack.c.h.b16 %v2574
        %v2746 = vunpack.c.l.b16 %v2575
        %v2747 = vunpack.c.h.b16 %v2575
        %v2748 = vunpack.c.l.b16 %v2576
        %v2749 = vunpack.c.h.b16 %v2576
        %v2750 = vunpack.c.l.b16 %v2577
        %v2751 = vunpack.c.h.b16 %v2577
        %v2752 = vunpack.c.l.b16 %v2578
        %v2753 = vunpack.c.h.b16 %v2578
        %v2754 = vunpack.c.l.b16 %v2579
        %v2755 = vunpack.c.h.b16 %v2579
        %v2756 = vunpack.c.l.b16 %v2580
        %v2757 = vunpack.c.h.b16 %v2580
        %v2758 = vunpack.c.l.b16 %v2581
        %v2759 = vunpack.c.h.b16 %v2581
        %v2760 = vunpack.c.l.b16 %v2582
        %v2761 = vunpack.c.h.b16 %v2582
        %v2762 = vunpack.c.l.b16 %v2583
        %v2763 = vunpack.c.h.b16 %v2583
        %v2764 = vunpack.c.l.b16 %v2584
        %v2765 = vunpack.c.h.b16 %v2584
        %v2766 = vunpack.c.l.b16 %v2585
        %v2767 = vunpack.c.h.b16 %v2585
        %v2768 = vunpack.c.l.b16 %v2586
        %v2769 = vunpack.c.h.b16 %v2586
        %v2770 = vunpack.c.l.b16 %v2587
        %v2771 = vunpack.c.h.b16 %v2587
        %v2772 = vunpack.c.l.b16 %v2588
        %v2773 = vunpack.c.h.b16 %v2588
        %v2774 = vunpack.c.l.b16 %v2589
        %v2775 = vunpack.c.h.b16 %v2589
        %v2776 = vunpack.c.l.b16 %v2590
        %v2777 = vunpack.c.h.b16 %v2590
        %v2778 = vunpack.c.l.b16 %v2591
        %v2779 = vunpack.c.h.b16 %v2591
        %v2780 = vunpack.c.l.b16 %v2592
        %v2781 = vunpack.c.h.b16 %v2592
        %v2782 = vunpack.c.l.b16 %v2593
        %v2783 = vunpack.c.h.b16 %v2593
        %v2784 = vunpack.c.l.b16 %v2594
        %v2785 = vunpack.c.h.b16 %v2594
        %v2786 = vunpack.c.l.b16 %v2595
        %v2787 = vunpack.c.h.b16 %v2595
        %v2788 = vunpack.c.l.b16 %v2596
        %v2789 = vunpack.c.h.b16 %v2596
        %v2790 = vunpack.c.l.b16 %v2597
        %v2791 = vunpack.c.h.b16 %v2597
        %v2792 = vunpack.c.l.b16 %v2598
        %v2793 = vunpack.c.h.b16 %v2598
        %v2794 = vunpack.c.l.b16 %v2599
        %v2795 = vunpack.c.h.b16 %v2599
        %v2796 = vunpack.c.l.b16 %v2600
        %v2797 = vunpack.c.h.b16 %v2600
        %v2798 = vunpack.c.l.b16 %v2601
        %v2799 = vunpack.c.h.b16 %v2601
        %v2800 = vunpack.c.l.b16 %v2602
        %v2801 = vunpack.c.h.b16 %v2602
        %v2802 = vunpack.c.l.b16 %v2603
        %v2803 = vunpack.c.h.b16 %v2603
        %v2804 = vunpack.c.l.b16 %v2604
        %v2805 = vunpack.c.h.b16 %v2604
        %v2806 = vunpack.c.l.b16 %v2605
        %v2807 = vunpack.c.h.b16 %v2605
        %v2808 = vunpack.c.l.b16 %v2606
        %v2809 = vunpack.c.h.b16 %v2606
        %v2810 = vunpack.c.l.b16 %v2607
        %v2811 = vunpack.c.h.b16 %v2607
        %v2812 = vpack.c.b16 %v2686, %v2684
        %v2813 = vpack.c.b16 %v2687, %v2685
        %v2814 = vpack.c.b16 %v2690, %v2688
        %v2815 = vpack.c.b16 %v2691, %v2689
        %v2816 = vpack.c.b16 %v2694, %v2692
        %v2817 = vpack.c.b16 %v2695, %v2693
        %v2818 = vpack.c.b16 %v2698, %v2696
        %v2819 = vpack.c.b16 %v2699, %v2697
        %v2820 = vpack.c.b16 %v2702, %v2700
        %v2821 = vpack.c.b16 %v2703, %v2701
        %v2822 = vpack.c.b16 %v2706, %v2704
        %v2823 = vpack.c.b16 %v2707, %v2705
        %v2824 = vpack.c.b16 %v2710, %v2708
        %v2825 = vpack.c.b16 %v2711, %v2709
        %v2826 = vpack.c.b16 %v2714, %v2712
        %v2827 = vpack.c.b16 %v2715, %v2713
        %v2828 = vpack.c.b16 %v2718, %v2716
        %v2829 = vpack.c.b16 %v2719, %v2717
        %v2830 = vpack.c.b16 %v2722, %v2720
        %v2831 = vpack.c.b16 %v2723, %v2721
        %v2832 = vpack.c.b16 %v2726, %v2724
        %v2833 = vpack.c.b16 %v2727, %v2725
        %v2834 = vpack.c.b16 %v2730, %v2728
        %v2835 = vpack.c.b16 %v2731, %v2729
        %v2836 = vpack.c.b16 %v2734, %v2732
        %v2837 = vpack.c.b16 %v2735, %v2733
        %v2838 = vpack.c.b16 %v2738, %v2736
        %v2839 = vpack.c.b16 %v2739, %v2737
        %v2840 = vpack.c.b16 %v2742, %v2740
        %v2841 = vpack.c.b16 %v2743, %v2741
        %v2842 = vpack.c.b16 %v2746, %v2744
        %v2843 = vpack.c.b16 %v2747, %v2745
        %v2844 = vpack.c.b16 %v2750, %v2748
        %v2845 = vpack.c.b16 %v2751, %v2749
        %v2846 = vpack.c.b16 %v2754, %v2752
        %v2847 = vpack.c.b16 %v2755, %v2753
        %v2848 = vpack.c.b16 %v2758, %v2756
        %v2849 = vpack.c.b16 %v2759, %v2757
        %v2850 = vpack.c.b16 %v2762, %v2760
        %v2851 = vpack.c.b16 %v2763, %v2761
        %v2852 = vpack.c.b16 %v2766, %v2764
        %v2853 = vpack.c.b16 %v2767, %v2765
        %v2854 = vpack.c.b16 %v2770, %v2768
        %v2855 = vpack.c.b16 %v2771, %v2769
        %v2856 = vpack.c.b16 %v2774, %v2772
        %v2857 = vpack.c.b16 %v2775, %v2773
        %v2858 = vpack.c.b16 %v2778, %v2776
        %v2859 = vpack.c.b16 %v2779, %v2777
        %v2860 = vpack.c.b16 %v2782, %v2780
        %v2861 = vpack.c.b16 %v2783, %v2781
        %v2862 = vpack.c.b16 %v2786, %v2784
        %v2863 = vpack.c.b16 %v2787, %v2785
        %v2864 = vpack.c.b16 %v2790, %v2788
        %v2865 = vpack.c.b16 %v2791, %v2789
        %v2866 = vpack.c.b16 %v2794, %v2792
        %v2867 = vpack.c.b16 %v2795, %v2793
        %v2868 = vpack.c.b16 %v2798, %v2796
        %v2869 = vpack.c.b16 %v2799, %v2797
        %v2870 = vpack.c.b16 %v2802, %v2800
        %v2871 = vpack.c.b16 %v2803, %v2801
        %v2872 = vpack.c.b16 %v2806, %v2804
        %v2873 = vpack.c.b16 %v2807, %v2805
        %v2874 = vpack.c.b16 %v2810, %v2808
        %v2875 = vpack.c.b16 %v2811, %v2809
        %2940 = vmatprep.subr.bf16.mxu0 %v2813
        %2941 = vmatpush1.bf16.msra.mxu0 %v2812
        %2942 = vmatprep.subr.bf16.mxu0 %v2815
        %2943 = vmatpush1.bf16.msra.mxu0 %v2814
        %2944 = vmatprep.subr.bf16.mxu0 %v2817
        %2945 = vmatpush1.bf16.msra.mxu0 %v2816
        %2946 = vmatprep.subr.bf16.mxu0 %v2819
        %2947 = vmatpush1.bf16.msra.mxu0 %v2818
        %2948 = vmatprep.subr.bf16.mxu0 %v2821
        %2949 = vmatpush1.bf16.msra.mxu0 %v2820
        %2950 = vmatprep.subr.bf16.mxu0 %v2823
        %2951 = vmatpush1.bf16.msra.mxu0 %v2822
        %2952 = vmatprep.subr.bf16.mxu0 %v2825
        %2953 = vmatpush1.bf16.msra.mxu0 %v2824
        %2954 = vmatprep.subr.bf16.mxu0 %v2827
        %2955 = vmatpush1.bf16.msra.mxu0 %v2826
        %2956 = vmatprep.subr.bf16.mxu0 %v2829
        %2957 = vmatpush1.bf16.msra.mxu0 %v2828
        %2958 = vmatprep.subr.bf16.mxu0 %v2831
        %2959 = vmatpush1.bf16.msra.mxu0 %v2830
        %2960 = vmatprep.subr.bf16.mxu0 %v2833
        %2961 = vmatpush1.bf16.msra.mxu0 %v2832
        %2962 = vmatprep.subr.bf16.mxu0 %v2835
        %2963 = vmatpush1.bf16.msra.mxu0 %v2834
        %2964 = vmatprep.subr.bf16.mxu0 %v2837
        %2965 = vmatpush1.bf16.msra.mxu0 %v2836
        %2966 = vmatprep.subr.bf16.mxu0 %v2839
        %2967 = vmatpush1.bf16.msra.mxu0 %v2838
        %2968 = vmatprep.subr.bf16.mxu0 %v2841
        %2969 = vmatpush1.bf16.msra.mxu0 %v2840
        %2970 = vmatprep.subr.bf16.mxu0 %v2843
        %2971 = vmatpush1.bf16.msra.mxu0 %v2842
        %2972 = vmatprep.mubr.bf16.mxu0 %v2513
        %2973 = vmatmul.mubr.bf16.gmra.mrb[0].mxu0 %v2512
        %v2974 = vpop.f32.mrb[0].mxu0
        %v2975 = vadd.f32 %v2613, %v2974
        %v2976 = vpop.f32.mrb[0].mxu0
        %v2977 = vadd.f32 %v2617, %v2976
        %v2978 = vpop.f32.mrb[0].mxu0
        %v2979 = vadd.f32 %v2613, %v2978
        %v2980 = vpop.f32.mrb[0].mxu0
        %v2981 = vadd.f32 %v2617, %v2980
        %2982 = vmatprep.mubr.bf16.mxu0 %v2517
        %2983 = vmatmul.mubr.bf16.gmra.mrb[0].mxu0 %v2516
        %v2984 = vpop.f32.mrb[0].mxu0
        %v2985 = vadd.f32 %v2613, %v2984
        %v2986 = vpop.f32.mrb[0].mxu0
        %v2987 = vadd.f32 %v2617, %v2986
        %v2988 = vpop.f32.mrb[0].mxu0
        %v2989 = vadd.f32 %v2613, %v2988
        %v2990 = vpop.f32.mrb[0].mxu0
        %v2991 = vadd.f32 %v2617, %v2990
        %2992 = vmatprep.mubr.bf16.mxu0 %v2521
        %2993 = vmatmul.mubr.bf16.gmra.mrb[0].mxu0 %v2520
        %v2994 = vpop.f32.mrb[0].mxu0
        %v2995 = vadd.f32 %v2613, %v2994
        %v2996 = vpop.f32.mrb[0].mxu0
        %v2997 = vadd.f32 %v2617, %v2996
        %v2998 = vpop.f32.mrb[0].mxu0
        %v2999 = vadd.f32 %v2613, %v2998
        %v3000 = vpop.f32.mrb[0].mxu0
        %v3001 = vadd.f32 %v2617, %v3000
        %3002 = vmatprep.mubr.bf16.mxu0 %v2525
        %3003 = vmatmul.mubr.bf16.gmra.mrb[0].mxu0 %v2524
        %v3004 = vpop.f32.mrb[0].mxu0
        %v3005 = vadd.f32 %v2613, %v3004
        %v3006 = vpop.f32.mrb[0].mxu0
        %v3007 = vadd.f32 %v2617, %v3006
        %v3008 = vpop.f32.mrb[0].mxu0
        %v3009 = vadd.f32 %v2613, %v3008
        %v3010 = vpop.f32.mrb[0].mxu0
        %v3011 = vadd.f32 %v2617, %v3010
        %3012 = vmatprep.mubr.bf16.mxu0 %v2529
        %3013 = vmatmul.mubr.bf16.gmra.mrb[0].mxu0 %v2528
        %v3014 = vpop.f32.mrb[0].mxu0
        %v3015 = vadd.f32 %v2613, %v3014
        %v3016 = vpop.f32.mrb[0].mxu0
        %v3017 = vadd.f32 %v2617, %v3016
        %v3018 = vpop.f32.mrb[0].mxu0
        %v3019 = vadd.f32 %v2613, %v3018
        %v3020 = vpop.f32.mrb[0].mxu0
        %v3021 = vadd.f32 %v2617, %v3020
        %3022 = vmatprep.mubr.bf16.mxu0 %v2533
        %3023 = vmatmul.mubr.bf16.gmra.mrb[0].mxu0 %v2532
        %v3024 = vpop.f32.mrb[0].mxu0
        %v3025 = vadd.f32 %v2613, %v3024
        %v3026 = vpop.f32.mrb[0].mxu0
        %v3027 = vadd.f32 %v2617, %v3026
        %v3028 = vpop.f32.mrb[0].mxu0
        %v3029 = vadd.f32 %v2613, %v3028
        %v3030 = vpop.f32.mrb[0].mxu0
        %v3031 = vadd.f32 %v2617, %v3030
        %3032 = vmatprep.mubr.bf16.mxu0 %v2537
        %3033 = vmatmul.mubr.bf16.gmra.mrb[0].mxu0 %v2536
        %v3034 = vpop.f32.mrb[0].mxu0
        %v3035 = vadd.f32 %v2613, %v3034
        %v3036 = vpop.f32.mrb[0].mxu0
        %v3037 = vadd.f32 %v2617, %v3036
        %v3038 = vpop.f32.mrb[0].mxu0
        %v3039 = vadd.f32 %v2613, %v3038
        %v3040 = vpop.f32.mrb[0].mxu0
        %v3041 = vadd.f32 %v2617, %v3040
        %3042 = vmatprep.mubr.bf16.mxu0 %v2541
        %3043 = vmatmul.mubr.bf16.gmra.mrb[0].mxu0 %v2540
        %v3044 = vpop.f32.mrb[0].mxu0
        %v3045 = vadd.f32 %v2613, %v3044
        %v3046 = vpop.f32.mrb[0].mxu0
        %v3047 = vadd.f32 %v2617, %v3046
        %v3048 = vpop.f32.mrb[0].mxu0
        %v3049 = vadd.f32 %v2613, %v3048
        %v3050 = vpop.f32.mrb[0].mxu0
        %v3051 = vadd.f32 %v2617, %v3050
        %3052 = vdwg.mxu0
        %3053 = vmatprep.subr.bf16.mxu0 %v2845
        %3054 = vmatpush1.bf16.msra.mxu0 %v2844
        %3055 = vmatprep.subr.bf16.mxu0 %v2847
        %3056 = vmatpush1.bf16.msra.mxu0 %v2846
        %3057 = vmatprep.subr.bf16.mxu0 %v2849
        %3058 = vmatpush1.bf16.msra.mxu0 %v2848
        %3059 = vmatprep.subr.bf16.mxu0 %v2851
        %3060 = vmatpush1.bf16.msra.mxu0 %v2850
        %3061 = vmatprep.subr.bf16.mxu0 %v2853
        %3062 = vmatpush1.bf16.msra.mxu0 %v2852
        %3063 = vmatprep.subr.bf16.mxu0 %v2855
        %3064 = vmatpush1.bf16.msra.mxu0 %v2854
        %3065 = vmatprep.subr.bf16.mxu0 %v2857
        %3066 = vmatpush1.bf16.msra.mxu0 %v2856
        %3067 = vmatprep.subr.bf16.mxu0 %v2859
        %3068 = vmatpush1.bf16.msra.mxu0 %v2858
        %3069 = vmatprep.subr.bf16.mxu0 %v2861
        %3070 = vmatpush1.bf16.msra.mxu0 %v2860
        %3071 = vmatprep.subr.bf16.mxu0 %v2863
        %3072 = vmatpush1.bf16.msra.mxu0 %v2862
        %3073 = vmatprep.subr.bf16.mxu0 %v2865
        %3074 = vmatpush1.bf16.msra.mxu0 %v2864
        %3075 = vmatprep.subr.bf16.mxu0 %v2867
        %3076 = vmatpush1.bf16.msra.mxu0 %v2866
        %3077 = vmatprep.subr.bf16.mxu0 %v2869
        %3078 = vmatpush1.bf16.msra.mxu0 %v2868
        %3079 = vmatprep.subr.bf16.mxu0 %v2871
        %3080 = vmatpush1.bf16.msra.mxu0 %v2870
        %3081 = vmatprep.subr.bf16.mxu0 %v2873
        %3082 = vmatpush1.bf16.msra.mxu0 %v2872
        %3083 = vmatprep.subr.bf16.mxu0 %v2875
        %3084 = vmatpush1.bf16.msra.mxu0 %v2874
        %3085 = vmatprep.mubr.bf16.mxu0 %v2515
        %3086 = vmatmul.mubr.bf16.gmra.mrb[0].mxu0 %v2514
        %v3087 = vpop.f32.mrb[0].mxu0
        %v3088 = vadd.f32 %v2975, %v3087
        %v3089 = vpop.f32.mrb[0].mxu0
        %v3090 = vadd.f32 %v2977, %v3089
        %v3091 = vpop.f32.mrb[0].mxu0
        %v3092 = vadd.f32 %v2979, %v3091
        %v3093 = vpop.f32.mrb[0].mxu0
        %v3094 = vadd.f32 %v2981, %v3093
        %3095 = vmatprep.mubr.bf16.mxu0 %v2519
        %3096 = vmatmul.mubr.bf16.gmra.mrb[0].mxu0 %v2518
        %v3097 = vpop.f32.mrb[0].mxu0
        %v3098 = vadd.f32 %v2985, %v3097
        %v3099 = vpop.f32.mrb[0].mxu0
        %v3100 = vadd.f32 %v2987, %v3099
        %v3101 = vpop.f32.mrb[0].mxu0
        %v3102 = vadd.f32 %v2989, %v3101
        %v3103 = vpop.f32.mrb[0].mxu0
        %v3104 = vadd.f32 %v2991, %v3103
        %3105 = vmatprep.mubr.bf16.mxu0 %v2523
        %3106 = vmatmul.mubr.bf16.gmra.mrb[0].mxu0 %v2522
        %v3107 = vpop.f32.mrb[0].mxu0
        %v3108 = vadd.f32 %v2995, %v3107
        %v3109 = vpop.f32.mrb[0].mxu0
        %v3110 = vadd.f32 %v2997, %v3109
        %v3111 = vpop.f32.mrb[0].mxu0
        %v3112 = vadd.f32 %v2999, %v3111
        %v3113 = vpop.f32.mrb[0].mxu0
        %v3114 = vadd.f32 %v3001, %v3113
        %3115 = vmatprep.mubr.bf16.mxu0 %v2527
        %3116 = vmatmul.mubr.bf16.gmra.mrb[0].mxu0 %v2526
        %v3117 = vpop.f32.mrb[0].mxu0
        %v3118 = vadd.f32 %v3005, %v3117
        %v3119 = vpop.f32.mrb[0].mxu0
        %v3120 = vadd.f32 %v3007, %v3119
        %v3121 = vpop.f32.mrb[0].mxu0
        %v3122 = vadd.f32 %v3009, %v3121
        %v3123 = vpop.f32.mrb[0].mxu0
        %v3124 = vadd.f32 %v3011, %v3123
        %3125 = vmatprep.mubr.bf16.mxu0 %v2531
        %3126 = vmatmul.mubr.bf16.gmra.mrb[0].mxu0 %v2530
        %v3127 = vpop.f32.mrb[0].mxu0
        %v3128 = vadd.f32 %v3015, %v3127
        %v3129 = vpop.f32.mrb[0].mxu0
        %v3130 = vadd.f32 %v3017, %v3129
        %v3131 = vpop.f32.mrb[0].mxu0
        %v3132 = vadd.f32 %v3019, %v3131
        %v3133 = vpop.f32.mrb[0].mxu0
        %v3134 = vadd.f32 %v3021, %v3133
        %3135 = vmatprep.mubr.bf16.mxu0 %v2535
        %3136 = vmatmul.mubr.bf16.gmra.mrb[0].mxu0 %v2534
        %v3137 = vpop.f32.mrb[0].mxu0
        %v3138 = vadd.f32 %v3025, %v3137
        %v3139 = vpop.f32.mrb[0].mxu0
        %v3140 = vadd.f32 %v3027, %v3139
        %v3141 = vpop.f32.mrb[0].mxu0
        %v3142 = vadd.f32 %v3029, %v3141
        %v3143 = vpop.f32.mrb[0].mxu0
        %v3144 = vadd.f32 %v3031, %v3143
        %3145 = vmatprep.mubr.bf16.mxu0 %v2539
        %3146 = vmatmul.mubr.bf16.gmra.mrb[0].mxu0 %v2538
        %v3147 = vpop.f32.mrb[0].mxu0
        %v3148 = vadd.f32 %v3035, %v3147
        %v3149 = vpop.f32.mrb[0].mxu0
        %v3150 = vadd.f32 %v3037, %v3149
        %v3151 = vpop.f32.mrb[0].mxu0
        %v3152 = vadd.f32 %v3039, %v3151
        %v3153 = vpop.f32.mrb[0].mxu0
        %v3154 = vadd.f32 %v3041, %v3153
        %3155 = vmatprep.mubr.bf16.mxu0 %v2543
        %3156 = vmatmul.mubr.bf16.gmra.mrb[0].mxu0 %v2542
        %v3157 = vpop.f32.mrb[0].mxu0
        %v3158 = vadd.f32 %v3045, %v3157
        %v3159 = vpop.f32.mrb[0].mxu0
        %v3160 = vadd.f32 %v3047, %v3159
        %v3161 = vpop.f32.mrb[0].mxu0
        %v3162 = vadd.f32 %v3049, %v3161
        %v3163 = vpop.f32.mrb[0].mxu0
        %v3164 = vadd.f32 %v3051, %v3163
        %3165 = vdwg.mxu0
        %v3166 = vmax.f32 %v3088, 0.0
        %v3167 = vmax.f32 %v3090, 0.0
        %v3168 = vmax.f32 %v3092, 0.0
        %v3169 = vmax.f32 %v3094, 0.0
        %v3170 = vmax.f32 %v3098, 0.0
        %v3171 = vmax.f32 %v3100, 0.0
        %v3172 = vmax.f32 %v3102, 0.0
        %v3173 = vmax.f32 %v3104, 0.0
        %v3174 = vmax.f32 %v3108, 0.0
        %v3175 = vmax.f32 %v3110, 0.0
        %v3176 = vmax.f32 %v3112, 0.0
        %v3177 = vmax.f32 %v3114, 0.0
        %v3178 = vmax.f32 %v3118, 0.0
        %v3179 = vmax.f32 %v3120, 0.0
        %v3180 = vmax.f32 %v3122, 0.0
        %v3181 = vmax.f32 %v3124, 0.0
        %v3182 = vmax.f32 %v3128, 0.0
        %v3183 = vmax.f32 %v3130, 0.0
        %v3184 = vmax.f32 %v3132, 0.0
        %v3185 = vmax.f32 %v3134, 0.0
        %v3186 = vmax.f32 %v3138, 0.0
        %v3187 = vmax.f32 %v3140, 0.0
        %v3188 = vmax.f32 %v3142, 0.0
        %v3189 = vmax.f32 %v3144, 0.0
        %v3190 = vmax.f32 %v3148, 0.0
        %v3191 = vmax.f32 %v3150, 0.0
        %v3192 = vmax.f32 %v3152, 0.0
        %v3193 = vmax.f32 %v3154, 0.0
        %v3194 = vmax.f32 %v3158, 0.0
        %v3195 = vmax.f32 %v3160, 0.0
        %v3196 = vmax.f32 %v3162, 0.0
        %v3197 = vmax.f32 %v3164, 0.0
        %v3198 = vpack.c.bf16 %v3168, %v3166
        %v3199 = vpack.c.bf16 %v3169, %v3167
        %v3200 = vpack.c.bf16 %v3172, %v3170
        %v3201 = vpack.c.bf16 %v3173, %v3171
        %v3202 = vpack.c.bf16 %v3176, %v3174
        %v3203 = vpack.c.bf16 %v3177, %v3175
        %v3204 = vpack.c.bf16 %v3180, %v3178
        %v3205 = vpack.c.bf16 %v3181, %v3179
        %v3206 = vpack.c.bf16 %v3184, %v3182
        %v3207 = vpack.c.bf16 %v3185, %v3183
        %v3208 = vpack.c.bf16 %v3188, %v3186
        %v3209 = vpack.c.bf16 %v3189, %v3187
        %v3210 = vpack.c.bf16 %v3192, %v3190
        %v3211 = vpack.c.bf16 %v3193, %v3191
        %v3212 = vpack.c.bf16 %v3196, %v3194
        %v3213 = vpack.c.bf16 %v3197, %v3195
        %v3214 = vld [vmem:[#allocation8] sm:$0xf]
        %v3215 = vld [vmem:[#allocation8 + $0x4] sm:$0xf]
        %v3216 = vld [vmem:[#allocation8 + $0x8] sm:$0xf]
        %v3217 = vld [vmem:[#allocation8 + $0xc] sm:$0xf]
        %v3218 = vld [vmem:[#allocation8 + $0x10] sm:$0xf]
        %v3219 = vld [vmem:[#allocation8 + $0x14] sm:$0xf]
        %v3220 = vld [vmem:[#allocation8 + $0x18] sm:$0xf]
        %v3221 = vld [vmem:[#allocation8 + $0x1c] sm:$0xf]
        %v3222 = vld [vmem:[#allocation8 + $0x20] sm:$0xf]
        %v3223 = vld [vmem:[#allocation8 + $0x24] sm:$0xf]
        %v3224 = vld [vmem:[#allocation8 + $0x28] sm:$0xf]
        %v3225 = vld [vmem:[#allocation8 + $0x2c] sm:$0xf]
        %v3226 = vld [vmem:[#allocation8 + $0x30] sm:$0xf]
        %v3227 = vld [vmem:[#allocation8 + $0x34] sm:$0xf]
        %v3228 = vld [vmem:[#allocation8 + $0x38] sm:$0xf]
        %v3229 = vld [vmem:[#allocation8 + $0x3c] sm:$0xf]
        %v3230 = vld [vmem:[#allocation8 + $0x40] sm:$0xf]
        %v3231 = vld [vmem:[#allocation8 + $0x44] sm:$0xf]
        %v3232 = vld [vmem:[#allocation8 + $0x48] sm:$0xf]
        %v3233 = vld [vmem:[#allocation8 + $0x4c] sm:$0xf]
        %v3234 = vld [vmem:[#allocation8 + $0x50] sm:$0xf]
        %v3235 = vld [vmem:[#allocation8 + $0x54] sm:$0xf]
        %v3236 = vld [vmem:[#allocation8 + $0x58] sm:$0xf]
        %v3237 = vld [vmem:[#allocation8 + $0x5c] sm:$0xf]
        %v3238 = vld [vmem:[#allocation8 + $0x60] sm:$0xf]
        %v3239 = vld [vmem:[#allocation8 + $0x64] sm:$0xf]
        %v3240 = vld [vmem:[#allocation8 + $0x68] sm:$0xf]
        %v3241 = vld [vmem:[#allocation8 + $0x6c] sm:$0xf]
        %v3242 = vld [vmem:[#allocation8 + $0x70] sm:$0xf]
        %v3243 = vld [vmem:[#allocation8 + $0x74] sm:$0xf]
        %v3244 = vld [vmem:[#allocation8 + $0x78] sm:$0xf]
        %v3245 = vld [vmem:[#allocation8 + $0x7c] sm:$0xf]
        %v3246 = vld [vmem:[%s6] sm:$0x1]
        %v3248 = vlaneseq
        %v3249 = vshrl.u32 %v3248, 7
        %v3250 = vsub.s32 0, %v3249
        %v3251 = vrot.slane %v3246, %v3250
        %v3285 = vunpack.c.l.b16 %v3214
        %v3286 = vunpack.c.l.b16 %v3215
        %v3287 = vunpack.c.l.b16 %v3216
        %v3288 = vunpack.c.l.b16 %v3217
        %v3289 = vunpack.c.l.b16 %v3218
        %v3290 = vunpack.c.l.b16 %v3219
        %v3291 = vunpack.c.l.b16 %v3220
        %v3292 = vunpack.c.l.b16 %v3221
        %v3293 = vunpack.c.l.b16 %v3222
        %v3294 = vunpack.c.l.b16 %v3223
        %v3295 = vunpack.c.l.b16 %v3224
        %v3296 = vunpack.c.l.b16 %v3225
        %v3297 = vunpack.c.l.b16 %v3226
        %v3298 = vunpack.c.l.b16 %v3227
        %v3299 = vunpack.c.l.b16 %v3228
        %v3300 = vunpack.c.l.b16 %v3229
        %v3301 = vunpack.c.l.b16 %v3230
        %v3302 = vunpack.c.l.b16 %v3231
        %v3303 = vunpack.c.l.b16 %v3232
        %v3304 = vunpack.c.l.b16 %v3233
        %v3305 = vunpack.c.l.b16 %v3234
        %v3306 = vunpack.c.l.b16 %v3235
        %v3307 = vunpack.c.l.b16 %v3236
        %v3308 = vunpack.c.l.b16 %v3237
        %v3309 = vunpack.c.l.b16 %v3238
        %v3310 = vunpack.c.l.b16 %v3239
        %v3311 = vunpack.c.l.b16 %v3240
        %v3312 = vunpack.c.l.b16 %v3241
        %v3313 = vunpack.c.l.b16 %v3242
        %v3314 = vunpack.c.l.b16 %v3243
        %v3315 = vunpack.c.l.b16 %v3244
        %v3316 = vunpack.c.l.b16 %v3245
        %v3317 = vpack.c.b16 %v3286, %v3285
        %v3318 = vpack.c.b16 %v3288, %v3287
        %v3319 = vpack.c.b16 %v3290, %v3289
        %v3320 = vpack.c.b16 %v3292, %v3291
        %v3321 = vpack.c.b16 %v3294, %v3293
        %v3322 = vpack.c.b16 %v3296, %v3295
        %v3323 = vpack.c.b16 %v3298, %v3297
        %v3324 = vpack.c.b16 %v3300, %v3299
        %v3325 = vpack.c.b16 %v3302, %v3301
        %v3326 = vpack.c.b16 %v3304, %v3303
        %v3327 = vpack.c.b16 %v3306, %v3305
        %v3328 = vpack.c.b16 %v3308, %v3307
        %v3329 = vpack.c.b16 %v3310, %v3309
        %v3330 = vpack.c.b16 %v3312, %v3311
        %v3331 = vpack.c.b16 %v3314, %v3313
        %v3332 = vpack.c.b16 %v3316, %v3315
        %3349 = vmatprep.subr.bf16.mxu0 0
        %3350 = vmatpush1.bf16.msra.mxu0 %v3317
        %3351 = vmatprep.subr.bf16.mxu0 0
        %3352 = vmatpush1.bf16.msra.mxu0 %v3318
        %3353 = vmatprep.subr.bf16.mxu0 0
        %3354 = vmatpush1.bf16.msra.mxu0 %v3319
        %3355 = vmatprep.subr.bf16.mxu0 0
        %3356 = vmatpush1.bf16.msra.mxu0 %v3320
        %3357 = vmatprep.subr.bf16.mxu0 0
        %3358 = vmatpush1.bf16.msra.mxu0 %v3321
        %3359 = vmatprep.subr.bf16.mxu0 0
        %3360 = vmatpush1.bf16.msra.mxu0 %v3322
        %3361 = vmatprep.subr.bf16.mxu0 0
        %3362 = vmatpush1.bf16.msra.mxu0 %v3323
        %3363 = vmatprep.subr.bf16.mxu0 0
        %3364 = vmatpush1.bf16.msra.mxu0 %v3324
        %3365 = vmatprep.subr.bf16.mxu0 0
        %3366 = vmatpush1.bf16.msra.mxu0 %v3325
        %3367 = vmatprep.subr.bf16.mxu0 0
        %3368 = vmatpush1.bf16.msra.mxu0 %v3326
        %3369 = vmatprep.subr.bf16.mxu0 0
        %3370 = vmatpush1.bf16.msra.mxu0 %v3327
        %3371 = vmatprep.subr.bf16.mxu0 0
        %3372 = vmatpush1.bf16.msra.mxu0 %v3328
        %3373 = vmatprep.subr.bf16.mxu0 0
        %3374 = vmatpush1.bf16.msra.mxu0 %v3329
        %3375 = vmatprep.subr.bf16.mxu0 0
        %3376 = vmatpush1.bf16.msra.mxu0 %v3330
        %3377 = vmatprep.subr.bf16.mxu0 0
        %3378 = vmatpush1.bf16.msra.mxu0 %v3331
        %3379 = vmatprep.subr.bf16.mxu0 0
        %3380 = vmatpush1.bf16.msra.mxu0 %v3332
        %3381 = vmatprep.mubr.bf16.mxu0 %v3199
        %3382 = vmatmul.mubr.bf16.gmra.mrb[0].mxu0 %v3198
        %v3383 = vpop.f32.mrb[0].mxu0
        %v3384 = vadd.f32 %v3251, %v3383
        %v3385 = vpop.f32.mrb[0].mxu0
        %v3386 = vpop.f32.mrb[0].mxu0
        %v3387 = vadd.f32 %v3251, %v3386
        %v3388 = vpop.f32.mrb[0].mxu0
        %3389 = vmatprep.mubr.bf16.mxu0 %v3201
        %3390 = vmatmul.mubr.bf16.gmra.mrb[0].mxu0 %v3200
        %v3391 = vpop.f32.mrb[0].mxu0
        %v3392 = vadd.f32 %v3251, %v3391
        %v3393 = vpop.f32.mrb[0].mxu0
        %v3394 = vpop.f32.mrb[0].mxu0
        %v3395 = vadd.f32 %v3251, %v3394
        %v3396 = vpop.f32.mrb[0].mxu0
        %3397 = vmatprep.mubr.bf16.mxu0 %v3203
        %3398 = vmatmul.mubr.bf16.gmra.mrb[0].mxu0 %v3202
        %v3399 = vpop.f32.mrb[0].mxu0
        %v3400 = vadd.f32 %v3251, %v3399
        %v3401 = vpop.f32.mrb[0].mxu0
        %v3402 = vpop.f32.mrb[0].mxu0
        %v3403 = vadd.f32 %v3251, %v3402
        %v3404 = vpop.f32.mrb[0].mxu0
        %3405 = vmatprep.mubr.bf16.mxu0 %v3205
        %3406 = vmatmul.mubr.bf16.gmra.mrb[0].mxu0 %v3204
        %v3407 = vpop.f32.mrb[0].mxu0
        %v3408 = vadd.f32 %v3251, %v3407
        %v3409 = vpop.f32.mrb[0].mxu0
        %v3410 = vpop.f32.mrb[0].mxu0
        %v3411 = vadd.f32 %v3251, %v3410
        %v3412 = vpop.f32.mrb[0].mxu0
        %3413 = vmatprep.mubr.bf16.mxu0 %v3207
        %3414 = vmatmul.mubr.bf16.gmra.mrb[0].mxu0 %v3206
        %v3415 = vpop.f32.mrb[0].mxu0
        %v3416 = vadd.f32 %v3251, %v3415
        %v3417 = vpop.f32.mrb[0].mxu0
        %v3418 = vpop.f32.mrb[0].mxu0
        %v3419 = vadd.f32 %v3251, %v3418
        %v3420 = vpop.f32.mrb[0].mxu0
        %3421 = vmatprep.mubr.bf16.mxu0 %v3209
        %3422 = vmatmul.mubr.bf16.gmra.mrb[0].mxu0 %v3208
        %v3423 = vpop.f32.mrb[0].mxu0
        %v3424 = vadd.f32 %v3251, %v3423
        %v3425 = vpop.f32.mrb[0].mxu0
        %v3426 = vpop.f32.mrb[0].mxu0
        %v3427 = vadd.f32 %v3251, %v3426
        %v3428 = vpop.f32.mrb[0].mxu0
        %3429 = vmatprep.mubr.bf16.mxu0 %v3211
        %3430 = vmatmul.mubr.bf16.gmra.mrb[0].mxu0 %v3210
        %v3431 = vpop.f32.mrb[0].mxu0
        %v3432 = vadd.f32 %v3251, %v3431
        %v3433 = vpop.f32.mrb[0].mxu0
        %v3434 = vpop.f32.mrb[0].mxu0
        %v3435 = vadd.f32 %v3251, %v3434
        %v3436 = vpop.f32.mrb[0].mxu0
        %3437 = vmatprep.mubr.bf16.mxu0 %v3213
        %3438 = vmatmul.mubr.bf16.gmra.mrb[0].mxu0 %v3212
        %v3439 = vpop.f32.mrb[0].mxu0
        %v3440 = vadd.f32 %v3251, %v3439
        %v3441 = vpop.f32.mrb[0].mxu0
        %v3442 = vpop.f32.mrb[0].mxu0
        %v3443 = vadd.f32 %v3251, %v3442
        %v3444 = vpop.f32.mrb[0].mxu0
        %3445 = vdwg.mxu0
        %3446 = vst [vmem:[%s440] sm:$0xff] %v3384
        %3447 = vst [vmem:[%s440 + $0x8] sm:$0xff] %v3387
        %3448 = vst [vmem:[%s440 + $0x10] sm:$0xff] %v3392
        %3449 = vst [vmem:[%s440 + $0x18] sm:$0xff] %v3395
        %3450 = vst [vmem:[%s440 + $0x20] sm:$0xff] %v3400
        %3451 = vst [vmem:[%s440 + $0x28] sm:$0xff] %v3403
        %3452 = vst [vmem:[%s440 + $0x30] sm:$0xff] %v3408
        %3453 = vst [vmem:[%s440 + $0x38] sm:$0xff] %v3411
        %3454 = vst [vmem:[%s440 + $0x40] sm:$0xff] %v3416
        %3455 = vst [vmem:[%s440 + $0x48] sm:$0xff] %v3419
        %3456 = vst [vmem:[%s440 + $0x50] sm:$0xff] %v3424
        %3457 = vst [vmem:[%s440 + $0x58] sm:$0xff] %v3427
        %3458 = vst [vmem:[%s440 + $0x60] sm:$0xff] %v3432
        %3459 = vst [vmem:[%s440 + $0x68] sm:$0xff] %v3435
        %3460 = vst [vmem:[%s440 + $0x70] sm:$0xff] %v3440
        %3461 = vst [vmem:[%s440 + $0x78] sm:$0xff] %v3443
        %v3462 = vpack.c.bf16 %v3387, %v3384
        %v3463 = vpack.c.bf16 %v3395, %v3392
        %v3464 = vpack.c.bf16 %v3403, %v3400
        %v3465 = vpack.c.bf16 %v3411, %v3408
        %v3466 = vpack.c.bf16 %v3419, %v3416
        %v3467 = vpack.c.bf16 %v3427, %v3424
        %v3468 = vpack.c.bf16 %v3435, %v3432
        %v3469 = vpack.c.bf16 %v3443, %v3440
        %v3470 = vld [vmem:[#allocation10] sm:$0xff]
        %v3471 = vld [vmem:[#allocation10 + $0x8] sm:$0xff]
        %v3472 = vld [vmem:[#allocation10 + $0x10] sm:$0xff]
        %v3473 = vld [vmem:[#allocation10 + $0x18] sm:$0xff]
        %v3474 = vld [vmem:[#allocation10 + $0x20] sm:$0xff]
        %v3475 = vld [vmem:[#allocation10 + $0x28] sm:$0xff]
        %v3476 = vld [vmem:[#allocation10 + $0x30] sm:$0xff]
        %v3477 = vld [vmem:[#allocation10 + $0x38] sm:$0xff]
        %v3478 = vld [vmem:[#allocation10 + $0x40] sm:$0xff]
        %v3479 = vld [vmem:[#allocation10 + $0x48] sm:$0xff]
        %v3480 = vld [vmem:[#allocation10 + $0x50] sm:$0xff]
        %v3481 = vld [vmem:[#allocation10 + $0x58] sm:$0xff]
        %v3482 = vld [vmem:[#allocation10 + $0x60] sm:$0xff]
        %v3483 = vld [vmem:[#allocation10 + $0x68] sm:$0xff]
        %v3484 = vld [vmem:[#allocation10 + $0x70] sm:$0xff]
        %v3485 = vld [vmem:[#allocation10 + $0x78] sm:$0xff]
        %v3486 = vld [vmem:[#allocation10 + $0x80] sm:$0xff]
        %v3487 = vld [vmem:[#allocation10 + $0x88] sm:$0xff]
        %v3488 = vld [vmem:[#allocation10 + $0x90] sm:$0xff]
        %v3489 = vld [vmem:[#allocation10 + $0x98] sm:$0xff]
        %v3490 = vld [vmem:[#allocation10 + $0xa0] sm:$0xff]
        %v3491 = vld [vmem:[#allocation10 + $0xa8] sm:$0xff]
        %v3492 = vld [vmem:[#allocation10 + $0xb0] sm:$0xff]
        %v3493 = vld [vmem:[#allocation10 + $0xb8] sm:$0xff]
        %v3494 = vld [vmem:[#allocation10 + $0xc0] sm:$0xff]
        %v3495 = vld [vmem:[#allocation10 + $0xc8] sm:$0xff]
        %v3496 = vld [vmem:[#allocation10 + $0xd0] sm:$0xff]
        %v3497 = vld [vmem:[#allocation10 + $0xd8] sm:$0xff]
        %v3498 = vld [vmem:[#allocation10 + $0xe0] sm:$0xff]
        %v3499 = vld [vmem:[#allocation10 + $0xe8] sm:$0xff]
        %v3500 = vld [vmem:[#allocation10 + $0xf0] sm:$0xff]
        %v3501 = vld [vmem:[#allocation10 + $0xf8] sm:$0xff]
        %v3502 = vld [vmem:[#allocation10 + $0x100] sm:$0xff]
        %v3503 = vld [vmem:[#allocation10 + $0x108] sm:$0xff]
        %v3504 = vld [vmem:[#allocation10 + $0x110] sm:$0xff]
        %v3505 = vld [vmem:[#allocation10 + $0x118] sm:$0xff]
        %v3506 = vld [vmem:[#allocation10 + $0x120] sm:$0xff]
        %v3507 = vld [vmem:[#allocation10 + $0x128] sm:$0xff]
        %v3508 = vld [vmem:[#allocation10 + $0x130] sm:$0xff]
        %v3509 = vld [vmem:[#allocation10 + $0x138] sm:$0xff]
        %v3510 = vld [vmem:[#allocation10 + $0x140] sm:$0xff]
        %v3511 = vld [vmem:[#allocation10 + $0x148] sm:$0xff]
        %v3512 = vld [vmem:[#allocation10 + $0x150] sm:$0xff]
        %v3513 = vld [vmem:[#allocation10 + $0x158] sm:$0xff]
        %v3514 = vld [vmem:[#allocation10 + $0x160] sm:$0xff]
        %v3515 = vld [vmem:[#allocation10 + $0x168] sm:$0xff]
        %v3516 = vld [vmem:[#allocation10 + $0x170] sm:$0xff]
        %v3517 = vld [vmem:[#allocation10 + $0x178] sm:$0xff]
        %v3518 = vld [vmem:[%s8] sm:$0x3f]
        %v3520 = vlaneseq
        %v3521 = vshrl.u32 %v3520, 7
        %v3522 = vsub.s32 0, %v3521
        %v3523 = vrot.slane %v3518, %v3522
        %v3524 = vlaneseq
        %v3525 = vshrl.u32 %v3524, 7
        %v3526 = vsub.s32 1, %v3525
        %v3527 = vrot.slane %v3518, %v3526
        %v3528 = vlaneseq
        %v3529 = vshrl.u32 %v3528, 7
        %v3530 = vsub.s32 2, %v3529
        %v3531 = vrot.slane %v3518, %v3530
        %v3532 = vlaneseq
        %v3533 = vshrl.u32 %v3532, 7
        %v3534 = vsub.s32 3, %v3533
        %v3535 = vrot.slane %v3518, %v3534
        %v3536 = vlaneseq
        %v3537 = vshrl.u32 %v3536, 7
        %v3538 = vsub.s32 4, %v3537
        %v3539 = vrot.slane %v3518, %v3538
        %v3540 = vlaneseq
        %v3541 = vshrl.u32 %v3540, 7
        %v3542 = vsub.s32 5, %v3541
        %v3543 = vrot.slane %v3518, %v3542
        %v3598 = vunpack.c.l.b16 %v3470
        %v3599 = vunpack.c.h.b16 %v3470
        %v3600 = vunpack.c.l.b16 %v3471
        %v3601 = vunpack.c.h.b16 %v3471
        %v3602 = vunpack.c.l.b16 %v3472
        %v3603 = vunpack.c.h.b16 %v3472
        %v3604 = vunpack.c.l.b16 %v3473
        %v3605 = vunpack.c.h.b16 %v3473
        %v3606 = vunpack.c.l.b16 %v3474
        %v3607 = vunpack.c.h.b16 %v3474
        %v3608 = vunpack.c.l.b16 %v3475
        %v3609 = vunpack.c.h.b16 %v3475
        %v3610 = vunpack.c.l.b16 %v3476
        %v3611 = vunpack.c.h.b16 %v3476
        %v3612 = vunpack.c.l.b16 %v3477
        %v3613 = vunpack.c.h.b16 %v3477
        %v3614 = vunpack.c.l.b16 %v3478
        %v3615 = vunpack.c.h.b16 %v3478
        %v3616 = vunpack.c.l.b16 %v3479
        %v3617 = vunpack.c.h.b16 %v3479
        %v3618 = vunpack.c.l.b16 %v3480
        %v3619 = vunpack.c.h.b16 %v3480
        %v3620 = vunpack.c.l.b16 %v3481
        %v3621 = vunpack.c.h.b16 %v3481
        %v3622 = vunpack.c.l.b16 %v3482
        %v3623 = vunpack.c.h.b16 %v3482
        %v3624 = vunpack.c.l.b16 %v3483
        %v3625 = vunpack.c.h.b16 %v3483
        %v3626 = vunpack.c.l.b16 %v3484
        %v3627 = vunpack.c.h.b16 %v3484
        %v3628 = vunpack.c.l.b16 %v3485
        %v3629 = vunpack.c.h.b16 %v3485
        %v3630 = vunpack.c.l.b16 %v3486
        %v3631 = vunpack.c.h.b16 %v3486
        %v3632 = vunpack.c.l.b16 %v3487
        %v3633 = vunpack.c.h.b16 %v3487
        %v3634 = vunpack.c.l.b16 %v3488
        %v3635 = vunpack.c.h.b16 %v3488
        %v3636 = vunpack.c.l.b16 %v3489
        %v3637 = vunpack.c.h.b16 %v3489
        %v3638 = vunpack.c.l.b16 %v3490
        %v3639 = vunpack.c.h.b16 %v3490
        %v3640 = vunpack.c.l.b16 %v3491
        %v3641 = vunpack.c.h.b16 %v3491
        %v3642 = vunpack.c.l.b16 %v3492
        %v3643 = vunpack.c.h.b16 %v3492
        %v3644 = vunpack.c.l.b16 %v3493
        %v3645 = vunpack.c.h.b16 %v3493
        %v3646 = vunpack.c.l.b16 %v3494
        %v3647 = vunpack.c.h.b16 %v3494
        %v3648 = vunpack.c.l.b16 %v3495
        %v3649 = vunpack.c.h.b16 %v3495
        %v3650 = vunpack.c.l.b16 %v3496
        %v3651 = vunpack.c.h.b16 %v3496
        %v3652 = vunpack.c.l.b16 %v3497
        %v3653 = vunpack.c.h.b16 %v3497
        %v3654 = vunpack.c.l.b16 %v3498
        %v3655 = vunpack.c.h.b16 %v3498
        %v3656 = vunpack.c.l.b16 %v3499
        %v3657 = vunpack.c.h.b16 %v3499
        %v3658 = vunpack.c.l.b16 %v3500
        %v3659 = vunpack.c.h.b16 %v3500
        %v3660 = vunpack.c.l.b16 %v3501
        %v3661 = vunpack.c.h.b16 %v3501
        %v3662 = vunpack.c.l.b16 %v3502
        %v3663 = vunpack.c.h.b16 %v3502
        %v3664 = vunpack.c.l.b16 %v3503
        %v3665 = vunpack.c.h.b16 %v3503
        %v3666 = vunpack.c.l.b16 %v3504
        %v3667 = vunpack.c.h.b16 %v3504
        %v3668 = vunpack.c.l.b16 %v3505
        %v3669 = vunpack.c.h.b16 %v3505
        %v3670 = vunpack.c.l.b16 %v3506
        %v3671 = vunpack.c.h.b16 %v3506
        %v3672 = vunpack.c.l.b16 %v3507
        %v3673 = vunpack.c.h.b16 %v3507
        %v3674 = vunpack.c.l.b16 %v3508
        %v3675 = vunpack.c.h.b16 %v3508
        %v3676 = vunpack.c.l.b16 %v3509
        %v3677 = vunpack.c.h.b16 %v3509
        %v3678 = vunpack.c.l.b16 %v3510
        %v3679 = vunpack.c.h.b16 %v3510
        %v3680 = vunpack.c.l.b16 %v3511
        %v3681 = vunpack.c.h.b16 %v3511
        %v3682 = vunpack.c.l.b16 %v3512
        %v3683 = vunpack.c.h.b16 %v3512
        %v3684 = vunpack.c.l.b16 %v3513
        %v3685 = vunpack.c.h.b16 %v3513
        %v3686 = vunpack.c.l.b16 %v3514
        %v3687 = vunpack.c.h.b16 %v3514
        %v3688 = vunpack.c.l.b16 %v3515
        %v3689 = vunpack.c.h.b16 %v3515
        %v3690 = vunpack.c.l.b16 %v3516
        %v3691 = vunpack.c.h.b16 %v3516
        %v3692 = vunpack.c.l.b16 %v3517
        %v3693 = vunpack.c.h.b16 %v3517
        %v3694 = vpack.c.b16 %v3604, %v3598
        %v3695 = vpack.c.b16 %v3605, %v3599
        %v3696 = vpack.c.b16 %v3606, %v3600
        %v3697 = vpack.c.b16 %v3607, %v3601
        %v3698 = vpack.c.b16 %v3608, %v3602
        %v3699 = vpack.c.b16 %v3609, %v3603
        %v3700 = vpack.c.b16 %v3616, %v3610
        %v3701 = vpack.c.b16 %v3617, %v3611
        %v3702 = vpack.c.b16 %v3618, %v3612
        %v3703 = vpack.c.b16 %v3619, %v3613
        %v3704 = vpack.c.b16 %v3620, %v3614
        %v3705 = vpack.c.b16 %v3621, %v3615
        %v3706 = vpack.c.b16 %v3628, %v3622
        %v3707 = vpack.c.b16 %v3629, %v3623
        %v3708 = vpack.c.b16 %v3630, %v3624
        %v3709 = vpack.c.b16 %v3631, %v3625
        %v3710 = vpack.c.b16 %v3632, %v3626
        %v3711 = vpack.c.b16 %v3633, %v3627
        %v3712 = vpack.c.b16 %v3640, %v3634
        %v3713 = vpack.c.b16 %v3641, %v3635
        %v3714 = vpack.c.b16 %v3642, %v3636
        %v3715 = vpack.c.b16 %v3643, %v3637
        %v3716 = vpack.c.b16 %v3644, %v3638
        %v3717 = vpack.c.b16 %v3645, %v3639
        %v3718 = vpack.c.b16 %v3652, %v3646
        %v3719 = vpack.c.b16 %v3653, %v3647
        %v3720 = vpack.c.b16 %v3654, %v3648
        %v3721 = vpack.c.b16 %v3655, %v3649
        %v3722 = vpack.c.b16 %v3656, %v3650
        %v3723 = vpack.c.b16 %v3657, %v3651
        %v3724 = vpack.c.b16 %v3664, %v3658
        %v3725 = vpack.c.b16 %v3665, %v3659
        %v3726 = vpack.c.b16 %v3666, %v3660
        %v3727 = vpack.c.b16 %v3667, %v3661
        %v3728 = vpack.c.b16 %v3668, %v3662
        %v3729 = vpack.c.b16 %v3669, %v3663
        %v3730 = vpack.c.b16 %v3676, %v3670
        %v3731 = vpack.c.b16 %v3677, %v3671
        %v3732 = vpack.c.b16 %v3678, %v3672
        %v3733 = vpack.c.b16 %v3679, %v3673
        %v3734 = vpack.c.b16 %v3680, %v3674
        %v3735 = vpack.c.b16 %v3681, %v3675
        %v3736 = vpack.c.b16 %v3688, %v3682
        %v3737 = vpack.c.b16 %v3689, %v3683
        %v3738 = vpack.c.b16 %v3690, %v3684
        %v3739 = vpack.c.b16 %v3691, %v3685
        %v3740 = vpack.c.b16 %v3692, %v3686
        %v3741 = vpack.c.b16 %v3693, %v3687
        %3790 = vmatprep.subr.bf16.mxu0 %v3695
        %3791 = vmatpush1.bf16.msra.mxu0 %v3694
        %3792 = vmatprep.subr.bf16.mxu0 %v3701
        %3793 = vmatpush1.bf16.msra.mxu0 %v3700
        %3794 = vmatprep.subr.bf16.mxu0 %v3707
        %3795 = vmatpush1.bf16.msra.mxu0 %v3706
        %3796 = vmatprep.subr.bf16.mxu0 %v3713
        %3797 = vmatpush1.bf16.msra.mxu0 %v3712
        %3798 = vmatprep.subr.bf16.mxu0 %v3719
        %3799 = vmatpush1.bf16.msra.mxu0 %v3718
        %3800 = vmatprep.subr.bf16.mxu0 %v3725
        %3801 = vmatpush1.bf16.msra.mxu0 %v3724
        %3802 = vmatprep.subr.bf16.mxu0 %v3731
        %3803 = vmatpush1.bf16.msra.mxu0 %v3730
        %3804 = vmatprep.subr.bf16.mxu0 %v3737
        %3805 = vmatpush1.bf16.msra.mxu0 %v3736
        %3806 = vmatprep.subr.bf16.mxu0 0
        %3807 = vmatpush1.bf16.msra.mxu0 0
        %3808 = vmatprep.subr.bf16.mxu0 0
        %3809 = vmatpush1.bf16.msra.mxu0 0
        %3810 = vmatprep.subr.bf16.mxu0 0
        %3811 = vmatpush1.bf16.msra.mxu0 0
        %3812 = vmatprep.subr.bf16.mxu0 0
        %3813 = vmatpush1.bf16.msra.mxu0 0
        %3814 = vmatprep.subr.bf16.mxu0 0
        %3815 = vmatpush1.bf16.msra.mxu0 0
        %3816 = vmatprep.subr.bf16.mxu0 0
        %3817 = vmatpush1.bf16.msra.mxu0 0
        %3818 = vmatprep.subr.bf16.mxu0 0
        %3819 = vmatpush1.bf16.msra.mxu0 0
        %3820 = vmatprep.subr.bf16.mxu0 0
        %3821 = vmatpush1.bf16.msra.mxu0 0
        %3822 = vmatprep.mubr.bf16.mxu0 0
        %3823 = vmatmul.mubr.bf16.gmra.mrb[0].mxu0 %v3462
        %v3824 = vpop.f32.mrb[0].mxu0
        %v3825 = vadd.f32 %v3523, %v3824
        %v3826 = vpop.f32.mrb[0].mxu0
        %v3827 = vadd.f32 %v3527, %v3826
        %v3828 = vpop.f32.mrb[0].mxu0
        %v3829 = vadd.f32 %v3523, %v3828
        %v3830 = vpop.f32.mrb[0].mxu0
        %v3831 = vadd.f32 %v3527, %v3830
        %3832 = vmatprep.mubr.bf16.mxu0 0
        %3833 = vmatmul.mubr.bf16.gmra.mrb[0].mxu0 %v3463
        %v3834 = vpop.f32.mrb[0].mxu0
        %v3835 = vadd.f32 %v3523, %v3834
        %v3836 = vpop.f32.mrb[0].mxu0
        %v3837 = vadd.f32 %v3527, %v3836
        %v3838 = vpop.f32.mrb[0].mxu0
        %v3839 = vadd.f32 %v3523, %v3838
        %v3840 = vpop.f32.mrb[0].mxu0
        %v3841 = vadd.f32 %v3527, %v3840
        %3842 = vmatprep.mubr.bf16.mxu0 0
        %3843 = vmatmul.mubr.bf16.gmra.mrb[0].mxu0 %v3464
        %v3844 = vpop.f32.mrb[0].mxu0
        %v3845 = vadd.f32 %v3523, %v3844
        %v3846 = vpop.f32.mrb[0].mxu0
        %v3847 = vadd.f32 %v3527, %v3846
        %v3848 = vpop.f32.mrb[0].mxu0
        %v3849 = vadd.f32 %v3523, %v3848
        %v3850 = vpop.f32.mrb[0].mxu0
        %v3851 = vadd.f32 %v3527, %v3850
        %3852 = vmatprep.mubr.bf16.mxu0 0
        %3853 = vmatmul.mubr.bf16.gmra.mrb[0].mxu0 %v3465
        %v3854 = vpop.f32.mrb[0].mxu0
        %v3855 = vadd.f32 %v3523, %v3854
        %v3856 = vpop.f32.mrb[0].mxu0
        %v3857 = vadd.f32 %v3527, %v3856
        %v3858 = vpop.f32.mrb[0].mxu0
        %v3859 = vadd.f32 %v3523, %v3858
        %v3860 = vpop.f32.mrb[0].mxu0
        %v3861 = vadd.f32 %v3527, %v3860
        %3862 = vmatprep.mubr.bf16.mxu0 0
        %3863 = vmatmul.mubr.bf16.gmra.mrb[0].mxu0 %v3466
        %v3864 = vpop.f32.mrb[0].mxu0
        %v3865 = vadd.f32 %v3523, %v3864
        %v3866 = vpop.f32.mrb[0].mxu0
        %v3867 = vadd.f32 %v3527, %v3866
        %v3868 = vpop.f32.mrb[0].mxu0
        %v3869 = vadd.f32 %v3523, %v3868
        %v3870 = vpop.f32.mrb[0].mxu0
        %v3871 = vadd.f32 %v3527, %v3870
        %3872 = vmatprep.mubr.bf16.mxu0 0
        %3873 = vmatmul.mubr.bf16.gmra.mrb[0].mxu0 %v3467
        %v3874 = vpop.f32.mrb[0].mxu0
        %v3875 = vadd.f32 %v3523, %v3874
        %v3876 = vpop.f32.mrb[0].mxu0
        %v3877 = vadd.f32 %v3527, %v3876
        %v3878 = vpop.f32.mrb[0].mxu0
        %v3879 = vadd.f32 %v3523, %v3878
        %v3880 = vpop.f32.mrb[0].mxu0
        %v3881 = vadd.f32 %v3527, %v3880
        %3882 = vmatprep.mubr.bf16.mxu0 0
        %3883 = vmatmul.mubr.bf16.gmra.mrb[0].mxu0 %v3468
        %v3884 = vpop.f32.mrb[0].mxu0
        %v3885 = vadd.f32 %v3523, %v3884
        %v3886 = vpop.f32.mrb[0].mxu0
        %v3887 = vadd.f32 %v3527, %v3886
        %v3888 = vpop.f32.mrb[0].mxu0
        %v3889 = vadd.f32 %v3523, %v3888
        %v3890 = vpop.f32.mrb[0].mxu0
        %v3891 = vadd.f32 %v3527, %v3890
        %3892 = vmatprep.mubr.bf16.mxu0 0
        %3893 = vmatmul.mubr.bf16.gmra.mrb[0].mxu0 %v3469
        %v3894 = vpop.f32.mrb[0].mxu0
        %v3895 = vadd.f32 %v3523, %v3894
        %v3896 = vpop.f32.mrb[0].mxu0
        %v3897 = vadd.f32 %v3527, %v3896
        %v3898 = vpop.f32.mrb[0].mxu0
        %v3899 = vadd.f32 %v3523, %v3898
        %v3900 = vpop.f32.mrb[0].mxu0
        %v3901 = vadd.f32 %v3527, %v3900
        %3902 = vdwg.mxu0
        %3903 = vmatprep.subr.bf16.mxu0 %v3697
        %3904 = vmatpush1.bf16.msra.mxu0 %v3696
        %3905 = vmatprep.subr.bf16.mxu0 %v3703
        %3906 = vmatpush1.bf16.msra.mxu0 %v3702
        %3907 = vmatprep.subr.bf16.mxu0 %v3709
        %3908 = vmatpush1.bf16.msra.mxu0 %v3708
        %3909 = vmatprep.subr.bf16.mxu0 %v3715
        %3910 = vmatpush1.bf16.msra.mxu0 %v3714
        %3911 = vmatprep.subr.bf16.mxu0 %v3721
        %3912 = vmatpush1.bf16.msra.mxu0 %v3720
        %3913 = vmatprep.subr.bf16.mxu0 %v3727
        %3914 = vmatpush1.bf16.msra.mxu0 %v3726
        %3915 = vmatprep.subr.bf16.mxu0 %v3733
        %3916 = vmatpush1.bf16.msra.mxu0 %v3732
        %3917 = vmatprep.subr.bf16.mxu0 %v3739
        %3918 = vmatpush1.bf16.msra.mxu0 %v3738
        %3919 = vmatprep.subr.bf16.mxu0 0
        %3920 = vmatpush1.bf16.msra.mxu0 0
        %3921 = vmatprep.subr.bf16.mxu0 0
        %3922 = vmatpush1.bf16.msra.mxu0 0
        %3923 = vmatprep.subr.bf16.mxu0 0
        %3924 = vmatpush1.bf16.msra.mxu0 0
        %3925 = vmatprep.subr.bf16.mxu0 0
        %3926 = vmatpush1.bf16.msra.mxu0 0
        %3927 = vmatprep.subr.bf16.mxu0 0
        %3928 = vmatpush1.bf16.msra.mxu0 0
        %3929 = vmatprep.subr.bf16.mxu0 0
        %3930 = vmatpush1.bf16.msra.mxu0 0
        %3931 = vmatprep.subr.bf16.mxu0 0
        %3932 = vmatpush1.bf16.msra.mxu0 0
        %3933 = vmatprep.subr.bf16.mxu0 0
        %3934 = vmatpush1.bf16.msra.mxu0 0
        %3935 = vmatprep.mubr.bf16.mxu0 0
        %3936 = vmatmul.mubr.bf16.gmra.mrb[0].mxu0 %v3462
        %v3937 = vpop.f32.mrb[0].mxu0
        %v3938 = vadd.f32 %v3531, %v3937
        %v3939 = vpop.f32.mrb[0].mxu0
        %v3940 = vadd.f32 %v3535, %v3939
        %v3941 = vpop.f32.mrb[0].mxu0
        %v3942 = vadd.f32 %v3531, %v3941
        %v3943 = vpop.f32.mrb[0].mxu0
        %v3944 = vadd.f32 %v3535, %v3943
        %3945 = vmatprep.mubr.bf16.mxu0 0
        %3946 = vmatmul.mubr.bf16.gmra.mrb[0].mxu0 %v3463
        %v3947 = vpop.f32.mrb[0].mxu0
        %v3948 = vadd.f32 %v3531, %v3947
        %v3949 = vpop.f32.mrb[0].mxu0
        %v3950 = vadd.f32 %v3535, %v3949
        %v3951 = vpop.f32.mrb[0].mxu0
        %v3952 = vadd.f32 %v3531, %v3951
        %v3953 = vpop.f32.mrb[0].mxu0
        %v3954 = vadd.f32 %v3535, %v3953
        %3955 = vmatprep.mubr.bf16.mxu0 0
        %3956 = vmatmul.mubr.bf16.gmra.mrb[0].mxu0 %v3464
        %v3957 = vpop.f32.mrb[0].mxu0
        %v3958 = vadd.f32 %v3531, %v3957
        %v3959 = vpop.f32.mrb[0].mxu0
        %v3960 = vadd.f32 %v3535, %v3959
        %v3961 = vpop.f32.mrb[0].mxu0
        %v3962 = vadd.f32 %v3531, %v3961
        %v3963 = vpop.f32.mrb[0].mxu0
        %v3964 = vadd.f32 %v3535, %v3963
        %3965 = vmatprep.mubr.bf16.mxu0 0
        %3966 = vmatmul.mubr.bf16.gmra.mrb[0].mxu0 %v3465
        %v3967 = vpop.f32.mrb[0].mxu0
        %v3968 = vadd.f32 %v3531, %v3967
        %v3969 = vpop.f32.mrb[0].mxu0
        %v3970 = vadd.f32 %v3535, %v3969
        %v3971 = vpop.f32.mrb[0].mxu0
        %v3972 = vadd.f32 %v3531, %v3971
        %v3973 = vpop.f32.mrb[0].mxu0
        %v3974 = vadd.f32 %v3535, %v3973
        %3975 = vmatprep.mubr.bf16.mxu0 0
        %3976 = vmatmul.mubr.bf16.gmra.mrb[0].mxu0 %v3466
        %v3977 = vpop.f32.mrb[0].mxu0
        %v3978 = vadd.f32 %v3531, %v3977
        %v3979 = vpop.f32.mrb[0].mxu0
        %v3980 = vadd.f32 %v3535, %v3979
        %v3981 = vpop.f32.mrb[0].mxu0
        %v3982 = vadd.f32 %v3531, %v3981
        %v3983 = vpop.f32.mrb[0].mxu0
        %v3984 = vadd.f32 %v3535, %v3983
        %3985 = vmatprep.mubr.bf16.mxu0 0
        %3986 = vmatmul.mubr.bf16.gmra.mrb[0].mxu0 %v3467
        %v3987 = vpop.f32.mrb[0].mxu0
        %v3988 = vadd.f32 %v3531, %v3987
        %v3989 = vpop.f32.mrb[0].mxu0
        %v3990 = vadd.f32 %v3535, %v3989
        %v3991 = vpop.f32.mrb[0].mxu0
        %v3992 = vadd.f32 %v3531, %v3991
        %v3993 = vpop.f32.mrb[0].mxu0
        %v3994 = vadd.f32 %v3535, %v3993
        %3995 = vmatprep.mubr.bf16.mxu0 0
        %3996 = vmatmul.mubr.bf16.gmra.mrb[0].mxu0 %v3468
        %v3997 = vpop.f32.mrb[0].mxu0
        %v3998 = vadd.f32 %v3531, %v3997
        %v3999 = vpop.f32.mrb[0].mxu0
        %v4000 = vadd.f32 %v3535, %v3999
        %v4001 = vpop.f32.mrb[0].mxu0
        %v4002 = vadd.f32 %v3531, %v4001
        %v4003 = vpop.f32.mrb[0].mxu0
        %v4004 = vadd.f32 %v3535, %v4003
        %4005 = vmatprep.mubr.bf16.mxu0 0
        %4006 = vmatmul.mubr.bf16.gmra.mrb[0].mxu0 %v3469
        %v4007 = vpop.f32.mrb[0].mxu0
        %v4008 = vadd.f32 %v3531, %v4007
        %v4009 = vpop.f32.mrb[0].mxu0
        %v4010 = vadd.f32 %v3535, %v4009
        %v4011 = vpop.f32.mrb[0].mxu0
        %v4012 = vadd.f32 %v3531, %v4011
        %v4013 = vpop.f32.mrb[0].mxu0
        %v4014 = vadd.f32 %v3535, %v4013
        %4015 = vdwg.mxu0
        %4016 = vmatprep.subr.bf16.mxu0 %v3699
        %4017 = vmatpush1.bf16.msra.mxu0 %v3698
        %4018 = vmatprep.subr.bf16.mxu0 %v3705
        %4019 = vmatpush1.bf16.msra.mxu0 %v3704
        %4020 = vmatprep.subr.bf16.mxu0 %v3711
        %4021 = vmatpush1.bf16.msra.mxu0 %v3710
        %4022 = vmatprep.subr.bf16.mxu0 %v3717
        %4023 = vmatpush1.bf16.msra.mxu0 %v3716
        %4024 = vmatprep.subr.bf16.mxu0 %v3723
        %4025 = vmatpush1.bf16.msra.mxu0 %v3722
        %4026 = vmatprep.subr.bf16.mxu0 %v3729
        %4027 = vmatpush1.bf16.msra.mxu0 %v3728
        %4028 = vmatprep.subr.bf16.mxu0 %v3735
        %4029 = vmatpush1.bf16.msra.mxu0 %v3734
        %4030 = vmatprep.subr.bf16.mxu0 %v3741
        %4031 = vmatpush1.bf16.msra.mxu0 %v3740
        %4032 = vmatprep.subr.bf16.mxu0 0
        %4033 = vmatpush1.bf16.msra.mxu0 0
        %4034 = vmatprep.subr.bf16.mxu0 0
        %4035 = vmatpush1.bf16.msra.mxu0 0
        %4036 = vmatprep.subr.bf16.mxu0 0
        %4037 = vmatpush1.bf16.msra.mxu0 0
        %4038 = vmatprep.subr.bf16.mxu0 0
        %4039 = vmatpush1.bf16.msra.mxu0 0
        %4040 = vmatprep.subr.bf16.mxu0 0
        %4041 = vmatpush1.bf16.msra.mxu0 0
        %4042 = vmatprep.subr.bf16.mxu0 0
        %4043 = vmatpush1.bf16.msra.mxu0 0
        %4044 = vmatprep.subr.bf16.mxu0 0
        %4045 = vmatpush1.bf16.msra.mxu0 0
        %4046 = vmatprep.subr.bf16.mxu0 0
        %4047 = vmatpush1.bf16.msra.mxu0 0
        %4048 = vmatprep.mubr.bf16.mxu0 0
        %4049 = vmatmul.mubr.bf16.gmra.mrb[0].mxu0 %v3462
        %v4050 = vpop.f32.mrb[0].mxu0
        %v4051 = vadd.f32 %v3539, %v4050
        %v4052 = vpop.f32.mrb[0].mxu0
        %v4053 = vadd.f32 %v3543, %v4052
        %v4054 = vpop.f32.mrb[0].mxu0
        %v4055 = vadd.f32 %v3539, %v4054
        %v4056 = vpop.f32.mrb[0].mxu0
        %v4057 = vadd.f32 %v3543, %v4056
        %4058 = vmatprep.mubr.bf16.mxu0 0
        %4059 = vmatmul.mubr.bf16.gmra.mrb[0].mxu0 %v3463
        %v4060 = vpop.f32.mrb[0].mxu0
        %v4061 = vadd.f32 %v3539, %v4060
        %v4062 = vpop.f32.mrb[0].mxu0
        %v4063 = vadd.f32 %v3543, %v4062
        %v4064 = vpop.f32.mrb[0].mxu0
        %v4065 = vadd.f32 %v3539, %v4064
        %v4066 = vpop.f32.mrb[0].mxu0
        %v4067 = vadd.f32 %v3543, %v4066
        %4068 = vmatprep.mubr.bf16.mxu0 0
        %4069 = vmatmul.mubr.bf16.gmra.mrb[0].mxu0 %v3464
        %v4070 = vpop.f32.mrb[0].mxu0
        %v4071 = vadd.f32 %v3539, %v4070
        %v4072 = vpop.f32.mrb[0].mxu0
        %v4073 = vadd.f32 %v3543, %v4072
        %v4074 = vpop.f32.mrb[0].mxu0
        %v4075 = vadd.f32 %v3539, %v4074
        %v4076 = vpop.f32.mrb[0].mxu0
        %v4077 = vadd.f32 %v3543, %v4076
        %4078 = vmatprep.mubr.bf16.mxu0 0
        %4079 = vmatmul.mubr.bf16.gmra.mrb[0].mxu0 %v3465
        %v4080 = vpop.f32.mrb[0].mxu0
        %v4081 = vadd.f32 %v3539, %v4080
        %v4082 = vpop.f32.mrb[0].mxu0
        %v4083 = vadd.f32 %v3543, %v4082
        %v4084 = vpop.f32.mrb[0].mxu0
        %v4085 = vadd.f32 %v3539, %v4084
        %v4086 = vpop.f32.mrb[0].mxu0
        %v4087 = vadd.f32 %v3543, %v4086
        %4088 = vmatprep.mubr.bf16.mxu0 0
        %4089 = vmatmul.mubr.bf16.gmra.mrb[0].mxu0 %v3466
        %v4090 = vpop.f32.mrb[0].mxu0
        %v4091 = vadd.f32 %v3539, %v4090
        %v4092 = vpop.f32.mrb[0].mxu0
        %v4093 = vadd.f32 %v3543, %v4092
        %v4094 = vpop.f32.mrb[0].mxu0
        %v4095 = vadd.f32 %v3539, %v4094
        %v4096 = vpop.f32.mrb[0].mxu0
        %v4097 = vadd.f32 %v3543, %v4096
        %4098 = vmatprep.mubr.bf16.mxu0 0
        %4099 = vmatmul.mubr.bf16.gmra.mrb[0].mxu0 %v3467
        %v4100 = vpop.f32.mrb[0].mxu0
        %v4101 = vadd.f32 %v3539, %v4100
        %v4102 = vpop.f32.mrb[0].mxu0
        %v4103 = vadd.f32 %v3543, %v4102
        %v4104 = vpop.f32.mrb[0].mxu0
        %v4105 = vadd.f32 %v3539, %v4104
        %v4106 = vpop.f32.mrb[0].mxu0
        %v4107 = vadd.f32 %v3543, %v4106
        %4108 = vmatprep.mubr.bf16.mxu0 0
        %4109 = vmatmul.mubr.bf16.gmra.mrb[0].mxu0 %v3468
        %v4110 = vpop.f32.mrb[0].mxu0
        %v4111 = vadd.f32 %v3539, %v4110
        %v4112 = vpop.f32.mrb[0].mxu0
        %v4113 = vadd.f32 %v3543, %v4112
        %v4114 = vpop.f32.mrb[0].mxu0
        %v4115 = vadd.f32 %v3539, %v4114
        %v4116 = vpop.f32.mrb[0].mxu0
        %v4117 = vadd.f32 %v3543, %v4116
        %4118 = vmatprep.mubr.bf16.mxu0 0
        %4119 = vmatmul.mubr.bf16.gmra.mrb[0].mxu0 %v3469
        %v4120 = vpop.f32.mrb[0].mxu0
        %v4121 = vadd.f32 %v3539, %v4120
        %v4122 = vpop.f32.mrb[0].mxu0
        %v4123 = vadd.f32 %v3543, %v4122
        %v4124 = vpop.f32.mrb[0].mxu0
        %v4125 = vadd.f32 %v3539, %v4124
        %v4126 = vpop.f32.mrb[0].mxu0
        %v4127 = vadd.f32 %v3543, %v4126
        %4128 = vdwg.mxu0
        %4129 = vst [vmem:[%s447] sm:$0xff] %v3825
        %4130 = vst [vmem:[%s447 + $0x8] sm:$0xff] %v3827
        %4131 = vst [vmem:[%s447 + $0x10] sm:$0xff] %v3938
        %4132 = vst [vmem:[%s447 + $0x18] sm:$0xff] %v3940
        %4133 = vst [vmem:[%s447 + $0x20] sm:$0xff] %v4051
        %4134 = vst [vmem:[%s447 + $0x28] sm:$0xff] %v4053
        %4135 = vst [vmem:[%s447 + $0x30] sm:$0xff] %v3829
        %4136 = vst [vmem:[%s447 + $0x38] sm:$0xff] %v3831
        %4137 = vst [vmem:[%s447 + $0x40] sm:$0xff] %v3942
        %4138 = vst [vmem:[%s447 + $0x48] sm:$0xff] %v3944
        %4139 = vst [vmem:[%s447 + $0x50] sm:$0xff] %v4055
        %4140 = vst [vmem:[%s447 + $0x58] sm:$0xff] %v4057
        %4141 = vst [vmem:[%s447 + $0x60] sm:$0xff] %v3835
        %4142 = vst [vmem:[%s447 + $0x68] sm:$0xff] %v3837
        %4143 = vst [vmem:[%s447 + $0x70] sm:$0xff] %v3948
        %4144 = vst [vmem:[%s447 + $0x78] sm:$0xff] %v3950
        %4145 = vst [vmem:[%s447 + $0x80] sm:$0xff] %v4061
        %4146 = vst [vmem:[%s447 + $0x88] sm:$0xff] %v4063
        %4147 = vst [vmem:[%s447 + $0x90] sm:$0xff] %v3839
        %4148 = vst [vmem:[%s447 + $0x98] sm:$0xff] %v3841
        %4149 = vst [vmem:[%s447 + $0xa0] sm:$0xff] %v3952
        %4150 = vst [vmem:[%s447 + $0xa8] sm:$0xff] %v3954
        %4151 = vst [vmem:[%s447 + $0xb0] sm:$0xff] %v4065
        %4152 = vst [vmem:[%s447 + $0xb8] sm:$0xff] %v4067
        %4153 = vst [vmem:[%s447 + $0xc0] sm:$0xff] %v3845
        %4154 = vst [vmem:[%s447 + $0xc8] sm:$0xff] %v3847
        %4155 = vst [vmem:[%s447 + $0xd0] sm:$0xff] %v3958
        %4156 = vst [vmem:[%s447 + $0xd8] sm:$0xff] %v3960
        %4157 = vst [vmem:[%s447 + $0xe0] sm:$0xff] %v4071
        %4158 = vst [vmem:[%s447 + $0xe8] sm:$0xff] %v4073
        %4159 = vst [vmem:[%s447 + $0xf0] sm:$0xff] %v3849
        %4160 = vst [vmem:[%s447 + $0xf8] sm:$0xff] %v3851
        %4161 = vst [vmem:[%s447 + $0x100] sm:$0xff] %v3962
        %4162 = vst [vmem:[%s447 + $0x108] sm:$0xff] %v3964
        %4163 = vst [vmem:[%s447 + $0x110] sm:$0xff] %v4075
        %4164 = vst [vmem:[%s447 + $0x118] sm:$0xff] %v4077
        %4165 = vst [vmem:[%s447 + $0x120] sm:$0xff] %v3855
        %4166 = vst [vmem:[%s447 + $0x128] sm:$0xff] %v3857
        %4167 = vst [vmem:[%s447 + $0x130] sm:$0xff] %v3968
        %4168 = vst [vmem:[%s447 + $0x138] sm:$0xff] %v3970
        %4169 = vst [vmem:[%s447 + $0x140] sm:$0xff] %v4081
        %4170 = vst [vmem:[%s447 + $0x148] sm:$0xff] %v4083
        %4171 = vst [vmem:[%s447 + $0x150] sm:$0xff] %v3859
        %4172 = vst [vmem:[%s447 + $0x158] sm:$0xff] %v3861
        %4173 = vst [vmem:[%s447 + $0x160] sm:$0xff] %v3972
        %4174 = vst [vmem:[%s447 + $0x168] sm:$0xff] %v3974
        %4175 = vst [vmem:[%s447 + $0x170] sm:$0xff] %v4085
        %4176 = vst [vmem:[%s447 + $0x178] sm:$0xff] %v4087
        %4177 = vst [vmem:[%s447 + $0x180] sm:$0xff] %v3865
        %4178 = vst [vmem:[%s447 + $0x188] sm:$0xff] %v3867
        %4179 = vst [vmem:[%s447 + $0x190] sm:$0xff] %v3978
        %4180 = vst [vmem:[%s447 + $0x198] sm:$0xff] %v3980
        %4181 = vst [vmem:[%s447 + $0x1a0] sm:$0xff] %v4091
        %4182 = vst [vmem:[%s447 + $0x1a8] sm:$0xff] %v4093
        %4183 = vst [vmem:[%s447 + $0x1b0] sm:$0xff] %v3869
        %4184 = vst [vmem:[%s447 + $0x1b8] sm:$0xff] %v3871
        %4185 = vst [vmem:[%s447 + $0x1c0] sm:$0xff] %v3982
        %4186 = vst [vmem:[%s447 + $0x1c8] sm:$0xff] %v3984
        %4187 = vst [vmem:[%s447 + $0x1d0] sm:$0xff] %v4095
        %4188 = vst [vmem:[%s447 + $0x1d8] sm:$0xff] %v4097
        %4189 = vst [vmem:[%s447 + $0x1e0] sm:$0xff] %v3875
        %4190 = vst [vmem:[%s447 + $0x1e8] sm:$0xff] %v3877
        %4191 = vst [vmem:[%s447 + $0x1f0] sm:$0xff] %v3988
        %4192 = vst [vmem:[%s447 + $0x1f8] sm:$0xff] %v3990
        %4193 = vst [vmem:[%s447 + $0x200] sm:$0xff] %v4101
        %4194 = vst [vmem:[%s447 + $0x208] sm:$0xff] %v4103
        %4195 = vst [vmem:[%s447 + $0x210] sm:$0xff] %v3879
        %4196 = vst [vmem:[%s447 + $0x218] sm:$0xff] %v3881
        %4197 = vst [vmem:[%s447 + $0x220] sm:$0xff] %v3992
        %4198 = vst [vmem:[%s447 + $0x228] sm:$0xff] %v3994
        %4199 = vst [vmem:[%s447 + $0x230] sm:$0xff] %v4105
        %4200 = vst [vmem:[%s447 + $0x238] sm:$0xff] %v4107
        %4201 = vst [vmem:[%s447 + $0x240] sm:$0xff] %v3885
        %4202 = vst [vmem:[%s447 + $0x248] sm:$0xff] %v3887
        %4203 = vst [vmem:[%s447 + $0x250] sm:$0xff] %v3998
        %4204 = vst [vmem:[%s447 + $0x258] sm:$0xff] %v4000
        %4205 = vst [vmem:[%s447 + $0x260] sm:$0xff] %v4111
        %4206 = vst [vmem:[%s447 + $0x268] sm:$0xff] %v4113
        %4207 = vst [vmem:[%s447 + $0x270] sm:$0xff] %v3889
        %4208 = vst [vmem:[%s447 + $0x278] sm:$0xff] %v3891
        %4209 = vst [vmem:[%s447 + $0x280] sm:$0xff] %v4002
        %4210 = vst [vmem:[%s447 + $0x288] sm:$0xff] %v4004
        %4211 = vst [vmem:[%s447 + $0x290] sm:$0xff] %v4115
        %4212 = vst [vmem:[%s447 + $0x298] sm:$0xff] %v4117
        %4213 = vst [vmem:[%s447 + $0x2a0] sm:$0xff] %v3895
        %4214 = vst [vmem:[%s447 + $0x2a8] sm:$0xff] %v3897
        %4215 = vst [vmem:[%s447 + $0x2b0] sm:$0xff] %v4008
        %4216 = vst [vmem:[%s447 + $0x2b8] sm:$0xff] %v4010
        %4217 = vst [vmem:[%s447 + $0x2c0] sm:$0xff] %v4121
        %4218 = vst [vmem:[%s447 + $0x2c8] sm:$0xff] %v4123
        %4219 = vst [vmem:[%s447 + $0x2d0] sm:$0xff] %v3899
        %4220 = vst [vmem:[%s447 + $0x2d8] sm:$0xff] %v3901
        %4221 = vst [vmem:[%s447 + $0x2e0] sm:$0xff] %v4012
        %4222 = vst [vmem:[%s447 + $0x2e8] sm:$0xff] %v4014
        %4223 = vst [vmem:[%s447 + $0x2f0] sm:$0xff] %v4125
        %4224 = vst [vmem:[%s447 + $0x2f8] sm:$0xff] %v4127
        %s4225 = sand.u32 %s235, 1
        %s4226 = scalar_lea.sflag [#allocation4], %s4225
        %s4227 = sand.u32 %s235, 1
        %s4228 = smul.addr %s4227, 128
        %s4229 = scalar_lea.vmem [#allocation11], %s4228
        %s4230 = sand.u32 %s261, 1
        %s4231 = scalar_lea.sflag [#allocation13], %s4230
        %s4232 = sand.u32 %s261, 1
        %s4233 = smul.addr %s4232, 768
        %s4234 = scalar_lea.vmem [#allocation12], %s4233
        // Predicated region
        $region77: #{tpu_custom_call.1} parent=55 // pred_check
          %p4235 = pneg %p245
        $region78: #{tpu_custom_call.1} parent=55 // pred_check_branch
          %4237 = sbr.rel (%p4235) target = $region80
        $region79: #{tpu_custom_call.1} parent=55 // pred_region
          %s4238 = smul.u32 16, %s33
          %s4240 = ssub.s32 2048, 2048
          %4241 = vsyncadd %s4226, %s4240
          %s4242 = smul.addr %s4238, 128
          %s4243 = scalar_lea.hbm %s9, %s4242
          %s4244 = sshll.u32 %s4229, 4
          %s4245 = int_to_ptr.vmem [resolvable:$true] %s4244
          %4250 = dma.vmem_to_hbm [thread:$0]  %s4245, 2048, %s4243, %s4226, 128, 128, 8
        $region80: #{tpu_custom_call.1} parent=55 // pred_fallthru
          _
        // Predicated region
        $region81: #{tpu_custom_call.1} parent=55 // pred_check
          %p4251 = pneg %p271
        $region82: #{tpu_custom_call.1} parent=55 // pred_check_branch
          %4253 = sbr.rel (%p4251) target = $region84
        $region83: #{tpu_custom_call.1} parent=55 // pred_region
          %s4254 = smul.u32 16, %s33
          %s4256 = ssub.s32 12288, 12288
          %4257 = vsyncadd %s4231, %s4256
          %s4258 = smul.addr %s4254, 6
          %s4259 = smul.addr %s4258, 128
          %s4260 = scalar_lea.hbm %s10, %s4259
          %s4261 = sshll.u32 %s4234, 4
          %s4262 = int_to_ptr.vmem [resolvable:$true] %s4261
          %4267 = dma.vmem_to_hbm [thread:$0]  %s4262, 12288, %s4260, %s4231, 768, 768, 48
        $region84: #{tpu_custom_call.1} parent=55 // pred_fallthru
          _
      $region56: #{tpu_custom_call.1} parent=5 // pred_fallthru
        _
      %p4268 = scmp.le.s32.totalorder 2, %s28
      // Predicated region
      $region85: #{tpu_custom_call.1} parent=5 // pred_check
        %p4269 = pneg %p4268
      $region86: #{tpu_custom_call.1} parent=5 // pred_check_branch
        %4271 = sbr.rel (%p4269) target = $region88
      $region87: #{tpu_custom_call.1} parent=5 // pred_region
        %s4272 = ssub.s32 %s28, 2
        // Predicated region
        $region89: #{tpu_custom_call.1} parent=87 // pred_check
          %p4273 = pneg %p251
        $region90: #{tpu_custom_call.1} parent=87 // pred_check_branch
          %4275 = sbr.rel (%p4273) target = $region92
        $region91: #{tpu_custom_call.1} parent=87 // pred_region
          %s4276 = sand.u32 %s236, 1
          %s4277 = scalar_lea.sflag [#allocation4], %s4276
          %s4278 = sand.u32 %s236, 1
          %s4279 = smul.addr %s4278, 128
          %s4280 = scalar_lea.vmem [#allocation11], %s4279
          %4281 = dma.done %s4277, 2048
        $region92: #{tpu_custom_call.1} parent=87 // pred_fallthru
          _
        // Predicated region
        $region93: #{tpu_custom_call.1} parent=87 // pred_check
          %p4282 = pneg %p277
        $region94: #{tpu_custom_call.1} parent=87 // pred_check_branch
          %4284 = sbr.rel (%p4282) target = $region96
        $region95: #{tpu_custom_call.1} parent=87 // pred_region
          %s4285 = sand.u32 %s262, 1
          %s4286 = scalar_lea.sflag [#allocation13], %s4285
          %s4287 = sand.u32 %s262, 1
          %s4288 = smul.addr %s4287, 768
          %s4289 = scalar_lea.vmem [#allocation12], %s4288
          %4290 = dma.done %s4286, 12288
        $region96: #{tpu_custom_call.1} parent=87 // pred_fallthru
          _
      $region88: #{tpu_custom_call.1} parent=5 // pred_fallthru
        _
    $region6: #{tpu_custom_call.1} parent=1 // loop_footer
      %s32 = sadd.s32 1, %s28
    $region7: #{tpu_custom_call.1} parent=1 // loop_footer_branch
      %27 = sbr.rel target = $region3
    $region8: #{tpu_custom_call.1} parent=1 // loop_exit
      _
    %4291 = vsyncpa [#allocation3], 1
    %s4292 = scalar_lea.sflag [#allocation3], 1
    %4293 = vsyncpa %s4292, 1
    %4294 = vsyncpa [#allocation6], 1
    %4295 = vsyncpa [#allocation9], 1
    %4296 = vsyncpa [#allocation4], 1
    %s4297 = scalar_lea.sflag [#allocation4], 1
    %4298 = vsyncpa %s4297, 1
    %4299 = vsyncpa [#allocation13], 1
    %s4300 = scalar_lea.sflag [#allocation13], 1
    %4301 = vsyncpa %s4300, 1

// kernel: tpu_custom_call.1
$region0: #{tpu_custom_call.1}
  #allocation0 [shape = 'u32[]', space=smem, size = 0x4, offset = 0x4, fixed_abs, tag = 'smem constant byte address 0x4 - core index']
  #allocation1 [shape = 'u32[144,128]{1,0:T(1,128)}', space=vmem, size = 0x12000, scoped, tag = 'internal scratch']
  %s0 = inlined_call_operand.hbm [shape: f32[256,768], index: 0, kind: input, shape index: {}]
  %s1 = inlined_call_operand.hbm [shape: bf16[768,512], index: 1, kind: input, shape index: {}]
  %s2 = inlined_call_operand.vmem [shape: f32[1,512], index: 2, kind: input, shape index: {}]
  %s3 = inlined_call_operand.hbm [shape: bf16[512,256], index: 3, kind: input, shape index: {}]
  %s4 = inlined_call_operand.vmem [shape: f32[1,256], index: 4, kind: input, shape index: {}]
  %s5 = inlined_call_operand.hbm [shape: bf16[256,128], index: 5, kind: input, shape index: {}]
  %s6 = inlined_call_operand.vmem [shape: f32[1,128], index: 6, kind: input, shape index: {}]
  %s7 = inlined_call_operand.hbm [shape: bf16[128,768], index: 7, kind: input, shape index: {}]
  %s8 = inlined_call_operand.vmem [shape: f32[1,768], index: 8, kind: input, shape index: {}]
  %s9 = inlined_call_operand.hbm [shape: f32[256,128], index: 9, kind: output, shape index: {0}]
  %s10 = inlined_call_operand.hbm [shape: f32[256,768], index: 10, kind: output, shape index: {1}]
  %11 = xla_tuple %s9, %s10
  %s12 = sld [smem:[#allocation0]]
  $region97: #{tpu_custom_call.1} parent=0
    _
  %s14 = ssub.s32 1, %s12
  %s15 = scalar_select 0, %s14, %s12
  $region1: #{tpu_custom_call.1} parent=0
    #allocation2 [shape = 'u8[786432]{0}', space=vmem, size = 0xc0000, scoped, tag = 'input window, operand 0']
    #allocation3 [shape = 's32[2]{0}', space=sflag, size = 0x8, scoped, tag = 'scoped memory for tpu_custom_call.1']
    #allocation4 [shape = 's32[2]{0}', space=sflag, size = 0x8, scoped, tag = 'scoped memory for tpu_custom_call.1']
    #allocation5 [shape = 'u8[786432]{0}', space=vmem, size = 0xc0000, scoped, tag = 'input window, operand 1, single buffered']
    #allocation6 [shape = 's32[1]{0}', space=sflag, size = 0x4, scoped, tag = 'scoped memory for tpu_custom_call.1']
    #allocation7 [shape = 'u8[262144]{0}', space=vmem, size = 0x40000, scoped, tag = 'input window, operand 3, single buffered']
    #allocation8 [shape = 'u8[65536]{0}', space=vmem, size = 0x10000, scoped, tag = 'input window, operand 5, single buffered']
    #allocation9 [shape = 's32[1]{0}', space=sflag, size = 0x4, scoped, tag = 'scoped memory for tpu_custom_call.1']
    #allocation10 [shape = 'u8[196608]{0}', space=vmem, size = 0x30000, scoped, tag = 'input window, operand 7, single buffered']
    #allocation11 [shape = 'u8[131072]{0}', space=vmem, size = 0x20000, scoped, tag = 'output window, operand 0']
    #allocation12 [shape = 'u8[786432]{0}', space=vmem, size = 0xc0000, scoped, tag = 'output window, operand 1']
    #allocation13 [shape = 's32[2]{0}', space=sflag, size = 0x8, scoped, tag = 'scoped memory for tpu_custom_call.1']
    %16 = vsyncpa [#allocation3], 0
    %s17 = scalar_lea.sflag [#allocation3], 1
    %18 = vsyncpa %s17, 0
    %19 = vsyncpa [#allocation6], 0
    %20 = vsyncpa [#allocation9], 0
    %21 = vsyncpa [#allocation4], 0
    %s22 = scalar_lea.sflag [#allocation4], 1
    %23 = vsyncpa %s22, 0
    %24 = vsyncpa [#allocation13], 0
    %s25 = scalar_lea.sflag [#allocation13], 1
    %26 = vsyncpa %s25, 0
    loop: start=0, step=1, limit=4
    $region2: #{tpu_custom_call.1} parent=1 // loop_pre_header
      _
    $region3: #{tpu_custom_call.1} parent=1 // loop_header
      %s28 = sphi 0, %s32
      %p29 = scmp.ge.s32.totalorder %s28, 4
      %s38 = sphi 0, %s40
      %s41 = sphi 0, %s38
      %s42 = sphi 0, %s41
      %s58 = sphi 0, %s42
      %s62 = sphi 0, %s62
      %s64 = sphi 0, %s62
      %s65 = sphi 0, %s64
      %s79 = sphi 0, %s65
      %s83 = sphi 0, %s83
      %s85 = sphi 0, %s83
      %s86 = sphi 0, %s85
      %s100 = sphi 0, %s86
      %s104 = sphi 0, %s104
      %s106 = sphi 0, %s104
      %s107 = sphi 0, %s106
      %s121 = sphi 0, %s107
      %s125 = sphi 0, %s125
      %s127 = sphi 0, %s125
      %s128 = sphi 0, %s127
      %s142 = sphi 0, %s128
      %s146 = sphi 0, %s146
      %s148 = sphi 0, %s146
      %s149 = sphi 0, %s148
      %s163 = sphi 0, %s149
      %s167 = sphi 0, %s167
      %s169 = sphi 0, %s167
      %s170 = sphi 0, %s169
      %s184 = sphi 0, %s170
      %s188 = sphi 0, %s188
      %s190 = sphi 0, %s188
      %s191 = sphi 0, %s190
      %s205 = sphi 0, %s191
      %s209 = sphi 0, %s209
      %s211 = sphi 0, %s209
      %s212 = sphi 0, %s211
      %s226 = sphi 0, %s212
      %s232 = sphi 0, %s234
      %s235 = sphi 0, %s232
      %s236 = sphi 0, %s235
      %s252 = sphi 0, %s236
      %s258 = sphi 0, %s260
      %s261 = sphi 0, %s258
      %s262 = sphi 0, %s261
      %s278 = sphi 0, %s262
    $region4: #{tpu_custom_call.1} parent=1 // loop_header_branch
      %31 = sbr.rel (%p29) target = $region8
    $region5: #{tpu_custom_call.1} parent=1 // loop_body
      %s33 = ssub.s32 %s28, 1
      %s34 = ssub.s32 %s28, 2
      %s35 = sadd.s32 %s28, 1
      %s36 = ssub.s32 %s28, %s35
      %p37 = scmp.eq.s32.totalorder %s36, 0
      %s39 = sadd.s32 %s38, 1
      %s40 = scalar_select %p37, %s38, %s39
      %p43 = pneg %p37
      %p44 = scmp.eq.s32.totalorder %s28, 1
      %p45 = por %p43, %p44
      %p46 = scmp.ne.s32.totalorder %s38, %s41
      %p47 = scmp.eq.s32.totalorder %s28, 0
      %p48 = por %p46, %p47
      %p49 = scmp.ne.s32.totalorder %s38, %s41
      %p50 = scmp.eq.s32.totalorder %s33, 1
      %p51 = por %p49, %p50
      %p52 = scmp.ne.s32.totalorder %s41, %s42
      %p53 = scmp.eq.s32.totalorder %s33, 0
      %p54 = por %p52, %p53
      %p55 = scmp.ne.s32.totalorder %s41, %s42
      %p56 = scmp.eq.s32.totalorder %s34, 1
      %p57 = por %p55, %p56
      %p59 = scmp.ne.s32.totalorder %s42, %s58
      %p60 = scmp.eq.s32.totalorder %s34, 0
      %p61 = por %p59, %p60
      %s63 = sadd.s32 %s62, 1
      %p66 = scmp.eq.s32.totalorder %s28, 1
      %p67 = scmp.ne.s32.totalorder %s62, %s64
      %p68 = scmp.eq.s32.totalorder %s28, 0
      %p69 = por %p67, %p68
      %p70 = scmp.ne.s32.totalorder %s62, %s64
      %p71 = scmp.eq.s32.totalorder %s33, 1
      %p72 = por %p70, %p71
      %p73 = scmp.ne.s32.totalorder %s64, %s65
      %p74 = scmp.eq.s32.totalorder %s33, 0
      %p75 = por %p73, %p74
      %p76 = scmp.ne.s32.totalorder %s64, %s65
      %p77 = scmp.eq.s32.totalorder %s34, 1
      %p78 = por %p76, %p77
      %p80 = scmp.ne.s32.totalorder %s65, %s79
      %p81 = scmp.eq.s32.totalorder %s34, 0
      %p82 = por %p80, %p81
      %s84 = sadd.s32 %s83, 1
      %p87 = scmp.eq.s32.totalorder %s28, 1
      %p88 = scmp.ne.s32.totalorder %s83, %s85
      %p89 = scmp.eq.s32.totalorder %s28, 0
      %p90 = por %p88, %p89
      %p91 = scmp.ne.s32.totalorder %s83, %s85
      %p92 = scmp.eq.s32.totalorder %s33, 1
      %p93 = por %p91, %p92
      %p94 = scmp.ne.s32.totalorder %s85, %s86
      %p95 = scmp.eq.s32.totalorder %s33, 0
      %p96 = por %p94, %p95
      %p97 = scmp.ne.s32.totalorder %s85, %s86
      %p98 = scmp.eq.s32.totalorder %s34, 1
      %p99 = por %p97, %p98
      %p101 = scmp.ne.s32.totalorder %s86, %s100
      %p102 = scmp.eq.s32.totalorder %s34, 0
      %p103 = por %p101, %p102
      %s105 = sadd.s32 %s104, 1
      %p108 = scmp.eq.s32.totalorder %s28, 1
      %p109 = scmp.ne.s32.totalorder %s104, %s106
      %p110 = scmp.eq.s32.totalorder %s28, 0
      %p111 = por %p109, %p110
      %p112 = scmp.ne.s32.totalorder %s104, %s106
      %p113 = scmp.eq.s32.totalorder %s33, 1
      %p114 = por %p112, %p113
      %p115 = scmp.ne.s32.totalorder %s106, %s107
      %p116 = scmp.eq.s32.totalorder %s33, 0
      %p117 = por %p115, %p116
      %p118 = scmp.ne.s32.totalorder %s106, %s107
      %p119 = scmp.eq.s32.totalorder %s34, 1
      %p120 = por %p118, %p119
      %p122 = scmp.ne.s32.totalorder %s107, %s121
      %p123 = scmp.eq.s32.totalorder %s34, 0
      %p124 = por %p122, %p123
      %s126 = sadd.s32 %s125, 1
      %p129 = scmp.eq.s32.totalorder %s28, 1
      %p130 = scmp.ne.s32.totalorder %s125, %s127
      %p131 = scmp.eq.s32.totalorder %s28, 0
      %p132 = por %p130, %p131
      %p133 = scmp.ne.s32.totalorder %s125, %s127
      %p134 = scmp.eq.s32.totalorder %s33, 1
      %p135 = por %p133, %p134
      %p136 = scmp.ne.s32.totalorder %s127, %s128
      %p137 = scmp.eq.s32.totalorder %s33, 0
      %p138 = por %p136, %p137
      %p139 = scmp.ne.s32.totalorder %s127, %s128
      %p140 = scmp.eq.s32.totalorder %s34, 1
      %p141 = por %p139, %p140
      %p143 = scmp.ne.s32.totalorder %s128, %s142
      %p144 = scmp.eq.s32.totalorder %s34, 0
      %p145 = por %p143, %p144
      %s147 = sadd.s32 %s146, 1
      %p150 = scmp.eq.s32.totalorder %s28, 1
      %p151 = scmp.ne.s32.totalorder %s146, %s148
      %p152 = scmp.eq.s32.totalorder %s28, 0
      %p153 = por %p151, %p152
      %p154 = scmp.ne.s32.totalorder %s146, %s148
      %p155 = scmp.eq.s32.totalorder %s33, 1
      %p156 = por %p154, %p155
      %p157 = scmp.ne.s32.totalorder %s148, %s149
      %p158 = scmp.eq.s32.totalorder %s33, 0
      %p159 = por %p157, %p158
      %p160 = scmp.ne.s32.totalorder %s148, %s149
      %p161 = scmp.eq.s32.totalorder %s34, 1
      %p162 = por %p160, %p161
      %p164 = scmp.ne.s32.totalorder %s149, %s163
      %p165 = scmp.eq.s32.totalorder %s34, 0
      %p166 = por %p164, %p165
      %s168 = sadd.s32 %s167, 1
      %p171 = scmp.eq.s32.totalorder %s28, 1
      %p172 = scmp.ne.s32.totalorder %s167, %s169
      %p173 = scmp.eq.s32.totalorder %s28, 0
      %p174 = por %p172, %p173
      %p175 = scmp.ne.s32.totalorder %s167, %s169
      %p176 = scmp.eq.s32.totalorder %s33, 1
      %p177 = por %p175, %p176
      %p178 = scmp.ne.s32.totalorder %s169, %s170
      %p179 = scmp.eq.s32.totalorder %s33, 0
      %p180 = por %p178, %p179
      %p181 = scmp.ne.s32.totalorder %s169, %s170
      %p182 = scmp.eq.s32.totalorder %s34, 1
      %p183 = por %p181, %p182
      %p185 = scmp.ne.s32.totalorder %s170, %s184
      %p186 = scmp.eq.s32.totalorder %s34, 0
      %p187 = por %p185, %p186
      %s189 = sadd.s32 %s188, 1
      %p192 = scmp.eq.s32.totalorder %s28, 1
      %p193 = scmp.ne.s32.totalorder %s188, %s190
      %p194 = scmp.eq.s32.totalorder %s28, 0
      %p195 = por %p193, %p194
      %p196 = scmp.ne.s32.totalorder %s188, %s190
      %p197 = scmp.eq.s32.totalorder %s33, 1
      %p198 = por %p196, %p197
      %p199 = scmp.ne.s32.totalorder %s190, %s191
      %p200 = scmp.eq.s32.totalorder %s33, 0
      %p201 = por %p199, %p200
      %p202 = scmp.ne.s32.totalorder %s190, %s191
      %p203 = scmp.eq.s32.totalorder %s34, 1
      %p204 = por %p202, %p203
      %p206 = scmp.ne.s32.totalorder %s191, %s205
      %p207 = scmp.eq.s32.totalorder %s34, 0
      %p208 = por %p206, %p207
      %s210 = sadd.s32 %s209, 1
      %p213 = scmp.eq.s32.totalorder %s28, 1
      %p214 = scmp.ne.s32.totalorder %s209, %s211
      %p215 = scmp.eq.s32.totalorder %s28, 0
      %p216 = por %p214, %p215
      %p217 = scmp.ne.s32.totalorder %s209, %s211
      %p218 = scmp.eq.s32.totalorder %s33, 1
      %p219 = por %p217, %p218
      %p220 = scmp.ne.s32.totalorder %s211, %s212
      %p221 = scmp.eq.s32.totalorder %s33, 0
      %p222 = por %p220, %p221
      %p223 = scmp.ne.s32.totalorder %s211, %s212
      %p224 = scmp.eq.s32.totalorder %s34, 1
      %p225 = por %p223, %p224
      %p227 = scmp.ne.s32.totalorder %s212, %s226
      %p228 = scmp.eq.s32.totalorder %s34, 0
      %p229 = por %p227, %p228
      %s230 = ssub.s32 %s28, %s35
      %p231 = scmp.eq.s32.totalorder %s230, 0
      %s233 = sadd.s32 %s232, 1
      %s234 = scalar_select %p231, %s232, %s233
      %p237 = pneg %p231
      %p238 = scmp.eq.s32.totalorder %s28, 1
      %p239 = por %p237, %p238
      %p240 = scmp.ne.s32.totalorder %s232, %s235
      %p241 = scmp.eq.s32.totalorder %s28, 0
      %p242 = por %p240, %p241
      %p243 = scmp.ne.s32.totalorder %s232, %s235
      %p244 = scmp.eq.s32.totalorder %s33, 1
      %p245 = por %p243, %p244
      %p246 = scmp.ne.s32.totalorder %s235, %s236
      %p247 = scmp.eq.s32.totalorder %s33, 0
      %p248 = por %p246, %p247
      %p249 = scmp.ne.s32.totalorder %s235, %s236
      %p250 = scmp.eq.s32.totalorder %s34, 1
      %p251 = por %p249, %p250
      %p253 = scmp.ne.s32.totalorder %s236, %s252
      %p254 = scmp.eq.s32.totalorder %s34, 0
      %p255 = por %p253, %p254
      %s256 = ssub.s32 %s28, %s35
      %p257 = scmp.eq.s32.totalorder %s256, 0
      %s259 = sadd.s32 %s258, 1
      %s260 = scalar_select %p257, %s258, %s259
      %p263 = pneg %p257
      %p264 = scmp.eq.s32.totalorder %s28, 1
      %p265 = por %p263, %p264
      %p266 = scmp.ne.s32.totalorder %s258, %s261
      %p267 = scmp.eq.s32.totalorder %s28, 0
      %p268 = por %p266, %p267
      %p269 = scmp.ne.s32.totalorder %s258, %s261
      %p270 = scmp.eq.s32.totalorder %s33, 1
      %p271 = por %p269, %p270
      %p272 = scmp.ne.s32.totalorder %s261, %s262
      %p273 = scmp.eq.s32.totalorder %s33, 0
      %p274 = por %p272, %p273
      %p275 = scmp.ne.s32.totalorder %s261, %s262
      %p276 = scmp.eq.s32.totalorder %s34, 1
      %p277 = por %p275, %p276
      %p279 = scmp.ne.s32.totalorder %s262, %s278
      %p280 = scmp.eq.s32.totalorder %s34, 0
      %p281 = por %p279, %p280
      %p282 = scmp.le.s32.totalorder 1, %s28
      %p283 = scmp.lt.s32.totalorder %s28, 3
      %p284 = pnand %p282, %p283
      %p285 = pneg %p284
      // Predicated region
      $region9: #{tpu_custom_call.1} parent=5 // pred_check
        _
      $region10: #{tpu_custom_call.1} parent=5 // pred_check_branch
        %287 = sbr.rel (%p284) target = $region12
      $region11: #{tpu_custom_call.1} parent=5 // pred_region
        %s288 = ssub.s32 %s28, 1
        // Predicated region
        $region13: #{tpu_custom_call.1} parent=11 // pred_check
          %p289 = pneg %p75
        $region14: #{tpu_custom_call.1} parent=11 // pred_check_branch
          %291 = sbr.rel (%p289) target = $region16
        $region15: #{tpu_custom_call.1} parent=11 // pred_region
          %s293 = ssub.s32 24576, 24576
          %294 = vsyncadd [#allocation6], %s293
          %s295 = sshll.u32 [#allocation5], 4
          %s296 = int_to_ptr.vmem [resolvable:$true] %s295
          %301 = dma.hbm_to_vmem [thread:$0]  %s1, 24576, %s296, [#allocation6], 256, 256, 16
        $region16: #{tpu_custom_call.1} parent=11 // pred_fallthru
          _
        // Predicated region
        $region17: #{tpu_custom_call.1} parent=11 // pred_check
          %p302 = pneg %p96
        $region18: #{tpu_custom_call.1} parent=11 // pred_check_branch
          %304 = sbr.rel (%p302) target = $region20
        $region19: #{tpu_custom_call.1} parent=11 // pred_region
          _
        $region20: #{tpu_custom_call.1} parent=11 // pred_fallthru
          _
        // Predicated region
        $region21: #{tpu_custom_call.1} parent=11 // pred_check
          %p305 = pneg %p117
        $region22: #{tpu_custom_call.1} parent=11 // pred_check_branch
          %307 = sbr.rel (%p305) target = $region24
        $region23: #{tpu_custom_call.1} parent=11 // pred_region
          %s309 = ssub.s32 8192, 8192
          %310 = vsyncadd [#allocation6], %s309
          %s311 = sshll.u32 [#allocation7], 4
          %s312 = int_to_ptr.vmem [resolvable:$true] %s311
          %317 = dma.hbm_to_vmem [thread:$0]  %s3, 8192, %s312, [#allocation6], 128, 128, 8
        $region24: #{tpu_custom_call.1} parent=11 // pred_fallthru
          _
        // Predicated region
        $region25: #{tpu_custom_call.1} parent=11 // pred_check
          %p318 = pneg %p138
        $region26: #{tpu_custom_call.1} parent=11 // pred_check_branch
          %320 = sbr.rel (%p318) target = $region28
        $region27: #{tpu_custom_call.1} parent=11 // pred_region
          _
        $region28: #{tpu_custom_call.1} parent=11 // pred_fallthru
          _
        // Predicated region
        $region29: #{tpu_custom_call.1} parent=11 // pred_check
          %p321 = pneg %p159
        $region30: #{tpu_custom_call.1} parent=11 // pred_check_branch
          %323 = sbr.rel (%p321) target = $region32
        $region31: #{tpu_custom_call.1} parent=11 // pred_region
          %s325 = ssub.s32 2048, 2048
          %326 = vsyncadd [#allocation9], %s325
          %s327 = sshll.u32 [#allocation8], 4
          %s328 = int_to_ptr.vmem [resolvable:$true] %s327
          %333 = dma.hbm_to_vmem [thread:$0]  %s5, 2048, %s328, [#allocation9], 64, 64, 4
        $region32: #{tpu_custom_call.1} parent=11 // pred_fallthru
          _
        // Predicated region
        $region33: #{tpu_custom_call.1} parent=11 // pred_check
          %p334 = pneg %p180
        $region34: #{tpu_custom_call.1} parent=11 // pred_check_branch
          %336 = sbr.rel (%p334) target = $region36
        $region35: #{tpu_custom_call.1} parent=11 // pred_region
          _
        $region36: #{tpu_custom_call.1} parent=11 // pred_fallthru
          _
        // Predicated region
        $region37: #{tpu_custom_call.1} parent=11 // pred_check
          %p337 = pneg %p201
        $region38: #{tpu_custom_call.1} parent=11 // pred_check_branch
          %339 = sbr.rel (%p337) target = $region40
        $region39: #{tpu_custom_call.1} parent=11 // pred_region
          %s341 = ssub.s32 6144, 6144
          %342 = vsyncadd [#allocation9], %s341
          %s343 = sshll.u32 [#allocation10], 4
          %s344 = int_to_ptr.vmem [resolvable:$true] %s343
          %349 = dma.hbm_to_vmem [thread:$0]  %s7, 6144, %s344, [#allocation9], 384, 384, 24
        $region40: #{tpu_custom_call.1} parent=11 // pred_fallthru
          _
        // Predicated region
        $region41: #{tpu_custom_call.1} parent=11 // pred_check
          %p350 = pneg %p222
        $region42: #{tpu_custom_call.1} parent=11 // pred_check_branch
          %352 = sbr.rel (%p350) target = $region44
        $region43: #{tpu_custom_call.1} parent=11 // pred_region
          _
        $region44: #{tpu_custom_call.1} parent=11 // pred_fallthru
          _
      $region12: #{tpu_custom_call.1} parent=5 // pred_fallthru
        _
      %p353 = scmp.lt.s32.totalorder %s28, 2
      // Predicated region
      $region45: #{tpu_custom_call.1} parent=5 // pred_check
        %p354 = pneg %p353
      $region46: #{tpu_custom_call.1} parent=5 // pred_check_branch
        %356 = sbr.rel (%p354) target = $region48
      $region47: #{tpu_custom_call.1} parent=5 // pred_region
        // Predicated region
        $region49: #{tpu_custom_call.1} parent=47 // pred_check
          %p357 = pneg %p48
        $region50: #{tpu_custom_call.1} parent=47 // pred_check_branch
          %359 = sbr.rel (%p357) target = $region52
        $region51: #{tpu_custom_call.1} parent=47 // pred_region
          %s360 = sand.u32 %s38, 1
          %s361 = scalar_lea.sflag [#allocation3], %s360
          %s362 = sand.u32 %s38, 1
          %s363 = smul.addr %s362, 768
          %s364 = scalar_lea.vmem [#allocation2], %s363
          %s365 = smul.u32 16, %s28
          %s367 = ssub.s32 12288, 12288
          %368 = vsyncadd %s361, %s367
          %s369 = smul.addr %s365, 6
          %s370 = smul.addr %s369, 128
          %s371 = scalar_lea.hbm %s0, %s370
          %s372 = sshll.u32 %s364, 4
          %s373 = int_to_ptr.vmem [resolvable:$true] %s372
          %378 = dma.hbm_to_vmem [thread:$0]  %s371, 12288, %s373, %s361, 768, 768, 48
        $region52: #{tpu_custom_call.1} parent=47 // pred_fallthru
          _
      $region48: #{tpu_custom_call.1} parent=5 // pred_fallthru
        _
      %p379 = scmp.le.s32.totalorder 1, %s28
      %p380 = scmp.lt.s32.totalorder %s28, 3
      %p381 = pnand %p379, %p380
      %p382 = pneg %p381
      // Predicated region
      $region53: #{tpu_custom_call.1} parent=5 // pred_check
        _
      $region54: #{tpu_custom_call.1} parent=5 // pred_check_branch
        %384 = sbr.rel (%p381) target = $region56
      $region55: #{tpu_custom_call.1} parent=5 // pred_region
        %s385 = ssub.s32 %s28, 1
        %s386 = sand.u32 %s41, 1
        %s387 = scalar_lea.sflag [#allocation3], %s386
        %s388 = sand.u32 %s41, 1
        %s389 = smul.addr %s388, 768
        %s390 = scalar_lea.vmem [#allocation2], %s389
        // Predicated region
        $region57: #{tpu_custom_call.1} parent=55 // pred_check
          %p391 = pneg %p54
        $region58: #{tpu_custom_call.1} parent=55 // pred_check_branch
          %393 = sbr.rel (%p391) target = $region60
        $region59: #{tpu_custom_call.1} parent=55 // pred_region
          %394 = dma.done %s387, 12288
        $region60: #{tpu_custom_call.1} parent=55 // pred_fallthru
          _
        // Predicated region
        $region61: #{tpu_custom_call.1} parent=55 // pred_check
          %p395 = pneg %p75
        $region62: #{tpu_custom_call.1} parent=55 // pred_check_branch
          %397 = sbr.rel (%p395) target = $region64
        $region63: #{tpu_custom_call.1} parent=55 // pred_region
          %398 = dma.done [#allocation6], 24576
        $region64: #{tpu_custom_call.1} parent=55 // pred_fallthru
          _
        // Predicated region
        $region65: #{tpu_custom_call.1} parent=55 // pred_check
          %p399 = pneg %p117
        $region66: #{tpu_custom_call.1} parent=55 // pred_check_branch
          %401 = sbr.rel (%p399) target = $region68
        $region67: #{tpu_custom_call.1} parent=55 // pred_region
          %402 = dma.done [#allocation6], 8192
        $region68: #{tpu_custom_call.1} parent=55 // pred_fallthru
          _
        // Predicated region
        $region69: #{tpu_custom_call.1} parent=55 // pred_check
          %p403 = pneg %p159
        $region70: #{tpu_custom_call.1} parent=55 // pred_check_branch
          %405 = sbr.rel (%p403) target = $region72
        $region71: #{tpu_custom_call.1} parent=55 // pred_region
          %406 = dma.done [#allocation9], 2048
        $region72: #{tpu_custom_call.1} parent=55 // pred_fallthru
          _
        // Predicated region
        $region73: #{tpu_custom_call.1} parent=55 // pred_check
          %p407 = pneg %p201
        $region74: #{tpu_custom_call.1} parent=55 // pred_check_branch
          %409 = sbr.rel (%p407) target = $region76
        $region75: #{tpu_custom_call.1} parent=55 // pred_region
          %410 = dma.done [#allocation9], 6144
        $region76: #{tpu_custom_call.1} parent=55 // pred_fallthru
          _
        %s411 = sand.u32 %s41, 1
        %s412 = scalar_lea.sflag [#allocation3], %s411
        %s413 = sand.u32 %s41, 1
        %s414 = smul.addr %s413, 768
        %s415 = scalar_lea.vmem [#allocation2], %s414
        %p416 = pneg %p54
        %p417 = pneg %p51
        %p418 = pneg %p75
        %p419 = pneg %p72
        %p420 = pneg %p96
        %p421 = pneg %p93
        %p422 = pneg %p117
        %p423 = pneg %p114
        %p424 = pneg %p138
        %p425 = pneg %p135
        %p426 = pneg %p159
        %p427 = pneg %p156
        %p428 = pneg %p180
        %p429 = pneg %p177
        %p430 = pneg %p201
        %p431 = pneg %p198
        %p432 = pneg %p222
        %p433 = pneg %p219
        %p434 = pneg %p248
        %p435 = pneg %p245
        %s436 = sand.u32 %s235, 1
        %s437 = scalar_lea.sflag [#allocation4], %s436
        %s438 = sand.u32 %s235, 1
        %s439 = smul.addr %s438, 128
        %s440 = scalar_lea.vmem [#allocation11], %s439
        %p441 = pneg %p274
        %p442 = pneg %p271
        %s443 = sand.u32 %s261, 1
        %s444 = scalar_lea.sflag [#allocation13], %s443
        %s445 = sand.u32 %s261, 1
        %s446 = smul.addr %s445, 768
        %s447 = scalar_lea.vmem [#allocation12], %s446
        %s448 = smul.u32 16, %s33
        %s449 = smul.u32 16, %s33
        %s450 = smul.u32 16, %s33
        %v452 = vld [vmem:[%s390] sm:$0xff]
        %v453 = vld [vmem:[%s390 + $0x8] sm:$0xff]
        %v454 = vld [vmem:[%s390 + $0x10] sm:$0xff]
        %v455 = vld [vmem:[%s390 + $0x18] sm:$0xff]
        %v456 = vld [vmem:[%s390 + $0x20] sm:$0xff]
        %v457 = vld [vmem:[%s390 + $0x28] sm:$0xff]
        %v458 = vld [vmem:[%s390 + $0x30] sm:$0xff]
        %v459 = vld [vmem:[%s390 + $0x38] sm:$0xff]
        %v460 = vld [vmem:[%s390 + $0x40] sm:$0xff]
        %v461 = vld [vmem:[%s390 + $0x48] sm:$0xff]
        %v462 = vld [vmem:[%s390 + $0x50] sm:$0xff]
        %v463 = vld [vmem:[%s390 + $0x58] sm:$0xff]
        %v464 = vld [vmem:[%s390 + $0x60] sm:$0xff]
        %v465 = vld [vmem:[%s390 + $0x68] sm:$0xff]
        %v466 = vld [vmem:[%s390 + $0x70] sm:$0xff]
        %v467 = vld [vmem:[%s390 + $0x78] sm:$0xff]
        %v468 = vld [vmem:[%s390 + $0x80] sm:$0xff]
        %v469 = vld [vmem:[%s390 + $0x88] sm:$0xff]
        %v470 = vld [vmem:[%s390 + $0x90] sm:$0xff]
        %v471 = vld [vmem:[%s390 + $0x98] sm:$0xff]
        %v472 = vld [vmem:[%s390 + $0xa0] sm:$0xff]
        %v473 = vld [vmem:[%s390 + $0xa8] sm:$0xff]
        %v474 = vld [vmem:[%s390 + $0xb0] sm:$0xff]
        %v475 = vld [vmem:[%s390 + $0xb8] sm:$0xff]
        %v476 = vld [vmem:[%s390 + $0xc0] sm:$0xff]
        %v477 = vld [vmem:[%s390 + $0xc8] sm:$0xff]
        %v478 = vld [vmem:[%s390 + $0xd0] sm:$0xff]
        %v479 = vld [vmem:[%s390 + $0xd8] sm:$0xff]
        %v480 = vld [vmem:[%s390 + $0xe0] sm:$0xff]
        %v481 = vld [vmem:[%s390 + $0xe8] sm:$0xff]
        %v482 = vld [vmem:[%s390 + $0xf0] sm:$0xff]
        %v483 = vld [vmem:[%s390 + $0xf8] sm:$0xff]
        %v484 = vld [vmem:[%s390 + $0x100] sm:$0xff]
        %v485 = vld [vmem:[%s390 + $0x108] sm:$0xff]
        %v486 = vld [vmem:[%s390 + $0x110] sm:$0xff]
        %v487 = vld [vmem:[%s390 + $0x118] sm:$0xff]
        %v488 = vld [vmem:[%s390 + $0x120] sm:$0xff]
        %v489 = vld [vmem:[%s390 + $0x128] sm:$0xff]
        %v490 = vld [vmem:[%s390 + $0x130] sm:$0xff]
        %v491 = vld [vmem:[%s390 + $0x138] sm:$0xff]
        %v492 = vld [vmem:[%s390 + $0x140] sm:$0xff]
        %v493 = vld [vmem:[%s390 + $0x148] sm:$0xff]
        %v494 = vld [vmem:[%s390 + $0x150] sm:$0xff]
        %v495 = vld [vmem:[%s390 + $0x158] sm:$0xff]
        %v496 = vld [vmem:[%s390 + $0x160] sm:$0xff]
        %v497 = vld [vmem:[%s390 + $0x168] sm:$0xff]
        %v498 = vld [vmem:[%s390 + $0x170] sm:$0xff]
        %v499 = vld [vmem:[%s390 + $0x178] sm:$0xff]
        %v500 = vld [vmem:[%s390 + $0x180] sm:$0xff]
        %v501 = vld [vmem:[%s390 + $0x188] sm:$0xff]
        %v502 = vld [vmem:[%s390 + $0x190] sm:$0xff]
        %v503 = vld [vmem:[%s390 + $0x198] sm:$0xff]
        %v504 = vld [vmem:[%s390 + $0x1a0] sm:$0xff]
        %v505 = vld [vmem:[%s390 + $0x1a8] sm:$0xff]
        %v506 = vld [vmem:[%s390 + $0x1b0] sm:$0xff]
        %v507 = vld [vmem:[%s390 + $0x1b8] sm:$0xff]
        %v508 = vld [vmem:[%s390 + $0x1c0] sm:$0xff]
        %v509 = vld [vmem:[%s390 + $0x1c8] sm:$0xff]
        %v510 = vld [vmem:[%s390 + $0x1d0] sm:$0xff]
        %v511 = vld [vmem:[%s390 + $0x1d8] sm:$0xff]
        %v512 = vld [vmem:[%s390 + $0x1e0] sm:$0xff]
        %v513 = vld [vmem:[%s390 + $0x1e8] sm:$0xff]
        %v514 = vld [vmem:[%s390 + $0x1f0] sm:$0xff]
        %v515 = vld [vmem:[%s390 + $0x1f8] sm:$0xff]
        %v516 = vld [vmem:[%s390 + $0x200] sm:$0xff]
        %v517 = vld [vmem:[%s390 + $0x208] sm:$0xff]
        %v518 = vld [vmem:[%s390 + $0x210] sm:$0xff]
        %v519 = vld [vmem:[%s390 + $0x218] sm:$0xff]
        %v520 = vld [vmem:[%s390 + $0x220] sm:$0xff]
        %v521 = vld [vmem:[%s390 + $0x228] sm:$0xff]
        %v522 = vld [vmem:[%s390 + $0x230] sm:$0xff]
        %v523 = vld [vmem:[%s390 + $0x238] sm:$0xff]
        %v524 = vld [vmem:[%s390 + $0x240] sm:$0xff]
        %v525 = vld [vmem:[%s390 + $0x248] sm:$0xff]
        %v526 = vld [vmem:[%s390 + $0x250] sm:$0xff]
        %v527 = vld [vmem:[%s390 + $0x258] sm:$0xff]
        %v528 = vld [vmem:[%s390 + $0x260] sm:$0xff]
        %v529 = vld [vmem:[%s390 + $0x268] sm:$0xff]
        %v530 = vld [vmem:[%s390 + $0x270] sm:$0xff]
        %v531 = vld [vmem:[%s390 + $0x278] sm:$0xff]
        %v532 = vld [vmem:[%s390 + $0x280] sm:$0xff]
        %v533 = vld [vmem:[%s390 + $0x288] sm:$0xff]
        %v534 = vld [vmem:[%s390 + $0x290] sm:$0xff]
        %v535 = vld [vmem:[%s390 + $0x298] sm:$0xff]
        %v536 = vld [vmem:[%s390 + $0x2a0] sm:$0xff]
        %v537 = vld [vmem:[%s390 + $0x2a8] sm:$0xff]
        %v538 = vld [vmem:[%s390 + $0x2b0] sm:$0xff]
        %v539 = vld [vmem:[%s390 + $0x2b8] sm:$0xff]
        %v540 = vld [vmem:[%s390 + $0x2c0] sm:$0xff]
        %v541 = vld [vmem:[%s390 + $0x2c8] sm:$0xff]
        %v542 = vld [vmem:[%s390 + $0x2d0] sm:$0xff]
        %v543 = vld [vmem:[%s390 + $0x2d8] sm:$0xff]
        %v544 = vld [vmem:[%s390 + $0x2e0] sm:$0xff]
        %v545 = vld [vmem:[%s390 + $0x2e8] sm:$0xff]
        %v546 = vld [vmem:[%s390 + $0x2f0] sm:$0xff]
        %v547 = vld [vmem:[%s390 + $0x2f8] sm:$0xff]
        %v548 = vpack.c.bf16 %v458, %v452
        %v549 = vpack.c.bf16 %v459, %v453
        %v550 = vpack.c.bf16 %v460, %v454
        %v551 = vpack.c.bf16 %v461, %v455
        %v552 = vpack.c.bf16 %v462, %v456
        %v553 = vpack.c.bf16 %v463, %v457
        %v554 = vpack.c.bf16 %v470, %v464
        %v555 = vpack.c.bf16 %v471, %v465
        %v556 = vpack.c.bf16 %v472, %v466
        %v557 = vpack.c.bf16 %v473, %v467
        %v558 = vpack.c.bf16 %v474, %v468
        %v559 = vpack.c.bf16 %v475, %v469
        %v560 = vpack.c.bf16 %v482, %v476
        %v561 = vpack.c.bf16 %v483, %v477
        %v562 = vpack.c.bf16 %v484, %v478
        %v563 = vpack.c.bf16 %v485, %v479
        %v564 = vpack.c.bf16 %v486, %v480
        %v565 = vpack.c.bf16 %v487, %v481
        %v566 = vpack.c.bf16 %v494, %v488
        %v567 = vpack.c.bf16 %v495, %v489
        %v568 = vpack.c.bf16 %v496, %v490
        %v569 = vpack.c.bf16 %v497, %v491
        %v570 = vpack.c.bf16 %v498, %v492
        %v571 = vpack.c.bf16 %v499, %v493
        %v572 = vpack.c.bf16 %v506, %v500
        %v573 = vpack.c.bf16 %v507, %v501
        %v574 = vpack.c.bf16 %v508, %v502
        %v575 = vpack.c.bf16 %v509, %v503
        %v576 = vpack.c.bf16 %v510, %v504
        %v577 = vpack.c.bf16 %v511, %v505
        %v578 = vpack.c.bf16 %v518, %v512
        %v579 = vpack.c.bf16 %v519, %v513
        %v580 = vpack.c.bf16 %v520, %v514
        %v581 = vpack.c.bf16 %v521, %v515
        %v582 = vpack.c.bf16 %v522, %v516
        %v583 = vpack.c.bf16 %v523, %v517
        %v584 = vpack.c.bf16 %v530, %v524
        %v585 = vpack.c.bf16 %v531, %v525
        %v586 = vpack.c.bf16 %v532, %v526
        %v587 = vpack.c.bf16 %v533, %v527
        %v588 = vpack.c.bf16 %v534, %v528
        %v589 = vpack.c.bf16 %v535, %v529
        %v590 = vpack.c.bf16 %v542, %v536
        %v591 = vpack.c.bf16 %v543, %v537
        %v592 = vpack.c.bf16 %v544, %v538
        %v593 = vpack.c.bf16 %v545, %v539
        %v594 = vpack.c.bf16 %v546, %v540
        %v595 = vpack.c.bf16 %v547, %v541
        %v596 = vld [vmem:[#allocation5] sm:$0xff]
        %v597 = vld [vmem:[#allocation5 + $0x8] sm:$0xff]
        %v598 = vld [vmem:[#allocation5 + $0x10] sm:$0xff]
        %v599 = vld [vmem:[#allocation5 + $0x18] sm:$0xff]
        %v600 = vld [vmem:[#allocation5 + $0x20] sm:$0xff]
        %v601 = vld [vmem:[#allocation5 + $0x28] sm:$0xff]
        %v602 = vld [vmem:[#allocation5 + $0x30] sm:$0xff]
        %v603 = vld [vmem:[#allocation5 + $0x38] sm:$0xff]
        %v604 = vld [vmem:[#allocation5 + $0x40] sm:$0xff]
        %v605 = vld [vmem:[#allocation5 + $0x48] sm:$0xff]
        %v606 = vld [vmem:[#allocation5 + $0x50] sm:$0xff]
        %v607 = vld [vmem:[#allocation5 + $0x58] sm:$0xff]
        %v608 = vld [vmem:[#allocation5 + $0x60] sm:$0xff]
        %v609 = vld [vmem:[#allocation5 + $0x68] sm:$0xff]
        %v610 = vld [vmem:[#allocation5 + $0x70] sm:$0xff]
        %v611 = vld [vmem:[#allocation5 + $0x78] sm:$0xff]
        %v612 = vld [vmem:[#allocation5 + $0x80] sm:$0xff]
        %v613 = vld [vmem:[#allocation5 + $0x88] sm:$0xff]
        %v614 = vld [vmem:[#allocation5 + $0x90] sm:$0xff]
        %v615 = vld [vmem:[#allocation5 + $0x98] sm:$0xff]
        %v616 = vld [vmem:[#allocation5 + $0xa0] sm:$0xff]
        %v617 = vld [vmem:[#allocation5 + $0xa8] sm:$0xff]
        %v618 = vld [vmem:[#allocation5 + $0xb0] sm:$0xff]
        %v619 = vld [vmem:[#allocation5 + $0xb8] sm:$0xff]
        %v620 = vld [vmem:[#allocation5 + $0xc0] sm:$0xff]
        %v621 = vld [vmem:[#allocation5 + $0xc8] sm:$0xff]
        %v622 = vld [vmem:[#allocation5 + $0xd0] sm:$0xff]
        %v623 = vld [vmem:[#allocation5 + $0xd8] sm:$0xff]
        %v624 = vld [vmem:[#allocation5 + $0xe0] sm:$0xff]
        %v625 = vld [vmem:[#allocation5 + $0xe8] sm:$0xff]
        %v626 = vld [vmem:[#allocation5 + $0xf0] sm:$0xff]
        %v627 = vld [vmem:[#allocation5 + $0xf8] sm:$0xff]
        %v628 = vld [vmem:[#allocation5 + $0x100] sm:$0xff]
        %v629 = vld [vmem:[#allocation5 + $0x108] sm:$0xff]
        %v630 = vld [vmem:[#allocation5 + $0x110] sm:$0xff]
        %v631 = vld [vmem:[#allocation5 + $0x118] sm:$0xff]
        %v632 = vld [vmem:[#allocation5 + $0x120] sm:$0xff]
        %v633 = vld [vmem:[#allocation5 + $0x128] sm:$0xff]
        %v634 = vld [vmem:[#allocation5 + $0x130] sm:$0xff]
        %v635 = vld [vmem:[#allocation5 + $0x138] sm:$0xff]
        %v636 = vld [vmem:[#allocation5 + $0x140] sm:$0xff]
        %v637 = vld [vmem:[#allocation5 + $0x148] sm:$0xff]
        %v638 = vld [vmem:[#allocation5 + $0x150] sm:$0xff]
        %v639 = vld [vmem:[#allocation5 + $0x158] sm:$0xff]
        %v640 = vld [vmem:[#allocation5 + $0x160] sm:$0xff]
        %v641 = vld [vmem:[#allocation5 + $0x168] sm:$0xff]
        %v642 = vld [vmem:[#allocation5 + $0x170] sm:$0xff]
        %v643 = vld [vmem:[#allocation5 + $0x178] sm:$0xff]
        %v644 = vld [vmem:[#allocation5 + $0x180] sm:$0xff]
        %v645 = vld [vmem:[#allocation5 + $0x188] sm:$0xff]
        %v646 = vld [vmem:[#allocation5 + $0x190] sm:$0xff]
        %v647 = vld [vmem:[#allocation5 + $0x198] sm:$0xff]
        %v648 = vld [vmem:[#allocation5 + $0x1a0] sm:$0xff]
        %v649 = vld [vmem:[#allocation5 + $0x1a8] sm:$0xff]
        %v650 = vld [vmem:[#allocation5 + $0x1b0] sm:$0xff]
        %v651 = vld [vmem:[#allocation5 + $0x1b8] sm:$0xff]
        %v652 = vld [vmem:[#allocation5 + $0x1c0] sm:$0xff]
        %v653 = vld [vmem:[#allocation5 + $0x1c8] sm:$0xff]
        %v654 = vld [vmem:[#allocation5 + $0x1d0] sm:$0xff]
        %v655 = vld [vmem:[#allocation5 + $0x1d8] sm:$0xff]
        %v656 = vld [vmem:[#allocation5 + $0x1e0] sm:$0xff]
        %v657 = vld [vmem:[#allocation5 + $0x1e8] sm:$0xff]
        %v658 = vld [vmem:[#allocation5 + $0x1f0] sm:$0xff]
        %v659 = vld [vmem:[#allocation5 + $0x1f8] sm:$0xff]
        %v660 = vld [vmem:[#allocation5 + $0x200] sm:$0xff]
        %v661 = vld [vmem:[#allocation5 + $0x208] sm:$0xff]
        %v662 = vld [vmem:[#allocation5 + $0x210] sm:$0xff]
        %v663 = vld [vmem:[#allocation5 + $0x218] sm:$0xff]
        %v664 = vld [vmem:[#allocation5 + $0x220] sm:$0xff]
        %v665 = vld [vmem:[#allocation5 + $0x228] sm:$0xff]
        %v666 = vld [vmem:[#allocation5 + $0x230] sm:$0xff]
        %v667 = vld [vmem:[#allocation5 + $0x238] sm:$0xff]
        %v668 = vld [vmem:[#allocation5 + $0x240] sm:$0xff]
        %v669 = vld [vmem:[#allocation5 + $0x248] sm:$0xff]
        %v670 = vld [vmem:[#allocation5 + $0x250] sm:$0xff]
        %v671 = vld [vmem:[#allocation5 + $0x258] sm:$0xff]
        %v672 = vld [vmem:[#allocation5 + $0x260] sm:$0xff]
        %v673 = vld [vmem:[#allocation5 + $0x268] sm:$0xff]
        %v674 = vld [vmem:[#allocation5 + $0x270] sm:$0xff]
        %v675 = vld [vmem:[#allocation5 + $0x278] sm:$0xff]
        %v676 = vld [vmem:[#allocation5 + $0x280] sm:$0xff]
        %v677 = vld [vmem:[#allocation5 + $0x288] sm:$0xff]
        %v678 = vld [vmem:[#allocation5 + $0x290] sm:$0xff]
        %v679 = vld [vmem:[#allocation5 + $0x298] sm:$0xff]
        %v680 = vld [vmem:[#allocation5 + $0x2a0] sm:$0xff]
        %v681 = vld [vmem:[#allocation5 + $0x2a8] sm:$0xff]
        %v682 = vld [vmem:[#allocation5 + $0x2b0] sm:$0xff]
        %v683 = vld [vmem:[#allocation5 + $0x2b8] sm:$0xff]
        %v684 = vld [vmem:[#allocation5 + $0x2c0] sm:$0xff]
        %v685 = vld [vmem:[#allocation5 + $0x2c8] sm:$0xff]
        %v686 = vld [vmem:[#allocation5 + $0x2d0] sm:$0xff]
        %v687 = vld [vmem:[#allocation5 + $0x2d8] sm:$0xff]
        %v688 = vld [vmem:[#allocation5 + $0x2e0] sm:$0xff]
        %v689 = vld [vmem:[#allocation5 + $0x2e8] sm:$0xff]
        %v690 = vld [vmem:[#allocation5 + $0x2f0] sm:$0xff]
        %v691 = vld [vmem:[#allocation5 + $0x2f8] sm:$0xff]
        %v692 = vld [vmem:[#allocation5 + $0x300] sm:$0xff]
        %v693 = vld [vmem:[#allocation5 + $0x308] sm:$0xff]
        %v694 = vld [vmem:[#allocation5 + $0x310] sm:$0xff]
        %v695 = vld [vmem:[#allocation5 + $0x318] sm:$0xff]
        %v696 = vld [vmem:[#allocation5 + $0x320] sm:$0xff]
        %v697 = vld [vmem:[#allocation5 + $0x328] sm:$0xff]
        %v698 = vld [vmem:[#allocation5 + $0x330] sm:$0xff]
        %v699 = vld [vmem:[#allocation5 + $0x338] sm:$0xff]
        %v700 = vld [vmem:[#allocation5 + $0x340] sm:$0xff]
        %v701 = vld [vmem:[#allocation5 + $0x348] sm:$0xff]
        %v702 = vld [vmem:[#allocation5 + $0x350] sm:$0xff]
        %v703 = vld [vmem:[#allocation5 + $0x358] sm:$0xff]
        %v704 = vld [vmem:[#allocation5 + $0x360] sm:$0xff]
        %v705 = vld [vmem:[#allocation5 + $0x368] sm:$0xff]
        %v706 = vld [vmem:[#allocation5 + $0x370] sm:$0xff]
        %v707 = vld [vmem:[#allocation5 + $0x378] sm:$0xff]
        %v708 = vld [vmem:[#allocation5 + $0x380] sm:$0xff]
        %v709 = vld [vmem:[#allocation5 + $0x388] sm:$0xff]
        %v710 = vld [vmem:[#allocation5 + $0x390] sm:$0xff]
        %v711 = vld [vmem:[#allocation5 + $0x398] sm:$0xff]
        %v712 = vld [vmem:[#allocation5 + $0x3a0] sm:$0xff]
        %v713 = vld [vmem:[#allocation5 + $0x3a8] sm:$0xff]
        %v714 = vld [vmem:[#allocation5 + $0x3b0] sm:$0xff]
        %v715 = vld [vmem:[#allocation5 + $0x3b8] sm:$0xff]
        %v716 = vld [vmem:[#allocation5 + $0x3c0] sm:$0xff]
        %v717 = vld [vmem:[#allocation5 + $0x3c8] sm:$0xff]
        %v718 = vld [vmem:[#allocation5 + $0x3d0] sm:$0xff]
        %v719 = vld [vmem:[#allocation5 + $0x3d8] sm:$0xff]
        %v720 = vld [vmem:[#allocation5 + $0x3e0] sm:$0xff]
        %v721 = vld [vmem:[#allocation5 + $0x3e8] sm:$0xff]
        %v722 = vld [vmem:[#allocation5 + $0x3f0] sm:$0xff]
        %v723 = vld [vmem:[#allocation5 + $0x3f8] sm:$0xff]
        %v724 = vld [vmem:[#allocation5 + $0x400] sm:$0xff]
        %v725 = vld [vmem:[#allocation5 + $0x408] sm:$0xff]
        %v726 = vld [vmem:[#allocation5 + $0x410] sm:$0xff]
        %v727 = vld [vmem:[#allocation5 + $0x418] sm:$0xff]
        %v728 = vld [vmem:[#allocation5 + $0x420] sm:$0xff]
        %v729 = vld [vmem:[#allocation5 + $0x428] sm:$0xff]
        %v730 = vld [vmem:[#allocation5 + $0x430] sm:$0xff]
        %v731 = vld [vmem:[#allocation5 + $0x438] sm:$0xff]
        %v732 = vld [vmem:[#allocation5 + $0x440] sm:$0xff]
        %v733 = vld [vmem:[#allocation5 + $0x448] sm:$0xff]
        %v734 = vld [vmem:[#allocation5 + $0x450] sm:$0xff]
        %v735 = vld [vmem:[#allocation5 + $0x458] sm:$0xff]
        %v736 = vld [vmem:[#allocation5 + $0x460] sm:$0xff]
        %v737 = vld [vmem:[#allocation5 + $0x468] sm:$0xff]
        %v738 = vld [vmem:[#allocation5 + $0x470] sm:$0xff]
        %v739 = vld [vmem:[#allocation5 + $0x478] sm:$0xff]
        %v740 = vld [vmem:[#allocation5 + $0x480] sm:$0xff]
        %v741 = vld [vmem:[#allocation5 + $0x488] sm:$0xff]
        %v742 = vld [vmem:[#allocation5 + $0x490] sm:$0xff]
        %v743 = vld [vmem:[#allocation5 + $0x498] sm:$0xff]
        %v744 = vld [vmem:[#allocation5 + $0x4a0] sm:$0xff]
        %v745 = vld [vmem:[#allocation5 + $0x4a8] sm:$0xff]
        %v746 = vld [vmem:[#allocation5 + $0x4b0] sm:$0xff]
        %v747 = vld [vmem:[#allocation5 + $0x4b8] sm:$0xff]
        %v748 = vld [vmem:[#allocation5 + $0x4c0] sm:$0xff]
        %v749 = vld [vmem:[#allocation5 + $0x4c8] sm:$0xff]
        %v750 = vld [vmem:[#allocation5 + $0x4d0] sm:$0xff]
        %v751 = vld [vmem:[#allocation5 + $0x4d8] sm:$0xff]
        %v752 = vld [vmem:[#allocation5 + $0x4e0] sm:$0xff]
        %v753 = vld [vmem:[#allocation5 + $0x4e8] sm:$0xff]
        %v754 = vld [vmem:[#allocation5 + $0x4f0] sm:$0xff]
        %v755 = vld [vmem:[#allocation5 + $0x4f8] sm:$0xff]
        %v756 = vld [vmem:[#allocation5 + $0x500] sm:$0xff]
        %v757 = vld [vmem:[#allocation5 + $0x508] sm:$0xff]
        %v758 = vld [vmem:[#allocation5 + $0x510] sm:$0xff]
        %v759 = vld [vmem:[#allocation5 + $0x518] sm:$0xff]
        %v760 = vld [vmem:[#allocation5 + $0x520] sm:$0xff]
        %v761 = vld [vmem:[#allocation5 + $0x528] sm:$0xff]
        %v762 = vld [vmem:[#allocation5 + $0x530] sm:$0xff]
        %v763 = vld [vmem:[#allocation5 + $0x538] sm:$0xff]
        %v764 = vld [vmem:[#allocation5 + $0x540] sm:$0xff]
        %v765 = vld [vmem:[#allocation5 + $0x548] sm:$0xff]
        %v766 = vld [vmem:[#allocation5 + $0x550] sm:$0xff]
        %v767 = vld [vmem:[#allocation5 + $0x558] sm:$0xff]
        %v768 = vld [vmem:[#allocation5 + $0x560] sm:$0xff]
        %v769 = vld [vmem:[#allocation5 + $0x568] sm:$0xff]
        %v770 = vld [vmem:[#allocation5 + $0x570] sm:$0xff]
        %v771 = vld [vmem:[#allocation5 + $0x578] sm:$0xff]
        %v772 = vld [vmem:[#allocation5 + $0x580] sm:$0xff]
        %v773 = vld [vmem:[#allocation5 + $0x588] sm:$0xff]
        %v774 = vld [vmem:[#allocation5 + $0x590] sm:$0xff]
        %v775 = vld [vmem:[#allocation5 + $0x598] sm:$0xff]
        %v776 = vld [vmem:[#allocation5 + $0x5a0] sm:$0xff]
        %v777 = vld [vmem:[#allocation5 + $0x5a8] sm:$0xff]
        %v778 = vld [vmem:[#allocation5 + $0x5b0] sm:$0xff]
        %v779 = vld [vmem:[#allocation5 + $0x5b8] sm:$0xff]
        %v780 = vld [vmem:[#allocation5 + $0x5c0] sm:$0xff]
        %v781 = vld [vmem:[#allocation5 + $0x5c8] sm:$0xff]
        %v782 = vld [vmem:[#allocation5 + $0x5d0] sm:$0xff]
        %v783 = vld [vmem:[#allocation5 + $0x5d8] sm:$0xff]
        %v784 = vld [vmem:[#allocation5 + $0x5e0] sm:$0xff]
        %v785 = vld [vmem:[#allocation5 + $0x5e8] sm:$0xff]
        %v786 = vld [vmem:[#allocation5 + $0x5f0] sm:$0xff]
        %v787 = vld [vmem:[#allocation5 + $0x5f8] sm:$0xff]
        %v788 = vld [vmem:[%s2] sm:$0xf]
        %v790 = vlaneseq
        %v791 = vshrl.u32 %v790, 7
        %v792 = vsub.s32 0, %v791
        %v793 = vrot.slane %v788, %v792
        %v794 = vlaneseq
        %v795 = vshrl.u32 %v794, 7
        %v796 = vsub.s32 1, %v795
        %v797 = vrot.slane %v788, %v796
        %v798 = vlaneseq
        %v799 = vshrl.u32 %v798, 7
        %v800 = vsub.s32 2, %v799
        %v801 = vrot.slane %v788, %v800
        %v802 = vlaneseq
        %v803 = vshrl.u32 %v802, 7
        %v804 = vsub.s32 3, %v803
        %v805 = vrot.slane %v788, %v804
        %v1002 = vunpack.c.l.b16 %v596
        %v1003 = vunpack.c.h.b16 %v596
        %v1004 = vunpack.c.l.b16 %v597
        %v1005 = vunpack.c.h.b16 %v597
        %v1006 = vunpack.c.l.b16 %v598
        %v1007 = vunpack.c.h.b16 %v598
        %v1008 = vunpack.c.l.b16 %v599
        %v1009 = vunpack.c.h.b16 %v599
        %v1010 = vunpack.c.l.b16 %v600
        %v1011 = vunpack.c.h.b16 %v600
        %v1012 = vunpack.c.l.b16 %v601
        %v1013 = vunpack.c.h.b16 %v601
        %v1014 = vunpack.c.l.b16 %v602
        %v1015 = vunpack.c.h.b16 %v602
        %v1016 = vunpack.c.l.b16 %v603
        %v1017 = vunpack.c.h.b16 %v603
        %v1018 = vunpack.c.l.b16 %v604
        %v1019 = vunpack.c.h.b16 %v604
        %v1020 = vunpack.c.l.b16 %v605
        %v1021 = vunpack.c.h.b16 %v605
        %v1022 = vunpack.c.l.b16 %v606
        %v1023 = vunpack.c.h.b16 %v606
        %v1024 = vunpack.c.l.b16 %v607
        %v1025 = vunpack.c.h.b16 %v607
        %v1026 = vunpack.c.l.b16 %v608
        %v1027 = vunpack.c.h.b16 %v608
        %v1028 = vunpack.c.l.b16 %v609
        %v1029 = vunpack.c.h.b16 %v609
        %v1030 = vunpack.c.l.b16 %v610
        %v1031 = vunpack.c.h.b16 %v610
        %v1032 = vunpack.c.l.b16 %v611
        %v1033 = vunpack.c.h.b16 %v611
        %v1034 = vunpack.c.l.b16 %v612
        %v1035 = vunpack.c.h.b16 %v612
        %v1036 = vunpack.c.l.b16 %v613
        %v1037 = vunpack.c.h.b16 %v613
        %v1038 = vunpack.c.l.b16 %v614
        %v1039 = vunpack.c.h.b16 %v614
        %v1040 = vunpack.c.l.b16 %v615
        %v1041 = vunpack.c.h.b16 %v615
        %v1042 = vunpack.c.l.b16 %v616
        %v1043 = vunpack.c.h.b16 %v616
        %v1044 = vunpack.c.l.b16 %v617
        %v1045 = vunpack.c.h.b16 %v617
        %v1046 = vunpack.c.l.b16 %v618
        %v1047 = vunpack.c.h.b16 %v618
        %v1048 = vunpack.c.l.b16 %v619
        %v1049 = vunpack.c.h.b16 %v619
        %v1050 = vunpack.c.l.b16 %v620
        %v1051 = vunpack.c.h.b16 %v620
        %v1052 = vunpack.c.l.b16 %v621
        %v1053 = vunpack.c.h.b16 %v621
        %v1054 = vunpack.c.l.b16 %v622
        %v1055 = vunpack.c.h.b16 %v622
        %v1056 = vunpack.c.l.b16 %v623
        %v1057 = vunpack.c.h.b16 %v623
        %v1058 = vunpack.c.l.b16 %v624
        %v1059 = vunpack.c.h.b16 %v624
        %v1060 = vunpack.c.l.b16 %v625
        %v1061 = vunpack.c.h.b16 %v625
        %v1062 = vunpack.c.l.b16 %v626
        %v1063 = vunpack.c.h.b16 %v626
        %v1064 = vunpack.c.l.b16 %v627
        %v1065 = vunpack.c.h.b16 %v627
        %v1066 = vunpack.c.l.b16 %v628
        %v1067 = vunpack.c.h.b16 %v628
        %v1068 = vunpack.c.l.b16 %v629
        %v1069 = vunpack.c.h.b16 %v629
        %v1070 = vunpack.c.l.b16 %v630
        %v1071 = vunpack.c.h.b16 %v630
        %v1072 = vunpack.c.l.b16 %v631
        %v1073 = vunpack.c.h.b16 %v631
        %v1074 = vunpack.c.l.b16 %v632
        %v1075 = vunpack.c.h.b16 %v632
        %v1076 = vunpack.c.l.b16 %v633
        %v1077 = vunpack.c.h.b16 %v633
        %v1078 = vunpack.c.l.b16 %v634
        %v1079 = vunpack.c.h.b16 %v634
        %v1080 = vunpack.c.l.b16 %v635
        %v1081 = vunpack.c.h.b16 %v635
        %v1082 = vunpack.c.l.b16 %v636
        %v1083 = vunpack.c.h.b16 %v636
        %v1084 = vunpack.c.l.b16 %v637
        %v1085 = vunpack.c.h.b16 %v637
        %v1086 = vunpack.c.l.b16 %v638
        %v1087 = vunpack.c.h.b16 %v638
        %v1088 = vunpack.c.l.b16 %v639
        %v1089 = vunpack.c.h.b16 %v639
        %v1090 = vunpack.c.l.b16 %v640
        %v1091 = vunpack.c.h.b16 %v640
        %v1092 = vunpack.c.l.b16 %v641
        %v1093 = vunpack.c.h.b16 %v641
        %v1094 = vunpack.c.l.b16 %v642
        %v1095 = vunpack.c.h.b16 %v642
        %v1096 = vunpack.c.l.b16 %v643
        %v1097 = vunpack.c.h.b16 %v643
        %v1098 = vunpack.c.l.b16 %v644
        %v1099 = vunpack.c.h.b16 %v644
        %v1100 = vunpack.c.l.b16 %v645
        %v1101 = vunpack.c.h.b16 %v645
        %v1102 = vunpack.c.l.b16 %v646
        %v1103 = vunpack.c.h.b16 %v646
        %v1104 = vunpack.c.l.b16 %v647
        %v1105 = vunpack.c.h.b16 %v647
        %v1106 = vunpack.c.l.b16 %v648
        %v1107 = vunpack.c.h.b16 %v648
        %v1108 = vunpack.c.l.b16 %v649
        %v1109 = vunpack.c.h.b16 %v649
        %v1110 = vunpack.c.l.b16 %v650
        %v1111 = vunpack.c.h.b16 %v650
        %v1112 = vunpack.c.l.b16 %v651
        %v1113 = vunpack.c.h.b16 %v651
        %v1114 = vunpack.c.l.b16 %v652
        %v1115 = vunpack.c.h.b16 %v652
        %v1116 = vunpack.c.l.b16 %v653
        %v1117 = vunpack.c.h.b16 %v653
        %v1118 = vunpack.c.l.b16 %v654
        %v1119 = vunpack.c.h.b16 %v654
        %v1120 = vunpack.c.l.b16 %v655
        %v1121 = vunpack.c.h.b16 %v655
        %v1122 = vunpack.c.l.b16 %v656
        %v1123 = vunpack.c.h.b16 %v656
        %v1124 = vunpack.c.l.b16 %v657
        %v1125 = vunpack.c.h.b16 %v657
        %v1126 = vunpack.c.l.b16 %v658
        %v1127 = vunpack.c.h.b16 %v658
        %v1128 = vunpack.c.l.b16 %v659
        %v1129 = vunpack.c.h.b16 %v659
        %v1130 = vunpack.c.l.b16 %v660
        %v1131 = vunpack.c.h.b16 %v660
        %v1132 = vunpack.c.l.b16 %v661
        %v1133 = vunpack.c.h.b16 %v661
        %v1134 = vunpack.c.l.b16 %v662
        %v1135 = vunpack.c.h.b16 %v662
        %v1136 = vunpack.c.l.b16 %v663
        %v1137 = vunpack.c.h.b16 %v663
        %v1138 = vunpack.c.l.b16 %v664
        %v1139 = vunpack.c.h.b16 %v664
        %v1140 = vunpack.c.l.b16 %v665
        %v1141 = vunpack.c.h.b16 %v665
        %v1142 = vunpack.c.l.b16 %v666
        %v1143 = vunpack.c.h.b16 %v666
        %v1144 = vunpack.c.l.b16 %v667
        %v1145 = vunpack.c.h.b16 %v667
        %v1146 = vunpack.c.l.b16 %v668
        %v1147 = vunpack.c.h.b16 %v668
        %v1148 = vunpack.c.l.b16 %v669
        %v1149 = vunpack.c.h.b16 %v669
        %v1150 = vunpack.c.l.b16 %v670
        %v1151 = vunpack.c.h.b16 %v670
        %v1152 = vunpack.c.l.b16 %v671
        %v1153 = vunpack.c.h.b16 %v671
        %v1154 = vunpack.c.l.b16 %v672
        %v1155 = vunpack.c.h.b16 %v672
        %v1156 = vunpack.c.l.b16 %v673
        %v1157 = vunpack.c.h.b16 %v673
        %v1158 = vunpack.c.l.b16 %v674
        %v1159 = vunpack.c.h.b16 %v674
        %v1160 = vunpack.c.l.b16 %v675
        %v1161 = vunpack.c.h.b16 %v675
        %v1162 = vunpack.c.l.b16 %v676
        %v1163 = vunpack.c.h.b16 %v676
        %v1164 = vunpack.c.l.b16 %v677
        %v1165 = vunpack.c.h.b16 %v677
        %v1166 = vunpack.c.l.b16 %v678
        %v1167 = vunpack.c.h.b16 %v678
        %v1168 = vunpack.c.l.b16 %v679
        %v1169 = vunpack.c.h.b16 %v679
        %v1170 = vunpack.c.l.b16 %v680
        %v1171 = vunpack.c.h.b16 %v680
        %v1172 = vunpack.c.l.b16 %v681
        %v1173 = vunpack.c.h.b16 %v681
        %v1174 = vunpack.c.l.b16 %v682
        %v1175 = vunpack.c.h.b16 %v682
        %v1176 = vunpack.c.l.b16 %v683
        %v1177 = vunpack.c.h.b16 %v683
        %v1178 = vunpack.c.l.b16 %v684
        %v1179 = vunpack.c.h.b16 %v684
        %v1180 = vunpack.c.l.b16 %v685
        %v1181 = vunpack.c.h.b16 %v685
        %v1182 = vunpack.c.l.b16 %v686
        %v1183 = vunpack.c.h.b16 %v686
        %v1184 = vunpack.c.l.b16 %v687
        %v1185 = vunpack.c.h.b16 %v687
        %v1186 = vunpack.c.l.b16 %v688
        %v1187 = vunpack.c.h.b16 %v688
        %v1188 = vunpack.c.l.b16 %v689
        %v1189 = vunpack.c.h.b16 %v689
        %v1190 = vunpack.c.l.b16 %v690
        %v1191 = vunpack.c.h.b16 %v690
        %v1192 = vunpack.c.l.b16 %v691
        %v1193 = vunpack.c.h.b16 %v691
        %v1194 = vunpack.c.l.b16 %v692
        %v1195 = vunpack.c.h.b16 %v692
        %v1196 = vunpack.c.l.b16 %v693
        %v1197 = vunpack.c.h.b16 %v693
        %v1198 = vunpack.c.l.b16 %v694
        %v1199 = vunpack.c.h.b16 %v694
        %v1200 = vunpack.c.l.b16 %v695
        %v1201 = vunpack.c.h.b16 %v695
        %v1202 = vunpack.c.l.b16 %v696
        %v1203 = vunpack.c.h.b16 %v696
        %v1204 = vunpack.c.l.b16 %v697
        %v1205 = vunpack.c.h.b16 %v697
        %v1206 = vunpack.c.l.b16 %v698
        %v1207 = vunpack.c.h.b16 %v698
        %v1208 = vunpack.c.l.b16 %v699
        %v1209 = vunpack.c.h.b16 %v699
        %v1210 = vunpack.c.l.b16 %v700
        %v1211 = vunpack.c.h.b16 %v700
        %v1212 = vunpack.c.l.b16 %v701
        %v1213 = vunpack.c.h.b16 %v701
        %v1214 = vunpack.c.l.b16 %v702
        %v1215 = vunpack.c.h.b16 %v702
        %v1216 = vunpack.c.l.b16 %v703
        %v1217 = vunpack.c.h.b16 %v703
        %v1218 = vunpack.c.l.b16 %v704
        %v1219 = vunpack.c.h.b16 %v704
        %v1220 = vunpack.c.l.b16 %v705
        %v1221 = vunpack.c.h.b16 %v705
        %v1222 = vunpack.c.l.b16 %v706
        %v1223 = vunpack.c.h.b16 %v706
        %v1224 = vunpack.c.l.b16 %v707
        %v1225 = vunpack.c.h.b16 %v707
        %v1226 = vunpack.c.l.b16 %v708
        %v1227 = vunpack.c.h.b16 %v708
        %v1228 = vunpack.c.l.b16 %v709
        %v1229 = vunpack.c.h.b16 %v709
        %v1230 = vunpack.c.l.b16 %v710
        %v1231 = vunpack.c.h.b16 %v710
        %v1232 = vunpack.c.l.b16 %v711
        %v1233 = vunpack.c.h.b16 %v711
        %v1234 = vunpack.c.l.b16 %v712
        %v1235 = vunpack.c.h.b16 %v712
        %v1236 = vunpack.c.l.b16 %v713
        %v1237 = vunpack.c.h.b16 %v713
        %v1238 = vunpack.c.l.b16 %v714
        %v1239 = vunpack.c.h.b16 %v714
        %v1240 = vunpack.c.l.b16 %v715
        %v1241 = vunpack.c.h.b16 %v715
        %v1242 = vunpack.c.l.b16 %v716
        %v1243 = vunpack.c.h.b16 %v716
        %v1244 = vunpack.c.l.b16 %v717
        %v1245 = vunpack.c.h.b16 %v717
        %v1246 = vunpack.c.l.b16 %v718
        %v1247 = vunpack.c.h.b16 %v718
        %v1248 = vunpack.c.l.b16 %v719
        %v1249 = vunpack.c.h.b16 %v719
        %v1250 = vunpack.c.l.b16 %v720
        %v1251 = vunpack.c.h.b16 %v720
        %v1252 = vunpack.c.l.b16 %v721
        %v1253 = vunpack.c.h.b16 %v721
        %v1254 = vunpack.c.l.b16 %v722
        %v1255 = vunpack.c.h.b16 %v722
        %v1256 = vunpack.c.l.b16 %v723
        %v1257 = vunpack.c.h.b16 %v723
        %v1258 = vunpack.c.l.b16 %v724
        %v1259 = vunpack.c.h.b16 %v724
        %v1260 = vunpack.c.l.b16 %v725
        %v1261 = vunpack.c.h.b16 %v725
        %v1262 = vunpack.c.l.b16 %v726
        %v1263 = vunpack.c.h.b16 %v726
        %v1264 = vunpack.c.l.b16 %v727
        %v1265 = vunpack.c.h.b16 %v727
        %v1266 = vunpack.c.l.b16 %v728
        %v1267 = vunpack.c.h.b16 %v728
        %v1268 = vunpack.c.l.b16 %v729
        %v1269 = vunpack.c.h.b16 %v729
        %v1270 = vunpack.c.l.b16 %v730
        %v1271 = vunpack.c.h.b16 %v730
        %v1272 = vunpack.c.l.b16 %v731
        %v1273 = vunpack.c.h.b16 %v731
        %v1274 = vunpack.c.l.b16 %v732
        %v1275 = vunpack.c.h.b16 %v732
        %v1276 = vunpack.c.l.b16 %v733
        %v1277 = vunpack.c.h.b16 %v733
        %v1278 = vunpack.c.l.b16 %v734
        %v1279 = vunpack.c.h.b16 %v734
        %v1280 = vunpack.c.l.b16 %v735
        %v1281 = vunpack.c.h.b16 %v735
        %v1282 = vunpack.c.l.b16 %v736
        %v1283 = vunpack.c.h.b16 %v736
        %v1284 = vunpack.c.l.b16 %v737
        %v1285 = vunpack.c.h.b16 %v737
        %v1286 = vunpack.c.l.b16 %v738
        %v1287 = vunpack.c.h.b16 %v738
        %v1288 = vunpack.c.l.b16 %v739
        %v1289 = vunpack.c.h.b16 %v739
        %v1290 = vunpack.c.l.b16 %v740
        %v1291 = vunpack.c.h.b16 %v740
        %v1292 = vunpack.c.l.b16 %v741
        %v1293 = vunpack.c.h.b16 %v741
        %v1294 = vunpack.c.l.b16 %v742
        %v1295 = vunpack.c.h.b16 %v742
        %v1296 = vunpack.c.l.b16 %v743
        %v1297 = vunpack.c.h.b16 %v743
        %v1298 = vunpack.c.l.b16 %v744
        %v1299 = vunpack.c.h.b16 %v744
        %v1300 = vunpack.c.l.b16 %v745
        %v1301 = vunpack.c.h.b16 %v745
        %v1302 = vunpack.c.l.b16 %v746
        %v1303 = vunpack.c.h.b16 %v746
        %v1304 = vunpack.c.l.b16 %v747
        %v1305 = vunpack.c.h.b16 %v747
        %v1306 = vunpack.c.l.b16 %v748
        %v1307 = vunpack.c.h.b16 %v748
        %v1308 = vunpack.c.l.b16 %v749
        %v1309 = vunpack.c.h.b16 %v749
        %v1310 = vunpack.c.l.b16 %v750
        %v1311 = vunpack.c.h.b16 %v750
        %v1312 = vunpack.c.l.b16 %v751
        %v1313 = vunpack.c.h.b16 %v751
        %v1314 = vunpack.c.l.b16 %v752
        %v1315 = vunpack.c.h.b16 %v752
        %v1316 = vunpack.c.l.b16 %v753
        %v1317 = vunpack.c.h.b16 %v753
        %v1318 = vunpack.c.l.b16 %v754
        %v1319 = vunpack.c.h.b16 %v754
        %v1320 = vunpack.c.l.b16 %v755
        %v1321 = vunpack.c.h.b16 %v755
        %v1322 = vunpack.c.l.b16 %v756
        %v1323 = vunpack.c.h.b16 %v756
        %v1324 = vunpack.c.l.b16 %v757
        %v1325 = vunpack.c.h.b16 %v757
        %v1326 = vunpack.c.l.b16 %v758
        %v1327 = vunpack.c.h.b16 %v758
        %v1328 = vunpack.c.l.b16 %v759
        %v1329 = vunpack.c.h.b16 %v759
        %v1330 = vunpack.c.l.b16 %v760
        %v1331 = vunpack.c.h.b16 %v760
        %v1332 = vunpack.c.l.b16 %v761
        %v1333 = vunpack.c.h.b16 %v761
        %v1334 = vunpack.c.l.b16 %v762
        %v1335 = vunpack.c.h.b16 %v762
        %v1336 = vunpack.c.l.b16 %v763
        %v1337 = vunpack.c.h.b16 %v763
        %v1338 = vunpack.c.l.b16 %v764
        %v1339 = vunpack.c.h.b16 %v764
        %v1340 = vunpack.c.l.b16 %v765
        %v1341 = vunpack.c.h.b16 %v765
        %v1342 = vunpack.c.l.b16 %v766
        %v1343 = vunpack.c.h.b16 %v766
        %v1344 = vunpack.c.l.b16 %v767
        %v1345 = vunpack.c.h.b16 %v767
        %v1346 = vunpack.c.l.b16 %v768
        %v1347 = vunpack.c.h.b16 %v768
        %v1348 = vunpack.c.l.b16 %v769
        %v1349 = vunpack.c.h.b16 %v769
        %v1350 = vunpack.c.l.b16 %v770
        %v1351 = vunpack.c.h.b16 %v770
        %v1352 = vunpack.c.l.b16 %v771
        %v1353 = vunpack.c.h.b16 %v771
        %v1354 = vunpack.c.l.b16 %v772
        %v1355 = vunpack.c.h.b16 %v772
        %v1356 = vunpack.c.l.b16 %v773
        %v1357 = vunpack.c.h.b16 %v773
        %v1358 = vunpack.c.l.b16 %v774
        %v1359 = vunpack.c.h.b16 %v774
        %v1360 = vunpack.c.l.b16 %v775
        %v1361 = vunpack.c.h.b16 %v775
        %v1362 = vunpack.c.l.b16 %v776
        %v1363 = vunpack.c.h.b16 %v776
        %v1364 = vunpack.c.l.b16 %v777
        %v1365 = vunpack.c.h.b16 %v777
        %v1366 = vunpack.c.l.b16 %v778
        %v1367 = vunpack.c.h.b16 %v778
        %v1368 = vunpack.c.l.b16 %v779
        %v1369 = vunpack.c.h.b16 %v779
        %v1370 = vunpack.c.l.b16 %v780
        %v1371 = vunpack.c.h.b16 %v780
        %v1372 = vunpack.c.l.b16 %v781
        %v1373 = vunpack.c.h.b16 %v781
        %v1374 = vunpack.c.l.b16 %v782
        %v1375 = vunpack.c.h.b16 %v782
        %v1376 = vunpack.c.l.b16 %v783
        %v1377 = vunpack.c.h.b16 %v783
        %v1378 = vunpack.c.l.b16 %v784
        %v1379 = vunpack.c.h.b16 %v784
        %v1380 = vunpack.c.l.b16 %v785
        %v1381 = vunpack.c.h.b16 %v785
        %v1382 = vunpack.c.l.b16 %v786
        %v1383 = vunpack.c.h.b16 %v786
        %v1384 = vunpack.c.l.b16 %v787
        %v1385 = vunpack.c.h.b16 %v787
        %v1386 = vpack.c.b16 %v1006, %v1002
        %v1387 = vpack.c.b16 %v1007, %v1003
        %v1388 = vpack.c.b16 %v1008, %v1004
        %v1389 = vpack.c.b16 %v1009, %v1005
        %v1390 = vpack.c.b16 %v1014, %v1010
        %v1391 = vpack.c.b16 %v1015, %v1011
        %v1392 = vpack.c.b16 %v1016, %v1012
        %v1393 = vpack.c.b16 %v1017, %v1013
        %v1394 = vpack.c.b16 %v1022, %v1018
        %v1395 = vpack.c.b16 %v1023, %v1019
        %v1396 = vpack.c.b16 %v1024, %v1020
        %v1397 = vpack.c.b16 %v1025, %v1021
        %v1398 = vpack.c.b16 %v1030, %v1026
        %v1399 = vpack.c.b16 %v1031, %v1027
        %v1400 = vpack.c.b16 %v1032, %v1028
        %v1401 = vpack.c.b16 %v1033, %v1029
        %v1402 = vpack.c.b16 %v1038, %v1034
        %v1403 = vpack.c.b16 %v1039, %v1035
        %v1404 = vpack.c.b16 %v1040, %v1036
        %v1405 = vpack.c.b16 %v1041, %v1037
        %v1406 = vpack.c.b16 %v1046, %v1042
        %v1407 = vpack.c.b16 %v1047, %v1043
        %v1408 = vpack.c.b16 %v1048, %v1044
        %v1409 = vpack.c.b16 %v1049, %v1045
        %v1410 = vpack.c.b16 %v1054, %v1050
        %v1411 = vpack.c.b16 %v1055, %v1051
        %v1412 = vpack.c.b16 %v1056, %v1052
        %v1413 = vpack.c.b16 %v1057, %v1053
        %v1414 = vpack.c.b16 %v1062, %v1058
        %v1415 = vpack.c.b16 %v1063, %v1059
        %v1416 = vpack.c.b16 %v1064, %v1060
        %v1417 = vpack.c.b16 %v1065, %v1061
        %v1418 = vpack.c.b16 %v1070, %v1066
        %v1419 = vpack.c.b16 %v1071, %v1067
        %v1420 = vpack.c.b16 %v1072, %v1068
        %v1421 = vpack.c.b16 %v1073, %v1069
        %v1422 = vpack.c.b16 %v1078, %v1074
        %v1423 = vpack.c.b16 %v1079, %v1075
        %v1424 = vpack.c.b16 %v1080, %v1076
        %v1425 = vpack.c.b16 %v1081, %v1077
        %v1426 = vpack.c.b16 %v1086, %v1082
        %v1427 = vpack.c.b16 %v1087, %v1083
        %v1428 = vpack.c.b16 %v1088, %v1084
        %v1429 = vpack.c.b16 %v1089, %v1085
        %v1430 = vpack.c.b16 %v1094, %v1090
        %v1431 = vpack.c.b16 %v1095, %v1091
        %v1432 = vpack.c.b16 %v1096, %v1092
        %v1433 = vpack.c.b16 %v1097, %v1093
        %v1434 = vpack.c.b16 %v1102, %v1098
        %v1435 = vpack.c.b16 %v1103, %v1099
        %v1436 = vpack.c.b16 %v1104, %v1100
        %v1437 = vpack.c.b16 %v1105, %v1101
        %v1438 = vpack.c.b16 %v1110, %v1106
        %v1439 = vpack.c.b16 %v1111, %v1107
        %v1440 = vpack.c.b16 %v1112, %v1108
        %v1441 = vpack.c.b16 %v1113, %v1109
        %v1442 = vpack.c.b16 %v1118, %v1114
        %v1443 = vpack.c.b16 %v1119, %v1115
        %v1444 = vpack.c.b16 %v1120, %v1116
        %v1445 = vpack.c.b16 %v1121, %v1117
        %v1446 = vpack.c.b16 %v1126, %v1122
        %v1447 = vpack.c.b16 %v1127, %v1123
        %v1448 = vpack.c.b16 %v1128, %v1124
        %v1449 = vpack.c.b16 %v1129, %v1125
        %v1450 = vpack.c.b16 %v1134, %v1130
        %v1451 = vpack.c.b16 %v1135, %v1131
        %v1452 = vpack.c.b16 %v1136, %v1132
        %v1453 = vpack.c.b16 %v1137, %v1133
        %v1454 = vpack.c.b16 %v1142, %v1138
        %v1455 = vpack.c.b16 %v1143, %v1139
        %v1456 = vpack.c.b16 %v1144, %v1140
        %v1457 = vpack.c.b16 %v1145, %v1141
        %v1458 = vpack.c.b16 %v1150, %v1146
        %v1459 = vpack.c.b16 %v1151, %v1147
        %v1460 = vpack.c.b16 %v1152, %v1148
        %v1461 = vpack.c.b16 %v1153, %v1149
        %v1462 = vpack.c.b16 %v1158, %v1154
        %v1463 = vpack.c.b16 %v1159, %v1155
        %v1464 = vpack.c.b16 %v1160, %v1156
        %v1465 = vpack.c.b16 %v1161, %v1157
        %v1466 = vpack.c.b16 %v1166, %v1162
        %v1467 = vpack.c.b16 %v1167, %v1163
        %v1468 = vpack.c.b16 %v1168, %v1164
        %v1469 = vpack.c.b16 %v1169, %v1165
        %v1470 = vpack.c.b16 %v1174, %v1170
        %v1471 = vpack.c.b16 %v1175, %v1171
        %v1472 = vpack.c.b16 %v1176, %v1172
        %v1473 = vpack.c.b16 %v1177, %v1173
        %v1474 = vpack.c.b16 %v1182, %v1178
        %v1475 = vpack.c.b16 %v1183, %v1179
        %v1476 = vpack.c.b16 %v1184, %v1180
        %v1477 = vpack.c.b16 %v1185, %v1181
        %v1478 = vpack.c.b16 %v1190, %v1186
        %v1479 = vpack.c.b16 %v1191, %v1187
        %v1480 = vpack.c.b16 %v1192, %v1188
        %v1481 = vpack.c.b16 %v1193, %v1189
        %v1482 = vpack.c.b16 %v1198, %v1194
        %v1483 = vpack.c.b16 %v1199, %v1195
        %v1484 = vpack.c.b16 %v1200, %v1196
        %v1485 = vpack.c.b16 %v1201, %v1197
        %v1486 = vpack.c.b16 %v1206, %v1202
        %v1487 = vpack.c.b16 %v1207, %v1203
        %v1488 = vpack.c.b16 %v1208, %v1204
        %v1489 = vpack.c.b16 %v1209, %v1205
        %v1490 = vpack.c.b16 %v1214, %v1210
        %v1491 = vpack.c.b16 %v1215, %v1211
        %v1492 = vpack.c.b16 %v1216, %v1212
        %v1493 = vpack.c.b16 %v1217, %v1213
        %v1494 = vpack.c.b16 %v1222, %v1218
        %v1495 = vpack.c.b16 %v1223, %v1219
        %v1496 = vpack.c.b16 %v1224, %v1220
        %v1497 = vpack.c.b16 %v1225, %v1221
        %v1498 = vpack.c.b16 %v1230, %v1226
        %v1499 = vpack.c.b16 %v1231, %v1227
        %v1500 = vpack.c.b16 %v1232, %v1228
        %v1501 = vpack.c.b16 %v1233, %v1229
        %v1502 = vpack.c.b16 %v1238, %v1234
        %v1503 = vpack.c.b16 %v1239, %v1235
        %v1504 = vpack.c.b16 %v1240, %v1236
        %v1505 = vpack.c.b16 %v1241, %v1237
        %v1506 = vpack.c.b16 %v1246, %v1242
        %v1507 = vpack.c.b16 %v1247, %v1243
        %v1508 = vpack.c.b16 %v1248, %v1244
        %v1509 = vpack.c.b16 %v1249, %v1245
        %v1510 = vpack.c.b16 %v1254, %v1250
        %v1511 = vpack.c.b16 %v1255, %v1251
        %v1512 = vpack.c.b16 %v1256, %v1252
        %v1513 = vpack.c.b16 %v1257, %v1253
        %v1514 = vpack.c.b16 %v1262, %v1258
        %v1515 = vpack.c.b16 %v1263, %v1259
        %v1516 = vpack.c.b16 %v1264, %v1260
        %v1517 = vpack.c.b16 %v1265, %v1261
        %v1518 = vpack.c.b16 %v1270, %v1266
        %v1519 = vpack.c.b16 %v1271, %v1267
        %v1520 = vpack.c.b16 %v1272, %v1268
        %v1521 = vpack.c.b16 %v1273, %v1269
        %v1522 = vpack.c.b16 %v1278, %v1274
        %v1523 = vpack.c.b16 %v1279, %v1275
        %v1524 = vpack.c.b16 %v1280, %v1276
        %v1525 = vpack.c.b16 %v1281, %v1277
        %v1526 = vpack.c.b16 %v1286, %v1282
        %v1527 = vpack.c.b16 %v1287, %v1283
        %v1528 = vpack.c.b16 %v1288, %v1284
        %v1529 = vpack.c.b16 %v1289, %v1285
        %v1530 = vpack.c.b16 %v1294, %v1290
        %v1531 = vpack.c.b16 %v1295, %v1291
        %v1532 = vpack.c.b16 %v1296, %v1292
        %v1533 = vpack.c.b16 %v1297, %v1293
        %v1534 = vpack.c.b16 %v1302, %v1298
        %v1535 = vpack.c.b16 %v1303, %v1299
        %v1536 = vpack.c.b16 %v1304, %v1300
        %v1537 = vpack.c.b16 %v1305, %v1301
        %v1538 = vpack.c.b16 %v1310, %v1306
        %v1539 = vpack.c.b16 %v1311, %v1307
        %v1540 = vpack.c.b16 %v1312, %v1308
        %v1541 = vpack.c.b16 %v1313, %v1309
        %v1542 = vpack.c.b16 %v1318, %v1314
        %v1543 = vpack.c.b16 %v1319, %v1315
        %v1544 = vpack.c.b16 %v1320, %v1316
        %v1545 = vpack.c.b16 %v1321, %v1317
        %v1546 = vpack.c.b16 %v1326, %v1322
        %v1547 = vpack.c.b16 %v1327, %v1323
        %v1548 = vpack.c.b16 %v1328, %v1324
        %v1549 = vpack.c.b16 %v1329, %v1325
        %v1550 = vpack.c.b16 %v1334, %v1330
        %v1551 = vpack.c.b16 %v1335, %v1331
        %v1552 = vpack.c.b16 %v1336, %v1332
        %v1553 = vpack.c.b16 %v1337, %v1333
        %v1554 = vpack.c.b16 %v1342, %v1338
        %v1555 = vpack.c.b16 %v1343, %v1339
        %v1556 = vpack.c.b16 %v1344, %v1340
        %v1557 = vpack.c.b16 %v1345, %v1341
        %v1558 = vpack.c.b16 %v1350, %v1346
        %v1559 = vpack.c.b16 %v1351, %v1347
        %v1560 = vpack.c.b16 %v1352, %v1348
        %v1561 = vpack.c.b16 %v1353, %v1349
        %v1562 = vpack.c.b16 %v1358, %v1354
        %v1563 = vpack.c.b16 %v1359, %v1355
        %v1564 = vpack.c.b16 %v1360, %v1356
        %v1565 = vpack.c.b16 %v1361, %v1357
        %v1566 = vpack.c.b16 %v1366, %v1362
        %v1567 = vpack.c.b16 %v1367, %v1363
        %v1568 = vpack.c.b16 %v1368, %v1364
        %v1569 = vpack.c.b16 %v1369, %v1365
        %v1570 = vpack.c.b16 %v1374, %v1370
        %v1571 = vpack.c.b16 %v1375, %v1371
        %v1572 = vpack.c.b16 %v1376, %v1372
        %v1573 = vpack.c.b16 %v1377, %v1373
        %v1574 = vpack.c.b16 %v1382, %v1378
        %v1575 = vpack.c.b16 %v1383, %v1379
        %v1576 = vpack.c.b16 %v1384, %v1380
        %v1577 = vpack.c.b16 %v1385, %v1381
        %1770 = vmatprep.subr.bf16.mxu0 %v1387
        %1771 = vmatpush1.bf16.msra.mxu0 %v1386
        %1772 = vmatprep.subr.bf16.mxu0 %v1391
        %1773 = vmatpush1.bf16.msra.mxu0 %v1390
        %1774 = vmatprep.subr.bf16.mxu0 %v1395
        %1775 = vmatpush1.bf16.msra.mxu0 %v1394
        %1776 = vmatprep.subr.bf16.mxu0 %v1399
        %1777 = vmatpush1.bf16.msra.mxu0 %v1398
        %1778 = vmatprep.subr.bf16.mxu0 %v1403
        %1779 = vmatpush1.bf16.msra.mxu0 %v1402
        %1780 = vmatprep.subr.bf16.mxu0 %v1407
        %1781 = vmatpush1.bf16.msra.mxu0 %v1406
        %1782 = vmatprep.subr.bf16.mxu0 %v1411
        %1783 = vmatpush1.bf16.msra.mxu0 %v1410
        %1784 = vmatprep.subr.bf16.mxu0 %v1415
        %1785 = vmatpush1.bf16.msra.mxu0 %v1414
        %1786 = vmatprep.subr.bf16.mxu0 %v1419
        %1787 = vmatpush1.bf16.msra.mxu0 %v1418
        %1788 = vmatprep.subr.bf16.mxu0 %v1423
        %1789 = vmatpush1.bf16.msra.mxu0 %v1422
        %1790 = vmatprep.subr.bf16.mxu0 %v1427
        %1791 = vmatpush1.bf16.msra.mxu0 %v1426
        %1792 = vmatprep.subr.bf16.mxu0 %v1431
        %1793 = vmatpush1.bf16.msra.mxu0 %v1430
        %1794 = vmatprep.subr.bf16.mxu0 %v1435
        %1795 = vmatpush1.bf16.msra.mxu0 %v1434
        %1796 = vmatprep.subr.bf16.mxu0 %v1439
        %1797 = vmatpush1.bf16.msra.mxu0 %v1438
        %1798 = vmatprep.subr.bf16.mxu0 %v1443
        %1799 = vmatpush1.bf16.msra.mxu0 %v1442
        %1800 = vmatprep.subr.bf16.mxu0 %v1447
        %1801 = vmatpush1.bf16.msra.mxu0 %v1446
        %1802 = vmatprep.mubr.bf16.mxu0 %v549
        %1803 = vmatmul.mubr.bf16.gmra.mrb[0].mxu0 %v548
        %v1804 = vpop.f32.mrb[0].mxu0
        %v1805 = vadd.f32 %v793, %v1804
        %v1806 = vpop.f32.mrb[0].mxu0
        %v1807 = vadd.f32 %v797, %v1806
        %v1808 = vpop.f32.mrb[0].mxu0
        %v1809 = vadd.f32 %v793, %v1808
        %v1810 = vpop.f32.mrb[0].mxu0
        %v1811 = vadd.f32 %v797, %v1810
        %1812 = vmatprep.mubr.bf16.mxu0 %v555
        %1813 = vmatmul.mubr.bf16.gmra.mrb[0].mxu0 %v554
        %v1814 = vpop.f32.mrb[0].mxu0
        %v1815 = vadd.f32 %v793, %v1814
        %v1816 = vpop.f32.mrb[0].mxu0
        %v1817 = vadd.f32 %v797, %v1816
        %v1818 = vpop.f32.mrb[0].mxu0
        %v1819 = vadd.f32 %v793, %v1818
        %v1820 = vpop.f32.mrb[0].mxu0
        %v1821 = vadd.f32 %v797, %v1820
        %1822 = vmatprep.mubr.bf16.mxu0 %v561
        %1823 = vmatmul.mubr.bf16.gmra.mrb[0].mxu0 %v560
        %v1824 = vpop.f32.mrb[0].mxu0
        %v1825 = vadd.f32 %v793, %v1824
        %v1826 = vpop.f32.mrb[0].mxu0
        %v1827 = vadd.f32 %v797, %v1826
        %v1828 = vpop.f32.mrb[0].mxu0
        %v1829 = vadd.f32 %v793, %v1828
        %v1830 = vpop.f32.mrb[0].mxu0
        %v1831 = vadd.f32 %v797, %v1830
        %1832 = vmatprep.mubr.bf16.mxu0 %v567
        %1833 = vmatmul.mubr.bf16.gmra.mrb[0].mxu0 %v566
        %v1834 = vpop.f32.mrb[0].mxu0
        %v1835 = vadd.f32 %v793, %v1834
        %v1836 = vpop.f32.mrb[0].mxu0
        %v1837 = vadd.f32 %v797, %v1836
        %v1838 = vpop.f32.mrb[0].mxu0
        %v1839 = vadd.f32 %v793, %v1838
        %v1840 = vpop.f32.mrb[0].mxu0
        %v1841 = vadd.f32 %v797, %v1840
        %1842 = vmatprep.mubr.bf16.mxu0 %v573
        %1843 = vmatmul.mubr.bf16.gmra.mrb[0].mxu0 %v572
        %v1844 = vpop.f32.mrb[0].mxu0
        %v1845 = vadd.f32 %v793, %v1844
        %v1846 = vpop.f32.mrb[0].mxu0
        %v1847 = vadd.f32 %v797, %v1846
        %v1848 = vpop.f32.mrb[0].mxu0
        %v1849 = vadd.f32 %v793, %v1848
        %v1850 = vpop.f32.mrb[0].mxu0
        %v1851 = vadd.f32 %v797, %v1850
        %1852 = vmatprep.mubr.bf16.mxu0 %v579
        %1853 = vmatmul.mubr.bf16.gmra.mrb[0].mxu0 %v578
        %v1854 = vpop.f32.mrb[0].mxu0
        %v1855 = vadd.f32 %v793, %v1854
        %v1856 = vpop.f32.mrb[0].mxu0
        %v1857 = vadd.f32 %v797, %v1856
        %v1858 = vpop.f32.mrb[0].mxu0
        %v1859 = vadd.f32 %v793, %v1858
        %v1860 = vpop.f32.mrb[0].mxu0
        %v1861 = vadd.f32 %v797, %v1860
        %1862 = vmatprep.mubr.bf16.mxu0 %v585
        %1863 = vmatmul.mubr.bf16.gmra.mrb[0].mxu0 %v584
        %v1864 = vpop.f32.mrb[0].mxu0
        %v1865 = vadd.f32 %v793, %v1864
        %v1866 = vpop.f32.mrb[0].mxu0
        %v1867 = vadd.f32 %v797, %v1866
        %v1868 = vpop.f32.mrb[0].mxu0
        %v1869 = vadd.f32 %v793, %v1868
        %v1870 = vpop.f32.mrb[0].mxu0
        %v1871 = vadd.f32 %v797, %v1870
        %1872 = vmatprep.mubr.bf16.mxu0 %v591
        %1873 = vmatmul.mubr.bf16.gmra.mrb[0].mxu0 %v590
        %v1874 = vpop.f32.mrb[0].mxu0
        %v1875 = vadd.f32 %v793, %v1874
        %v1876 = vpop.f32.mrb[0].mxu0
        %v1877 = vadd.f32 %v797, %v1876
        %v1878 = vpop.f32.mrb[0].mxu0
        %v1879 = vadd.f32 %v793, %v1878
        %v1880 = vpop.f32.mrb[0].mxu0
        %v1881 = vadd.f32 %v797, %v1880
        %1882 = vdwg.mxu0
        %1883 = vmatprep.subr.bf16.mxu0 %v1451
        %1884 = vmatpush1.bf16.msra.mxu0 %v1450
        %1885 = vmatprep.subr.bf16.mxu0 %v1455
        %1886 = vmatpush1.bf16.msra.mxu0 %v1454
        %1887 = vmatprep.subr.bf16.mxu0 %v1459
        %1888 = vmatpush1.bf16.msra.mxu0 %v1458
        %1889 = vmatprep.subr.bf16.mxu0 %v1463
        %1890 = vmatpush1.bf16.msra.mxu0 %v1462
        %1891 = vmatprep.subr.bf16.mxu0 %v1467
        %1892 = vmatpush1.bf16.msra.mxu0 %v1466
        %1893 = vmatprep.subr.bf16.mxu0 %v1471
        %1894 = vmatpush1.bf16.msra.mxu0 %v1470
        %1895 = vmatprep.subr.bf16.mxu0 %v1475
        %1896 = vmatpush1.bf16.msra.mxu0 %v1474
        %1897 = vmatprep.subr.bf16.mxu0 %v1479
        %1898 = vmatpush1.bf16.msra.mxu0 %v1478
        %1899 = vmatprep.subr.bf16.mxu0 %v1483
        %1900 = vmatpush1.bf16.msra.mxu0 %v1482
        %1901 = vmatprep.subr.bf16.mxu0 %v1487
        %1902 = vmatpush1.bf16.msra.mxu0 %v1486
        %1903 = vmatprep.subr.bf16.mxu0 %v1491
        %1904 = vmatpush1.bf16.msra.mxu0 %v1490
        %1905 = vmatprep.subr.bf16.mxu0 %v1495
        %1906 = vmatpush1.bf16.msra.mxu0 %v1494
        %1907 = vmatprep.subr.bf16.mxu0 %v1499
        %1908 = vmatpush1.bf16.msra.mxu0 %v1498
        %1909 = vmatprep.subr.bf16.mxu0 %v1503
        %1910 = vmatpush1.bf16.msra.mxu0 %v1502
        %1911 = vmatprep.subr.bf16.mxu0 %v1507
        %1912 = vmatpush1.bf16.msra.mxu0 %v1506
        %1913 = vmatprep.subr.bf16.mxu0 %v1511
        %1914 = vmatpush1.bf16.msra.mxu0 %v1510
        %1915 = vmatprep.mubr.bf16.mxu0 %v551
        %1916 = vmatmul.mubr.bf16.gmra.mrb[0].mxu0 %v550
        %v1917 = vpop.f32.mrb[0].mxu0
        %v1918 = vadd.f32 %v1805, %v1917
        %v1919 = vpop.f32.mrb[0].mxu0
        %v1920 = vadd.f32 %v1807, %v1919
        %v1921 = vpop.f32.mrb[0].mxu0
        %v1922 = vadd.f32 %v1809, %v1921
        %v1923 = vpop.f32.mrb[0].mxu0
        %v1924 = vadd.f32 %v1811, %v1923
        %1925 = vmatprep.mubr.bf16.mxu0 %v557
        %1926 = vmatmul.mubr.bf16.gmra.mrb[0].mxu0 %v556
        %v1927 = vpop.f32.mrb[0].mxu0
        %v1928 = vadd.f32 %v1815, %v1927
        %v1929 = vpop.f32.mrb[0].mxu0
        %v1930 = vadd.f32 %v1817, %v1929
        %v1931 = vpop.f32.mrb[0].mxu0
        %v1932 = vadd.f32 %v1819, %v1931
        %v1933 = vpop.f32.mrb[0].mxu0
        %v1934 = vadd.f32 %v1821, %v1933
        %1935 = vmatprep.mubr.bf16.mxu0 %v563
        %1936 = vmatmul.mubr.bf16.gmra.mrb[0].mxu0 %v562
        %v1937 = vpop.f32.mrb[0].mxu0
        %v1938 = vadd.f32 %v1825, %v1937
        %v1939 = vpop.f32.mrb[0].mxu0
        %v1940 = vadd.f32 %v1827, %v1939
        %v1941 = vpop.f32.mrb[0].mxu0
        %v1942 = vadd.f32 %v1829, %v1941
        %v1943 = vpop.f32.mrb[0].mxu0
        %v1944 = vadd.f32 %v1831, %v1943
        %1945 = vmatprep.mubr.bf16.mxu0 %v569
        %1946 = vmatmul.mubr.bf16.gmra.mrb[0].mxu0 %v568
        %v1947 = vpop.f32.mrb[0].mxu0
        %v1948 = vadd.f32 %v1835, %v1947
        %v1949 = vpop.f32.mrb[0].mxu0
        %v1950 = vadd.f32 %v1837, %v1949
        %v1951 = vpop.f32.mrb[0].mxu0
        %v1952 = vadd.f32 %v1839, %v1951
        %v1953 = vpop.f32.mrb[0].mxu0
        %v1954 = vadd.f32 %v1841, %v1953
        %1955 = vmatprep.mubr.bf16.mxu0 %v575
        %1956 = vmatmul.mubr.bf16.gmra.mrb[0].mxu0 %v574
        %v1957 = vpop.f32.mrb[0].mxu0
        %v1958 = vadd.f32 %v1845, %v1957
        %v1959 = vpop.f32.mrb[0].mxu0
        %v1960 = vadd.f32 %v1847, %v1959
        %v1961 = vpop.f32.mrb[0].mxu0
        %v1962 = vadd.f32 %v1849, %v1961
        %v1963 = vpop.f32.mrb[0].mxu0
        %v1964 = vadd.f32 %v1851, %v1963
        %1965 = vmatprep.mubr.bf16.mxu0 %v581
        %1966 = vmatmul.mubr.bf16.gmra.mrb[0].mxu0 %v580
        %v1967 = vpop.f32.mrb[0].mxu0
        %v1968 = vadd.f32 %v1855, %v1967
        %v1969 = vpop.f32.mrb[0].mxu0
        %v1970 = vadd.f32 %v1857, %v1969
        %v1971 = vpop.f32.mrb[0].mxu0
        %v1972 = vadd.f32 %v1859, %v1971
        %v1973 = vpop.f32.mrb[0].mxu0
        %v1974 = vadd.f32 %v1861, %v1973
        %1975 = vmatprep.mubr.bf16.mxu0 %v587
        %1976 = vmatmul.mubr.bf16.gmra.mrb[0].mxu0 %v586
        %v1977 = vpop.f32.mrb[0].mxu0
        %v1978 = vadd.f32 %v1865, %v1977
        %v1979 = vpop.f32.mrb[0].mxu0
        %v1980 = vadd.f32 %v1867, %v1979
        %v1981 = vpop.f32.mrb[0].mxu0
        %v1982 = vadd.f32 %v1869, %v1981
        %v1983 = vpop.f32.mrb[0].mxu0
        %v1984 = vadd.f32 %v1871, %v1983
        %1985 = vmatprep.mubr.bf16.mxu0 %v593
        %1986 = vmatmul.mubr.bf16.gmra.mrb[0].mxu0 %v592
        %v1987 = vpop.f32.mrb[0].mxu0
        %v1988 = vadd.f32 %v1875, %v1987
        %v1989 = vpop.f32.mrb[0].mxu0
        %v1990 = vadd.f32 %v1877, %v1989
        %v1991 = vpop.f32.mrb[0].mxu0
        %v1992 = vadd.f32 %v1879, %v1991
        %v1993 = vpop.f32.mrb[0].mxu0
        %v1994 = vadd.f32 %v1881, %v1993
        %1995 = vdwg.mxu0
        %1996 = vmatprep.subr.bf16.mxu0 %v1515
        %1997 = vmatpush1.bf16.msra.mxu0 %v1514
        %1998 = vmatprep.subr.bf16.mxu0 %v1519
        %1999 = vmatpush1.bf16.msra.mxu0 %v1518
        %2000 = vmatprep.subr.bf16.mxu0 %v1523
        %2001 = vmatpush1.bf16.msra.mxu0 %v1522
        %2002 = vmatprep.subr.bf16.mxu0 %v1527
        %2003 = vmatpush1.bf16.msra.mxu0 %v1526
        %2004 = vmatprep.subr.bf16.mxu0 %v1531
        %2005 = vmatpush1.bf16.msra.mxu0 %v1530
        %2006 = vmatprep.subr.bf16.mxu0 %v1535
        %2007 = vmatpush1.bf16.msra.mxu0 %v1534
        %2008 = vmatprep.subr.bf16.mxu0 %v1539
        %2009 = vmatpush1.bf16.msra.mxu0 %v1538
        %2010 = vmatprep.subr.bf16.mxu0 %v1543
        %2011 = vmatpush1.bf16.msra.mxu0 %v1542
        %2012 = vmatprep.subr.bf16.mxu0 %v1547
        %2013 = vmatpush1.bf16.msra.mxu0 %v1546
        %2014 = vmatprep.subr.bf16.mxu0 %v1551
        %2015 = vmatpush1.bf16.msra.mxu0 %v1550
        %2016 = vmatprep.subr.bf16.mxu0 %v1555
        %2017 = vmatpush1.bf16.msra.mxu0 %v1554
        %2018 = vmatprep.subr.bf16.mxu0 %v1559
        %2019 = vmatpush1.bf16.msra.mxu0 %v1558
        %2020 = vmatprep.subr.bf16.mxu0 %v1563
        %2021 = vmatpush1.bf16.msra.mxu0 %v1562
        %2022 = vmatprep.subr.bf16.mxu0 %v1567
        %2023 = vmatpush1.bf16.msra.mxu0 %v1566
        %2024 = vmatprep.subr.bf16.mxu0 %v1571
        %2025 = vmatpush1.bf16.msra.mxu0 %v1570
        %2026 = vmatprep.subr.bf16.mxu0 %v1575
        %2027 = vmatpush1.bf16.msra.mxu0 %v1574
        %2028 = vmatprep.mubr.bf16.mxu0 %v553
        %2029 = vmatmul.mubr.bf16.gmra.mrb[0].mxu0 %v552
        %v2030 = vpop.f32.mrb[0].mxu0
        %v2031 = vadd.f32 %v1918, %v2030
        %v2032 = vpop.f32.mrb[0].mxu0
        %v2033 = vadd.f32 %v1920, %v2032
        %v2034 = vpop.f32.mrb[0].mxu0
        %v2035 = vadd.f32 %v1922, %v2034
        %v2036 = vpop.f32.mrb[0].mxu0
        %v2037 = vadd.f32 %v1924, %v2036
        %2038 = vmatprep.mubr.bf16.mxu0 %v559
        %2039 = vmatmul.mubr.bf16.gmra.mrb[0].mxu0 %v558
        %v2040 = vpop.f32.mrb[0].mxu0
        %v2041 = vadd.f32 %v1928, %v2040
        %v2042 = vpop.f32.mrb[0].mxu0
        %v2043 = vadd.f32 %v1930, %v2042
        %v2044 = vpop.f32.mrb[0].mxu0
        %v2045 = vadd.f32 %v1932, %v2044
        %v2046 = vpop.f32.mrb[0].mxu0
        %v2047 = vadd.f32 %v1934, %v2046
        %2048 = vmatprep.mubr.bf16.mxu0 %v565
        %2049 = vmatmul.mubr.bf16.gmra.mrb[0].mxu0 %v564
        %v2050 = vpop.f32.mrb[0].mxu0
        %v2051 = vadd.f32 %v1938, %v2050
        %v2052 = vpop.f32.mrb[0].mxu0
        %v2053 = vadd.f32 %v1940, %v2052
        %v2054 = vpop.f32.mrb[0].mxu0
        %v2055 = vadd.f32 %v1942, %v2054
        %v2056 = vpop.f32.mrb[0].mxu0
        %v2057 = vadd.f32 %v1944, %v2056
        %2058 = vmatprep.mubr.bf16.mxu0 %v571
        %2059 = vmatmul.mubr.bf16.gmra.mrb[0].mxu0 %v570
        %v2060 = vpop.f32.mrb[0].mxu0
        %v2061 = vadd.f32 %v1948, %v2060
        %v2062 = vpop.f32.mrb[0].mxu0
        %v2063 = vadd.f32 %v1950, %v2062
        %v2064 = vpop.f32.mrb[0].mxu0
        %v2065 = vadd.f32 %v1952, %v2064
        %v2066 = vpop.f32.mrb[0].mxu0
        %v2067 = vadd.f32 %v1954, %v2066
        %2068 = vmatprep.mubr.bf16.mxu0 %v577
        %2069 = vmatmul.mubr.bf16.gmra.mrb[0].mxu0 %v576
        %v2070 = vpop.f32.mrb[0].mxu0
        %v2071 = vadd.f32 %v1958, %v2070
        %v2072 = vpop.f32.mrb[0].mxu0
        %v2073 = vadd.f32 %v1960, %v2072
        %v2074 = vpop.f32.mrb[0].mxu0
        %v2075 = vadd.f32 %v1962, %v2074
        %v2076 = vpop.f32.mrb[0].mxu0
        %v2077 = vadd.f32 %v1964, %v2076
        %2078 = vmatprep.mubr.bf16.mxu0 %v583
        %2079 = vmatmul.mubr.bf16.gmra.mrb[0].mxu0 %v582
        %v2080 = vpop.f32.mrb[0].mxu0
        %v2081 = vadd.f32 %v1968, %v2080
        %v2082 = vpop.f32.mrb[0].mxu0
        %v2083 = vadd.f32 %v1970, %v2082
        %v2084 = vpop.f32.mrb[0].mxu0
        %v2085 = vadd.f32 %v1972, %v2084
        %v2086 = vpop.f32.mrb[0].mxu0
        %v2087 = vadd.f32 %v1974, %v2086
        %2088 = vmatprep.mubr.bf16.mxu0 %v589
        %2089 = vmatmul.mubr.bf16.gmra.mrb[0].mxu0 %v588
        %v2090 = vpop.f32.mrb[0].mxu0
        %v2091 = vadd.f32 %v1978, %v2090
        %v2092 = vpop.f32.mrb[0].mxu0
        %v2093 = vadd.f32 %v1980, %v2092
        %v2094 = vpop.f32.mrb[0].mxu0
        %v2095 = vadd.f32 %v1982, %v2094
        %v2096 = vpop.f32.mrb[0].mxu0
        %v2097 = vadd.f32 %v1984, %v2096
        %2098 = vmatprep.mubr.bf16.mxu0 %v595
        %2099 = vmatmul.mubr.bf16.gmra.mrb[0].mxu0 %v594
        %v2100 = vpop.f32.mrb[0].mxu0
        %v2101 = vadd.f32 %v1988, %v2100
        %v2102 = vpop.f32.mrb[0].mxu0
        %v2103 = vadd.f32 %v1990, %v2102
        %v2104 = vpop.f32.mrb[0].mxu0
        %v2105 = vadd.f32 %v1992, %v2104
        %v2106 = vpop.f32.mrb[0].mxu0
        %v2107 = vadd.f32 %v1994, %v2106
        %2108 = vdwg.mxu0
        %2109 = vmatprep.subr.bf16.mxu0 %v1389
        %2110 = vmatpush1.bf16.msra.mxu0 %v1388
        %2111 = vmatprep.subr.bf16.mxu0 %v1393
        %2112 = vmatpush1.bf16.msra.mxu0 %v1392
        %2113 = vmatprep.subr.bf16.mxu0 %v1397
        %2114 = vmatpush1.bf16.msra.mxu0 %v1396
        %2115 = vmatprep.subr.bf16.mxu0 %v1401
        %2116 = vmatpush1.bf16.msra.mxu0 %v1400
        %2117 = vmatprep.subr.bf16.mxu0 %v1405
        %2118 = vmatpush1.bf16.msra.mxu0 %v1404
        %2119 = vmatprep.subr.bf16.mxu0 %v1409
        %2120 = vmatpush1.bf16.msra.mxu0 %v1408
        %2121 = vmatprep.subr.bf16.mxu0 %v1413
        %2122 = vmatpush1.bf16.msra.mxu0 %v1412
        %2123 = vmatprep.subr.bf16.mxu0 %v1417
        %2124 = vmatpush1.bf16.msra.mxu0 %v1416
        %2125 = vmatprep.subr.bf16.mxu0 %v1421
        %2126 = vmatpush1.bf16.msra.mxu0 %v1420
        %2127 = vmatprep.subr.bf16.mxu0 %v1425
        %2128 = vmatpush1.bf16.msra.mxu0 %v1424
        %2129 = vmatprep.subr.bf16.mxu0 %v1429
        %2130 = vmatpush1.bf16.msra.mxu0 %v1428
        %2131 = vmatprep.subr.bf16.mxu0 %v1433
        %2132 = vmatpush1.bf16.msra.mxu0 %v1432
        %2133 = vmatprep.subr.bf16.mxu0 %v1437
        %2134 = vmatpush1.bf16.msra.mxu0 %v1436
        %2135 = vmatprep.subr.bf16.mxu0 %v1441
        %2136 = vmatpush1.bf16.msra.mxu0 %v1440
        %2137 = vmatprep.subr.bf16.mxu0 %v1445
        %2138 = vmatpush1.bf16.msra.mxu0 %v1444
        %2139 = vmatprep.subr.bf16.mxu0 %v1449
        %2140 = vmatpush1.bf16.msra.mxu0 %v1448
        %2141 = vmatprep.mubr.bf16.mxu0 %v549
        %2142 = vmatmul.mubr.bf16.gmra.mrb[0].mxu0 %v548
        %v2143 = vpop.f32.mrb[0].mxu0
        %v2144 = vadd.f32 %v801, %v2143
        %v2145 = vpop.f32.mrb[0].mxu0
        %v2146 = vadd.f32 %v805, %v2145
        %v2147 = vpop.f32.mrb[0].mxu0
        %v2148 = vadd.f32 %v801, %v2147
        %v2149 = vpop.f32.mrb[0].mxu0
        %v2150 = vadd.f32 %v805, %v2149
        %2151 = vmatprep.mubr.bf16.mxu0 %v555
        %2152 = vmatmul.mubr.bf16.gmra.mrb[0].mxu0 %v554
        %v2153 = vpop.f32.mrb[0].mxu0
        %v2154 = vadd.f32 %v801, %v2153
        %v2155 = vpop.f32.mrb[0].mxu0
        %v2156 = vadd.f32 %v805, %v2155
        %v2157 = vpop.f32.mrb[0].mxu0
        %v2158 = vadd.f32 %v801, %v2157
        %v2159 = vpop.f32.mrb[0].mxu0
        %v2160 = vadd.f32 %v805, %v2159
        %2161 = vmatprep.mubr.bf16.mxu0 %v561
        %2162 = vmatmul.mubr.bf16.gmra.mrb[0].mxu0 %v560
        %v2163 = vpop.f32.mrb[0].mxu0
        %v2164 = vadd.f32 %v801, %v2163
        %v2165 = vpop.f32.mrb[0].mxu0
        %v2166 = vadd.f32 %v805, %v2165
        %v2167 = vpop.f32.mrb[0].mxu0
        %v2168 = vadd.f32 %v801, %v2167
        %v2169 = vpop.f32.mrb[0].mxu0
        %v2170 = vadd.f32 %v805, %v2169
        %2171 = vmatprep.mubr.bf16.mxu0 %v567
        %2172 = vmatmul.mubr.bf16.gmra.mrb[0].mxu0 %v566
        %v2173 = vpop.f32.mrb[0].mxu0
        %v2174 = vadd.f32 %v801, %v2173
        %v2175 = vpop.f32.mrb[0].mxu0
        %v2176 = vadd.f32 %v805, %v2175
        %v2177 = vpop.f32.mrb[0].mxu0
        %v2178 = vadd.f32 %v801, %v2177
        %v2179 = vpop.f32.mrb[0].mxu0
        %v2180 = vadd.f32 %v805, %v2179
        %2181 = vmatprep.mubr.bf16.mxu0 %v573
        %2182 = vmatmul.mubr.bf16.gmra.mrb[0].mxu0 %v572
        %v2183 = vpop.f32.mrb[0].mxu0
        %v2184 = vadd.f32 %v801, %v2183
        %v2185 = vpop.f32.mrb[0].mxu0
        %v2186 = vadd.f32 %v805, %v2185
        %v2187 = vpop.f32.mrb[0].mxu0
        %v2188 = vadd.f32 %v801, %v2187
        %v2189 = vpop.f32.mrb[0].mxu0
        %v2190 = vadd.f32 %v805, %v2189
        %2191 = vmatprep.mubr.bf16.mxu0 %v579
        %2192 = vmatmul.mubr.bf16.gmra.mrb[0].mxu0 %v578
        %v2193 = vpop.f32.mrb[0].mxu0
        %v2194 = vadd.f32 %v801, %v2193
        %v2195 = vpop.f32.mrb[0].mxu0
        %v2196 = vadd.f32 %v805, %v2195
        %v2197 = vpop.f32.mrb[0].mxu0
        %v2198 = vadd.f32 %v801, %v2197
        %v2199 = vpop.f32.mrb[0].mxu0
        %v2200 = vadd.f32 %v805, %v2199
        %2201 = vmatprep.mubr.bf16.mxu0 %v585
        %2202 = vmatmul.mubr.bf16.gmra.mrb[0].mxu0 %v584
        %v2203 = vpop.f32.mrb[0].mxu0
        %v2204 = vadd.f32 %v801, %v2203
        %v2205 = vpop.f32.mrb[0].mxu0
        %v2206 = vadd.f32 %v805, %v2205
        %v2207 = vpop.f32.mrb[0].mxu0
        %v2208 = vadd.f32 %v801, %v2207
        %v2209 = vpop.f32.mrb[0].mxu0
        %v2210 = vadd.f32 %v805, %v2209
        %2211 = vmatprep.mubr.bf16.mxu0 %v591
        %2212 = vmatmul.mubr.bf16.gmra.mrb[0].mxu0 %v590
        %v2213 = vpop.f32.mrb[0].mxu0
        %v2214 = vadd.f32 %v801, %v2213
        %v2215 = vpop.f32.mrb[0].mxu0
        %v2216 = vadd.f32 %v805, %v2215
        %v2217 = vpop.f32.mrb[0].mxu0
        %v2218 = vadd.f32 %v801, %v2217
        %v2219 = vpop.f32.mrb[0].mxu0
        %v2220 = vadd.f32 %v805, %v2219
        %2221 = vdwg.mxu0
        %2222 = vmatprep.subr.bf16.mxu0 %v1453
        %2223 = vmatpush1.bf16.msra.mxu0 %v1452
        %2224 = vmatprep.subr.bf16.mxu0 %v1457
        %2225 = vmatpush1.bf16.msra.mxu0 %v1456
        %2226 = vmatprep.subr.bf16.mxu0 %v1461
        %2227 = vmatpush1.bf16.msra.mxu0 %v1460
        %2228 = vmatprep.subr.bf16.mxu0 %v1465
        %2229 = vmatpush1.bf16.msra.mxu0 %v1464
        %2230 = vmatprep.subr.bf16.mxu0 %v1469
        %2231 = vmatpush1.bf16.msra.mxu0 %v1468
        %2232 = vmatprep.subr.bf16.mxu0 %v1473
        %2233 = vmatpush1.bf16.msra.mxu0 %v1472
        %2234 = vmatprep.subr.bf16.mxu0 %v1477
        %2235 = vmatpush1.bf16.msra.mxu0 %v1476
        %2236 = vmatprep.subr.bf16.mxu0 %v1481
        %2237 = vmatpush1.bf16.msra.mxu0 %v1480
        %2238 = vmatprep.subr.bf16.mxu0 %v1485
        %2239 = vmatpush1.bf16.msra.mxu0 %v1484
        %2240 = vmatprep.subr.bf16.mxu0 %v1489
        %2241 = vmatpush1.bf16.msra.mxu0 %v1488
        %2242 = vmatprep.subr.bf16.mxu0 %v1493
        %2243 = vmatpush1.bf16.msra.mxu0 %v1492
        %2244 = vmatprep.subr.bf16.mxu0 %v1497
        %2245 = vmatpush1.bf16.msra.mxu0 %v1496
        %2246 = vmatprep.subr.bf16.mxu0 %v1501
        %2247 = vmatpush1.bf16.msra.mxu0 %v1500
        %2248 = vmatprep.subr.bf16.mxu0 %v1505
        %2249 = vmatpush1.bf16.msra.mxu0 %v1504
        %2250 = vmatprep.subr.bf16.mxu0 %v1509
        %2251 = vmatpush1.bf16.msra.mxu0 %v1508
        %2252 = vmatprep.subr.bf16.mxu0 %v1513
        %2253 = vmatpush1.bf16.msra.mxu0 %v1512
        %2254 = vmatprep.mubr.bf16.mxu0 %v551
        %2255 = vmatmul.mubr.bf16.gmra.mrb[0].mxu0 %v550
        %v2256 = vpop.f32.mrb[0].mxu0
        %v2257 = vadd.f32 %v2144, %v2256
        %v2258 = vpop.f32.mrb[0].mxu0
        %v2259 = vadd.f32 %v2146, %v2258
        %v2260 = vpop.f32.mrb[0].mxu0
        %v2261 = vadd.f32 %v2148, %v2260
        %v2262 = vpop.f32.mrb[0].mxu0
        %v2263 = vadd.f32 %v2150, %v2262
        %2264 = vmatprep.mubr.bf16.mxu0 %v557
        %2265 = vmatmul.mubr.bf16.gmra.mrb[0].mxu0 %v556
        %v2266 = vpop.f32.mrb[0].mxu0
        %v2267 = vadd.f32 %v2154, %v2266
        %v2268 = vpop.f32.mrb[0].mxu0
        %v2269 = vadd.f32 %v2156, %v2268
        %v2270 = vpop.f32.mrb[0].mxu0
        %v2271 = vadd.f32 %v2158, %v2270
        %v2272 = vpop.f32.mrb[0].mxu0
        %v2273 = vadd.f32 %v2160, %v2272
        %2274 = vmatprep.mubr.bf16.mxu0 %v563
        %2275 = vmatmul.mubr.bf16.gmra.mrb[0].mxu0 %v562
        %v2276 = vpop.f32.mrb[0].mxu0
        %v2277 = vadd.f32 %v2164, %v2276
        %v2278 = vpop.f32.mrb[0].mxu0
        %v2279 = vadd.f32 %v2166, %v2278
        %v2280 = vpop.f32.mrb[0].mxu0
        %v2281 = vadd.f32 %v2168, %v2280
        %v2282 = vpop.f32.mrb[0].mxu0
        %v2283 = vadd.f32 %v2170, %v2282
        %2284 = vmatprep.mubr.bf16.mxu0 %v569
        %2285 = vmatmul.mubr.bf16.gmra.mrb[0].mxu0 %v568
        %v2286 = vpop.f32.mrb[0].mxu0
        %v2287 = vadd.f32 %v2174, %v2286
        %v2288 = vpop.f32.mrb[0].mxu0
        %v2289 = vadd.f32 %v2176, %v2288
        %v2290 = vpop.f32.mrb[0].mxu0
        %v2291 = vadd.f32 %v2178, %v2290
        %v2292 = vpop.f32.mrb[0].mxu0
        %v2293 = vadd.f32 %v2180, %v2292
        %2294 = vmatprep.mubr.bf16.mxu0 %v575
        %2295 = vmatmul.mubr.bf16.gmra.mrb[0].mxu0 %v574
        %v2296 = vpop.f32.mrb[0].mxu0
        %v2297 = vadd.f32 %v2184, %v2296
        %v2298 = vpop.f32.mrb[0].mxu0
        %v2299 = vadd.f32 %v2186, %v2298
        %v2300 = vpop.f32.mrb[0].mxu0
        %v2301 = vadd.f32 %v2188, %v2300
        %v2302 = vpop.f32.mrb[0].mxu0
        %v2303 = vadd.f32 %v2190, %v2302
        %2304 = vmatprep.mubr.bf16.mxu0 %v581
        %2305 = vmatmul.mubr.bf16.gmra.mrb[0].mxu0 %v580
        %v2306 = vpop.f32.mrb[0].mxu0
        %v2307 = vadd.f32 %v2194, %v2306
        %v2308 = vpop.f32.mrb[0].mxu0
        %v2309 = vadd.f32 %v2196, %v2308
        %v2310 = vpop.f32.mrb[0].mxu0
        %v2311 = vadd.f32 %v2198, %v2310
        %v2312 = vpop.f32.mrb[0].mxu0
        %v2313 = vadd.f32 %v2200, %v2312
        %2314 = vmatprep.mubr.bf16.mxu0 %v587
        %2315 = vmatmul.mubr.bf16.gmra.mrb[0].mxu0 %v586
        %v2316 = vpop.f32.mrb[0].mxu0
        %v2317 = vadd.f32 %v2204, %v2316
        %v2318 = vpop.f32.mrb[0].mxu0
        %v2319 = vadd.f32 %v2206, %v2318
        %v2320 = vpop.f32.mrb[0].mxu0
        %v2321 = vadd.f32 %v2208, %v2320
        %v2322 = vpop.f32.mrb[0].mxu0
        %v2323 = vadd.f32 %v2210, %v2322
        %2324 = vmatprep.mubr.bf16.mxu0 %v593
        %2325 = vmatmul.mubr.bf16.gmra.mrb[0].mxu0 %v592
        %v2326 = vpop.f32.mrb[0].mxu0
        %v2327 = vadd.f32 %v2214, %v2326
        %v2328 = vpop.f32.mrb[0].mxu0
        %v2329 = vadd.f32 %v2216, %v2328
        %v2330 = vpop.f32.mrb[0].mxu0
        %v2331 = vadd.f32 %v2218, %v2330
        %v2332 = vpop.f32.mrb[0].mxu0
        %v2333 = vadd.f32 %v2220, %v2332
        %2334 = vdwg.mxu0
        %2335 = vmatprep.subr.bf16.mxu0 %v1517
        %2336 = vmatpush1.bf16.msra.mxu0 %v1516
        %2337 = vmatprep.subr.bf16.mxu0 %v1521
        %2338 = vmatpush1.bf16.msra.mxu0 %v1520
        %2339 = vmatprep.subr.bf16.mxu0 %v1525
        %2340 = vmatpush1.bf16.msra.mxu0 %v1524
        %2341 = vmatprep.subr.bf16.mxu0 %v1529
        %2342 = vmatpush1.bf16.msra.mxu0 %v1528
        %2343 = vmatprep.subr.bf16.mxu0 %v1533
        %2344 = vmatpush1.bf16.msra.mxu0 %v1532
        %2345 = vmatprep.subr.bf16.mxu0 %v1537
        %2346 = vmatpush1.bf16.msra.mxu0 %v1536
        %2347 = vmatprep.subr.bf16.mxu0 %v1541
        %2348 = vmatpush1.bf16.msra.mxu0 %v1540
        %2349 = vmatprep.subr.bf16.mxu0 %v1545
        %2350 = vmatpush1.bf16.msra.mxu0 %v1544
        %2351 = vmatprep.subr.bf16.mxu0 %v1549
        %2352 = vmatpush1.bf16.msra.mxu0 %v1548
        %2353 = vmatprep.subr.bf16.mxu0 %v1553
        %2354 = vmatpush1.bf16.msra.mxu0 %v1552
        %2355 = vmatprep.subr.bf16.mxu0 %v1557
        %2356 = vmatpush1.bf16.msra.mxu0 %v1556
        %2357 = vmatprep.subr.bf16.mxu0 %v1561
        %2358 = vmatpush1.bf16.msra.mxu0 %v1560
        %2359 = vmatprep.subr.bf16.mxu0 %v1565
        %2360 = vmatpush1.bf16.msra.mxu0 %v1564
        %2361 = vmatprep.subr.bf16.mxu0 %v1569
        %2362 = vmatpush1.bf16.msra.mxu0 %v1568
        %2363 = vmatprep.subr.bf16.mxu0 %v1573
        %2364 = vmatpush1.bf16.msra.mxu0 %v1572
        %2365 = vmatprep.subr.bf16.mxu0 %v1577
        %2366 = vmatpush1.bf16.msra.mxu0 %v1576
        %2367 = vmatprep.mubr.bf16.mxu0 %v553
        %2368 = vmatmul.mubr.bf16.gmra.mrb[0].mxu0 %v552
        %v2369 = vpop.f32.mrb[0].mxu0
        %v2370 = vadd.f32 %v2257, %v2369
        %v2371 = vpop.f32.mrb[0].mxu0
        %v2372 = vadd.f32 %v2259, %v2371
        %v2373 = vpop.f32.mrb[0].mxu0
        %v2374 = vadd.f32 %v2261, %v2373
        %v2375 = vpop.f32.mrb[0].mxu0
        %v2376 = vadd.f32 %v2263, %v2375
        %2377 = vmatprep.mubr.bf16.mxu0 %v559
        %2378 = vmatmul.mubr.bf16.gmra.mrb[0].mxu0 %v558
        %v2379 = vpop.f32.mrb[0].mxu0
        %v2380 = vadd.f32 %v2267, %v2379
        %v2381 = vpop.f32.mrb[0].mxu0
        %v2382 = vadd.f32 %v2269, %v2381
        %v2383 = vpop.f32.mrb[0].mxu0
        %v2384 = vadd.f32 %v2271, %v2383
        %v2385 = vpop.f32.mrb[0].mxu0
        %v2386 = vadd.f32 %v2273, %v2385
        %2387 = vmatprep.mubr.bf16.mxu0 %v565
        %2388 = vmatmul.mubr.bf16.gmra.mrb[0].mxu0 %v564
        %v2389 = vpop.f32.mrb[0].mxu0
        %v2390 = vadd.f32 %v2277, %v2389
        %v2391 = vpop.f32.mrb[0].mxu0
        %v2392 = vadd.f32 %v2279, %v2391
        %v2393 = vpop.f32.mrb[0].mxu0
        %v2394 = vadd.f32 %v2281, %v2393
        %v2395 = vpop.f32.mrb[0].mxu0
        %v2396 = vadd.f32 %v2283, %v2395
        %2397 = vmatprep.mubr.bf16.mxu0 %v571
        %2398 = vmatmul.mubr.bf16.gmra.mrb[0].mxu0 %v570
        %v2399 = vpop.f32.mrb[0].mxu0
        %v2400 = vadd.f32 %v2287, %v2399
        %v2401 = vpop.f32.mrb[0].mxu0
        %v2402 = vadd.f32 %v2289, %v2401
        %v2403 = vpop.f32.mrb[0].mxu0
        %v2404 = vadd.f32 %v2291, %v2403
        %v2405 = vpop.f32.mrb[0].mxu0
        %v2406 = vadd.f32 %v2293, %v2405
        %2407 = vmatprep.mubr.bf16.mxu0 %v577
        %2408 = vmatmul.mubr.bf16.gmra.mrb[0].mxu0 %v576
        %v2409 = vpop.f32.mrb[0].mxu0
        %v2410 = vadd.f32 %v2297, %v2409
        %v2411 = vpop.f32.mrb[0].mxu0
        %v2412 = vadd.f32 %v2299, %v2411
        %v2413 = vpop.f32.mrb[0].mxu0
        %v2414 = vadd.f32 %v2301, %v2413
        %v2415 = vpop.f32.mrb[0].mxu0
        %v2416 = vadd.f32 %v2303, %v2415
        %2417 = vmatprep.mubr.bf16.mxu0 %v583
        %2418 = vmatmul.mubr.bf16.gmra.mrb[0].mxu0 %v582
        %v2419 = vpop.f32.mrb[0].mxu0
        %v2420 = vadd.f32 %v2307, %v2419
        %v2421 = vpop.f32.mrb[0].mxu0
        %v2422 = vadd.f32 %v2309, %v2421
        %v2423 = vpop.f32.mrb[0].mxu0
        %v2424 = vadd.f32 %v2311, %v2423
        %v2425 = vpop.f32.mrb[0].mxu0
        %v2426 = vadd.f32 %v2313, %v2425
        %2427 = vmatprep.mubr.bf16.mxu0 %v589
        %2428 = vmatmul.mubr.bf16.gmra.mrb[0].mxu0 %v588
        %v2429 = vpop.f32.mrb[0].mxu0
        %v2430 = vadd.f32 %v2317, %v2429
        %v2431 = vpop.f32.mrb[0].mxu0
        %v2432 = vadd.f32 %v2319, %v2431
        %v2433 = vpop.f32.mrb[0].mxu0
        %v2434 = vadd.f32 %v2321, %v2433
        %v2435 = vpop.f32.mrb[0].mxu0
        %v2436 = vadd.f32 %v2323, %v2435
        %2437 = vmatprep.mubr.bf16.mxu0 %v595
        %2438 = vmatmul.mubr.bf16.gmra.mrb[0].mxu0 %v594
        %v2439 = vpop.f32.mrb[0].mxu0
        %v2440 = vadd.f32 %v2327, %v2439
        %v2441 = vpop.f32.mrb[0].mxu0
        %v2442 = vadd.f32 %v2329, %v2441
        %v2443 = vpop.f32.mrb[0].mxu0
        %v2444 = vadd.f32 %v2331, %v2443
        %v2445 = vpop.f32.mrb[0].mxu0
        %v2446 = vadd.f32 %v2333, %v2445
        %2447 = vdwg.mxu0
        %v2448 = vmax.f32 %v2031, 0.0
        %v2449 = vmax.f32 %v2033, 0.0
        %v2450 = vmax.f32 %v2370, 0.0
        %v2451 = vmax.f32 %v2372, 0.0
        %v2452 = vmax.f32 %v2035, 0.0
        %v2453 = vmax.f32 %v2037, 0.0
        %v2454 = vmax.f32 %v2374, 0.0
        %v2455 = vmax.f32 %v2376, 0.0
        %v2456 = vmax.f32 %v2041, 0.0
        %v2457 = vmax.f32 %v2043, 0.0
        %v2458 = vmax.f32 %v2380, 0.0
        %v2459 = vmax.f32 %v2382, 0.0
        %v2460 = vmax.f32 %v2045, 0.0
        %v2461 = vmax.f32 %v2047, 0.0
        %v2462 = vmax.f32 %v2384, 0.0
        %v2463 = vmax.f32 %v2386, 0.0
        %v2464 = vmax.f32 %v2051, 0.0
        %v2465 = vmax.f32 %v2053, 0.0
        %v2466 = vmax.f32 %v2390, 0.0
        %v2467 = vmax.f32 %v2392, 0.0
        %v2468 = vmax.f32 %v2055, 0.0
        %v2469 = vmax.f32 %v2057, 0.0
        %v2470 = vmax.f32 %v2394, 0.0
        %v2471 = vmax.f32 %v2396, 0.0
        %v2472 = vmax.f32 %v2061, 0.0
        %v2473 = vmax.f32 %v2063, 0.0
        %v2474 = vmax.f32 %v2400, 0.0
        %v2475 = vmax.f32 %v2402, 0.0
        %v2476 = vmax.f32 %v2065, 0.0
        %v2477 = vmax.f32 %v2067, 0.0
        %v2478 = vmax.f32 %v2404, 0.0
        %v2479 = vmax.f32 %v2406, 0.0
        %v2480 = vmax.f32 %v2071, 0.0
        %v2481 = vmax.f32 %v2073, 0.0
        %v2482 = vmax.f32 %v2410, 0.0
        %v2483 = vmax.f32 %v2412, 0.0
        %v2484 = vmax.f32 %v2075, 0.0
        %v2485 = vmax.f32 %v2077, 0.0
        %v2486 = vmax.f32 %v2414, 0.0
        %v2487 = vmax.f32 %v2416, 0.0
        %v2488 = vmax.f32 %v2081, 0.0
        %v2489 = vmax.f32 %v2083, 0.0
        %v2490 = vmax.f32 %v2420, 0.0
        %v2491 = vmax.f32 %v2422, 0.0
        %v2492 = vmax.f32 %v2085, 0.0
        %v2493 = vmax.f32 %v2087, 0.0
        %v2494 = vmax.f32 %v2424, 0.0
        %v2495 = vmax.f32 %v2426, 0.0
        %v2496 = vmax.f32 %v2091, 0.0
        %v2497 = vmax.f32 %v2093, 0.0
        %v2498 = vmax.f32 %v2430, 0.0
        %v2499 = vmax.f32 %v2432, 0.0
        %v2500 = vmax.f32 %v2095, 0.0
        %v2501 = vmax.f32 %v2097, 0.0
        %v2502 = vmax.f32 %v2434, 0.0
        %v2503 = vmax.f32 %v2436, 0.0
        %v2504 = vmax.f32 %v2101, 0.0
        %v2505 = vmax.f32 %v2103, 0.0
        %v2506 = vmax.f32 %v2440, 0.0
        %v2507 = vmax.f32 %v2442, 0.0
        %v2508 = vmax.f32 %v2105, 0.0
        %v2509 = vmax.f32 %v2107, 0.0
        %v2510 = vmax.f32 %v2444, 0.0
        %v2511 = vmax.f32 %v2446, 0.0
        %v2512 = vpack.c.bf16 %v2452, %v2448
        %v2513 = vpack.c.bf16 %v2453, %v2449
        %v2514 = vpack.c.bf16 %v2454, %v2450
        %v2515 = vpack.c.bf16 %v2455, %v2451
        %v2516 = vpack.c.bf16 %v2460, %v2456
        %v2517 = vpack.c.bf16 %v2461, %v2457
        %v2518 = vpack.c.bf16 %v2462, %v2458
        %v2519 = vpack.c.bf16 %v2463, %v2459
        %v2520 = vpack.c.bf16 %v2468, %v2464
        %v2521 = vpack.c.bf16 %v2469, %v2465
        %v2522 = vpack.c.bf16 %v2470, %v2466
        %v2523 = vpack.c.bf16 %v2471, %v2467
        %v2524 = vpack.c.bf16 %v2476, %v2472
        %v2525 = vpack.c.bf16 %v2477, %v2473
        %v2526 = vpack.c.bf16 %v2478, %v2474
        %v2527 = vpack.c.bf16 %v2479, %v2475
        %v2528 = vpack.c.bf16 %v2484, %v2480
        %v2529 = vpack.c.bf16 %v2485, %v2481
        %v2530 = vpack.c.bf16 %v2486, %v2482
        %v2531 = vpack.c.bf16 %v2487, %v2483
        %v2532 = vpack.c.bf16 %v2492, %v2488
        %v2533 = vpack.c.bf16 %v2493, %v2489
        %v2534 = vpack.c.bf16 %v2494, %v2490
        %v2535 = vpack.c.bf16 %v2495, %v2491
        %v2536 = vpack.c.bf16 %v2500, %v2496
        %v2537 = vpack.c.bf16 %v2501, %v2497
        %v2538 = vpack.c.bf16 %v2502, %v2498
        %v2539 = vpack.c.bf16 %v2503, %v2499
        %v2540 = vpack.c.bf16 %v2508, %v2504
        %v2541 = vpack.c.bf16 %v2509, %v2505
        %v2542 = vpack.c.bf16 %v2510, %v2506
        %v2543 = vpack.c.bf16 %v2511, %v2507
        %v2544 = vld [vmem:[#allocation7] sm:$0xff]
        %v2545 = vld [vmem:[#allocation7 + $0x8] sm:$0xff]
        %v2546 = vld [vmem:[#allocation7 + $0x10] sm:$0xff]
        %v2547 = vld [vmem:[#allocation7 + $0x18] sm:$0xff]
        %v2548 = vld [vmem:[#allocation7 + $0x20] sm:$0xff]
        %v2549 = vld [vmem:[#allocation7 + $0x28] sm:$0xff]
        %v2550 = vld [vmem:[#allocation7 + $0x30] sm:$0xff]
        %v2551 = vld [vmem:[#allocation7 + $0x38] sm:$0xff]
        %v2552 = vld [vmem:[#allocation7 + $0x40] sm:$0xff]
        %v2553 = vld [vmem:[#allocation7 + $0x48] sm:$0xff]
        %v2554 = vld [vmem:[#allocation7 + $0x50] sm:$0xff]
        %v2555 = vld [vmem:[#allocation7 + $0x58] sm:$0xff]
        %v2556 = vld [vmem:[#allocation7 + $0x60] sm:$0xff]
        %v2557 = vld [vmem:[#allocation7 + $0x68] sm:$0xff]
        %v2558 = vld [vmem:[#allocation7 + $0x70] sm:$0xff]
        %v2559 = vld [vmem:[#allocation7 + $0x78] sm:$0xff]
        %v2560 = vld [vmem:[#allocation7 + $0x80] sm:$0xff]
        %v2561 = vld [vmem:[#allocation7 + $0x88] sm:$0xff]
        %v2562 = vld [vmem:[#allocation7 + $0x90] sm:$0xff]
        %v2563 = vld [vmem:[#allocation7 + $0x98] sm:$0xff]
        %v2564 = vld [vmem:[#allocation7 + $0xa0] sm:$0xff]
        %v2565 = vld [vmem:[#allocation7 + $0xa8] sm:$0xff]
        %v2566 = vld [vmem:[#allocation7 + $0xb0] sm:$0xff]
        %v2567 = vld [vmem:[#allocation7 + $0xb8] sm:$0xff]
        %v2568 = vld [vmem:[#allocation7 + $0xc0] sm:$0xff]
        %v2569 = vld [vmem:[#allocation7 + $0xc8] sm:$0xff]
        %v2570 = vld [vmem:[#allocation7 + $0xd0] sm:$0xff]
        %v2571 = vld [vmem:[#allocation7 + $0xd8] sm:$0xff]
        %v2572 = vld [vmem:[#allocation7 + $0xe0] sm:$0xff]
        %v2573 = vld [vmem:[#allocation7 + $0xe8] sm:$0xff]
        %v2574 = vld [vmem:[#allocation7 + $0xf0] sm:$0xff]
        %v2575 = vld [vmem:[#allocation7 + $0xf8] sm:$0xff]
        %v2576 = vld [vmem:[#allocation7 + $0x100] sm:$0xff]
        %v2577 = vld [vmem:[#allocation7 + $0x108] sm:$0xff]
        %v2578 = vld [vmem:[#allocation7 + $0x110] sm:$0xff]
        %v2579 = vld [vmem:[#allocation7 + $0x118] sm:$0xff]
        %v2580 = vld [vmem:[#allocation7 + $0x120] sm:$0xff]
        %v2581 = vld [vmem:[#allocation7 + $0x128] sm:$0xff]
        %v2582 = vld [vmem:[#allocation7 + $0x130] sm:$0xff]
        %v2583 = vld [vmem:[#allocation7 + $0x138] sm:$0xff]
        %v2584 = vld [vmem:[#allocation7 + $0x140] sm:$0xff]
        %v2585 = vld [vmem:[#allocation7 + $0x148] sm:$0xff]
        %v2586 = vld [vmem:[#allocation7 + $0x150] sm:$0xff]
        %v2587 = vld [vmem:[#allocation7 + $0x158] sm:$0xff]
        %v2588 = vld [vmem:[#allocation7 + $0x160] sm:$0xff]
        %v2589 = vld [vmem:[#allocation7 + $0x168] sm:$0xff]
        %v2590 = vld [vmem:[#allocation7 + $0x170] sm:$0xff]
        %v2591 = vld [vmem:[#allocation7 + $0x178] sm:$0xff]
        %v2592 = vld [vmem:[#allocation7 + $0x180] sm:$0xff]
        %v2593 = vld [vmem:[#allocation7 + $0x188] sm:$0xff]
        %v2594 = vld [vmem:[#allocation7 + $0x190] sm:$0xff]
        %v2595 = vld [vmem:[#allocation7 + $0x198] sm:$0xff]
        %v2596 = vld [vmem:[#allocation7 + $0x1a0] sm:$0xff]
        %v2597 = vld [vmem:[#allocation7 + $0x1a8] sm:$0xff]
        %v2598 = vld [vmem:[#allocation7 + $0x1b0] sm:$0xff]
        %v2599 = vld [vmem:[#allocation7 + $0x1b8] sm:$0xff]
        %v2600 = vld [vmem:[#allocation7 + $0x1c0] sm:$0xff]
        %v2601 = vld [vmem:[#allocation7 + $0x1c8] sm:$0xff]
        %v2602 = vld [vmem:[#allocation7 + $0x1d0] sm:$0xff]
        %v2603 = vld [vmem:[#allocation7 + $0x1d8] sm:$0xff]
        %v2604 = vld [vmem:[#allocation7 + $0x1e0] sm:$0xff]
        %v2605 = vld [vmem:[#allocation7 + $0x1e8] sm:$0xff]
        %v2606 = vld [vmem:[#allocation7 + $0x1f0] sm:$0xff]
        %v2607 = vld [vmem:[#allocation7 + $0x1f8] sm:$0xff]
        %v2608 = vld [vmem:[%s4] sm:$0x3]
        %v2610 = vlaneseq
        %v2611 = vshrl.u32 %v2610, 7
        %v2612 = vsub.s32 0, %v2611
        %v2613 = vrot.slane %v2608, %v2612
        %v2614 = vlaneseq
        %v2615 = vshrl.u32 %v2614, 7
        %v2616 = vsub.s32 1, %v2615
        %v2617 = vrot.slane %v2608, %v2616
        %v2684 = vunpack.c.l.b16 %v2544
        %v2685 = vunpack.c.h.b16 %v2544
        %v2686 = vunpack.c.l.b16 %v2545
        %v2687 = vunpack.c.h.b16 %v2545
        %v2688 = vunpack.c.l.b16 %v2546
        %v2689 = vunpack.c.h.b16 %v2546
        %v2690 = vunpack.c.l.b16 %v2547
        %v2691 = vunpack.c.h.b16 %v2547
        %v2692 = vunpack.c.l.b16 %v2548
        %v2693 = vunpack.c.h.b16 %v2548
        %v2694 = vunpack.c.l.b16 %v2549
        %v2695 = vunpack.c.h.b16 %v2549
        %v2696 = vunpack.c.l.b16 %v2550
        %v2697 = vunpack.c.h.b16 %v2550
        %v2698 = vunpack.c.l.b16 %v2551
        %v2699 = vunpack.c.h.b16 %v2551
        %v2700 = vunpack.c.l.b16 %v2552
        %v2701 = vunpack.c.h.b16 %v2552
        %v2702 = vunpack.c.l.b16 %v2553
        %v2703 = vunpack.c.h.b16 %v2553
        %v2704 = vunpack.c.l.b16 %v2554
        %v2705 = vunpack.c.h.b16 %v2554
        %v2706 = vunpack.c.l.b16 %v2555
        %v2707 = vunpack.c.h.b16 %v2555
        %v2708 = vunpack.c.l.b16 %v2556
        %v2709 = vunpack.c.h.b16 %v2556
        %v2710 = vunpack.c.l.b16 %v2557
        %v2711 = vunpack.c.h.b16 %v2557
        %v2712 = vunpack.c.l.b16 %v2558
        %v2713 = vunpack.c.h.b16 %v2558
        %v2714 = vunpack.c.l.b16 %v2559
        %v2715 = vunpack.c.h.b16 %v2559
        %v2716 = vunpack.c.l.b16 %v2560
        %v2717 = vunpack.c.h.b16 %v2560
        %v2718 = vunpack.c.l.b16 %v2561
        %v2719 = vunpack.c.h.b16 %v2561
        %v2720 = vunpack.c.l.b16 %v2562
        %v2721 = vunpack.c.h.b16 %v2562
        %v2722 = vunpack.c.l.b16 %v2563
        %v2723 = vunpack.c.h.b16 %v2563
        %v2724 = vunpack.c.l.b16 %v2564
        %v2725 = vunpack.c.h.b16 %v2564
        %v2726 = vunpack.c.l.b16 %v2565
        %v2727 = vunpack.c.h.b16 %v2565
        %v2728 = vunpack.c.l.b16 %v2566
        %v2729 = vunpack.c.h.b16 %v2566
        %v2730 = vunpack.c.l.b16 %v2567
        %v2731 = vunpack.c.h.b16 %v2567
        %v2732 = vunpack.c.l.b16 %v2568
        %v2733 = vunpack.c.h.b16 %v2568
        %v2734 = vunpack.c.l.b16 %v2569
        %v2735 = vunpack.c.h.b16 %v2569
        %v2736 = vunpack.c.l.b16 %v2570
        %v2737 = vunpack.c.h.b16 %v2570
        %v2738 = vunpack.c.l.b16 %v2571
        %v2739 = vunpack.c.h.b16 %v2571
        %v2740 = vunpack.c.l.b16 %v2572
        %v2741 = vunpack.c.h.b16 %v2572
        %v2742 = vunpack.c.l.b16 %v2573
        %v2743 = vunpack.c.h.b16 %v2573
        %v2744 = vunpack.c.l.b16 %v2574
        %v2745 = vunpack.c.h.b16 %v2574
        %v2746 = vunpack.c.l.b16 %v2575
        %v2747 = vunpack.c.h.b16 %v2575
        %v2748 = vunpack.c.l.b16 %v2576
        %v2749 = vunpack.c.h.b16 %v2576
        %v2750 = vunpack.c.l.b16 %v2577
        %v2751 = vunpack.c.h.b16 %v2577
        %v2752 = vunpack.c.l.b16 %v2578
        %v2753 = vunpack.c.h.b16 %v2578
        %v2754 = vunpack.c.l.b16 %v2579
        %v2755 = vunpack.c.h.b16 %v2579
        %v2756 = vunpack.c.l.b16 %v2580
        %v2757 = vunpack.c.h.b16 %v2580
        %v2758 = vunpack.c.l.b16 %v2581
        %v2759 = vunpack.c.h.b16 %v2581
        %v2760 = vunpack.c.l.b16 %v2582
        %v2761 = vunpack.c.h.b16 %v2582
        %v2762 = vunpack.c.l.b16 %v2583
        %v2763 = vunpack.c.h.b16 %v2583
        %v2764 = vunpack.c.l.b16 %v2584
        %v2765 = vunpack.c.h.b16 %v2584
        %v2766 = vunpack.c.l.b16 %v2585
        %v2767 = vunpack.c.h.b16 %v2585
        %v2768 = vunpack.c.l.b16 %v2586
        %v2769 = vunpack.c.h.b16 %v2586
        %v2770 = vunpack.c.l.b16 %v2587
        %v2771 = vunpack.c.h.b16 %v2587
        %v2772 = vunpack.c.l.b16 %v2588
        %v2773 = vunpack.c.h.b16 %v2588
        %v2774 = vunpack.c.l.b16 %v2589
        %v2775 = vunpack.c.h.b16 %v2589
        %v2776 = vunpack.c.l.b16 %v2590
        %v2777 = vunpack.c.h.b16 %v2590
        %v2778 = vunpack.c.l.b16 %v2591
        %v2779 = vunpack.c.h.b16 %v2591
        %v2780 = vunpack.c.l.b16 %v2592
        %v2781 = vunpack.c.h.b16 %v2592
        %v2782 = vunpack.c.l.b16 %v2593
        %v2783 = vunpack.c.h.b16 %v2593
        %v2784 = vunpack.c.l.b16 %v2594
        %v2785 = vunpack.c.h.b16 %v2594
        %v2786 = vunpack.c.l.b16 %v2595
        %v2787 = vunpack.c.h.b16 %v2595
        %v2788 = vunpack.c.l.b16 %v2596
        %v2789 = vunpack.c.h.b16 %v2596
        %v2790 = vunpack.c.l.b16 %v2597
        %v2791 = vunpack.c.h.b16 %v2597
        %v2792 = vunpack.c.l.b16 %v2598
        %v2793 = vunpack.c.h.b16 %v2598
        %v2794 = vunpack.c.l.b16 %v2599
        %v2795 = vunpack.c.h.b16 %v2599
        %v2796 = vunpack.c.l.b16 %v2600
        %v2797 = vunpack.c.h.b16 %v2600
        %v2798 = vunpack.c.l.b16 %v2601
        %v2799 = vunpack.c.h.b16 %v2601
        %v2800 = vunpack.c.l.b16 %v2602
        %v2801 = vunpack.c.h.b16 %v2602
        %v2802 = vunpack.c.l.b16 %v2603
        %v2803 = vunpack.c.h.b16 %v2603
        %v2804 = vunpack.c.l.b16 %v2604
        %v2805 = vunpack.c.h.b16 %v2604
        %v2806 = vunpack.c.l.b16 %v2605
        %v2807 = vunpack.c.h.b16 %v2605
        %v2808 = vunpack.c.l.b16 %v2606
        %v2809 = vunpack.c.h.b16 %v2606
        %v2810 = vunpack.c.l.b16 %v2607
        %v2811 = vunpack.c.h.b16 %v2607
        %v2812 = vpack.c.b16 %v2686, %v2684
        %v2813 = vpack.c.b16 %v2687, %v2685
        %v2814 = vpack.c.b16 %v2690, %v2688
        %v2815 = vpack.c.b16 %v2691, %v2689
        %v2816 = vpack.c.b16 %v2694, %v2692
        %v2817 = vpack.c.b16 %v2695, %v2693
        %v2818 = vpack.c.b16 %v2698, %v2696
        %v2819 = vpack.c.b16 %v2699, %v2697
        %v2820 = vpack.c.b16 %v2702, %v2700
        %v2821 = vpack.c.b16 %v2703, %v2701
        %v2822 = vpack.c.b16 %v2706, %v2704
        %v2823 = vpack.c.b16 %v2707, %v2705
        %v2824 = vpack.c.b16 %v2710, %v2708
        %v2825 = vpack.c.b16 %v2711, %v2709
        %v2826 = vpack.c.b16 %v2714, %v2712
        %v2827 = vpack.c.b16 %v2715, %v2713
        %v2828 = vpack.c.b16 %v2718, %v2716
        %v2829 = vpack.c.b16 %v2719, %v2717
        %v2830 = vpack.c.b16 %v2722, %v2720
        %v2831 = vpack.c.b16 %v2723, %v2721
        %v2832 = vpack.c.b16 %v2726, %v2724
        %v2833 = vpack.c.b16 %v2727, %v2725
        %v2834 = vpack.c.b16 %v2730, %v2728
        %v2835 = vpack.c.b16 %v2731, %v2729
        %v2836 = vpack.c.b16 %v2734, %v2732
        %v2837 = vpack.c.b16 %v2735, %v2733
        %v2838 = vpack.c.b16 %v2738, %v2736
        %v2839 = vpack.c.b16 %v2739, %v2737
        %v2840 = vpack.c.b16 %v2742, %v2740
        %v2841 = vpack.c.b16 %v2743, %v2741
        %v2842 = vpack.c.b16 %v2746, %v2744
        %v2843 = vpack.c.b16 %v2747, %v2745
        %v2844 = vpack.c.b16 %v2750, %v2748
        %v2845 = vpack.c.b16 %v2751, %v2749
        %v2846 = vpack.c.b16 %v2754, %v2752
        %v2847 = vpack.c.b16 %v2755, %v2753
        %v2848 = vpack.c.b16 %v2758, %v2756
        %v2849 = vpack.c.b16 %v2759, %v2757
        %v2850 = vpack.c.b16 %v2762, %v2760
        %v2851 = vpack.c.b16 %v2763, %v2761
        %v2852 = vpack.c.b16 %v2766, %v2764
        %v2853 = vpack.c.b16 %v2767, %v2765
        %v2854 = vpack.c.b16 %v2770, %v2768
        %v2855 = vpack.c.b16 %v2771, %v2769
        %v2856 = vpack.c.b16 %v2774, %v2772
        %v2857 = vpack.c.b16 %v2775, %v2773
        %v2858 = vpack.c.b16 %v2778, %v2776
        %v2859 = vpack.c.b16 %v2779, %v2777
        %v2860 = vpack.c.b16 %v2782, %v2780
        %v2861 = vpack.c.b16 %v2783, %v2781
        %v2862 = vpack.c.b16 %v2786, %v2784
        %v2863 = vpack.c.b16 %v2787, %v2785
        %v2864 = vpack.c.b16 %v2790, %v2788
        %v2865 = vpack.c.b16 %v2791, %v2789
        %v2866 = vpack.c.b16 %v2794, %v2792
        %v2867 = vpack.c.b16 %v2795, %v2793
        %v2868 = vpack.c.b16 %v2798, %v2796
        %v2869 = vpack.c.b16 %v2799, %v2797
        %v2870 = vpack.c.b16 %v2802, %v2800
        %v2871 = vpack.c.b16 %v2803, %v2801
        %v2872 = vpack.c.b16 %v2806, %v2804
        %v2873 = vpack.c.b16 %v2807, %v2805
        %v2874 = vpack.c.b16 %v2810, %v2808
        %v2875 = vpack.c.b16 %v2811, %v2809
        %2940 = vmatprep.subr.bf16.mxu0 %v2813
        %2941 = vmatpush1.bf16.msra.mxu0 %v2812
        %2942 = vmatprep.subr.bf16.mxu0 %v2815
        %2943 = vmatpush1.bf16.msra.mxu0 %v2814
        %2944 = vmatprep.subr.bf16.mxu0 %v2817
        %2945 = vmatpush1.bf16.msra.mxu0 %v2816
        %2946 = vmatprep.subr.bf16.mxu0 %v2819
        %2947 = vmatpush1.bf16.msra.mxu0 %v2818
        %2948 = vmatprep.subr.bf16.mxu0 %v2821
        %2949 = vmatpush1.bf16.msra.mxu0 %v2820
        %2950 = vmatprep.subr.bf16.mxu0 %v2823
        %2951 = vmatpush1.bf16.msra.mxu0 %v2822
        %2952 = vmatprep.subr.bf16.mxu0 %v2825
        %2953 = vmatpush1.bf16.msra.mxu0 %v2824
        %2954 = vmatprep.subr.bf16.mxu0 %v2827
        %2955 = vmatpush1.bf16.msra.mxu0 %v2826
        %2956 = vmatprep.subr.bf16.mxu0 %v2829
        %2957 = vmatpush1.bf16.msra.mxu0 %v2828
        %2958 = vmatprep.subr.bf16.mxu0 %v2831
        %2959 = vmatpush1.bf16.msra.mxu0 %v2830
        %2960 = vmatprep.subr.bf16.mxu0 %v2833
        %2961 = vmatpush1.bf16.msra.mxu0 %v2832
        %2962 = vmatprep.subr.bf16.mxu0 %v2835
        %2963 = vmatpush1.bf16.msra.mxu0 %v2834
        %2964 = vmatprep.subr.bf16.mxu0 %v2837
        %2965 = vmatpush1.bf16.msra.mxu0 %v2836
        %2966 = vmatprep.subr.bf16.mxu0 %v2839
        %2967 = vmatpush1.bf16.msra.mxu0 %v2838
        %2968 = vmatprep.subr.bf16.mxu0 %v2841
        %2969 = vmatpush1.bf16.msra.mxu0 %v2840
        %2970 = vmatprep.subr.bf16.mxu0 %v2843
        %2971 = vmatpush1.bf16.msra.mxu0 %v2842
        %2972 = vmatprep.mubr.bf16.mxu0 %v2513
        %2973 = vmatmul.mubr.bf16.gmra.mrb[0].mxu0 %v2512
        %v2974 = vpop.f32.mrb[0].mxu0
        %v2975 = vadd.f32 %v2613, %v2974
        %v2976 = vpop.f32.mrb[0].mxu0
        %v2977 = vadd.f32 %v2617, %v2976
        %v2978 = vpop.f32.mrb[0].mxu0
        %v2979 = vadd.f32 %v2613, %v2978
        %v2980 = vpop.f32.mrb[0].mxu0
        %v2981 = vadd.f32 %v2617, %v2980
        %2982 = vmatprep.mubr.bf16.mxu0 %v2517
        %2983 = vmatmul.mubr.bf16.gmra.mrb[0].mxu0 %v2516
        %v2984 = vpop.f32.mrb[0].mxu0
        %v2985 = vadd.f32 %v2613, %v2984
        %v2986 = vpop.f32.mrb[0].mxu0
        %v2987 = vadd.f32 %v2617, %v2986
        %v2988 = vpop.f32.mrb[0].mxu0
        %v2989 = vadd.f32 %v2613, %v2988
        %v2990 = vpop.f32.mrb[0].mxu0
        %v2991 = vadd.f32 %v2617, %v2990
        %2992 = vmatprep.mubr.bf16.mxu0 %v2521
        %2993 = vmatmul.mubr.bf16.gmra.mrb[0].mxu0 %v2520
        %v2994 = vpop.f32.mrb[0].mxu0
        %v2995 = vadd.f32 %v2613, %v2994
        %v2996 = vpop.f32.mrb[0].mxu0
        %v2997 = vadd.f32 %v2617, %v2996
        %v2998 = vpop.f32.mrb[0].mxu0
        %v2999 = vadd.f32 %v2613, %v2998
        %v3000 = vpop.f32.mrb[0].mxu0
        %v3001 = vadd.f32 %v2617, %v3000
        %3002 = vmatprep.mubr.bf16.mxu0 %v2525
        %3003 = vmatmul.mubr.bf16.gmra.mrb[0].mxu0 %v2524
        %v3004 = vpop.f32.mrb[0].mxu0
        %v3005 = vadd.f32 %v2613, %v3004
        %v3006 = vpop.f32.mrb[0].mxu0
        %v3007 = vadd.f32 %v2617, %v3006
        %v3008 = vpop.f32.mrb[0].mxu0
        %v3009 = vadd.f32 %v2613, %v3008
        %v3010 = vpop.f32.mrb[0].mxu0
        %v3011 = vadd.f32 %v2617, %v3010
        %3012 = vmatprep.mubr.bf16.mxu0 %v2529
        %3013 = vmatmul.mubr.bf16.gmra.mrb[0].mxu0 %v2528
        %v3014 = vpop.f32.mrb[0].mxu0
        %v3015 = vadd.f32 %v2613, %v3014
        %v3016 = vpop.f32.mrb[0].mxu0
        %v3017 = vadd.f32 %v2617, %v3016
        %v3018 = vpop.f32.mrb[0].mxu0
        %v3019 = vadd.f32 %v2613, %v3018
        %v3020 = vpop.f32.mrb[0].mxu0
        %v3021 = vadd.f32 %v2617, %v3020
        %3022 = vmatprep.mubr.bf16.mxu0 %v2533
        %3023 = vmatmul.mubr.bf16.gmra.mrb[0].mxu0 %v2532
        %v3024 = vpop.f32.mrb[0].mxu0
        %v3025 = vadd.f32 %v2613, %v3024
        %v3026 = vpop.f32.mrb[0].mxu0
        %v3027 = vadd.f32 %v2617, %v3026
        %v3028 = vpop.f32.mrb[0].mxu0
        %v3029 = vadd.f32 %v2613, %v3028
        %v3030 = vpop.f32.mrb[0].mxu0
        %v3031 = vadd.f32 %v2617, %v3030
        %3032 = vmatprep.mubr.bf16.mxu0 %v2537
        %3033 = vmatmul.mubr.bf16.gmra.mrb[0].mxu0 %v2536
        %v3034 = vpop.f32.mrb[0].mxu0
        %v3035 = vadd.f32 %v2613, %v3034
        %v3036 = vpop.f32.mrb[0].mxu0
        %v3037 = vadd.f32 %v2617, %v3036
        %v3038 = vpop.f32.mrb[0].mxu0
        %v3039 = vadd.f32 %v2613, %v3038
        %v3040 = vpop.f32.mrb[0].mxu0
        %v3041 = vadd.f32 %v2617, %v3040
        %3042 = vmatprep.mubr.bf16.mxu0 %v2541
        %3043 = vmatmul.mubr.bf16.gmra.mrb[0].mxu0 %v2540
        %v3044 = vpop.f32.mrb[0].mxu0
        %v3045 = vadd.f32 %v2613, %v3044
        %v3046 = vpop.f32.mrb[0].mxu0
        %v3047 = vadd.f32 %v2617, %v3046
        %v3048 = vpop.f32.mrb[0].mxu0
        %v3049 = vadd.f32 %v2613, %v3048
        %v3050 = vpop.f32.mrb[0].mxu0
        %v3051 = vadd.f32 %v2617, %v3050
        %3052 = vdwg.mxu0
        %3053 = vmatprep.subr.bf16.mxu0 %v2845
        %3054 = vmatpush1.bf16.msra.mxu0 %v2844
        %3055 = vmatprep.subr.bf16.mxu0 %v2847
        %3056 = vmatpush1.bf16.msra.mxu0 %v2846
        %3057 = vmatprep.subr.bf16.mxu0 %v2849
        %3058 = vmatpush1.bf16.msra.mxu0 %v2848
        %3059 = vmatprep.subr.bf16.mxu0 %v2851
        %3060 = vmatpush1.bf16.msra.mxu0 %v2850
        %3061 = vmatprep.subr.bf16.mxu0 %v2853
        %3062 = vmatpush1.bf16.msra.mxu0 %v2852
        %3063 = vmatprep.subr.bf16.mxu0 %v2855
        %3064 = vmatpush1.bf16.msra.mxu0 %v2854
        %3065 = vmatprep.subr.bf16.mxu0 %v2857
        %3066 = vmatpush1.bf16.msra.mxu0 %v2856
        %3067 = vmatprep.subr.bf16.mxu0 %v2859
        %3068 = vmatpush1.bf16.msra.mxu0 %v2858
        %3069 = vmatprep.subr.bf16.mxu0 %v2861
        %3070 = vmatpush1.bf16.msra.mxu0 %v2860
        %3071 = vmatprep.subr.bf16.mxu0 %v2863
        %3072 = vmatpush1.bf16.msra.mxu0 %v2862
        %3073 = vmatprep.subr.bf16.mxu0 %v2865
        %3074 = vmatpush1.bf16.msra.mxu0 %v2864
        %3075 = vmatprep.subr.bf16.mxu0 %v2867
        %3076 = vmatpush1.bf16.msra.mxu0 %v2866
        %3077 = vmatprep.subr.bf16.mxu0 %v2869
        %3078 = vmatpush1.bf16.msra.mxu0 %v2868
        %3079 = vmatprep.subr.bf16.mxu0 %v2871
        %3080 = vmatpush1.bf16.msra.mxu0 %v2870
        %3081 = vmatprep.subr.bf16.mxu0 %v2873
        %3082 = vmatpush1.bf16.msra.mxu0 %v2872
        %3083 = vmatprep.subr.bf16.mxu0 %v2875
        %3084 = vmatpush1.bf16.msra.mxu0 %v2874
        %3085 = vmatprep.mubr.bf16.mxu0 %v2515
        %3086 = vmatmul.mubr.bf16.gmra.mrb[0].mxu0 %v2514
        %v3087 = vpop.f32.mrb[0].mxu0
        %v3088 = vadd.f32 %v2975, %v3087
        %v3089 = vpop.f32.mrb[0].mxu0
        %v3090 = vadd.f32 %v2977, %v3089
        %v3091 = vpop.f32.mrb[0].mxu0
        %v3092 = vadd.f32 %v2979, %v3091
        %v3093 = vpop.f32.mrb[0].mxu0
        %v3094 = vadd.f32 %v2981, %v3093
        %3095 = vmatprep.mubr.bf16.mxu0 %v2519
        %3096 = vmatmul.mubr.bf16.gmra.mrb[0].mxu0 %v2518
        %v3097 = vpop.f32.mrb[0].mxu0
        %v3098 = vadd.f32 %v2985, %v3097
        %v3099 = vpop.f32.mrb[0].mxu0
        %v3100 = vadd.f32 %v2987, %v3099
        %v3101 = vpop.f32.mrb[0].mxu0
        %v3102 = vadd.f32 %v2989, %v3101
        %v3103 = vpop.f32.mrb[0].mxu0
        %v3104 = vadd.f32 %v2991, %v3103
        %3105 = vmatprep.mubr.bf16.mxu0 %v2523
        %3106 = vmatmul.mubr.bf16.gmra.mrb[0].mxu0 %v2522
        %v3107 = vpop.f32.mrb[0].mxu0
        %v3108 = vadd.f32 %v2995, %v3107
        %v3109 = vpop.f32.mrb[0].mxu0
        %v3110 = vadd.f32 %v2997, %v3109
        %v3111 = vpop.f32.mrb[0].mxu0
        %v3112 = vadd.f32 %v2999, %v3111
        %v3113 = vpop.f32.mrb[0].mxu0
        %v3114 = vadd.f32 %v3001, %v3113
        %3115 = vmatprep.mubr.bf16.mxu0 %v2527
        %3116 = vmatmul.mubr.bf16.gmra.mrb[0].mxu0 %v2526
        %v3117 = vpop.f32.mrb[0].mxu0
        %v3118 = vadd.f32 %v3005, %v3117
        %v3119 = vpop.f32.mrb[0].mxu0
        %v3120 = vadd.f32 %v3007, %v3119
        %v3121 = vpop.f32.mrb[0].mxu0
        %v3122 = vadd.f32 %v3009, %v3121
        %v3123 = vpop.f32.mrb[0].mxu0
        %v3124 = vadd.f32 %v3011, %v3123
        %3125 = vmatprep.mubr.bf16.mxu0 %v2531
        %3126 = vmatmul.mubr.bf16.gmra.mrb[0].mxu0 %v2530
        %v3127 = vpop.f32.mrb[0].mxu0
        %v3128 = vadd.f32 %v3015, %v3127
        %v3129 = vpop.f32.mrb[0].mxu0
        %v3130 = vadd.f32 %v3017, %v3129
        %v3131 = vpop.f32.mrb[0].mxu0
        %v3132 = vadd.f32 %v3019, %v3131
        %v3133 = vpop.f32.mrb[0].mxu0
        %v3134 = vadd.f32 %v3021, %v3133
        %3135 = vmatprep.mubr.bf16.mxu0 %v2535
        %3136 = vmatmul.mubr.bf16.gmra.mrb[0].mxu0 %v2534
        %v3137 = vpop.f32.mrb[0].mxu0
        %v3138 = vadd.f32 %v3025, %v3137
        %v3139 = vpop.f32.mrb[0].mxu0
        %v3140 = vadd.f32 %v3027, %v3139
        %v3141 = vpop.f32.mrb[0].mxu0
        %v3142 = vadd.f32 %v3029, %v3141
        %v3143 = vpop.f32.mrb[0].mxu0
        %v3144 = vadd.f32 %v3031, %v3143
        %3145 = vmatprep.mubr.bf16.mxu0 %v2539
        %3146 = vmatmul.mubr.bf16.gmra.mrb[0].mxu0 %v2538
        %v3147 = vpop.f32.mrb[0].mxu0
        %v3148 = vadd.f32 %v3035, %v3147
        %v3149 = vpop.f32.mrb[0].mxu0
        %v3150 = vadd.f32 %v3037, %v3149
        %v3151 = vpop.f32.mrb[0].mxu0
        %v3152 = vadd.f32 %v3039, %v3151
        %v3153 = vpop.f32.mrb[0].mxu0
        %v3154 = vadd.f32 %v3041, %v3153
        %3155 = vmatprep.mubr.bf16.mxu0 %v2543
        %3156 = vmatmul.mubr.bf16.gmra.mrb[0].mxu0 %v2542
        %v3157 = vpop.f32.mrb[0].mxu0
        %v3158 = vadd.f32 %v3045, %v3157
        %v3159 = vpop.f32.mrb[0].mxu0
        %v3160 = vadd.f32 %v3047, %v3159
        %v3161 = vpop.f32.mrb[0].mxu0
        %v3162 = vadd.f32 %v3049, %v3161
        %v3163 = vpop.f32.mrb[0].mxu0
        %v3164 = vadd.f32 %v3051, %v3163
        %3165 = vdwg.mxu0
        %v3166 = vmax.f32 %v3088, 0.0
        %v3167 = vmax.f32 %v3090, 0.0
        %v3168 = vmax.f32 %v3092, 0.0
        %v3169 = vmax.f32 %v3094, 0.0
        %v3170 = vmax.f32 %v3098, 0.0
        %v3171 = vmax.f32 %v3100, 0.0
        %v3172 = vmax.f32 %v3102, 0.0
        %v3173 = vmax.f32 %v3104, 0.0
        %v3174 = vmax.f32 %v3108, 0.0
        %v3175 = vmax.f32 %v3110, 0.0
        %v3176 = vmax.f32 %v3112, 0.0
        %v3177 = vmax.f32 %v3114, 0.0
        %v3178 = vmax.f32 %v3118, 0.0
        %v3179 = vmax.f32 %v3120, 0.0
        %v3180 = vmax.f32 %v3122, 0.0
        %v3181 = vmax.f32 %v3124, 0.0
        %v3182 = vmax.f32 %v3128, 0.0
        %v3183 = vmax.f32 %v3130, 0.0
        %v3184 = vmax.f32 %v3132, 0.0
        %v3185 = vmax.f32 %v3134, 0.0
        %v3186 = vmax.f32 %v3138, 0.0
        %v3187 = vmax.f32 %v3140, 0.0
        %v3188 = vmax.f32 %v3142, 0.0
        %v3189 = vmax.f32 %v3144, 0.0
        %v3190 = vmax.f32 %v3148, 0.0
        %v3191 = vmax.f32 %v3150, 0.0
        %v3192 = vmax.f32 %v3152, 0.0
        %v3193 = vmax.f32 %v3154, 0.0
        %v3194 = vmax.f32 %v3158, 0.0
        %v3195 = vmax.f32 %v3160, 0.0
        %v3196 = vmax.f32 %v3162, 0.0
        %v3197 = vmax.f32 %v3164, 0.0
        %v3198 = vpack.c.bf16 %v3168, %v3166
        %v3199 = vpack.c.bf16 %v3169, %v3167
        %v3200 = vpack.c.bf16 %v3172, %v3170
        %v3201 = vpack.c.bf16 %v3173, %v3171
        %v3202 = vpack.c.bf16 %v3176, %v3174
        %v3203 = vpack.c.bf16 %v3177, %v3175
        %v3204 = vpack.c.bf16 %v3180, %v3178
        %v3205 = vpack.c.bf16 %v3181, %v3179
        %v3206 = vpack.c.bf16 %v3184, %v3182
        %v3207 = vpack.c.bf16 %v3185, %v3183
        %v3208 = vpack.c.bf16 %v3188, %v3186
        %v3209 = vpack.c.bf16 %v3189, %v3187
        %v3210 = vpack.c.bf16 %v3192, %v3190
        %v3211 = vpack.c.bf16 %v3193, %v3191
        %v3212 = vpack.c.bf16 %v3196, %v3194
        %v3213 = vpack.c.bf16 %v3197, %v3195
        %v3214 = vld [vmem:[#allocation8] sm:$0xf]
        %v3215 = vld [vmem:[#allocation8 + $0x4] sm:$0xf]
        %v3216 = vld [vmem:[#allocation8 + $0x8] sm:$0xf]
        %v3217 = vld [vmem:[#allocation8 + $0xc] sm:$0xf]
        %v3218 = vld [vmem:[#allocation8 + $0x10] sm:$0xf]
        %v3219 = vld [vmem:[#allocation8 + $0x14] sm:$0xf]
        %v3220 = vld [vmem:[#allocation8 + $0x18] sm:$0xf]
        %v3221 = vld [vmem:[#allocation8 + $0x1c] sm:$0xf]
        %v3222 = vld [vmem:[#allocation8 + $0x20] sm:$0xf]
        %v3223 = vld [vmem:[#allocation8 + $0x24] sm:$0xf]
        %v3224 = vld [vmem:[#allocation8 + $0x28] sm:$0xf]
        %v3225 = vld [vmem:[#allocation8 + $0x2c] sm:$0xf]
        %v3226 = vld [vmem:[#allocation8 + $0x30] sm:$0xf]
        %v3227 = vld [vmem:[#allocation8 + $0x34] sm:$0xf]
        %v3228 = vld [vmem:[#allocation8 + $0x38] sm:$0xf]
        %v3229 = vld [vmem:[#allocation8 + $0x3c] sm:$0xf]
        %v3230 = vld [vmem:[#allocation8 + $0x40] sm:$0xf]
        %v3231 = vld [vmem:[#allocation8 + $0x44] sm:$0xf]
        %v3232 = vld [vmem:[#allocation8 + $0x48] sm:$0xf]
        %v3233 = vld [vmem:[#allocation8 + $0x4c] sm:$0xf]
        %v3234 = vld [vmem:[#allocation8 + $0x50] sm:$0xf]
        %v3235 = vld [vmem:[#allocation8 + $0x54] sm:$0xf]
        %v3236 = vld [vmem:[#allocation8 + $0x58] sm:$0xf]
        %v3237 = vld [vmem:[#allocation8 + $0x5c] sm:$0xf]
        %v3238 = vld [vmem:[#allocation8 + $0x60] sm:$0xf]
        %v3239 = vld [vmem:[#allocation8 + $0x64] sm:$0xf]
        %v3240 = vld [vmem:[#allocation8 + $0x68] sm:$0xf]
        %v3241 = vld [vmem:[#allocation8 + $0x6c] sm:$0xf]
        %v3242 = vld [vmem:[#allocation8 + $0x70] sm:$0xf]
        %v3243 = vld [vmem:[#allocation8 + $0x74] sm:$0xf]
        %v3244 = vld [vmem:[#allocation8 + $0x78] sm:$0xf]
        %v3245 = vld [vmem:[#allocation8 + $0x7c] sm:$0xf]
        %v3246 = vld [vmem:[%s6] sm:$0x1]
        %v3248 = vlaneseq
        %v3249 = vshrl.u32 %v3248, 7
        %v3250 = vsub.s32 0, %v3249
        %v3251 = vrot.slane %v3246, %v3250
        %v3285 = vunpack.c.l.b16 %v3214
        %v3286 = vunpack.c.l.b16 %v3215
        %v3287 = vunpack.c.l.b16 %v3216
        %v3288 = vunpack.c.l.b16 %v3217
        %v3289 = vunpack.c.l.b16 %v3218
        %v3290 = vunpack.c.l.b16 %v3219
        %v3291 = vunpack.c.l.b16 %v3220
        %v3292 = vunpack.c.l.b16 %v3221
        %v3293 = vunpack.c.l.b16 %v3222
        %v3294 = vunpack.c.l.b16 %v3223
        %v3295 = vunpack.c.l.b16 %v3224
        %v3296 = vunpack.c.l.b16 %v3225
        %v3297 = vunpack.c.l.b16 %v3226
        %v3298 = vunpack.c.l.b16 %v3227
        %v3299 = vunpack.c.l.b16 %v3228
        %v3300 = vunpack.c.l.b16 %v3229
        %v3301 = vunpack.c.l.b16 %v3230
        %v3302 = vunpack.c.l.b16 %v3231
        %v3303 = vunpack.c.l.b16 %v3232
        %v3304 = vunpack.c.l.b16 %v3233
        %v3305 = vunpack.c.l.b16 %v3234
        %v3306 = vunpack.c.l.b16 %v3235
        %v3307 = vunpack.c.l.b16 %v3236
        %v3308 = vunpack.c.l.b16 %v3237
        %v3309 = vunpack.c.l.b16 %v3238
        %v3310 = vunpack.c.l.b16 %v3239
        %v3311 = vunpack.c.l.b16 %v3240
        %v3312 = vunpack.c.l.b16 %v3241
        %v3313 = vunpack.c.l.b16 %v3242
        %v3314 = vunpack.c.l.b16 %v3243
        %v3315 = vunpack.c.l.b16 %v3244
        %v3316 = vunpack.c.l.b16 %v3245
        %v3317 = vpack.c.b16 %v3286, %v3285
        %v3318 = vpack.c.b16 %v3288, %v3287
        %v3319 = vpack.c.b16 %v3290, %v3289
        %v3320 = vpack.c.b16 %v3292, %v3291
        %v3321 = vpack.c.b16 %v3294, %v3293
        %v3322 = vpack.c.b16 %v3296, %v3295
        %v3323 = vpack.c.b16 %v3298, %v3297
        %v3324 = vpack.c.b16 %v3300, %v3299
        %v3325 = vpack.c.b16 %v3302, %v3301
        %v3326 = vpack.c.b16 %v3304, %v3303
        %v3327 = vpack.c.b16 %v3306, %v3305
        %v3328 = vpack.c.b16 %v3308, %v3307
        %v3329 = vpack.c.b16 %v3310, %v3309
        %v3330 = vpack.c.b16 %v3312, %v3311
        %v3331 = vpack.c.b16 %v3314, %v3313
        %v3332 = vpack.c.b16 %v3316, %v3315
        %3349 = vmatprep.subr.bf16.mxu0 0
        %3350 = vmatpush1.bf16.msra.mxu0 %v3317
        %3351 = vmatprep.subr.bf16.mxu0 0
        %3352 = vmatpush1.bf16.msra.mxu0 %v3318
        %3353 = vmatprep.subr.bf16.mxu0 0
        %3354 = vmatpush1.bf16.msra.mxu0 %v3319
        %3355 = vmatprep.subr.bf16.mxu0 0
        %3356 = vmatpush1.bf16.msra.mxu0 %v3320
        %3357 = vmatprep.subr.bf16.mxu0 0
        %3358 = vmatpush1.bf16.msra.mxu0 %v3321
        %3359 = vmatprep.subr.bf16.mxu0 0
        %3360 = vmatpush1.bf16.msra.mxu0 %v3322
        %3361 = vmatprep.subr.bf16.mxu0 0
        %3362 = vmatpush1.bf16.msra.mxu0 %v3323
        %3363 = vmatprep.subr.bf16.mxu0 0
        %3364 = vmatpush1.bf16.msra.mxu0 %v3324
        %3365 = vmatprep.subr.bf16.mxu0 0
        %3366 = vmatpush1.bf16.msra.mxu0 %v3325
        %3367 = vmatprep.subr.bf16.mxu0 0
        %3368 = vmatpush1.bf16.msra.mxu0 %v3326
        %3369 = vmatprep.subr.bf16.mxu0 0
        %3370 = vmatpush1.bf16.msra.mxu0 %v3327
        %3371 = vmatprep.subr.bf16.mxu0 0
        %3372 = vmatpush1.bf16.msra.mxu0 %v3328
        %3373 = vmatprep.subr.bf16.mxu0 0
        %3374 = vmatpush1.bf16.msra.mxu0 %v3329
        %3375 = vmatprep.subr.bf16.mxu0 0
        %3376 = vmatpush1.bf16.msra.mxu0 %v3330
        %3377 = vmatprep.subr.bf16.mxu0 0
        %3378 = vmatpush1.bf16.msra.mxu0 %v3331
        %3379 = vmatprep.subr.bf16.mxu0 0
        %3380 = vmatpush1.bf16.msra.mxu0 %v3332
        %3381 = vmatprep.mubr.bf16.mxu0 %v3199
        %3382 = vmatmul.mubr.bf16.gmra.mrb[0].mxu0 %v3198
        %v3383 = vpop.f32.mrb[0].mxu0
        %v3384 = vadd.f32 %v3251, %v3383
        %v3385 = vpop.f32.mrb[0].mxu0
        %v3386 = vpop.f32.mrb[0].mxu0
        %v3387 = vadd.f32 %v3251, %v3386
        %v3388 = vpop.f32.mrb[0].mxu0
        %3389 = vmatprep.mubr.bf16.mxu0 %v3201
        %3390 = vmatmul.mubr.bf16.gmra.mrb[0].mxu0 %v3200
        %v3391 = vpop.f32.mrb[0].mxu0
        %v3392 = vadd.f32 %v3251, %v3391
        %v3393 = vpop.f32.mrb[0].mxu0
        %v3394 = vpop.f32.mrb[0].mxu0
        %v3395 = vadd.f32 %v3251, %v3394
        %v3396 = vpop.f32.mrb[0].mxu0
        %3397 = vmatprep.mubr.bf16.mxu0 %v3203
        %3398 = vmatmul.mubr.bf16.gmra.mrb[0].mxu0 %v3202
        %v3399 = vpop.f32.mrb[0].mxu0
        %v3400 = vadd.f32 %v3251, %v3399
        %v3401 = vpop.f32.mrb[0].mxu0
        %v3402 = vpop.f32.mrb[0].mxu0
        %v3403 = vadd.f32 %v3251, %v3402
        %v3404 = vpop.f32.mrb[0].mxu0
        %3405 = vmatprep.mubr.bf16.mxu0 %v3205
        %3406 = vmatmul.mubr.bf16.gmra.mrb[0].mxu0 %v3204
        %v3407 = vpop.f32.mrb[0].mxu0
        %v3408 = vadd.f32 %v3251, %v3407
        %v3409 = vpop.f32.mrb[0].mxu0
        %v3410 = vpop.f32.mrb[0].mxu0
        %v3411 = vadd.f32 %v3251, %v3410
        %v3412 = vpop.f32.mrb[0].mxu0
        %3413 = vmatprep.mubr.bf16.mxu0 %v3207
        %3414 = vmatmul.mubr.bf16.gmra.mrb[0].mxu0 %v3206
        %v3415 = vpop.f32.mrb[0].mxu0
        %v3416 = vadd.f32 %v3251, %v3415
        %v3417 = vpop.f32.mrb[0].mxu0
        %v3418 = vpop.f32.mrb[0].mxu0
        %v3419 = vadd.f32 %v3251, %v3418
        %v3420 = vpop.f32.mrb[0].mxu0
        %3421 = vmatprep.mubr.bf16.mxu0 %v3209
        %3422 = vmatmul.mubr.bf16.gmra.mrb[0].mxu0 %v3208
        %v3423 = vpop.f32.mrb[0].mxu0
        %v3424 = vadd.f32 %v3251, %v3423
        %v3425 = vpop.f32.mrb[0].mxu0
        %v3426 = vpop.f32.mrb[0].mxu0
        %v3427 = vadd.f32 %v3251, %v3426
        %v3428 = vpop.f32.mrb[0].mxu0
        %3429 = vmatprep.mubr.bf16.mxu0 %v3211
        %3430 = vmatmul.mubr.bf16.gmra.mrb[0].mxu0 %v3210
        %v3431 = vpop.f32.mrb[0].mxu0
        %v3432 = vadd.f32 %v3251, %v3431
        %v3433 = vpop.f32.mrb[0].mxu0
        %v3434 = vpop.f32.mrb[0].mxu0
        %v3435 = vadd.f32 %v3251, %v3434
        %v3436 = vpop.f32.mrb[0].mxu0
        %3437 = vmatprep.mubr.bf16.mxu0 %v3213
        %3438 = vmatmul.mubr.bf16.gmra.mrb[0].mxu0 %v3212
        %v3439 = vpop.f32.mrb[0].mxu0
        %v3440 = vadd.f32 %v3251, %v3439
        %v3441 = vpop.f32.mrb[0].mxu0
        %v3442 = vpop.f32.mrb[0].mxu0
        %v3443 = vadd.f32 %v3251, %v3442
        %v3444 = vpop.f32.mrb[0].mxu0
        %3445 = vdwg.mxu0
        %3446 = vst [vmem:[%s440] sm:$0xff] %v3384
        %3447 = vst [vmem:[%s440 + $0x8] sm:$0xff] %v3387
        %3448 = vst [vmem:[%s440 + $0x10] sm:$0xff] %v3392
        %3449 = vst [vmem:[%s440 + $0x18] sm:$0xff] %v3395
        %3450 = vst [vmem:[%s440 + $0x20] sm:$0xff] %v3400
        %3451 = vst [vmem:[%s440 + $0x28] sm:$0xff] %v3403
        %3452 = vst [vmem:[%s440 + $0x30] sm:$0xff] %v3408
        %3453 = vst [vmem:[%s440 + $0x38] sm:$0xff] %v3411
        %3454 = vst [vmem:[%s440 + $0x40] sm:$0xff] %v3416
        %3455 = vst [vmem:[%s440 + $0x48] sm:$0xff] %v3419
        %3456 = vst [vmem:[%s440 + $0x50] sm:$0xff] %v3424
        %3457 = vst [vmem:[%s440 + $0x58] sm:$0xff] %v3427
        %3458 = vst [vmem:[%s440 + $0x60] sm:$0xff] %v3432
        %3459 = vst [vmem:[%s440 + $0x68] sm:$0xff] %v3435
        %3460 = vst [vmem:[%s440 + $0x70] sm:$0xff] %v3440
        %3461 = vst [vmem:[%s440 + $0x78] sm:$0xff] %v3443
        %v3462 = vpack.c.bf16 %v3387, %v3384
        %v3463 = vpack.c.bf16 %v3395, %v3392
        %v3464 = vpack.c.bf16 %v3403, %v3400
        %v3465 = vpack.c.bf16 %v3411, %v3408
        %v3466 = vpack.c.bf16 %v3419, %v3416
        %v3467 = vpack.c.bf16 %v3427, %v3424
        %v3468 = vpack.c.bf16 %v3435, %v3432
        %v3469 = vpack.c.bf16 %v3443, %v3440
        %v3470 = vld [vmem:[#allocation10] sm:$0xff]
        %v3471 = vld [vmem:[#allocation10 + $0x8] sm:$0xff]
        %v3472 = vld [vmem:[#allocation10 + $0x10] sm:$0xff]
        %v3473 = vld [vmem:[#allocation10 + $0x18] sm:$0xff]
        %v3474 = vld [vmem:[#allocation10 + $0x20] sm:$0xff]
        %v3475 = vld [vmem:[#allocation10 + $0x28] sm:$0xff]
        %v3476 = vld [vmem:[#allocation10 + $0x30] sm:$0xff]
        %v3477 = vld [vmem:[#allocation10 + $0x38] sm:$0xff]
        %v3478 = vld [vmem:[#allocation10 + $0x40] sm:$0xff]
        %v3479 = vld [vmem:[#allocation10 + $0x48] sm:$0xff]
        %v3480 = vld [vmem:[#allocation10 + $0x50] sm:$0xff]
        %v3481 = vld [vmem:[#allocation10 + $0x58] sm:$0xff]
        %v3482 = vld [vmem:[#allocation10 + $0x60] sm:$0xff]
        %v3483 = vld [vmem:[#allocation10 + $0x68] sm:$0xff]
        %v3484 = vld [vmem:[#allocation10 + $0x70] sm:$0xff]
        %v3485 = vld [vmem:[#allocation10 + $0x78] sm:$0xff]
        %v3486 = vld [vmem:[#allocation10 + $0x80] sm:$0xff]
        %v3487 = vld [vmem:[#allocation10 + $0x88] sm:$0xff]
        %v3488 = vld [vmem:[#allocation10 + $0x90] sm:$0xff]
        %v3489 = vld [vmem:[#allocation10 + $0x98] sm:$0xff]
        %v3490 = vld [vmem:[#allocation10 + $0xa0] sm:$0xff]
        %v3491 = vld [vmem:[#allocation10 + $0xa8] sm:$0xff]
        %v3492 = vld [vmem:[#allocation10 + $0xb0] sm:$0xff]
        %v3493 = vld [vmem:[#allocation10 + $0xb8] sm:$0xff]
        %v3494 = vld [vmem:[#allocation10 + $0xc0] sm:$0xff]
        %v3495 = vld [vmem:[#allocation10 + $0xc8] sm:$0xff]
        %v3496 = vld [vmem:[#allocation10 + $0xd0] sm:$0xff]
        %v3497 = vld [vmem:[#allocation10 + $0xd8] sm:$0xff]
        %v3498 = vld [vmem:[#allocation10 + $0xe0] sm:$0xff]
        %v3499 = vld [vmem:[#allocation10 + $0xe8] sm:$0xff]
        %v3500 = vld [vmem:[#allocation10 + $0xf0] sm:$0xff]
        %v3501 = vld [vmem:[#allocation10 + $0xf8] sm:$0xff]
        %v3502 = vld [vmem:[#allocation10 + $0x100] sm:$0xff]
        %v3503 = vld [vmem:[#allocation10 + $0x108] sm:$0xff]
        %v3504 = vld [vmem:[#allocation10 + $0x110] sm:$0xff]
        %v3505 = vld [vmem:[#allocation10 + $0x118] sm:$0xff]
        %v3506 = vld [vmem:[#allocation10 + $0x120] sm:$0xff]
        %v3507 = vld [vmem:[#allocation10 + $0x128] sm:$0xff]
        %v3508 = vld [vmem:[#allocation10 + $0x130] sm:$0xff]
        %v3509 = vld [vmem:[#allocation10 + $0x138] sm:$0xff]
        %v3510 = vld [vmem:[#allocation10 + $0x140] sm:$0xff]
        %v3511 = vld [vmem:[#allocation10 + $0x148] sm:$0xff]
        %v3512 = vld [vmem:[#allocation10 + $0x150] sm:$0xff]
        %v3513 = vld [vmem:[#allocation10 + $0x158] sm:$0xff]
        %v3514 = vld [vmem:[#allocation10 + $0x160] sm:$0xff]
        %v3515 = vld [vmem:[#allocation10 + $0x168] sm:$0xff]
        %v3516 = vld [vmem:[#allocation10 + $0x170] sm:$0xff]
        %v3517 = vld [vmem:[#allocation10 + $0x178] sm:$0xff]
        %v3518 = vld [vmem:[%s8] sm:$0x3f]
        %v3520 = vlaneseq
        %v3521 = vshrl.u32 %v3520, 7
        %v3522 = vsub.s32 0, %v3521
        %v3523 = vrot.slane %v3518, %v3522
        %v3524 = vlaneseq
        %v3525 = vshrl.u32 %v3524, 7
        %v3526 = vsub.s32 1, %v3525
        %v3527 = vrot.slane %v3518, %v3526
        %v3528 = vlaneseq
        %v3529 = vshrl.u32 %v3528, 7
        %v3530 = vsub.s32 2, %v3529
        %v3531 = vrot.slane %v3518, %v3530
        %v3532 = vlaneseq
        %v3533 = vshrl.u32 %v3532, 7
        %v3534 = vsub.s32 3, %v3533
        %v3535 = vrot.slane %v3518, %v3534
        %v3536 = vlaneseq
        %v3537 = vshrl.u32 %v3536, 7
        %v3538 = vsub.s32 4, %v3537
        %v3539 = vrot.slane %v3518, %v3538
        %v3540 = vlaneseq
        %v3541 = vshrl.u32 %v3540, 7
        %v3542 = vsub.s32 5, %v3541
        %v3543 = vrot.slane %v3518, %v3542
        %v3598 = vunpack.c.l.b16 %v3470
        %v3599 = vunpack.c.h.b16 %v3470
        %v3600 = vunpack.c.l.b16 %v3471
        %v3601 = vunpack.c.h.b16 %v3471
        %v3602 = vunpack.c.l.b16 %v3472
        %v3603 = vunpack.c.h.b16 %v3472
        %v3604 = vunpack.c.l.b16 %v3473
        %v3605 = vunpack.c.h.b16 %v3473
        %v3606 = vunpack.c.l.b16 %v3474
        %v3607 = vunpack.c.h.b16 %v3474
        %v3608 = vunpack.c.l.b16 %v3475
        %v3609 = vunpack.c.h.b16 %v3475
        %v3610 = vunpack.c.l.b16 %v3476
        %v3611 = vunpack.c.h.b16 %v3476
        %v3612 = vunpack.c.l.b16 %v3477
        %v3613 = vunpack.c.h.b16 %v3477
        %v3614 = vunpack.c.l.b16 %v3478
        %v3615 = vunpack.c.h.b16 %v3478
        %v3616 = vunpack.c.l.b16 %v3479
        %v3617 = vunpack.c.h.b16 %v3479
        %v3618 = vunpack.c.l.b16 %v3480
        %v3619 = vunpack.c.h.b16 %v3480
        %v3620 = vunpack.c.l.b16 %v3481
        %v3621 = vunpack.c.h.b16 %v3481
        %v3622 = vunpack.c.l.b16 %v3482
        %v3623 = vunpack.c.h.b16 %v3482
        %v3624 = vunpack.c.l.b16 %v3483
        %v3625 = vunpack.c.h.b16 %v3483
        %v3626 = vunpack.c.l.b16 %v3484
        %v3627 = vunpack.c.h.b16 %v3484
        %v3628 = vunpack.c.l.b16 %v3485
        %v3629 = vunpack.c.h.b16 %v3485
        %v3630 = vunpack.c.l.b16 %v3486
        %v3631 = vunpack.c.h.b16 %v3486
        %v3632 = vunpack.c.l.b16 %v3487
        %v3633 = vunpack.c.h.b16 %v3487
        %v3634 = vunpack.c.l.b16 %v3488
        %v3635 = vunpack.c.h.b16 %v3488
        %v3636 = vunpack.c.l.b16 %v3489
        %v3637 = vunpack.c.h.b16 %v3489
        %v3638 = vunpack.c.l.b16 %v3490
        %v3639 = vunpack.c.h.b16 %v3490
        %v3640 = vunpack.c.l.b16 %v3491
        %v3641 = vunpack.c.h.b16 %v3491
        %v3642 = vunpack.c.l.b16 %v3492
        %v3643 = vunpack.c.h.b16 %v3492
        %v3644 = vunpack.c.l.b16 %v3493
        %v3645 = vunpack.c.h.b16 %v3493
        %v3646 = vunpack.c.l.b16 %v3494
        %v3647 = vunpack.c.h.b16 %v3494
        %v3648 = vunpack.c.l.b16 %v3495
        %v3649 = vunpack.c.h.b16 %v3495
        %v3650 = vunpack.c.l.b16 %v3496
        %v3651 = vunpack.c.h.b16 %v3496
        %v3652 = vunpack.c.l.b16 %v3497
        %v3653 = vunpack.c.h.b16 %v3497
        %v3654 = vunpack.c.l.b16 %v3498
        %v3655 = vunpack.c.h.b16 %v3498
        %v3656 = vunpack.c.l.b16 %v3499
        %v3657 = vunpack.c.h.b16 %v3499
        %v3658 = vunpack.c.l.b16 %v3500
        %v3659 = vunpack.c.h.b16 %v3500
        %v3660 = vunpack.c.l.b16 %v3501
        %v3661 = vunpack.c.h.b16 %v3501
        %v3662 = vunpack.c.l.b16 %v3502
        %v3663 = vunpack.c.h.b16 %v3502
        %v3664 = vunpack.c.l.b16 %v3503
        %v3665 = vunpack.c.h.b16 %v3503
        %v3666 = vunpack.c.l.b16 %v3504
        %v3667 = vunpack.c.h.b16 %v3504
        %v3668 = vunpack.c.l.b16 %v3505
        %v3669 = vunpack.c.h.b16 %v3505
        %v3670 = vunpack.c.l.b16 %v3506
        %v3671 = vunpack.c.h.b16 %v3506
        %v3672 = vunpack.c.l.b16 %v3507
        %v3673 = vunpack.c.h.b16 %v3507
        %v3674 = vunpack.c.l.b16 %v3508
        %v3675 = vunpack.c.h.b16 %v3508
        %v3676 = vunpack.c.l.b16 %v3509
        %v3677 = vunpack.c.h.b16 %v3509
        %v3678 = vunpack.c.l.b16 %v3510
        %v3679 = vunpack.c.h.b16 %v3510
        %v3680 = vunpack.c.l.b16 %v3511
        %v3681 = vunpack.c.h.b16 %v3511
        %v3682 = vunpack.c.l.b16 %v3512
        %v3683 = vunpack.c.h.b16 %v3512
        %v3684 = vunpack.c.l.b16 %v3513
        %v3685 = vunpack.c.h.b16 %v3513
        %v3686 = vunpack.c.l.b16 %v3514
        %v3687 = vunpack.c.h.b16 %v3514
        %v3688 = vunpack.c.l.b16 %v3515
        %v3689 = vunpack.c.h.b16 %v3515
        %v3690 = vunpack.c.l.b16 %v3516
        %v3691 = vunpack.c.h.b16 %v3516
        %v3692 = vunpack.c.l.b16 %v3517
        %v3693 = vunpack.c.h.b16 %v3517
        %v3694 = vpack.c.b16 %v3604, %v3598
        %v3695 = vpack.c.b16 %v3605, %v3599
        %v3696 = vpack.c.b16 %v3606, %v3600
        %v3697 = vpack.c.b16 %v3607, %v3601
        %v3698 = vpack.c.b16 %v3608, %v3602
        %v3699 = vpack.c.b16 %v3609, %v3603
        %v3700 = vpack.c.b16 %v3616, %v3610
        %v3701 = vpack.c.b16 %v3617, %v3611
        %v3702 = vpack.c.b16 %v3618, %v3612
        %v3703 = vpack.c.b16 %v3619, %v3613
        %v3704 = vpack.c.b16 %v3620, %v3614
        %v3705 = vpack.c.b16 %v3621, %v3615
        %v3706 = vpack.c.b16 %v3628, %v3622
        %v3707 = vpack.c.b16 %v3629, %v3623
        %v3708 = vpack.c.b16 %v3630, %v3624
        %v3709 = vpack.c.b16 %v3631, %v3625
        %v3710 = vpack.c.b16 %v3632, %v3626
        %v3711 = vpack.c.b16 %v3633, %v3627
        %v3712 = vpack.c.b16 %v3640, %v3634
        %v3713 = vpack.c.b16 %v3641, %v3635
        %v3714 = vpack.c.b16 %v3642, %v3636
        %v3715 = vpack.c.b16 %v3643, %v3637
        %v3716 = vpack.c.b16 %v3644, %v3638
        %v3717 = vpack.c.b16 %v3645, %v3639
        %v3718 = vpack.c.b16 %v3652, %v3646
        %v3719 = vpack.c.b16 %v3653, %v3647
        %v3720 = vpack.c.b16 %v3654, %v3648
        %v3721 = vpack.c.b16 %v3655, %v3649
        %v3722 = vpack.c.b16 %v3656, %v3650
        %v3723 = vpack.c.b16 %v3657, %v3651
        %v3724 = vpack.c.b16 %v3664, %v3658
        %v3725 = vpack.c.b16 %v3665, %v3659
        %v3726 = vpack.c.b16 %v3666, %v3660
        %v3727 = vpack.c.b16 %v3667, %v3661
        %v3728 = vpack.c.b16 %v3668, %v3662
        %v3729 = vpack.c.b16 %v3669, %v3663
        %v3730 = vpack.c.b16 %v3676, %v3670
        %v3731 = vpack.c.b16 %v3677, %v3671
        %v3732 = vpack.c.b16 %v3678, %v3672
        %v3733 = vpack.c.b16 %v3679, %v3673
        %v3734 = vpack.c.b16 %v3680, %v3674
        %v3735 = vpack.c.b16 %v3681, %v3675
        %v3736 = vpack.c.b16 %v3688, %v3682
        %v3737 = vpack.c.b16 %v3689, %v3683
        %v3738 = vpack.c.b16 %v3690, %v3684
        %v3739 = vpack.c.b16 %v3691, %v3685
        %v3740 = vpack.c.b16 %v3692, %v3686
        %v3741 = vpack.c.b16 %v3693, %v3687
        %3790 = vmatprep.subr.bf16.mxu0 %v3695
        %3791 = vmatpush1.bf16.msra.mxu0 %v3694
        %3792 = vmatprep.subr.bf16.mxu0 %v3701
        %3793 = vmatpush1.bf16.msra.mxu0 %v3700
        %3794 = vmatprep.subr.bf16.mxu0 %v3707
        %3795 = vmatpush1.bf16.msra.mxu0 %v3706
        %3796 = vmatprep.subr.bf16.mxu0 %v3713
        %3797 = vmatpush1.bf16.msra.mxu0 %v3712
        %3798 = vmatprep.subr.bf16.mxu0 %v3719
        %3799 = vmatpush1.bf16.msra.mxu0 %v3718
        %3800 = vmatprep.subr.bf16.mxu0 %v3725
        %3801 = vmatpush1.bf16.msra.mxu0 %v3724
        %3802 = vmatprep.subr.bf16.mxu0 %v3731
        %3803 = vmatpush1.bf16.msra.mxu0 %v3730
        %3804 = vmatprep.subr.bf16.mxu0 %v3737
        %3805 = vmatpush1.bf16.msra.mxu0 %v3736
        %3806 = vmatprep.subr.bf16.mxu0 0
        %3807 = vmatpush1.bf16.msra.mxu0 0
        %3808 = vmatprep.subr.bf16.mxu0 0
        %3809 = vmatpush1.bf16.msra.mxu0 0
        %3810 = vmatprep.subr.bf16.mxu0 0
        %3811 = vmatpush1.bf16.msra.mxu0 0
        %3812 = vmatprep.subr.bf16.mxu0 0
        %3813 = vmatpush1.bf16.msra.mxu0 0
        %3814 = vmatprep.subr.bf16.mxu0 0
        %3815 = vmatpush1.bf16.msra.mxu0 0
        %3816 = vmatprep.subr.bf16.mxu0 0
        %3817 = vmatpush1.bf16.msra.mxu0 0
        %3818 = vmatprep.subr.bf16.mxu0 0
        %3819 = vmatpush1.bf16.msra.mxu0 0
        %3820 = vmatprep.subr.bf16.mxu0 0
        %3821 = vmatpush1.bf16.msra.mxu0 0
        %3822 = vmatprep.mubr.bf16.mxu0 0
        %3823 = vmatmul.mubr.bf16.gmra.mrb[0].mxu0 %v3462
        %v3824 = vpop.f32.mrb[0].mxu0
        %v3825 = vadd.f32 %v3523, %v3824
        %v3826 = vpop.f32.mrb[0].mxu0
        %v3827 = vadd.f32 %v3527, %v3826
        %v3828 = vpop.f32.mrb[0].mxu0
        %v3829 = vadd.f32 %v3523, %v3828
        %v3830 = vpop.f32.mrb[0].mxu0
        %v3831 = vadd.f32 %v3527, %v3830
        %3832 = vmatprep.mubr.bf16.mxu0 0
        %3833 = vmatmul.mubr.bf16.gmra.mrb[0].mxu0 %v3463
        %v3834 = vpop.f32.mrb[0].mxu0
        %v3835 = vadd.f32 %v3523, %v3834
        %v3836 = vpop.f32.mrb[0].mxu0
        %v3837 = vadd.f32 %v3527, %v3836
        %v3838 = vpop.f32.mrb[0].mxu0
        %v3839 = vadd.f32 %v3523, %v3838
        %v3840 = vpop.f32.mrb[0].mxu0
        %v3841 = vadd.f32 %v3527, %v3840
        %3842 = vmatprep.mubr.bf16.mxu0 0
        %3843 = vmatmul.mubr.bf16.gmra.mrb[0].mxu0 %v3464
        %v3844 = vpop.f32.mrb[0].mxu0
        %v3845 = vadd.f32 %v3523, %v3844
        %v3846 = vpop.f32.mrb[0].mxu0
        %v3847 = vadd.f32 %v3527, %v3846
        %v3848 = vpop.f32.mrb[0].mxu0
        %v3849 = vadd.f32 %v3523, %v3848
        %v3850 = vpop.f32.mrb[0].mxu0
        %v3851 = vadd.f32 %v3527, %v3850
        %3852 = vmatprep.mubr.bf16.mxu0 0
        %3853 = vmatmul.mubr.bf16.gmra.mrb[0].mxu0 %v3465
        %v3854 = vpop.f32.mrb[0].mxu0
        %v3855 = vadd.f32 %v3523, %v3854
        %v3856 = vpop.f32.mrb[0].mxu0
        %v3857 = vadd.f32 %v3527, %v3856
        %v3858 = vpop.f32.mrb[0].mxu0
        %v3859 = vadd.f32 %v3523, %v3858
        %v3860 = vpop.f32.mrb[0].mxu0
        %v3861 = vadd.f32 %v3527, %v3860
        %3862 = vmatprep.mubr.bf16.mxu0 0
        %3863 = vmatmul.mubr.bf16.gmra.mrb[0].mxu0 %v3466
        %v3864 = vpop.f32.mrb[0].mxu0
        %v3865 = vadd.f32 %v3523, %v3864
        %v3866 = vpop.f32.mrb[0].mxu0
        %v3867 = vadd.f32 %v3527, %v3866
        %v3868 = vpop.f32.mrb[0].mxu0
        %v3869 = vadd.f32 %v3523, %v3868
        %v3870 = vpop.f32.mrb[0].mxu0
        %v3871 = vadd.f32 %v3527, %v3870
        %3872 = vmatprep.mubr.bf16.mxu0 0
        %3873 = vmatmul.mubr.bf16.gmra.mrb[0].mxu0 %v3467
        %v3874 = vpop.f32.mrb[0].mxu0
        %v3875 = vadd.f32 %v3523, %v3874
        %v3876 = vpop.f32.mrb[0].mxu0
        %v3877 = vadd.f32 %v3527, %v3876
        %v3878 = vpop.f32.mrb[0].mxu0
        %v3879 = vadd.f32 %v3523, %v3878
        %v3880 = vpop.f32.mrb[0].mxu0
        %v3881 = vadd.f32 %v3527, %v3880
        %3882 = vmatprep.mubr.bf16.mxu0 0
        %3883 = vmatmul.mubr.bf16.gmra.mrb[0].mxu0 %v3468
        %v3884 = vpop.f32.mrb[0].mxu0
        %v3885 = vadd.f32 %v3523, %v3884
        %v3886 = vpop.f32.mrb[0].mxu0
        %v3887 = vadd.f32 %v3527, %v3886
        %v3888 = vpop.f32.mrb[0].mxu0
        %v3889 = vadd.f32 %v3523, %v3888
        %v3890 = vpop.f32.mrb[0].mxu0
        %v3891 = vadd.f32 %v3527, %v3890
        %3892 = vmatprep.mubr.bf16.mxu0 0
        %3893 = vmatmul.mubr.bf16.gmra.mrb[0].mxu0 %v3469
        %v3894 = vpop.f32.mrb[0].mxu0
        %v3895 = vadd.f32 %v3523, %v3894
        %v3896 = vpop.f32.mrb[0].mxu0
        %v3897 = vadd.f32 %v3527, %v3896
        %v3898 = vpop.f32.mrb[0].mxu0
        %v3899 = vadd.f32 %v3523, %v3898
        %v3900 = vpop.f32.mrb[0].mxu0
        %v3901 = vadd.f32 %v3527, %v3900
        %3902 = vdwg.mxu0
        %3903 = vmatprep.subr.bf16.mxu0 %v3697
        %3904 = vmatpush1.bf16.msra.mxu0 %v3696
        %3905 = vmatprep.subr.bf16.mxu0 %v3703
        %3906 = vmatpush1.bf16.msra.mxu0 %v3702
        %3907 = vmatprep.subr.bf16.mxu0 %v3709
        %3908 = vmatpush1.bf16.msra.mxu0 %v3708
        %3909 = vmatprep.subr.bf16.mxu0 %v3715
        %3910 = vmatpush1.bf16.msra.mxu0 %v3714
        %3911 = vmatprep.subr.bf16.mxu0 %v3721
        %3912 = vmatpush1.bf16.msra.mxu0 %v3720
        %3913 = vmatprep.subr.bf16.mxu0 %v3727
        %3914 = vmatpush1.bf16.msra.mxu0 %v3726
        %3915 = vmatprep.subr.bf16.mxu0 %v3733
        %3916 = vmatpush1.bf16.msra.mxu0 %v3732
        %3917 = vmatprep.subr.bf16.mxu0 %v3739
        %3918 = vmatpush1.bf16.msra.mxu0 %v3738
        %3919 = vmatprep.subr.bf16.mxu0 0
        %3920 = vmatpush1.bf16.msra.mxu0 0
        %3921 = vmatprep.subr.bf16.mxu0 0
        %3922 = vmatpush1.bf16.msra.mxu0 0
        %3923 = vmatprep.subr.bf16.mxu0 0
        %3924 = vmatpush1.bf16.msra.mxu0 0
        %3925 = vmatprep.subr.bf16.mxu0 0
        %3926 = vmatpush1.bf16.msra.mxu0 0
        %3927 = vmatprep.subr.bf16.mxu0 0
        %3928 = vmatpush1.bf16.msra.mxu0 0
        %3929 = vmatprep.subr.bf16.mxu0 0
        %3930 = vmatpush1.bf16.msra.mxu0 0
        %3931 = vmatprep.subr.bf16.mxu0 0
        %3932 = vmatpush1.bf16.msra.mxu0 0
        %3933 = vmatprep.subr.bf16.mxu0 0
        %3934 = vmatpush1.bf16.msra.mxu0 0
        %3935 = vmatprep.mubr.bf16.mxu0 0
        %3936 = vmatmul.mubr.bf16.gmra.mrb[0].mxu0 %v3462
        %v3937 = vpop.f32.mrb[0].mxu0
        %v3938 = vadd.f32 %v3531, %v3937
        %v3939 = vpop.f32.mrb[0].mxu0
        %v3940 = vadd.f32 %v3535, %v3939
        %v3941 = vpop.f32.mrb[0].mxu0
        %v3942 = vadd.f32 %v3531, %v3941
        %v3943 = vpop.f32.mrb[0].mxu0
        %v3944 = vadd.f32 %v3535, %v3943
        %3945 = vmatprep.mubr.bf16.mxu0 0
        %3946 = vmatmul.mubr.bf16.gmra.mrb[0].mxu0 %v3463
        %v3947 = vpop.f32.mrb[0].mxu0
        %v3948 = vadd.f32 %v3531, %v3947
        %v3949 = vpop.f32.mrb[0].mxu0
        %v3950 = vadd.f32 %v3535, %v3949
        %v3951 = vpop.f32.mrb[0].mxu0
        %v3952 = vadd.f32 %v3531, %v3951
        %v3953 = vpop.f32.mrb[0].mxu0
        %v3954 = vadd.f32 %v3535, %v3953
        %3955 = vmatprep.mubr.bf16.mxu0 0
        %3956 = vmatmul.mubr.bf16.gmra.mrb[0].mxu0 %v3464
        %v3957 = vpop.f32.mrb[0].mxu0
        %v3958 = vadd.f32 %v3531, %v3957
        %v3959 = vpop.f32.mrb[0].mxu0
        %v3960 = vadd.f32 %v3535, %v3959
        %v3961 = vpop.f32.mrb[0].mxu0
        %v3962 = vadd.f32 %v3531, %v3961
        %v3963 = vpop.f32.mrb[0].mxu0
        %v3964 = vadd.f32 %v3535, %v3963
        %3965 = vmatprep.mubr.bf16.mxu0 0
        %3966 = vmatmul.mubr.bf16.gmra.mrb[0].mxu0 %v3465
        %v3967 = vpop.f32.mrb[0].mxu0
        %v3968 = vadd.f32 %v3531, %v3967
        %v3969 = vpop.f32.mrb[0].mxu0
        %v3970 = vadd.f32 %v3535, %v3969
        %v3971 = vpop.f32.mrb[0].mxu0
        %v3972 = vadd.f32 %v3531, %v3971
        %v3973 = vpop.f32.mrb[0].mxu0
        %v3974 = vadd.f32 %v3535, %v3973
        %3975 = vmatprep.mubr.bf16.mxu0 0
        %3976 = vmatmul.mubr.bf16.gmra.mrb[0].mxu0 %v3466
        %v3977 = vpop.f32.mrb[0].mxu0
        %v3978 = vadd.f32 %v3531, %v3977
        %v3979 = vpop.f32.mrb[0].mxu0
        %v3980 = vadd.f32 %v3535, %v3979
        %v3981 = vpop.f32.mrb[0].mxu0
        %v3982 = vadd.f32 %v3531, %v3981
        %v3983 = vpop.f32.mrb[0].mxu0
        %v3984 = vadd.f32 %v3535, %v3983
        %3985 = vmatprep.mubr.bf16.mxu0 0
        %3986 = vmatmul.mubr.bf16.gmra.mrb[0].mxu0 %v3467
        %v3987 = vpop.f32.mrb[0].mxu0
        %v3988 = vadd.f32 %v3531, %v3987
        %v3989 = vpop.f32.mrb[0].mxu0
        %v3990 = vadd.f32 %v3535, %v3989
        %v3991 = vpop.f32.mrb[0].mxu0
        %v3992 = vadd.f32 %v3531, %v3991
        %v3993 = vpop.f32.mrb[0].mxu0
        %v3994 = vadd.f32 %v3535, %v3993
        %3995 = vmatprep.mubr.bf16.mxu0 0
        %3996 = vmatmul.mubr.bf16.gmra.mrb[0].mxu0 %v3468
        %v3997 = vpop.f32.mrb[0].mxu0
        %v3998 = vadd.f32 %v3531, %v3997
        %v3999 = vpop.f32.mrb[0].mxu0
        %v4000 = vadd.f32 %v3535, %v3999
        %v4001 = vpop.f32.mrb[0].mxu0
        %v4002 = vadd.f32 %v3531, %v4001
        %v4003 = vpop.f32.mrb[0].mxu0
        %v4004 = vadd.f32 %v3535, %v4003
        %4005 = vmatprep.mubr.bf16.mxu0 0
        %4006 = vmatmul.mubr.bf16.gmra.mrb[0].mxu0 %v3469
        %v4007 = vpop.f32.mrb[0].mxu0
        %v4008 = vadd.f32 %v3531, %v4007
        %v4009 = vpop.f32.mrb[0].mxu0
        %v4010 = vadd.f32 %v3535, %v4009
        %v4011 = vpop.f32.mrb[0].mxu0
        %v4012 = vadd.f32 %v3531, %v4011
        %v4013 = vpop.f32.mrb[0].mxu0
        %v4014 = vadd.f32 %v3535, %v4013
        %4015 = vdwg.mxu0
        %4016 = vmatprep.subr.bf16.mxu0 %v3699
        %4017 = vmatpush1.bf16.msra.mxu0 %v3698
        %4018 = vmatprep.subr.bf16.mxu0 %v3705
        %4019 = vmatpush1.bf16.msra.mxu0 %v3704
        %4020 = vmatprep.subr.bf16.mxu0 %v3711
        %4021 = vmatpush1.bf16.msra.mxu0 %v3710
        %4022 = vmatprep.subr.bf16.mxu0 %v3717
        %4023 = vmatpush1.bf16.msra.mxu0 %v3716
        %4024 = vmatprep.subr.bf16.mxu0 %v3723
        %4025 = vmatpush1.bf16.msra.mxu0 %v3722
        %4026 = vmatprep.subr.bf16.mxu0 %v3729
        %4027 = vmatpush1.bf16.msra.mxu0 %v3728
        %4028 = vmatprep.subr.bf16.mxu0 %v3735
        %4029 = vmatpush1.bf16.msra.mxu0 %v3734
        %4030 = vmatprep.subr.bf16.mxu0 %v3741
        %4031 = vmatpush1.bf16.msra.mxu0 %v3740
        %4032 = vmatprep.subr.bf16.mxu0 0
        %4033 = vmatpush1.bf16.msra.mxu0 0
        %4034 = vmatprep.subr.bf16.mxu0 0
        %4035 = vmatpush1.bf16.msra.mxu0 0
        %4036 = vmatprep.subr.bf16.mxu0 0
        %4037 = vmatpush1.bf16.msra.mxu0 0
        %4038 = vmatprep.subr.bf16.mxu0 0
        %4039 = vmatpush1.bf16.msra.mxu0 0
        %4040 = vmatprep.subr.bf16.mxu0 0
        %4041 = vmatpush1.bf16.msra.mxu0 0
        %4042 = vmatprep.subr.bf16.mxu0 0
        %4043 = vmatpush1.bf16.msra.mxu0 0
        %4044 = vmatprep.subr.bf16.mxu0 0
        %4045 = vmatpush1.bf16.msra.mxu0 0
        %4046 = vmatprep.subr.bf16.mxu0 0
        %4047 = vmatpush1.bf16.msra.mxu0 0
        %4048 = vmatprep.mubr.bf16.mxu0 0
        %4049 = vmatmul.mubr.bf16.gmra.mrb[0].mxu0 %v3462
        %v4050 = vpop.f32.mrb[0].mxu0
        %v4051 = vadd.f32 %v3539, %v4050
        %v4052 = vpop.f32.mrb[0].mxu0
        %v4053 = vadd.f32 %v3543, %v4052
        %v4054 = vpop.f32.mrb[0].mxu0
        %v4055 = vadd.f32 %v3539, %v4054
        %v4056 = vpop.f32.mrb[0].mxu0
        %v4057 = vadd.f32 %v3543, %v4056
        %4058 = vmatprep.mubr.bf16.mxu0 0
        %4059 = vmatmul.mubr.bf16.gmra.mrb[0].mxu0 %v3463
        %v4060 = vpop.f32.mrb[0].mxu0
        %v4061 = vadd.f32 %v3539, %v4060
        %v4062 = vpop.f32.mrb[0].mxu0
        %v4063 = vadd.f32 %v3543, %v4062
        %v4064 = vpop.f32.mrb[0].mxu0
        %v4065 = vadd.f32 %v3539, %v4064
        %v4066 = vpop.f32.mrb[0].mxu0
        %v4067 = vadd.f32 %v3543, %v4066
        %4068 = vmatprep.mubr.bf16.mxu0 0
        %4069 = vmatmul.mubr.bf16.gmra.mrb[0].mxu0 %v3464
        %v4070 = vpop.f32.mrb[0].mxu0
        %v4071 = vadd.f32 %v3539, %v4070
        %v4072 = vpop.f32.mrb[0].mxu0
        %v4073 = vadd.f32 %v3543, %v4072
        %v4074 = vpop.f32.mrb[0].mxu0
        %v4075 = vadd.f32 %v3539, %v4074
        %v4076 = vpop.f32.mrb[0].mxu0
        %v4077 = vadd.f32 %v3543, %v4076
        %4078 = vmatprep.mubr.bf16.mxu0 0
        %4079 = vmatmul.mubr.bf16.gmra.mrb[0].mxu0 %v3465
        %v4080 = vpop.f32.mrb[0].mxu0
        %v4081 = vadd.f32 %v3539, %v4080
        %v4082 = vpop.f32.mrb[0].mxu0
        %v4083 = vadd.f32 %v3543, %v4082
        %v4084 = vpop.f32.mrb[0].mxu0
        %v4085 = vadd.f32 %v3539, %v4084
        %v4086 = vpop.f32.mrb[0].mxu0
        %v4087 = vadd.f32 %v3543, %v4086
        %4088 = vmatprep.mubr.bf16.mxu0 0
        %4089 = vmatmul.mubr.bf16.gmra.mrb[0].mxu0 %v3466
        %v4090 = vpop.f32.mrb[0].mxu0
        %v4091 = vadd.f32 %v3539, %v4090
        %v4092 = vpop.f32.mrb[0].mxu0
        %v4093 = vadd.f32 %v3543, %v4092
        %v4094 = vpop.f32.mrb[0].mxu0
        %v4095 = vadd.f32 %v3539, %v4094
        %v4096 = vpop.f32.mrb[0].mxu0
        %v4097 = vadd.f32 %v3543, %v4096
        %4098 = vmatprep.mubr.bf16.mxu0 0
        %4099 = vmatmul.mubr.bf16.gmra.mrb[0].mxu0 %v3467
        %v4100 = vpop.f32.mrb[0].mxu0
        %v4101 = vadd.f32 %v3539, %v4100
        %v4102 = vpop.f32.mrb[0].mxu0
        %v4103 = vadd.f32 %v3543, %v4102
        %v4104 = vpop.f32.mrb[0].mxu0
        %v4105 = vadd.f32 %v3539, %v4104
        %v4106 = vpop.f32.mrb[0].mxu0
        %v4107 = vadd.f32 %v3543, %v4106
        %4108 = vmatprep.mubr.bf16.mxu0 0
        %4109 = vmatmul.mubr.bf16.gmra.mrb[0].mxu0 %v3468
        %v4110 = vpop.f32.mrb[0].mxu0
        %v4111 = vadd.f32 %v3539, %v4110
        %v4112 = vpop.f32.mrb[0].mxu0
        %v4113 = vadd.f32 %v3543, %v4112
        %v4114 = vpop.f32.mrb[0].mxu0
        %v4115 = vadd.f32 %v3539, %v4114
        %v4116 = vpop.f32.mrb[0].mxu0
        %v4117 = vadd.f32 %v3543, %v4116
        %4118 = vmatprep.mubr.bf16.mxu0 0
        %4119 = vmatmul.mubr.bf16.gmra.mrb[0].mxu0 %v3469
        %v4120 = vpop.f32.mrb[0].mxu0
        %v4121 = vadd.f32 %v3539, %v4120
        %v4122 = vpop.f32.mrb[0].mxu0
        %v4123 = vadd.f32 %v3543, %v4122
        %v4124 = vpop.f32.mrb[0].mxu0
        %v4125 = vadd.f32 %v3539, %v4124
        %v4126 = vpop.f32.mrb[0].mxu0
        %v4127 = vadd.f32 %v3543, %v4126
        %4128 = vdwg.mxu0
        %4129 = vst [vmem:[%s447] sm:$0xff] %v3825
        %4130 = vst [vmem:[%s447 + $0x8] sm:$0xff] %v3827
        %4131 = vst [vmem:[%s447 + $0x10] sm:$0xff] %v3938
        %4132 = vst [vmem:[%s447 + $0x18] sm:$0xff] %v3940
        %4133 = vst [vmem:[%s447 + $0x20] sm:$0xff] %v4051
        %4134 = vst [vmem:[%s447 + $0x28] sm:$0xff] %v4053
        %4135 = vst [vmem:[%s447 + $0x30] sm:$0xff] %v3829
        %4136 = vst [vmem:[%s447 + $0x38] sm:$0xff] %v3831
        %4137 = vst [vmem:[%s447 + $0x40] sm:$0xff] %v3942
        %4138 = vst [vmem:[%s447 + $0x48] sm:$0xff] %v3944
        %4139 = vst [vmem:[%s447 + $0x50] sm:$0xff] %v4055
        %4140 = vst [vmem:[%s447 + $0x58] sm:$0xff] %v4057
        %4141 = vst [vmem:[%s447 + $0x60] sm:$0xff] %v3835
        %4142 = vst [vmem:[%s447 + $0x68] sm:$0xff] %v3837
        %4143 = vst [vmem:[%s447 + $0x70] sm:$0xff] %v3948
        %4144 = vst [vmem:[%s447 + $0x78] sm:$0xff] %v3950
        %4145 = vst [vmem:[%s447 + $0x80] sm:$0xff] %v4061
        %4146 = vst [vmem:[%s447 + $0x88] sm:$0xff] %v4063
        %4147 = vst [vmem:[%s447 + $0x90] sm:$0xff] %v3839
        %4148 = vst [vmem:[%s447 + $0x98] sm:$0xff] %v3841
        %4149 = vst [vmem:[%s447 + $0xa0] sm:$0xff] %v3952
        %4150 = vst [vmem:[%s447 + $0xa8] sm:$0xff] %v3954
        %4151 = vst [vmem:[%s447 + $0xb0] sm:$0xff] %v4065
        %4152 = vst [vmem:[%s447 + $0xb8] sm:$0xff] %v4067
        %4153 = vst [vmem:[%s447 + $0xc0] sm:$0xff] %v3845
        %4154 = vst [vmem:[%s447 + $0xc8] sm:$0xff] %v3847
        %4155 = vst [vmem:[%s447 + $0xd0] sm:$0xff] %v3958
        %4156 = vst [vmem:[%s447 + $0xd8] sm:$0xff] %v3960
        %4157 = vst [vmem:[%s447 + $0xe0] sm:$0xff] %v4071
        %4158 = vst [vmem:[%s447 + $0xe8] sm:$0xff] %v4073
        %4159 = vst [vmem:[%s447 + $0xf0] sm:$0xff] %v3849
        %4160 = vst [vmem:[%s447 + $0xf8] sm:$0xff] %v3851
        %4161 = vst [vmem:[%s447 + $0x100] sm:$0xff] %v3962
        %4162 = vst [vmem:[%s447 + $0x108] sm:$0xff] %v3964
        %4163 = vst [vmem:[%s447 + $0x110] sm:$0xff] %v4075
        %4164 = vst [vmem:[%s447 + $0x118] sm:$0xff] %v4077
        %4165 = vst [vmem:[%s447 + $0x120] sm:$0xff] %v3855
        %4166 = vst [vmem:[%s447 + $0x128] sm:$0xff] %v3857
        %4167 = vst [vmem:[%s447 + $0x130] sm:$0xff] %v3968
        %4168 = vst [vmem:[%s447 + $0x138] sm:$0xff] %v3970
        %4169 = vst [vmem:[%s447 + $0x140] sm:$0xff] %v4081
        %4170 = vst [vmem:[%s447 + $0x148] sm:$0xff] %v4083
        %4171 = vst [vmem:[%s447 + $0x150] sm:$0xff] %v3859
        %4172 = vst [vmem:[%s447 + $0x158] sm:$0xff] %v3861
        %4173 = vst [vmem:[%s447 + $0x160] sm:$0xff] %v3972
        %4174 = vst [vmem:[%s447 + $0x168] sm:$0xff] %v3974
        %4175 = vst [vmem:[%s447 + $0x170] sm:$0xff] %v4085
        %4176 = vst [vmem:[%s447 + $0x178] sm:$0xff] %v4087
        %4177 = vst [vmem:[%s447 + $0x180] sm:$0xff] %v3865
        %4178 = vst [vmem:[%s447 + $0x188] sm:$0xff] %v3867
        %4179 = vst [vmem:[%s447 + $0x190] sm:$0xff] %v3978
        %4180 = vst [vmem:[%s447 + $0x198] sm:$0xff] %v3980
        %4181 = vst [vmem:[%s447 + $0x1a0] sm:$0xff] %v4091
        %4182 = vst [vmem:[%s447 + $0x1a8] sm:$0xff] %v4093
        %4183 = vst [vmem:[%s447 + $0x1b0] sm:$0xff] %v3869
        %4184 = vst [vmem:[%s447 + $0x1b8] sm:$0xff] %v3871
        %4185 = vst [vmem:[%s447 + $0x1c0] sm:$0xff] %v3982
        %4186 = vst [vmem:[%s447 + $0x1c8] sm:$0xff] %v3984
        %4187 = vst [vmem:[%s447 + $0x1d0] sm:$0xff] %v4095
        %4188 = vst [vmem:[%s447 + $0x1d8] sm:$0xff] %v4097
        %4189 = vst [vmem:[%s447 + $0x1e0] sm:$0xff] %v3875
        %4190 = vst [vmem:[%s447 + $0x1e8] sm:$0xff] %v3877
        %4191 = vst [vmem:[%s447 + $0x1f0] sm:$0xff] %v3988
        %4192 = vst [vmem:[%s447 + $0x1f8] sm:$0xff] %v3990
        %4193 = vst [vmem:[%s447 + $0x200] sm:$0xff] %v4101
        %4194 = vst [vmem:[%s447 + $0x208] sm:$0xff] %v4103
        %4195 = vst [vmem:[%s447 + $0x210] sm:$0xff] %v3879
        %4196 = vst [vmem:[%s447 + $0x218] sm:$0xff] %v3881
        %4197 = vst [vmem:[%s447 + $0x220] sm:$0xff] %v3992
        %4198 = vst [vmem:[%s447 + $0x228] sm:$0xff] %v3994
        %4199 = vst [vmem:[%s447 + $0x230] sm:$0xff] %v4105
        %4200 = vst [vmem:[%s447 + $0x238] sm:$0xff] %v4107
        %4201 = vst [vmem:[%s447 + $0x240] sm:$0xff] %v3885
        %4202 = vst [vmem:[%s447 + $0x248] sm:$0xff] %v3887
        %4203 = vst [vmem:[%s447 + $0x250] sm:$0xff] %v3998
        %4204 = vst [vmem:[%s447 + $0x258] sm:$0xff] %v4000
        %4205 = vst [vmem:[%s447 + $0x260] sm:$0xff] %v4111
        %4206 = vst [vmem:[%s447 + $0x268] sm:$0xff] %v4113
        %4207 = vst [vmem:[%s447 + $0x270] sm:$0xff] %v3889
        %4208 = vst [vmem:[%s447 + $0x278] sm:$0xff] %v3891
        %4209 = vst [vmem:[%s447 + $0x280] sm:$0xff] %v4002
        %4210 = vst [vmem:[%s447 + $0x288] sm:$0xff] %v4004
        %4211 = vst [vmem:[%s447 + $0x290] sm:$0xff] %v4115
        %4212 = vst [vmem:[%s447 + $0x298] sm:$0xff] %v4117
        %4213 = vst [vmem:[%s447 + $0x2a0] sm:$0xff] %v3895
        %4214 = vst [vmem:[%s447 + $0x2a8] sm:$0xff] %v3897
        %4215 = vst [vmem:[%s447 + $0x2b0] sm:$0xff] %v4008
        %4216 = vst [vmem:[%s447 + $0x2b8] sm:$0xff] %v4010
        %4217 = vst [vmem:[%s447 + $0x2c0] sm:$0xff] %v4121
        %4218 = vst [vmem:[%s447 + $0x2c8] sm:$0xff] %v4123
        %4219 = vst [vmem:[%s447 + $0x2d0] sm:$0xff] %v3899
        %4220 = vst [vmem:[%s447 + $0x2d8] sm:$0xff] %v3901
        %4221 = vst [vmem:[%s447 + $0x2e0] sm:$0xff] %v4012
        %4222 = vst [vmem:[%s447 + $0x2e8] sm:$0xff] %v4014
        %4223 = vst [vmem:[%s447 + $0x2f0] sm:$0xff] %v4125
        %4224 = vst [vmem:[%s447 + $0x2f8] sm:$0xff] %v4127
        %s4225 = sand.u32 %s235, 1
        %s4226 = scalar_lea.sflag [#allocation4], %s4225
        %s4227 = sand.u32 %s235, 1
        %s4228 = smul.addr %s4227, 128
        %s4229 = scalar_lea.vmem [#allocation11], %s4228
        %s4230 = sand.u32 %s261, 1
        %s4231 = scalar_lea.sflag [#allocation13], %s4230
        %s4232 = sand.u32 %s261, 1
        %s4233 = smul.addr %s4232, 768
        %s4234 = scalar_lea.vmem [#allocation12], %s4233
        // Predicated region
        $region77: #{tpu_custom_call.1} parent=55 // pred_check
          %p4235 = pneg %p245
        $region78: #{tpu_custom_call.1} parent=55 // pred_check_branch
          %4237 = sbr.rel (%p4235) target = $region80
        $region79: #{tpu_custom_call.1} parent=55 // pred_region
          %s4238 = smul.u32 16, %s33
          %s4240 = ssub.s32 2048, 2048
          %4241 = vsyncadd %s4226, %s4240
          %s4242 = smul.addr %s4238, 128
          %s4243 = scalar_lea.hbm %s9, %s4242
          %s4244 = sshll.u32 %s4229, 4
          %s4245 = int_to_ptr.vmem [resolvable:$true] %s4244
          %4250 = dma.vmem_to_hbm [thread:$0]  %s4245, 2048, %s4243, %s4226, 128, 128, 8
        $region80: #{tpu_custom_call.1} parent=55 // pred_fallthru
          _
        // Predicated region
        $region81: #{tpu_custom_call.1} parent=55 // pred_check
          %p4251 = pneg %p271
        $region82: #{tpu_custom_call.1} parent=55 // pred_check_branch
          %4253 = sbr.rel (%p4251) target = $region84
        $region83: #{tpu_custom_call.1} parent=55 // pred_region
          %s4254 = smul.u32 16, %s33
          %s4256 = ssub.s32 12288, 12288
          %4257 = vsyncadd %s4231, %s4256
          %s4258 = smul.addr %s4254, 6
          %s4259 = smul.addr %s4258, 128
          %s4260 = scalar_lea.hbm %s10, %s4259
          %s4261 = sshll.u32 %s4234, 4
          %s4262 = int_to_ptr.vmem [resolvable:$true] %s4261
          %4267 = dma.vmem_to_hbm [thread:$0]  %s4262, 12288, %s4260, %s4231, 768, 768, 48
        $region84: #{tpu_custom_call.1} parent=55 // pred_fallthru
          _
      $region56: #{tpu_custom_call.1} parent=5 // pred_fallthru
        _
      %p4268 = scmp.le.s32.totalorder 2, %s28
      // Predicated region
      $region85: #{tpu_custom_call.1} parent=5 // pred_check
        %p4269 = pneg %p4268
      $region86: #{tpu_custom_call.1} parent=5 // pred_check_branch
        %4271 = sbr.rel (%p4269) target = $region88
      $region87: #{tpu_custom_call.1} parent=5 // pred_region
        %s4272 = ssub.s32 %s28, 2
        // Predicated region
        $region89: #{tpu_custom_call.1} parent=87 // pred_check
          %p4273 = pneg %p251
        $region90: #{tpu_custom_call.1} parent=87 // pred_check_branch
          %4275 = sbr.rel (%p4273) target = $region92
        $region91: #{tpu_custom_call.1} parent=87 // pred_region
          %s4276 = sand.u32 %s236, 1
          %s4277 = scalar_lea.sflag [#allocation4], %s4276
          %s4278 = sand.u32 %s236, 1
          %s4279 = smul.addr %s4278, 128
          %s4280 = scalar_lea.vmem [#allocation11], %s4279
          %4281 = dma.done %s4277, 2048
        $region92: #{tpu_custom_call.1} parent=87 // pred_fallthru
          _
        // Predicated region
        $region93: #{tpu_custom_call.1} parent=87 // pred_check
          %p4282 = pneg %p277
        $region94: #{tpu_custom_call.1} parent=87 // pred_check_branch
          %4284 = sbr.rel (%p4282) target = $region96
        $region95: #{tpu_custom_call.1} parent=87 // pred_region
          %s4285 = sand.u32 %s262, 1
          %s4286 = scalar_lea.sflag [#allocation13], %s4285
          %s4287 = sand.u32 %s262, 1
          %s4288 = smul.addr %s4287, 768
          %s4289 = scalar_lea.vmem [#allocation12], %s4288
          %4290 = dma.done %s4286, 12288
        $region96: #{tpu_custom_call.1} parent=87 // pred_fallthru
          _
      $region88: #{tpu_custom_call.1} parent=5 // pred_fallthru
        _
    $region6: #{tpu_custom_call.1} parent=1 // loop_footer
      %s32 = sadd.s32 1, %s28
    $region7: #{tpu_custom_call.1} parent=1 // loop_footer_branch
      %27 = sbr.rel target = $region3
    $region8: #{tpu_custom_call.1} parent=1 // loop_exit
      _
    %4291 = vsyncpa [#allocation3], 1
    %s4292 = scalar_lea.sflag [#allocation3], 1
    %4293 = vsyncpa %s4292, 1
    %4294 = vsyncpa [#allocation6], 1
    %4295 = vsyncpa [#allocation9], 1
    %4296 = vsyncpa [#allocation4], 1
    %s4297 = scalar_lea.sflag [#allocation4], 1
    %4298 = vsyncpa %s4297, 1
    %4299 = vsyncpa [#allocation13], 1
    %s4300 = scalar_lea.sflag [#allocation13], 1
    %4301 = vsyncpa %s4300, 1

</llo_original>
